<compile_context>
chip_gen: v7x
topology: tpu7x:2x2x1
jax: 0.10.0
libtpu: 0.0.40
codegen_flags: <defaults>
</compile_context>

<pallas_src>
import jax
import jax.numpy as jnp
from jax import lax
from jax.experimental import pallas as pl
from jax.experimental.pallas import tpu as pltpu


# ----------------------------------------------------------------------------
# Pallas kernels
# ----------------------------------------------------------------------------
def _conv_fused_kernel(x_ref, w_ref, b_ref, o_ref):
    """Fused conv (+ optional 2x2 maxpool) + bias + ReLU, lane-dense.

    x_ref: (Q, K, P) bf16   Q pooling quadrants of im2col patches, transposed so
                            the large spatial dim P is on the lane axis.
    w_ref: (Cout, K) bf16   conv weight, K ordered (cin, kh, kw).
    b_ref: (Cout, 1) f32
    o_ref: (Cout, P) f32    lane-dense output (already pooled when Q == 4).
    """
    w = w_ref[...]
    acc = jnp.dot(w, x_ref[0], preferred_element_type=jnp.float32)
    for q in range(1, x_ref.shape[0]):          # static Python loop (Q is 1 or 4)
        acc = jnp.maximum(
            acc, jnp.dot(w, x_ref[q], preferred_element_type=jnp.float32))
    # max-pool commutes with the per-channel bias add and the monotonic ReLU,
    # so max_q(relu(conv_q + b)) == relu(max_q(conv_q) + b).
    o_ref[...] = jnp.maximum(acc + b_ref[...], 0.0)


def _fc_kernel(x_ref, w_ref, b_ref, o_ref):
    """x: (M, K) bf16; w: (Cout, K) bf16 (lane-dense K); b: (1, Cout) f32."""
    acc = lax.dot_general(
        x_ref[...], w_ref[...],
        dimension_numbers=(((1,), (1,)), ((), ())),   # contract K with K (trans_b)
        preferred_element_type=jnp.float32)
    o_ref[...] = (acc + b_ref[...]).astype(o_ref.dtype)


# ----------------------------------------------------------------------------
# Pallas wrappers
# ----------------------------------------------------------------------------
def conv_fused(patches, w, b):
    """patches: (N, Q, K, P) bf16; w: (Cout, K) bf16; b: (Cout, 1) f32 -> (N, Cout, P) f32."""
    n, q, k, p = patches.shape
    cout = w.shape[0]
    return pl.pallas_call(
        _conv_fused_kernel,
        out_shape=jax.ShapeDtypeStruct((n, cout, p), jnp.float32),
        grid=(n,),
        in_specs=[
            pl.BlockSpec((None, q, k, p), lambda i: (i, 0, 0, 0)),
            pl.BlockSpec((cout, k), lambda i: (0, 0)),
            pl.BlockSpec((cout, 1), lambda i: (0, 0)),
        ],
        out_specs=pl.BlockSpec((None, cout, p), lambda i: (i, 0, 0)),
        compiler_params=pltpu.CompilerParams(dimension_semantics=("parallel",)),
    )(patches, w, b)


def linear(x2d, w2d, bias):
    """x2d: (M, K) bf16; w2d: (Cout, K) bf16; bias: (1, Cout) f32 -> (M, Cout) f32."""
    m, k = x2d.shape
    cout = w2d.shape[0]
    return pl.pallas_call(
        _fc_kernel,
        out_shape=jax.ShapeDtypeStruct((m, cout), jnp.float32),
        grid=(1,),
        in_specs=[
            pl.BlockSpec((m, k), lambda i: (0, 0)),
            pl.BlockSpec((cout, k), lambda i: (0, 0)),
            pl.BlockSpec((1, cout), lambda i: (0, 0)),
        ],
        out_specs=pl.BlockSpec((m, cout), lambda i: (0, 0)),
        compiler_params=pltpu.CompilerParams(dimension_semantics=("arbitrary",)),
    )(x2d, w2d, bias)


# ----------------------------------------------------------------------------
# Glue: patch extraction (layout plumbing only; all FLOPs are in the kernels)
# ----------------------------------------------------------------------------
def _pooled_conv_patches(x_nchw, hp, wp):
    """3x3 valid conv followed by 2x2/2 maxpool: build the 4 pooling-quadrant
    im2col operands, transposed to (K, P).  Returns (N, 4, Cin*9, hp*wp),
    K ordered (cin, kh, kw) to match weight.reshape(Cout, -1)."""
    n, cin, _, _ = x_nchw.shape
    quads = []
    for qh in (0, 1):
        for qw in (0, 1):
            taps = []
            for di in range(3):
                for dj in range(3):
                    r0, c0 = qh + di, qw + dj
                    taps.append(x_nchw[:, :, r0:r0 + 2 * hp - 1:2,
                                             c0:c0 + 2 * wp - 1:2])
            t = jnp.stack(taps, axis=2)                    # (N, Cin, 9, hp, wp)
            quads.append(t.reshape(n, cin * 9, hp * wp))
    return jnp.stack(quads, axis=1)                        # (N, 4, Cin*9, hp*wp)


def _conv_patches(x_nchw, ho, wo):
    """Plain 3x3 valid-conv im2col, transposed to (K, P).  (N, Cin*9, ho*wo)."""
    n, cin, _, _ = x_nchw.shape
    taps = []
    for di in range(3):
        for dj in range(3):
            taps.append(x_nchw[:, :, di:di + ho, dj:dj + wo])
    t = jnp.stack(taps, axis=2)                            # (N, Cin, 9, ho, wo)
    return t.reshape(n, cin * 9, ho * wo)


# ----------------------------------------------------------------------------
# Parameters
# ----------------------------------------------------------------------------
def init_torch_params(key):
    """Deterministic synthetic parameters in PyTorch layouts."""
    ks = jax.random.split(key, 8)
    return {
        "w1": jax.random.normal(ks[0], (8, 1, 3, 3), jnp.float32) * 0.1,
        "b1": jax.random.normal(ks[1], (8,), jnp.float32) * 0.1,
        "w2": jax.random.normal(ks[2], (16, 8, 3, 3), jnp.float32) * 0.1,
        "b2": jax.random.normal(ks[3], (16,), jnp.float32) * 0.1,
        "w3": jax.random.normal(ks[4], (32, 16, 3, 3), jnp.float32) * 0.1,
        "b3": jax.random.normal(ks[5], (32,), jnp.float32) * 0.1,
        "fc_w": jax.random.normal(ks[6], (2, 14112), jnp.float32) * 0.01,
        "fc_b": jax.random.normal(ks[7], (2,), jnp.float32) * 0.1,
    }


def to_kernel_params(tp):
    """PyTorch layouts -> kernel layouts (bf16 matmul operands, f32 bias/epilogue)."""
    def conv_w(w_oihw):
        cout = w_oihw.shape[0]
        return w_oihw.reshape(cout, -1).astype(jnp.bfloat16)   # K = (cin, kh, kw)

    return {
        "w1": conv_w(tp["w1"]), "b1": tp["b1"].reshape(-1, 1),
        "w2": conv_w(tp["w2"]), "b2": tp["b2"].reshape(-1, 1),
        "w3": conv_w(tp["w3"]), "b3": tp["b3"].reshape(-1, 1),
        # fc weight stays (2, 14112); its columns are already in torch's
        # (c, h, w) flatten order, which is exactly the kernels' CHW layout.
        "wfc": tp["fc_w"].astype(jnp.bfloat16),
        "bfc": tp["fc_b"].reshape(1, -1),
    }


# ----------------------------------------------------------------------------
# Forward
# ----------------------------------------------------------------------------
@jax.jit
def cnn_forward(x_nchw, kp):
    n = x_nchw.shape[0]

    # conv1 + relu + pool  (98 -> 96 -> 48), fused in one kernel
    p = _pooled_conv_patches(x_nchw, 48, 48).astype(jnp.bfloat16)   # (N,4,9,2304)
    y = conv_fused(p, kp["w1"], kp["b1"])                           # (N,8,2304) f32
    y = y.reshape(n, 8, 48, 48)

    # conv2 + relu + pool  (48 -> 46 -> 23), fused in one kernel
    p = _pooled_conv_patches(y, 23, 23).astype(jnp.bfloat16)        # (N,4,72,529)
    y = conv_fused(p, kp["w2"], kp["b2"])                           # (N,16,529) f32
    y = y.reshape(n, 16, 23, 23)

    # conv3 + relu  (23 -> 21), same kernel with a single "quadrant"
    p = _conv_patches(y, 21, 21)[:, None].astype(jnp.bfloat16)      # (N,1,144,441)
    y = conv_fused(p, kp["w3"], kp["b3"])                           # (N,32,441) f32

    # flatten: the (C, H*W) layout already matches torch's x.view(-1, 14112)
    flat = y.reshape(n, 32 * 21 * 21).astype(jnp.bfloat16)          # (N,14112)
    return linear(flat, kp["wfc"], kp["bfc"])                       # (N,2)


# ----------------------------------------------------------------------------
# Pure-JAX reference (correctness check only)
# ----------------------------------------------------------------------------
def ref_forward(x_nchw, tp):
    def conv(x, w, b):
        y = lax.conv_general_dilated(
            x, w, (1, 1), "VALID",
            dimension_numbers=("NCHW", "OIHW", "NCHW"),
            precision=lax.Precision.HIGHEST)
        return y + b.reshape(1, -1, 1, 1)

    def pool(x):
        return lax.reduce_window(
            x, -jnp.inf, lax.max, (1, 1, 2, 2), (1, 1, 2, 2), "VALID")

    y = pool(jax.nn.relu(conv(x_nchw, tp["w1"], tp["b1"])))
    y = pool(jax.nn.relu(conv(y, tp["w2"], tp["b2"])))
    y = jax.nn.relu(conv(y, tp["w3"], tp["b3"]))
    y = y.reshape(y.shape[0], -1)                 # NCHW flatten == torch .view
    return jnp.dot(y, tp["fc_w"].T, precision=lax.Precision.HIGHEST) + tp["fc_b"]


if __name__ == "__main__":
    key = jax.random.PRNGKey(0)
    kx, kparam = jax.random.split(key)
    # 98x98 single-channel input is implied by fc1's 14112 = 32*21*21 features.
    x = jax.random.normal(kx, (2, 1, 98, 98), jnp.float32)

    torch_params = init_torch_params(kparam)
    kernel_params = to_kernel_params(torch_params)

    out = jax.block_until_ready(cnn_forward(x, kernel_params))
    ref = ref_forward(x, torch_params)

    assert out.shape == (2, 2), out.shape
    assert jnp.allclose(out, ref, rtol=2e-2, atol=2e-2), (out, ref)
    print("KERNEL_OK")
</pallas_src>

<mosaic_0001>
module attributes {stable_mosaic.version = 11 : i64} {
  func.func @_conv_fused_kernel(%arg0: i32, %arg1: memref<1x4x9x2304xbf16, #tpu.memory_space<vmem>>, %arg2: memref<8x9xbf16, #tpu.memory_space<vmem>>, %arg3: memref<8x1xf32, #tpu.memory_space<vmem>>, %arg4: memref<1x8x2304xf32, #tpu.memory_space<vmem>>) attributes {dimension_semantics = [#tpu.dimension_semantics<parallel>], iteration_bounds = array<i64: 2>, scalar_prefetch = 0 : i64, scratch_operands = 0 : i64, tpu.core_type = #tpu.core_type<tc>, window_params = [{transform_indices = @transform_0, window_bounds = array<i64: 1, 4, 9, 2304>}, {pipeline_mode = #tpu.pipeline_mode<synchronous>, transform_indices = @transform_1, window_bounds = array<i64: 8, 9>}, {pipeline_mode = #tpu.pipeline_mode<synchronous>, transform_indices = @transform_2, window_bounds = array<i64: 8, 1>}, {transform_indices = @transform_3, window_bounds = array<i64: 1, 8, 2304>}]} {
    %c0 = arith.constant 0 : index
    %c0_0 = arith.constant 0 : index
    %0 = vector.load %arg2[%c0, %c0_0] : memref<8x9xbf16, #tpu.memory_space<vmem>>, vector<8x9xbf16>
    %c0_1 = arith.constant 0 : index
    %c0_2 = arith.constant 0 : index
    %c0_3 = arith.constant 0 : index
    %c0_4 = arith.constant 0 : index
    %1 = vector.load %arg1[%c0_1, %c0_2, %c0_3, %c0_4] : memref<1x4x9x2304xbf16, #tpu.memory_space<vmem>>, vector<1x1x9x2304xbf16>
    %2 = vector.shape_cast %1 : vector<1x1x9x2304xbf16> to vector<9x2304xbf16>
    %cst = arith.constant dense<0.000000e+00> : vector<8x2304xf32>
    %3 = tpu.matmul %0, %2, %cst {dimension_numbers = #tpu.dot_dimension_numbers<[1], [0], [0], [1], [0, 0, 1, 1], [], []>} : vector<8x9xbf16>, vector<9x2304xbf16>, vector<8x2304xf32> -> vector<8x2304xf32>
    %c0_5 = arith.constant 0 : index
    %c1 = arith.constant 1 : index
    %c0_6 = arith.constant 0 : index
    %c0_7 = arith.constant 0 : index
    %4 = vector.load %arg1[%c0_5, %c1, %c0_6, %c0_7] : memref<1x4x9x2304xbf16, #tpu.memory_space<vmem>>, vector<1x1x9x2304xbf16>
    %5 = vector.shape_cast %4 : vector<1x1x9x2304xbf16> to vector<9x2304xbf16>
    %cst_8 = arith.constant dense<0.000000e+00> : vector<8x2304xf32>
    %6 = tpu.matmul %0, %5, %cst_8 {dimension_numbers = #tpu.dot_dimension_numbers<[1], [0], [0], [1], [0, 0, 1, 1], [], []>} : vector<8x9xbf16>, vector<9x2304xbf16>, vector<8x2304xf32> -> vector<8x2304xf32>
    %7 = arith.maximumf %3, %6 : vector<8x2304xf32>
    %c0_9 = arith.constant 0 : index
    %c2 = arith.constant 2 : index
    %c0_10 = arith.constant 0 : index
    %c0_11 = arith.constant 0 : index
    %8 = vector.load %arg1[%c0_9, %c2, %c0_10, %c0_11] : memref<1x4x9x2304xbf16, #tpu.memory_space<vmem>>, vector<1x1x9x2304xbf16>
    %9 = vector.shape_cast %8 : vector<1x1x9x2304xbf16> to vector<9x2304xbf16>
    %cst_12 = arith.constant dense<0.000000e+00> : vector<8x2304xf32>
    %10 = tpu.matmul %0, %9, %cst_12 {dimension_numbers = #tpu.dot_dimension_numbers<[1], [0], [0], [1], [0, 0, 1, 1], [], []>} : vector<8x9xbf16>, vector<9x2304xbf16>, vector<8x2304xf32> -> vector<8x2304xf32>
    %11 = arith.maximumf %7, %10 : vector<8x2304xf32>
    %c0_13 = arith.constant 0 : index
    %c3 = arith.constant 3 : index
    %c0_14 = arith.constant 0 : index
    %c0_15 = arith.constant 0 : index
    %12 = vector.load %arg1[%c0_13, %c3, %c0_14, %c0_15] : memref<1x4x9x2304xbf16, #tpu.memory_space<vmem>>, vector<1x1x9x2304xbf16>
    %13 = vector.shape_cast %12 : vector<1x1x9x2304xbf16> to vector<9x2304xbf16>
    %cst_16 = arith.constant dense<0.000000e+00> : vector<8x2304xf32>
    %14 = tpu.matmul %0, %13, %cst_16 {dimension_numbers = #tpu.dot_dimension_numbers<[1], [0], [0], [1], [0, 0, 1, 1], [], []>} : vector<8x9xbf16>, vector<9x2304xbf16>, vector<8x2304xf32> -> vector<8x2304xf32>
    %15 = arith.maximumf %11, %14 : vector<8x2304xf32>
    %c0_17 = arith.constant 0 : index
    %c0_18 = arith.constant 0 : index
    %16 = vector.load %arg3[%c0_17, %c0_18] : memref<8x1xf32, #tpu.memory_space<vmem>>, vector<8x1xf32>
    %17 = vector.broadcast %16 : vector<8x1xf32> to vector<8x2304xf32>
    %18 = arith.addf %15, %17 : vector<8x2304xf32>
    %cst_19 = arith.constant 0.000000e+00 : f32
    %19 = vector.broadcast %cst_19 : f32 to vector<8x2304xf32>
    %20 = arith.maximumf %18, %19 : vector<8x2304xf32>
    %c0_20 = arith.constant 0 : index
    %c0_21 = arith.constant 0 : index
    %c0_22 = arith.constant 0 : index
    %21 = vector.load %arg4[%c0_20, %c0_21, %c0_22] : memref<1x8x2304xf32, #tpu.memory_space<vmem>>, vector<1x8x2304xf32>
    %22 = vector.shape_cast %21 : vector<1x8x2304xf32> to vector<8x2304xf32>
    %23 = vector.shape_cast %20 : vector<8x2304xf32> to vector<1x8x2304xf32>
    tpu.vector_store %arg4[%c0_20, %c0_21, %c0_22], %23 {strides = array<i32>} : memref<1x8x2304xf32, #tpu.memory_space<vmem>>, vector<1x8x2304xf32>,
    return
  }
  func.func @transform_0(%arg0: i32) -> (i32, i32, i32, i32) {
    %c0_i32 = arith.constant 0 : i32
    %c0_i32_0 = arith.constant 0 : i32
    %c0_i32_1 = arith.constant 0 : i32
    %c0_i32_2 = arith.constant 0 : i32
    return %arg0, %c0_i32, %c0_i32_0, %c0_i32_1 : i32, i32, i32, i32
  }
  func.func @transform_1(%arg0: i32) -> (i32, i32) {
    %c0_i32 = arith.constant 0 : i32
    %c0_i32_0 = arith.constant 0 : i32
    %c0_i32_1 = arith.constant 0 : i32
    return %c0_i32, %c0_i32_0 : i32, i32
  }
  func.func @transform_2(%arg0: i32) -> (i32, i32) {
    %c0_i32 = arith.constant 0 : i32
    %c0_i32_0 = arith.constant 0 : i32
    %c0_i32_1 = arith.constant 0 : i32
    return %c0_i32, %c0_i32_0 : i32, i32
  }
  func.func @transform_3(%arg0: i32) -> (i32, i32, i32) {
    %c0_i32 = arith.constant 0 : i32
    %c0_i32_0 = arith.constant 0 : i32
    %c0_i32_1 = arith.constant 0 : i32
    return %arg0, %c0_i32, %c0_i32_0 : i32, i32, i32
  }
}

module attributes {stable_mosaic.version = 11 : i64} {
  func.func @_conv_fused_kernel(%arg0: i32, %arg1: memref<1x4x72x529xbf16, #tpu.memory_space<vmem>>, %arg2: memref<16x72xbf16, #tpu.memory_space<vmem>>, %arg3: memref<16x1xf32, #tpu.memory_space<vmem>>, %arg4: memref<1x16x529xf32, #tpu.memory_space<vmem>>) attributes {dimension_semantics = [#tpu.dimension_semantics<parallel>], iteration_bounds = array<i64: 2>, scalar_prefetch = 0 : i64, scratch_operands = 0 : i64, tpu.core_type = #tpu.core_type<tc>, window_params = [{transform_indices = @transform_0, window_bounds = array<i64: 1, 4, 72, 529>}, {pipeline_mode = #tpu.pipeline_mode<synchronous>, transform_indices = @transform_1, window_bounds = array<i64: 16, 72>}, {pipeline_mode = #tpu.pipeline_mode<synchronous>, transform_indices = @transform_2, window_bounds = array<i64: 16, 1>}, {transform_indices = @transform_3, window_bounds = array<i64: 1, 16, 529>}]} {
    %c0 = arith.constant 0 : index
    %c0_0 = arith.constant 0 : index
    %0 = vector.load %arg2[%c0, %c0_0] : memref<16x72xbf16, #tpu.memory_space<vmem>>, vector<16x72xbf16>
    %c0_1 = arith.constant 0 : index
    %c0_2 = arith.constant 0 : index
    %c0_3 = arith.constant 0 : index
    %c0_4 = arith.constant 0 : index
    %1 = vector.load %arg1[%c0_1, %c0_2, %c0_3, %c0_4] : memref<1x4x72x529xbf16, #tpu.memory_space<vmem>>, vector<1x1x72x529xbf16>
    %2 = vector.shape_cast %1 : vector<1x1x72x529xbf16> to vector<72x529xbf16>
    %cst = arith.constant dense<0.000000e+00> : vector<16x529xf32>
    %3 = tpu.matmul %0, %2, %cst {dimension_numbers = #tpu.dot_dimension_numbers<[1], [0], [0], [1], [0, 0, 1, 1], [], []>} : vector<16x72xbf16>, vector<72x529xbf16>, vector<16x529xf32> -> vector<16x529xf32>
    %c0_5 = arith.constant 0 : index
    %c1 = arith.constant 1 : index
    %c0_6 = arith.constant 0 : index
    %c0_7 = arith.constant 0 : index
    %4 = vector.load %arg1[%c0_5, %c1, %c0_6, %c0_7] : memref<1x4x72x529xbf16, #tpu.memory_space<vmem>>, vector<1x1x72x529xbf16>
    %5 = vector.shape_cast %4 : vector<1x1x72x529xbf16> to vector<72x529xbf16>
    %cst_8 = arith.constant dense<0.000000e+00> : vector<16x529xf32>
    %6 = tpu.matmul %0, %5, %cst_8 {dimension_numbers = #tpu.dot_dimension_numbers<[1], [0], [0], [1], [0, 0, 1, 1], [], []>} : vector<16x72xbf16>, vector<72x529xbf16>, vector<16x529xf32> -> vector<16x529xf32>
    %7 = arith.maximumf %3, %6 : vector<16x529xf32>
    %c0_9 = arith.constant 0 : index
    %c2 = arith.constant 2 : index
    %c0_10 = arith.constant 0 : index
    %c0_11 = arith.constant 0 : index
    %8 = vector.load %arg1[%c0_9, %c2, %c0_10, %c0_11] : memref<1x4x72x529xbf16, #tpu.memory_space<vmem>>, vector<1x1x72x529xbf16>
    %9 = vector.shape_cast %8 : vector<1x1x72x529xbf16> to vector<72x529xbf16>
    %cst_12 = arith.constant dense<0.000000e+00> : vector<16x529xf32>
    %10 = tpu.matmul %0, %9, %cst_12 {dimension_numbers = #tpu.dot_dimension_numbers<[1], [0], [0], [1], [0, 0, 1, 1], [], []>} : vector<16x72xbf16>, vector<72x529xbf16>, vector<16x529xf32> -> vector<16x529xf32>
    %11 = arith.maximumf %7, %10 : vector<16x529xf32>
    %c0_13 = arith.constant 0 : index
    %c3 = arith.constant 3 : index
    %c0_14 = arith.constant 0 : index
    %c0_15 = arith.constant 0 : index
    %12 = vector.load %arg1[%c0_13, %c3, %c0_14, %c0_15] : memref<1x4x72x529xbf16, #tpu.memory_space<vmem>>, vector<1x1x72x529xbf16>
    %13 = vector.shape_cast %12 : vector<1x1x72x529xbf16> to vector<72x529xbf16>
    %cst_16 = arith.constant dense<0.000000e+00> : vector<16x529xf32>
    %14 = tpu.matmul %0, %13, %cst_16 {dimension_numbers = #tpu.dot_dimension_numbers<[1], [0], [0], [1], [0, 0, 1, 1], [], []>} : vector<16x72xbf16>, vector<72x529xbf16>, vector<16x529xf32> -> vector<16x529xf32>
    %15 = arith.maximumf %11, %14 : vector<16x529xf32>
    %c0_17 = arith.constant 0 : index
    %c0_18 = arith.constant 0 : index
    %16 = vector.load %arg3[%c0_17, %c0_18] : memref<16x1xf32, #tpu.memory_space<vmem>>, vector<16x1xf32>
    %17 = vector.broadcast %16 : vector<16x1xf32> to vector<16x529xf32>
    %18 = arith.addf %15, %17 : vector<16x529xf32>
    %cst_19 = arith.constant 0.000000e+00 : f32
    %19 = vector.broadcast %cst_19 : f32 to vector<16x529xf32>
    %20 = arith.maximumf %18, %19 : vector<16x529xf32>
    %c0_20 = arith.constant 0 : index
    %c0_21 = arith.constant 0 : index
    %c0_22 = arith.constant 0 : index
    %21 = vector.load %arg4[%c0_20, %c0_21, %c0_22] : memref<1x16x529xf32, #tpu.memory_space<vmem>>, vector<1x16x529xf32>
    %22 = vector.shape_cast %21 : vector<1x16x529xf32> to vector<16x529xf32>
    %23 = vector.shape_cast %20 : vector<16x529xf32> to vector<1x16x529xf32>
    tpu.vector_store %arg4[%c0_20, %c0_21, %c0_22], %23 {strides = array<i32>} : memref<1x16x529xf32, #tpu.memory_space<vmem>>, vector<1x16x529xf32>,
    return
  }
  func.func @transform_0(%arg0: i32) -> (i32, i32, i32, i32) {
    %c0_i32 = arith.constant 0 : i32
    %c0_i32_0 = arith.constant 0 : i32
    %c0_i32_1 = arith.constant 0 : i32
    %c0_i32_2 = arith.constant 0 : i32
    return %arg0, %c0_i32, %c0_i32_0, %c0_i32_1 : i32, i32, i32, i32
  }
  func.func @transform_1(%arg0: i32) -> (i32, i32) {
    %c0_i32 = arith.constant 0 : i32
    %c0_i32_0 = arith.constant 0 : i32
    %c0_i32_1 = arith.constant 0 : i32
    return %c0_i32, %c0_i32_0 : i32, i32
  }
  func.func @transform_2(%arg0: i32) -> (i32, i32) {
    %c0_i32 = arith.constant 0 : i32
    %c0_i32_0 = arith.constant 0 : i32
    %c0_i32_1 = arith.constant 0 : i32
    return %c0_i32, %c0_i32_0 : i32, i32
  }
  func.func @transform_3(%arg0: i32) -> (i32, i32, i32) {
    %c0_i32 = arith.constant 0 : i32
    %c0_i32_0 = arith.constant 0 : i32
    %c0_i32_1 = arith.constant 0 : i32
    return %arg0, %c0_i32, %c0_i32_0 : i32, i32, i32
  }
}

module attributes {stable_mosaic.version = 11 : i64} {
  func.func @_conv_fused_kernel(%arg0: i32, %arg1: memref<1x1x144x441xbf16, #tpu.memory_space<vmem>>, %arg2: memref<32x144xbf16, #tpu.memory_space<vmem>>, %arg3: memref<32x1xf32, #tpu.memory_space<vmem>>, %arg4: memref<1x32x441xf32, #tpu.memory_space<vmem>>) attributes {dimension_semantics = [#tpu.dimension_semantics<parallel>], iteration_bounds = array<i64: 2>, scalar_prefetch = 0 : i64, scratch_operands = 0 : i64, tpu.core_type = #tpu.core_type<tc>, window_params = [{transform_indices = @transform_0, window_bounds = array<i64: 1, 1, 144, 441>}, {pipeline_mode = #tpu.pipeline_mode<synchronous>, transform_indices = @transform_1, window_bounds = array<i64: 32, 144>}, {pipeline_mode = #tpu.pipeline_mode<synchronous>, transform_indices = @transform_2, window_bounds = array<i64: 32, 1>}, {transform_indices = @transform_3, window_bounds = array<i64: 1, 32, 441>}]} {
    %c0 = arith.constant 0 : index
    %c0_0 = arith.constant 0 : index
    %0 = vector.load %arg2[%c0, %c0_0] : memref<32x144xbf16, #tpu.memory_space<vmem>>, vector<32x144xbf16>
    %c0_1 = arith.constant 0 : index
    %c0_2 = arith.constant 0 : index
    %c0_3 = arith.constant 0 : index
    %c0_4 = arith.constant 0 : index
    %1 = vector.load %arg1[%c0_1, %c0_2, %c0_3, %c0_4] : memref<1x1x144x441xbf16, #tpu.memory_space<vmem>>, vector<1x1x144x441xbf16>
    %2 = vector.shape_cast %1 : vector<1x1x144x441xbf16> to vector<144x441xbf16>
    %cst = arith.constant dense<0.000000e+00> : vector<32x441xf32>
    %3 = tpu.matmul %0, %2, %cst {dimension_numbers = #tpu.dot_dimension_numbers<[1], [0], [0], [1], [0, 0, 1, 1], [], []>} : vector<32x144xbf16>, vector<144x441xbf16>, vector<32x441xf32> -> vector<32x441xf32>
    %c0_5 = arith.constant 0 : index
    %c0_6 = arith.constant 0 : index
    %4 = vector.load %arg3[%c0_5, %c0_6] : memref<32x1xf32, #tpu.memory_space<vmem>>, vector<32x1xf32>
    %5 = vector.broadcast %4 : vector<32x1xf32> to vector<32x441xf32>
    %6 = arith.addf %3, %5 : vector<32x441xf32>
    %cst_7 = arith.constant 0.000000e+00 : f32
    %7 = vector.broadcast %cst_7 : f32 to vector<32x441xf32>
    %8 = arith.maximumf %6, %7 : vector<32x441xf32>
    %c0_8 = arith.constant 0 : index
    %c0_9 = arith.constant 0 : index
    %c0_10 = arith.constant 0 : index
    %9 = vector.load %arg4[%c0_8, %c0_9, %c0_10] : memref<1x32x441xf32, #tpu.memory_space<vmem>>, vector<1x32x441xf32>
    %10 = vector.shape_cast %9 : vector<1x32x441xf32> to vector<32x441xf32>
    %11 = vector.shape_cast %8 : vector<32x441xf32> to vector<1x32x441xf32>
    tpu.vector_store %arg4[%c0_8, %c0_9, %c0_10], %11 {strides = array<i32>} : memref<1x32x441xf32, #tpu.memory_space<vmem>>, vector<1x32x441xf32>,
    return
  }
  func.func @transform_0(%arg0: i32) -> (i32, i32, i32, i32) {
    %c0_i32 = arith.constant 0 : i32
    %c0_i32_0 = arith.constant 0 : i32
    %c0_i32_1 = arith.constant 0 : i32
    %c0_i32_2 = arith.constant 0 : i32
    return %arg0, %c0_i32, %c0_i32_0, %c0_i32_1 : i32, i32, i32, i32
  }
  func.func @transform_1(%arg0: i32) -> (i32, i32) {
    %c0_i32 = arith.constant 0 : i32
    %c0_i32_0 = arith.constant 0 : i32
    %c0_i32_1 = arith.constant 0 : i32
    return %c0_i32, %c0_i32_0 : i32, i32
  }
  func.func @transform_2(%arg0: i32) -> (i32, i32) {
    %c0_i32 = arith.constant 0 : i32
    %c0_i32_0 = arith.constant 0 : i32
    %c0_i32_1 = arith.constant 0 : i32
    return %c0_i32, %c0_i32_0 : i32, i32
  }
  func.func @transform_3(%arg0: i32) -> (i32, i32, i32) {
    %c0_i32 = arith.constant 0 : i32
    %c0_i32_0 = arith.constant 0 : i32
    %c0_i32_1 = arith.constant 0 : i32
    return %arg0, %c0_i32, %c0_i32_0 : i32, i32, i32
  }
}

module attributes {stable_mosaic.version = 11 : i64} {
  func.func @_fc_kernel(%arg0: i32, %arg1: memref<2x14112xbf16, #tpu.memory_space<vmem>>, %arg2: memref<2x14112xbf16, #tpu.memory_space<vmem>>, %arg3: memref<1x2xf32, #tpu.memory_space<vmem>>, %arg4: memref<2x2xf32, #tpu.memory_space<vmem>>) attributes {dimension_semantics = [#tpu.dimension_semantics<arbitrary>], iteration_bounds = array<i64: 1>, scalar_prefetch = 0 : i64, scratch_operands = 0 : i64, tpu.core_type = #tpu.core_type<tc>, window_params = [{pipeline_mode = #tpu.pipeline_mode<synchronous>, transform_indices = @transform_0, window_bounds = array<i64: 2, 14112>}, {pipeline_mode = #tpu.pipeline_mode<synchronous>, transform_indices = @transform_1, window_bounds = array<i64: 2, 14112>}, {pipeline_mode = #tpu.pipeline_mode<synchronous>, transform_indices = @transform_2, window_bounds = array<i64: 1, 2>}, {pipeline_mode = #tpu.pipeline_mode<synchronous>, transform_indices = @transform_3, window_bounds = array<i64: 2, 2>}]} {
    %c0 = arith.constant 0 : index
    %c0_0 = arith.constant 0 : index
    %0 = vector.load %arg1[%c0, %c0_0] : memref<2x14112xbf16, #tpu.memory_space<vmem>>, vector<2x14112xbf16>
    %c0_1 = arith.constant 0 : index
    %c0_2 = arith.constant 0 : index
    %1 = vector.load %arg2[%c0_1, %c0_2] : memref<2x14112xbf16, #tpu.memory_space<vmem>>, vector<2x14112xbf16>
    %cst = arith.constant dense<0.000000e+00> : vector<2x2xf32>
    %2 = tpu.matmul %0, %1, %cst {dimension_numbers = #tpu.dot_dimension_numbers<[1], [1], [0], [0], [0, 0, 1, 0], [], []>} : vector<2x14112xbf16>, vector<2x14112xbf16>, vector<2x2xf32> -> vector<2x2xf32>
    %c0_3 = arith.constant 0 : index
    %c0_4 = arith.constant 0 : index
    %3 = vector.load %arg3[%c0_3, %c0_4] : memref<1x2xf32, #tpu.memory_space<vmem>>, vector<1x2xf32>
    %4 = vector.broadcast %3 : vector<1x2xf32> to vector<2x2xf32>
    %5 = arith.addf %2, %4 : vector<2x2xf32>
    %c0_5 = arith.constant 0 : index
    %c0_6 = arith.constant 0 : index
    %6 = vector.load %arg4[%c0_5, %c0_6] : memref<2x2xf32, #tpu.memory_space<vmem>>, vector<2x2xf32>
    tpu.vector_store %arg4[%c0_5, %c0_6], %5 {strides = array<i32>} : memref<2x2xf32, #tpu.memory_space<vmem>>, vector<2x2xf32>,
    return
  }
  func.func @transform_0(%arg0: i32) -> (i32, i32) {
    %c0_i32 = arith.constant 0 : i32
    %c0_i32_0 = arith.constant 0 : i32
    %c0_i32_1 = arith.constant 0 : i32
    return %c0_i32, %c0_i32_0 : i32, i32
  }
  func.func @transform_1(%arg0: i32) -> (i32, i32) {
    %c0_i32 = arith.constant 0 : i32
    %c0_i32_0 = arith.constant 0 : i32
    %c0_i32_1 = arith.constant 0 : i32
    return %c0_i32, %c0_i32_0 : i32, i32
  }
  func.func @transform_2(%arg0: i32) -> (i32, i32) {
    %c0_i32 = arith.constant 0 : i32
    %c0_i32_0 = arith.constant 0 : i32
    %c0_i32_1 = arith.constant 0 : i32
    return %c0_i32, %c0_i32_0 : i32, i32
  }
  func.func @transform_3(%arg0: i32) -> (i32, i32) {
    %c0_i32 = arith.constant 0 : i32
    %c0_i32_0 = arith.constant 0 : i32
    %c0_i32_1 = arith.constant 0 : i32
    return %c0_i32, %c0_i32_0 : i32, i32
  }
}

</mosaic_0001>

<llo_original>
// kernel: cnn_forward.4
$region0: #{cnn_forward.4}
  #allocation0 [shape = 'u32[]', space=smem, size = 0x4, offset = 0x4, fixed_abs, tag = 'smem constant byte address 0x4 - core index']
  #allocation1 [shape = 'u32[144,128]{1,0:T(1,128)}', space=vmem, size = 0x12000, scoped, tag = 'internal scratch']
  %s0 = inlined_call_operand.vmem [shape: bf16[2,4,9,2304], index: 0, kind: input, shape index: {}]
  %s1 = inlined_call_operand.vmem [shape: bf16[8,9], index: 1, kind: input, shape index: {}]
  %s2 = inlined_call_operand.vmem [shape: f32[8,1], index: 2, kind: input, shape index: {}]
  %s3 = inlined_call_operand.vmem [shape: f32[2,8,2304], index: 3, kind: output, shape index: {}]
  %s4 = sld [smem:[#allocation0]]
  $region45: #{cnn_forward.4} parent=0
    _
  %s6 = ssub.s32 1, %s4
  %s7 = scalar_select 0, %s6, %s4
  loop: start=0, step=1, limit=4
  $region2: #{cnn_forward.4} parent=0 // loop_pre_header
    _
  $region3: #{cnn_forward.4} parent=0 // loop_header
    %s9 = sphi 0, %s13
    %p10 = scmp.ge.s32.totalorder %s9, 4
    %s19 = sphi 0, %s21
    %s22 = sphi 0, %s19
    %s23 = sphi 0, %s22
    %s39 = sphi 0, %s23
    %s43 = sphi 0, %s43
    %s45 = sphi 0, %s43
    %s46 = sphi 0, %s45
    %s60 = sphi 0, %s46
    %s64 = sphi 0, %s64
    %s66 = sphi 0, %s64
    %s67 = sphi 0, %s66
    %s81 = sphi 0, %s67
    %s87 = sphi 0, %s89
    %s90 = sphi 0, %s87
    %s91 = sphi 0, %s90
    %s107 = sphi 0, %s91
  $region4: #{cnn_forward.4} parent=0 // loop_header_branch
    %12 = sbr.rel (%p10) target = $region8
  $region5: #{cnn_forward.4} parent=0 // loop_body
    %s14 = ssub.s32 %s9, 1
    %s15 = ssub.s32 %s9, 2
    %s16 = sadd.s32 %s9, 1
    %s17 = ssub.s32 %s9, %s16
    %p18 = scmp.eq.s32.totalorder %s17, 0
    %s20 = sadd.s32 %s19, 1
    %s21 = scalar_select %p18, %s19, %s20
    %p24 = pneg %p18
    %p25 = scmp.eq.s32.totalorder %s9, 1
    %p26 = por %p24, %p25
    %p27 = scmp.ne.s32.totalorder %s19, %s22
    %p28 = scmp.eq.s32.totalorder %s9, 0
    %p29 = por %p27, %p28
    %p30 = scmp.ne.s32.totalorder %s19, %s22
    %p31 = scmp.eq.s32.totalorder %s14, 1
    %p32 = por %p30, %p31
    %p33 = scmp.ne.s32.totalorder %s22, %s23
    %p34 = scmp.eq.s32.totalorder %s14, 0
    %p35 = por %p33, %p34
    %p36 = scmp.ne.s32.totalorder %s22, %s23
    %p37 = scmp.eq.s32.totalorder %s15, 1
    %p38 = por %p36, %p37
    %p40 = scmp.ne.s32.totalorder %s23, %s39
    %p41 = scmp.eq.s32.totalorder %s15, 0
    %p42 = por %p40, %p41
    %s44 = sadd.s32 %s43, 1
    %p47 = scmp.eq.s32.totalorder %s9, 1
    %p48 = scmp.ne.s32.totalorder %s43, %s45
    %p49 = scmp.eq.s32.totalorder %s9, 0
    %p50 = por %p48, %p49
    %p51 = scmp.ne.s32.totalorder %s43, %s45
    %p52 = scmp.eq.s32.totalorder %s14, 1
    %p53 = por %p51, %p52
    %p54 = scmp.ne.s32.totalorder %s45, %s46
    %p55 = scmp.eq.s32.totalorder %s14, 0
    %p56 = por %p54, %p55
    %p57 = scmp.ne.s32.totalorder %s45, %s46
    %p58 = scmp.eq.s32.totalorder %s15, 1
    %p59 = por %p57, %p58
    %p61 = scmp.ne.s32.totalorder %s46, %s60
    %p62 = scmp.eq.s32.totalorder %s15, 0
    %p63 = por %p61, %p62
    %s65 = sadd.s32 %s64, 1
    %p68 = scmp.eq.s32.totalorder %s9, 1
    %p69 = scmp.ne.s32.totalorder %s64, %s66
    %p70 = scmp.eq.s32.totalorder %s9, 0
    %p71 = por %p69, %p70
    %p72 = scmp.ne.s32.totalorder %s64, %s66
    %p73 = scmp.eq.s32.totalorder %s14, 1
    %p74 = por %p72, %p73
    %p75 = scmp.ne.s32.totalorder %s66, %s67
    %p76 = scmp.eq.s32.totalorder %s14, 0
    %p77 = por %p75, %p76
    %p78 = scmp.ne.s32.totalorder %s66, %s67
    %p79 = scmp.eq.s32.totalorder %s15, 1
    %p80 = por %p78, %p79
    %p82 = scmp.ne.s32.totalorder %s67, %s81
    %p83 = scmp.eq.s32.totalorder %s15, 0
    %p84 = por %p82, %p83
    %s85 = ssub.s32 %s9, %s16
    %p86 = scmp.eq.s32.totalorder %s85, 0
    %s88 = sadd.s32 %s87, 1
    %s89 = scalar_select %p86, %s87, %s88
    %p92 = pneg %p86
    %p93 = scmp.eq.s32.totalorder %s9, 1
    %p94 = por %p92, %p93
    %p95 = scmp.ne.s32.totalorder %s87, %s90
    %p96 = scmp.eq.s32.totalorder %s9, 0
    %p97 = por %p95, %p96
    %p98 = scmp.ne.s32.totalorder %s87, %s90
    %p99 = scmp.eq.s32.totalorder %s14, 1
    %p100 = por %p98, %p99
    %p101 = scmp.ne.s32.totalorder %s90, %s91
    %p102 = scmp.eq.s32.totalorder %s14, 0
    %p103 = por %p101, %p102
    %p104 = scmp.ne.s32.totalorder %s90, %s91
    %p105 = scmp.eq.s32.totalorder %s15, 1
    %p106 = por %p104, %p105
    %p108 = scmp.ne.s32.totalorder %s91, %s107
    %p109 = scmp.eq.s32.totalorder %s15, 0
    %p110 = por %p108, %p109
    %p111 = scmp.le.s32.totalorder 1, %s9
    %p112 = scmp.lt.s32.totalorder %s9, 3
    %p113 = pnand %p111, %p112
    %p114 = pneg %p113
    // Predicated region
    $region9: #{cnn_forward.4} parent=5 // pred_check
      _
    $region10: #{cnn_forward.4} parent=5 // pred_check_branch
      %116 = sbr.rel (%p113) target = $region12
    $region11: #{cnn_forward.4} parent=5 // pred_region
      %s117 = ssub.s32 %s9, 1
      // Predicated region
      $region13: #{cnn_forward.4} parent=11 // pred_check
        %p118 = pneg %p56
      $region14: #{cnn_forward.4} parent=11 // pred_check_branch
        %120 = sbr.rel (%p118) target = $region16
      $region15: #{cnn_forward.4} parent=11 // pred_region
        _
      $region16: #{cnn_forward.4} parent=11 // pred_fallthru
        _
      // Predicated region
      $region17: #{cnn_forward.4} parent=11 // pred_check
        %p121 = pneg %p77
      $region18: #{cnn_forward.4} parent=11 // pred_check_branch
        %123 = sbr.rel (%p121) target = $region20
      $region19: #{cnn_forward.4} parent=11 // pred_region
        _
      $region20: #{cnn_forward.4} parent=11 // pred_fallthru
        _
    $region12: #{cnn_forward.4} parent=5 // pred_fallthru
      _
    %p124 = scmp.lt.s32.totalorder %s9, 2
    // Predicated region
    $region21: #{cnn_forward.4} parent=5 // pred_check
      %p125 = pneg %p124
    $region22: #{cnn_forward.4} parent=5 // pred_check_branch
      %127 = sbr.rel (%p125) target = $region24
    $region23: #{cnn_forward.4} parent=5 // pred_region
      // Predicated region
      $region25: #{cnn_forward.4} parent=23 // pred_check
        %p128 = pneg %p29
      $region26: #{cnn_forward.4} parent=23 // pred_check_branch
        %130 = sbr.rel (%p128) target = $region28
      $region27: #{cnn_forward.4} parent=23 // pred_region
        %p131 = scmp.lt.s32.totalorder %s9, 1
        %s132 = scalar_select %p131, %s9, 1
        %s133 = smul.addr %s132, 144
        %s134 = smul.addr %s133, 4
        %s135 = scalar_lea.vmem %s0, %s134
      $region28: #{cnn_forward.4} parent=23 // pred_fallthru
        _
    $region24: #{cnn_forward.4} parent=5 // pred_fallthru
      _
    %p136 = scmp.le.s32.totalorder 1, %s9
    %p137 = scmp.lt.s32.totalorder %s9, 3
    %p138 = pnand %p136, %p137
    %p139 = pneg %p138
    // Predicated region
    $region29: #{cnn_forward.4} parent=5 // pred_check
      _
    $region30: #{cnn_forward.4} parent=5 // pred_check_branch
      %141 = sbr.rel (%p138) target = $region32
    $region31: #{cnn_forward.4} parent=5 // pred_region
      %s142 = ssub.s32 %s9, 1
      %p143 = scmp.lt.s32.totalorder %s14, 1
      %s144 = scalar_select %p143, %s14, 1
      %s145 = smul.addr %s144, 144
      %s146 = smul.addr %s145, 4
      %s147 = scalar_lea.vmem %s0, %s146
      %p148 = pneg %p35
      %p149 = pneg %p32
      %p150 = pneg %p56
      %p151 = pneg %p53
      %p152 = pneg %p77
      %p153 = pneg %p74
      %p154 = pneg %p103
      %p155 = pneg %p100
      %p156 = scmp.lt.s32.totalorder %s14, 1
      %s157 = scalar_select %p156, %s14, 1
      %s158 = smul.addr %s157, 18
      %s159 = smul.addr %s158, 8
      %s160 = scalar_lea.vmem %s3, %s159
      %p161 = scmp.lt.s32.totalorder %s14, 1
      %s162 = scalar_select %p161, %s14, 1
      %s163 = smul.addr %s162, 144
      %s164 = smul.addr %s163, 4
      %s165 = scalar_lea.vmem %s0, %s164
      %p166 = scmp.lt.s32.totalorder %s14, 1
      %s167 = scalar_select %p166, %s14, 1
      %s168 = smul.addr %s167, 18
      %s169 = smul.addr %s168, 8
      %s170 = scalar_lea.vmem %s3, %s169
      %v172 = vld [vmem:[%s1] sm:$0xf]
      %v173 = vld [vmem:[%s165] sm:$0xff]
      %v174 = vld [vmem:[%s165 + $0x8] sm:$0xff]
      %v175 = vld [vmem:[%s165 + $0x10] sm:$0xff]
      %v176 = vld [vmem:[%s165 + $0x18] sm:$0xff]
      %v177 = vld [vmem:[%s165 + $0x20] sm:$0xff]
      %v178 = vld [vmem:[%s165 + $0x28] sm:$0xff]
      %v179 = vld [vmem:[%s165 + $0x30] sm:$0xff]
      %v180 = vld [vmem:[%s165 + $0x38] sm:$0xff]
      %v181 = vld [vmem:[%s165 + $0x40] sm:$0xff]
      %v182 = vld [vmem:[%s165 + $0x48] sm:$0x11]
      %v183 = vld [vmem:[%s165 + $0x50] sm:$0x11]
      %v184 = vld [vmem:[%s165 + $0x58] sm:$0x11]
      %v185 = vld [vmem:[%s165 + $0x60] sm:$0x11]
      %v186 = vld [vmem:[%s165 + $0x68] sm:$0x11]
      %v187 = vld [vmem:[%s165 + $0x70] sm:$0x11]
      %v188 = vld [vmem:[%s165 + $0x78] sm:$0x11]
      %v189 = vld [vmem:[%s165 + $0x80] sm:$0x11]
      %v190 = vld [vmem:[%s165 + $0x88] sm:$0x11]
      %v209 = vunpack.c.l.b16 %v173
      %v210 = vunpack.c.h.b16 %v173
      %v211 = vunpack.c.l.b16 %v174
      %v212 = vunpack.c.h.b16 %v174
      %v213 = vunpack.c.l.b16 %v175
      %v214 = vunpack.c.h.b16 %v175
      %v215 = vunpack.c.l.b16 %v176
      %v216 = vunpack.c.h.b16 %v176
      %v217 = vunpack.c.l.b16 %v177
      %v218 = vunpack.c.h.b16 %v177
      %v219 = vunpack.c.l.b16 %v178
      %v220 = vunpack.c.h.b16 %v178
      %v221 = vunpack.c.l.b16 %v179
      %v222 = vunpack.c.h.b16 %v179
      %v223 = vunpack.c.l.b16 %v180
      %v224 = vunpack.c.h.b16 %v180
      %v225 = vunpack.c.l.b16 %v181
      %v226 = vunpack.c.h.b16 %v181
      %v227 = vunpack.c.l.b16 %v182
      %v228 = vunpack.c.h.b16 %v182
      %v229 = vunpack.c.l.b16 %v183
      %v230 = vunpack.c.h.b16 %v183
      %v231 = vunpack.c.l.b16 %v184
      %v232 = vunpack.c.h.b16 %v184
      %v233 = vunpack.c.l.b16 %v185
      %v234 = vunpack.c.h.b16 %v185
      %v235 = vunpack.c.l.b16 %v186
      %v236 = vunpack.c.h.b16 %v186
      %v237 = vunpack.c.l.b16 %v187
      %v238 = vunpack.c.h.b16 %v187
      %v239 = vunpack.c.l.b16 %v188
      %v240 = vunpack.c.h.b16 %v188
      %v241 = vunpack.c.l.b16 %v189
      %v242 = vunpack.c.h.b16 %v189
      %v243 = vunpack.c.l.b16 %v190
      %v244 = vunpack.c.h.b16 %v190
      %v245 = vpack.c.b16 %v227, %v209
      %v246 = vpack.c.b16 %v228, %v210
      %v247 = vpack.c.b16 %v229, %v211
      %v248 = vpack.c.b16 %v230, %v212
      %v249 = vpack.c.b16 %v231, %v213
      %v250 = vpack.c.b16 %v232, %v214
      %v251 = vpack.c.b16 %v233, %v215
      %v252 = vpack.c.b16 %v234, %v216
      %v253 = vpack.c.b16 %v235, %v217
      %v254 = vpack.c.b16 %v236, %v218
      %v255 = vpack.c.b16 %v237, %v219
      %v256 = vpack.c.b16 %v238, %v220
      %v257 = vpack.c.b16 %v239, %v221
      %v258 = vpack.c.b16 %v240, %v222
      %v259 = vpack.c.b16 %v241, %v223
      %v260 = vpack.c.b16 %v242, %v224
      %v261 = vpack.c.b16 %v243, %v225
      %v262 = vpack.c.b16 %v244, %v226
      %vm263 = vcmask 72704
      %v265 = vsel %vm263, %v172, 0
      %vm267 = vcmask 1043456
      %vm268 = vcmask 1044480
      %v269 = vsel %vm267, 4294967295, 65535
      %v270 = vsel %vm268, %v269, 0
      %v272 = vand.u32 %v245, %v270
      %v275 = vand.u32 %v246, %v270
      %v278 = vand.u32 %v247, %v270
      %v281 = vand.u32 %v248, %v270
      %v284 = vand.u32 %v249, %v270
      %v287 = vand.u32 %v250, %v270
      %v290 = vand.u32 %v251, %v270
      %v293 = vand.u32 %v252, %v270
      %v296 = vand.u32 %v253, %v270
      %v299 = vand.u32 %v254, %v270
      %v302 = vand.u32 %v255, %v270
      %v305 = vand.u32 %v256, %v270
      %v308 = vand.u32 %v257, %v270
      %v311 = vand.u32 %v258, %v270
      %v314 = vand.u32 %v259, %v270
      %v317 = vand.u32 %v260, %v270
      %v320 = vand.u32 %v261, %v270
      %v323 = vand.u32 %v262, %v270
      %325 = vmatprep.subr.bf16.mxu0 %v275
      %326 = vmatpush1.bf16.msra.mxu0 %v272
      %327 = vmatprep.subr.bf16.mxu0 0
      %328 = vmatpush1.bf16.msra.mxu0 0
      %329 = vmatprep.subr.bf16.mxu0 0
      %330 = vmatpush1.bf16.msra.mxu0 0
      %331 = vmatprep.subr.bf16.mxu0 0
      %332 = vmatpush1.bf16.msra.mxu0 0
      %333 = vmatprep.subr.bf16.mxu0 0
      %334 = vmatpush1.bf16.msra.mxu0 0
      %335 = vmatprep.subr.bf16.mxu0 0
      %336 = vmatpush1.bf16.msra.mxu0 0
      %337 = vmatprep.subr.bf16.mxu0 0
      %338 = vmatpush1.bf16.msra.mxu0 0
      %339 = vmatprep.subr.bf16.mxu0 0
      %340 = vmatpush1.bf16.msra.mxu0 0
      %341 = vmatprep.subr.bf16.mxu0 0
      %342 = vmatpush1.bf16.msra.mxu0 0
      %343 = vmatprep.subr.bf16.mxu0 0
      %344 = vmatpush1.bf16.msra.mxu0 0
      %345 = vmatprep.subr.bf16.mxu0 0
      %346 = vmatpush1.bf16.msra.mxu0 0
      %347 = vmatprep.subr.bf16.mxu0 0
      %348 = vmatpush1.bf16.msra.mxu0 0
      %349 = vmatprep.subr.bf16.mxu0 0
      %350 = vmatpush1.bf16.msra.mxu0 0
      %351 = vmatprep.subr.bf16.mxu0 0
      %352 = vmatpush1.bf16.msra.mxu0 0
      %353 = vmatprep.subr.bf16.mxu0 0
      %354 = vmatpush1.bf16.msra.mxu0 0
      %355 = vmatprep.subr.bf16.mxu0 0
      %356 = vmatpush1.bf16.msra.mxu0 0
      %357 = vmatprep.mubr.bf16.mxu0 0
      %358 = vmatmul.mubr.bf16.gmra.mrb[0].mxu0 %v265
      %v359 = vpop.f32.mrb[0].mxu0
      %v360 = vadd.f32 0.0, %v359
      %v361 = vpop.f32.mrb[0].mxu0
      %v362 = vadd.f32 0.0, %v361
      %v363 = vpop.f32.mrb[0].mxu0
      %v364 = vpop.f32.mrb[0].mxu0
      %365 = vdwg.mxu0
      %366 = vmatprep.subr.bf16.mxu0 %v281
      %367 = vmatpush1.bf16.msra.mxu0 %v278
      %368 = vmatprep.subr.bf16.mxu0 0
      %369 = vmatpush1.bf16.msra.mxu0 0
      %370 = vmatprep.subr.bf16.mxu0 0
      %371 = vmatpush1.bf16.msra.mxu0 0
      %372 = vmatprep.subr.bf16.mxu0 0
      %373 = vmatpush1.bf16.msra.mxu0 0
      %374 = vmatprep.subr.bf16.mxu0 0
      %375 = vmatpush1.bf16.msra.mxu0 0
      %376 = vmatprep.subr.bf16.mxu0 0
      %377 = vmatpush1.bf16.msra.mxu0 0
      %378 = vmatprep.subr.bf16.mxu0 0
      %379 = vmatpush1.bf16.msra.mxu0 0
      %380 = vmatprep.subr.bf16.mxu0 0
      %381 = vmatpush1.bf16.msra.mxu0 0
      %382 = vmatprep.subr.bf16.mxu0 0
      %383 = vmatpush1.bf16.msra.mxu0 0
      %384 = vmatprep.subr.bf16.mxu0 0
      %385 = vmatpush1.bf16.msra.mxu0 0
      %386 = vmatprep.subr.bf16.mxu0 0
      %387 = vmatpush1.bf16.msra.mxu0 0
      %388 = vmatprep.subr.bf16.mxu0 0
      %389 = vmatpush1.bf16.msra.mxu0 0
      %390 = vmatprep.subr.bf16.mxu0 0
      %391 = vmatpush1.bf16.msra.mxu0 0
      %392 = vmatprep.subr.bf16.mxu0 0
      %393 = vmatpush1.bf16.msra.mxu0 0
      %394 = vmatprep.subr.bf16.mxu0 0
      %395 = vmatpush1.bf16.msra.mxu0 0
      %396 = vmatprep.subr.bf16.mxu0 0
      %397 = vmatpush1.bf16.msra.mxu0 0
      %398 = vmatprep.mubr.bf16.mxu0 0
      %399 = vmatmul.mubr.bf16.gmra.mrb[0].mxu0 %v265
      %v400 = vpop.f32.mrb[0].mxu0
      %v401 = vadd.f32 0.0, %v400
      %v402 = vpop.f32.mrb[0].mxu0
      %v403 = vadd.f32 0.0, %v402
      %v404 = vpop.f32.mrb[0].mxu0
      %v405 = vpop.f32.mrb[0].mxu0
      %406 = vdwg.mxu0
      %407 = vmatprep.subr.bf16.mxu0 %v287
      %408 = vmatpush1.bf16.msra.mxu0 %v284
      %409 = vmatprep.subr.bf16.mxu0 0
      %410 = vmatpush1.bf16.msra.mxu0 0
      %411 = vmatprep.subr.bf16.mxu0 0
      %412 = vmatpush1.bf16.msra.mxu0 0
      %413 = vmatprep.subr.bf16.mxu0 0
      %414 = vmatpush1.bf16.msra.mxu0 0
      %415 = vmatprep.subr.bf16.mxu0 0
      %416 = vmatpush1.bf16.msra.mxu0 0
      %417 = vmatprep.subr.bf16.mxu0 0
      %418 = vmatpush1.bf16.msra.mxu0 0
      %419 = vmatprep.subr.bf16.mxu0 0
      %420 = vmatpush1.bf16.msra.mxu0 0
      %421 = vmatprep.subr.bf16.mxu0 0
      %422 = vmatpush1.bf16.msra.mxu0 0
      %423 = vmatprep.subr.bf16.mxu0 0
      %424 = vmatpush1.bf16.msra.mxu0 0
      %425 = vmatprep.subr.bf16.mxu0 0
      %426 = vmatpush1.bf16.msra.mxu0 0
      %427 = vmatprep.subr.bf16.mxu0 0
      %428 = vmatpush1.bf16.msra.mxu0 0
      %429 = vmatprep.subr.bf16.mxu0 0
      %430 = vmatpush1.bf16.msra.mxu0 0
      %431 = vmatprep.subr.bf16.mxu0 0
      %432 = vmatpush1.bf16.msra.mxu0 0
      %433 = vmatprep.subr.bf16.mxu0 0
      %434 = vmatpush1.bf16.msra.mxu0 0
      %435 = vmatprep.subr.bf16.mxu0 0
      %436 = vmatpush1.bf16.msra.mxu0 0
      %437 = vmatprep.subr.bf16.mxu0 0
      %438 = vmatpush1.bf16.msra.mxu0 0
      %439 = vmatprep.mubr.bf16.mxu0 0
      %440 = vmatmul.mubr.bf16.gmra.mrb[0].mxu0 %v265
      %v441 = vpop.f32.mrb[0].mxu0
      %v442 = vadd.f32 0.0, %v441
      %v443 = vpop.f32.mrb[0].mxu0
      %v444 = vadd.f32 0.0, %v443
      %v445 = vpop.f32.mrb[0].mxu0
      %v446 = vpop.f32.mrb[0].mxu0
      %447 = vdwg.mxu0
      %448 = vmatprep.subr.bf16.mxu0 %v293
      %449 = vmatpush1.bf16.msra.mxu0 %v290
      %450 = vmatprep.subr.bf16.mxu0 0
      %451 = vmatpush1.bf16.msra.mxu0 0
      %452 = vmatprep.subr.bf16.mxu0 0
      %453 = vmatpush1.bf16.msra.mxu0 0
      %454 = vmatprep.subr.bf16.mxu0 0
      %455 = vmatpush1.bf16.msra.mxu0 0
      %456 = vmatprep.subr.bf16.mxu0 0
      %457 = vmatpush1.bf16.msra.mxu0 0
      %458 = vmatprep.subr.bf16.mxu0 0
      %459 = vmatpush1.bf16.msra.mxu0 0
      %460 = vmatprep.subr.bf16.mxu0 0
      %461 = vmatpush1.bf16.msra.mxu0 0
      %462 = vmatprep.subr.bf16.mxu0 0
      %463 = vmatpush1.bf16.msra.mxu0 0
      %464 = vmatprep.subr.bf16.mxu0 0
      %465 = vmatpush1.bf16.msra.mxu0 0
      %466 = vmatprep.subr.bf16.mxu0 0
      %467 = vmatpush1.bf16.msra.mxu0 0
      %468 = vmatprep.subr.bf16.mxu0 0
      %469 = vmatpush1.bf16.msra.mxu0 0
      %470 = vmatprep.subr.bf16.mxu0 0
      %471 = vmatpush1.bf16.msra.mxu0 0
      %472 = vmatprep.subr.bf16.mxu0 0
      %473 = vmatpush1.bf16.msra.mxu0 0
      %474 = vmatprep.subr.bf16.mxu0 0
      %475 = vmatpush1.bf16.msra.mxu0 0
      %476 = vmatprep.subr.bf16.mxu0 0
      %477 = vmatpush1.bf16.msra.mxu0 0
      %478 = vmatprep.subr.bf16.mxu0 0
      %479 = vmatpush1.bf16.msra.mxu0 0
      %480 = vmatprep.mubr.bf16.mxu0 0
      %481 = vmatmul.mubr.bf16.gmra.mrb[0].mxu0 %v265
      %v482 = vpop.f32.mrb[0].mxu0
      %v483 = vadd.f32 0.0, %v482
      %v484 = vpop.f32.mrb[0].mxu0
      %v485 = vadd.f32 0.0, %v484
      %v486 = vpop.f32.mrb[0].mxu0
      %v487 = vpop.f32.mrb[0].mxu0
      %488 = vdwg.mxu0
      %489 = vmatprep.subr.bf16.mxu0 %v299
      %490 = vmatpush1.bf16.msra.mxu0 %v296
      %491 = vmatprep.subr.bf16.mxu0 0
      %492 = vmatpush1.bf16.msra.mxu0 0
      %493 = vmatprep.subr.bf16.mxu0 0
      %494 = vmatpush1.bf16.msra.mxu0 0
      %495 = vmatprep.subr.bf16.mxu0 0
      %496 = vmatpush1.bf16.msra.mxu0 0
      %497 = vmatprep.subr.bf16.mxu0 0
      %498 = vmatpush1.bf16.msra.mxu0 0
      %499 = vmatprep.subr.bf16.mxu0 0
      %500 = vmatpush1.bf16.msra.mxu0 0
      %501 = vmatprep.subr.bf16.mxu0 0
      %502 = vmatpush1.bf16.msra.mxu0 0
      %503 = vmatprep.subr.bf16.mxu0 0
      %504 = vmatpush1.bf16.msra.mxu0 0
      %505 = vmatprep.subr.bf16.mxu0 0
      %506 = vmatpush1.bf16.msra.mxu0 0
      %507 = vmatprep.subr.bf16.mxu0 0
      %508 = vmatpush1.bf16.msra.mxu0 0
      %509 = vmatprep.subr.bf16.mxu0 0
      %510 = vmatpush1.bf16.msra.mxu0 0
      %511 = vmatprep.subr.bf16.mxu0 0
      %512 = vmatpush1.bf16.msra.mxu0 0
      %513 = vmatprep.subr.bf16.mxu0 0
      %514 = vmatpush1.bf16.msra.mxu0 0
      %515 = vmatprep.subr.bf16.mxu0 0
      %516 = vmatpush1.bf16.msra.mxu0 0
      %517 = vmatprep.subr.bf16.mxu0 0
      %518 = vmatpush1.bf16.msra.mxu0 0
      %519 = vmatprep.subr.bf16.mxu0 0
      %520 = vmatpush1.bf16.msra.mxu0 0
      %521 = vmatprep.mubr.bf16.mxu0 0
      %522 = vmatmul.mubr.bf16.gmra.mrb[0].mxu0 %v265
      %v523 = vpop.f32.mrb[0].mxu0
      %v524 = vadd.f32 0.0, %v523
      %v525 = vpop.f32.mrb[0].mxu0
      %v526 = vadd.f32 0.0, %v525
      %v527 = vpop.f32.mrb[0].mxu0
      %v528 = vpop.f32.mrb[0].mxu0
      %529 = vdwg.mxu0
      %530 = vmatprep.subr.bf16.mxu0 %v305
      %531 = vmatpush1.bf16.msra.mxu0 %v302
      %532 = vmatprep.subr.bf16.mxu0 0
      %533 = vmatpush1.bf16.msra.mxu0 0
      %534 = vmatprep.subr.bf16.mxu0 0
      %535 = vmatpush1.bf16.msra.mxu0 0
      %536 = vmatprep.subr.bf16.mxu0 0
      %537 = vmatpush1.bf16.msra.mxu0 0
      %538 = vmatprep.subr.bf16.mxu0 0
      %539 = vmatpush1.bf16.msra.mxu0 0
      %540 = vmatprep.subr.bf16.mxu0 0
      %541 = vmatpush1.bf16.msra.mxu0 0
      %542 = vmatprep.subr.bf16.mxu0 0
      %543 = vmatpush1.bf16.msra.mxu0 0
      %544 = vmatprep.subr.bf16.mxu0 0
      %545 = vmatpush1.bf16.msra.mxu0 0
      %546 = vmatprep.subr.bf16.mxu0 0
      %547 = vmatpush1.bf16.msra.mxu0 0
      %548 = vmatprep.subr.bf16.mxu0 0
      %549 = vmatpush1.bf16.msra.mxu0 0
      %550 = vmatprep.subr.bf16.mxu0 0
      %551 = vmatpush1.bf16.msra.mxu0 0
      %552 = vmatprep.subr.bf16.mxu0 0
      %553 = vmatpush1.bf16.msra.mxu0 0
      %554 = vmatprep.subr.bf16.mxu0 0
      %555 = vmatpush1.bf16.msra.mxu0 0
      %556 = vmatprep.subr.bf16.mxu0 0
      %557 = vmatpush1.bf16.msra.mxu0 0
      %558 = vmatprep.subr.bf16.mxu0 0
      %559 = vmatpush1.bf16.msra.mxu0 0
      %560 = vmatprep.subr.bf16.mxu0 0
      %561 = vmatpush1.bf16.msra.mxu0 0
      %562 = vmatprep.mubr.bf16.mxu0 0
      %563 = vmatmul.mubr.bf16.gmra.mrb[0].mxu0 %v265
      %v564 = vpop.f32.mrb[0].mxu0
      %v565 = vadd.f32 0.0, %v564
      %v566 = vpop.f32.mrb[0].mxu0
      %v567 = vadd.f32 0.0, %v566
      %v568 = vpop.f32.mrb[0].mxu0
      %v569 = vpop.f32.mrb[0].mxu0
      %570 = vdwg.mxu0
      %571 = vmatprep.subr.bf16.mxu0 %v311
      %572 = vmatpush1.bf16.msra.mxu0 %v308
      %573 = vmatprep.subr.bf16.mxu0 0
      %574 = vmatpush1.bf16.msra.mxu0 0
      %575 = vmatprep.subr.bf16.mxu0 0
      %576 = vmatpush1.bf16.msra.mxu0 0
      %577 = vmatprep.subr.bf16.mxu0 0
      %578 = vmatpush1.bf16.msra.mxu0 0
      %579 = vmatprep.subr.bf16.mxu0 0
      %580 = vmatpush1.bf16.msra.mxu0 0
      %581 = vmatprep.subr.bf16.mxu0 0
      %582 = vmatpush1.bf16.msra.mxu0 0
      %583 = vmatprep.subr.bf16.mxu0 0
      %584 = vmatpush1.bf16.msra.mxu0 0
      %585 = vmatprep.subr.bf16.mxu0 0
      %586 = vmatpush1.bf16.msra.mxu0 0
      %587 = vmatprep.subr.bf16.mxu0 0
      %588 = vmatpush1.bf16.msra.mxu0 0
      %589 = vmatprep.subr.bf16.mxu0 0
      %590 = vmatpush1.bf16.msra.mxu0 0
      %591 = vmatprep.subr.bf16.mxu0 0
      %592 = vmatpush1.bf16.msra.mxu0 0
      %593 = vmatprep.subr.bf16.mxu0 0
      %594 = vmatpush1.bf16.msra.mxu0 0
      %595 = vmatprep.subr.bf16.mxu0 0
      %596 = vmatpush1.bf16.msra.mxu0 0
      %597 = vmatprep.subr.bf16.mxu0 0
      %598 = vmatpush1.bf16.msra.mxu0 0
      %599 = vmatprep.subr.bf16.mxu0 0
      %600 = vmatpush1.bf16.msra.mxu0 0
      %601 = vmatprep.subr.bf16.mxu0 0
      %602 = vmatpush1.bf16.msra.mxu0 0
      %603 = vmatprep.mubr.bf16.mxu0 0
      %604 = vmatmul.mubr.bf16.gmra.mrb[0].mxu0 %v265
      %v605 = vpop.f32.mrb[0].mxu0
      %v606 = vadd.f32 0.0, %v605
      %v607 = vpop.f32.mrb[0].mxu0
      %v608 = vadd.f32 0.0, %v607
      %v609 = vpop.f32.mrb[0].mxu0
      %v610 = vpop.f32.mrb[0].mxu0
      %611 = vdwg.mxu0
      %612 = vmatprep.subr.bf16.mxu0 %v317
      %613 = vmatpush1.bf16.msra.mxu0 %v314
      %614 = vmatprep.subr.bf16.mxu0 0
      %615 = vmatpush1.bf16.msra.mxu0 0
      %616 = vmatprep.subr.bf16.mxu0 0
      %617 = vmatpush1.bf16.msra.mxu0 0
      %618 = vmatprep.subr.bf16.mxu0 0
      %619 = vmatpush1.bf16.msra.mxu0 0
      %620 = vmatprep.subr.bf16.mxu0 0
      %621 = vmatpush1.bf16.msra.mxu0 0
      %622 = vmatprep.subr.bf16.mxu0 0
      %623 = vmatpush1.bf16.msra.mxu0 0
      %624 = vmatprep.subr.bf16.mxu0 0
      %625 = vmatpush1.bf16.msra.mxu0 0
      %626 = vmatprep.subr.bf16.mxu0 0
      %627 = vmatpush1.bf16.msra.mxu0 0
      %628 = vmatprep.subr.bf16.mxu0 0
      %629 = vmatpush1.bf16.msra.mxu0 0
      %630 = vmatprep.subr.bf16.mxu0 0
      %631 = vmatpush1.bf16.msra.mxu0 0
      %632 = vmatprep.subr.bf16.mxu0 0
      %633 = vmatpush1.bf16.msra.mxu0 0
      %634 = vmatprep.subr.bf16.mxu0 0
      %635 = vmatpush1.bf16.msra.mxu0 0
      %636 = vmatprep.subr.bf16.mxu0 0
      %637 = vmatpush1.bf16.msra.mxu0 0
      %638 = vmatprep.subr.bf16.mxu0 0
      %639 = vmatpush1.bf16.msra.mxu0 0
      %640 = vmatprep.subr.bf16.mxu0 0
      %641 = vmatpush1.bf16.msra.mxu0 0
      %642 = vmatprep.subr.bf16.mxu0 0
      %643 = vmatpush1.bf16.msra.mxu0 0
      %644 = vmatprep.mubr.bf16.mxu0 0
      %645 = vmatmul.mubr.bf16.gmra.mrb[0].mxu0 %v265
      %v646 = vpop.f32.mrb[0].mxu0
      %v647 = vadd.f32 0.0, %v646
      %v648 = vpop.f32.mrb[0].mxu0
      %v649 = vadd.f32 0.0, %v648
      %v650 = vpop.f32.mrb[0].mxu0
      %v651 = vpop.f32.mrb[0].mxu0
      %652 = vdwg.mxu0
      %653 = vmatprep.subr.bf16.mxu0 %v323
      %654 = vmatpush1.bf16.msra.mxu0 %v320
      %655 = vmatprep.subr.bf16.mxu0 0
      %656 = vmatpush1.bf16.msra.mxu0 0
      %657 = vmatprep.subr.bf16.mxu0 0
      %658 = vmatpush1.bf16.msra.mxu0 0
      %659 = vmatprep.subr.bf16.mxu0 0
      %660 = vmatpush1.bf16.msra.mxu0 0
      %661 = vmatprep.subr.bf16.mxu0 0
      %662 = vmatpush1.bf16.msra.mxu0 0
      %663 = vmatprep.subr.bf16.mxu0 0
      %664 = vmatpush1.bf16.msra.mxu0 0
      %665 = vmatprep.subr.bf16.mxu0 0
      %666 = vmatpush1.bf16.msra.mxu0 0
      %667 = vmatprep.subr.bf16.mxu0 0
      %668 = vmatpush1.bf16.msra.mxu0 0
      %669 = vmatprep.subr.bf16.mxu0 0
      %670 = vmatpush1.bf16.msra.mxu0 0
      %671 = vmatprep.subr.bf16.mxu0 0
      %672 = vmatpush1.bf16.msra.mxu0 0
      %673 = vmatprep.subr.bf16.mxu0 0
      %674 = vmatpush1.bf16.msra.mxu0 0
      %675 = vmatprep.subr.bf16.mxu0 0
      %676 = vmatpush1.bf16.msra.mxu0 0
      %677 = vmatprep.subr.bf16.mxu0 0
      %678 = vmatpush1.bf16.msra.mxu0 0
      %679 = vmatprep.subr.bf16.mxu0 0
      %680 = vmatpush1.bf16.msra.mxu0 0
      %681 = vmatprep.subr.bf16.mxu0 0
      %682 = vmatpush1.bf16.msra.mxu0 0
      %683 = vmatprep.subr.bf16.mxu0 0
      %684 = vmatpush1.bf16.msra.mxu0 0
      %685 = vmatprep.mubr.bf16.mxu0 0
      %686 = vmatmul.mubr.bf16.gmra.mrb[0].mxu0 %v265
      %v687 = vpop.f32.mrb[0].mxu0
      %v688 = vadd.f32 0.0, %v687
      %v689 = vpop.f32.mrb[0].mxu0
      %v690 = vadd.f32 0.0, %v689
      %v691 = vpop.f32.mrb[0].mxu0
      %v692 = vpop.f32.mrb[0].mxu0
      %693 = vdwg.mxu0
      %s694 = scalar_lea.vmem %s165, 144
      %v695 = vld [vmem:[%s694] sm:$0xff]
      %v696 = vld [vmem:[%s694 + $0x8] sm:$0xff]
      %v697 = vld [vmem:[%s694 + $0x10] sm:$0xff]
      %v698 = vld [vmem:[%s694 + $0x18] sm:$0xff]
      %v699 = vld [vmem:[%s694 + $0x20] sm:$0xff]
      %v700 = vld [vmem:[%s694 + $0x28] sm:$0xff]
      %v701 = vld [vmem:[%s694 + $0x30] sm:$0xff]
      %v702 = vld [vmem:[%s694 + $0x38] sm:$0xff]
      %v703 = vld [vmem:[%s694 + $0x40] sm:$0xff]
      %v704 = vld [vmem:[%s694 + $0x48] sm:$0x11]
      %v705 = vld [vmem:[%s694 + $0x50] sm:$0x11]
      %v706 = vld [vmem:[%s694 + $0x58] sm:$0x11]
      %v707 = vld [vmem:[%s694 + $0x60] sm:$0x11]
      %v708 = vld [vmem:[%s694 + $0x68] sm:$0x11]
      %v709 = vld [vmem:[%s694 + $0x70] sm:$0x11]
      %v710 = vld [vmem:[%s694 + $0x78] sm:$0x11]
      %v711 = vld [vmem:[%s694 + $0x80] sm:$0x11]
      %v712 = vld [vmem:[%s694 + $0x88] sm:$0x11]
      %v731 = vunpack.c.l.b16 %v695
      %v732 = vunpack.c.h.b16 %v695
      %v733 = vunpack.c.l.b16 %v696
      %v734 = vunpack.c.h.b16 %v696
      %v735 = vunpack.c.l.b16 %v697
      %v736 = vunpack.c.h.b16 %v697
      %v737 = vunpack.c.l.b16 %v698
      %v738 = vunpack.c.h.b16 %v698
      %v739 = vunpack.c.l.b16 %v699
      %v740 = vunpack.c.h.b16 %v699
      %v741 = vunpack.c.l.b16 %v700
      %v742 = vunpack.c.h.b16 %v700
      %v743 = vunpack.c.l.b16 %v701
      %v744 = vunpack.c.h.b16 %v701
      %v745 = vunpack.c.l.b16 %v702
      %v746 = vunpack.c.h.b16 %v702
      %v747 = vunpack.c.l.b16 %v703
      %v748 = vunpack.c.h.b16 %v703
      %v749 = vunpack.c.l.b16 %v704
      %v750 = vunpack.c.h.b16 %v704
      %v751 = vunpack.c.l.b16 %v705
      %v752 = vunpack.c.h.b16 %v705
      %v753 = vunpack.c.l.b16 %v706
      %v754 = vunpack.c.h.b16 %v706
      %v755 = vunpack.c.l.b16 %v707
      %v756 = vunpack.c.h.b16 %v707
      %v757 = vunpack.c.l.b16 %v708
      %v758 = vunpack.c.h.b16 %v708
      %v759 = vunpack.c.l.b16 %v709
      %v760 = vunpack.c.h.b16 %v709
      %v761 = vunpack.c.l.b16 %v710
      %v762 = vunpack.c.h.b16 %v710
      %v763 = vunpack.c.l.b16 %v711
      %v764 = vunpack.c.h.b16 %v711
      %v765 = vunpack.c.l.b16 %v712
      %v766 = vunpack.c.h.b16 %v712
      %v767 = vpack.c.b16 %v749, %v731
      %v768 = vpack.c.b16 %v750, %v732
      %v769 = vpack.c.b16 %v751, %v733
      %v770 = vpack.c.b16 %v752, %v734
      %v771 = vpack.c.b16 %v753, %v735
      %v772 = vpack.c.b16 %v754, %v736
      %v773 = vpack.c.b16 %v755, %v737
      %v774 = vpack.c.b16 %v756, %v738
      %v775 = vpack.c.b16 %v757, %v739
      %v776 = vpack.c.b16 %v758, %v740
      %v777 = vpack.c.b16 %v759, %v741
      %v778 = vpack.c.b16 %v760, %v742
      %v779 = vpack.c.b16 %v761, %v743
      %v780 = vpack.c.b16 %v762, %v744
      %v781 = vpack.c.b16 %v763, %v745
      %v782 = vpack.c.b16 %v764, %v746
      %v783 = vpack.c.b16 %v765, %v747
      %v784 = vpack.c.b16 %v766, %v748
      %v786 = vand.u32 %v767, %v270
      %v789 = vand.u32 %v768, %v270
      %v792 = vand.u32 %v769, %v270
      %v795 = vand.u32 %v770, %v270
      %v798 = vand.u32 %v771, %v270
      %v801 = vand.u32 %v772, %v270
      %v804 = vand.u32 %v773, %v270
      %v807 = vand.u32 %v774, %v270
      %v810 = vand.u32 %v775, %v270
      %v813 = vand.u32 %v776, %v270
      %v816 = vand.u32 %v777, %v270
      %v819 = vand.u32 %v778, %v270
      %v822 = vand.u32 %v779, %v270
      %v825 = vand.u32 %v780, %v270
      %v828 = vand.u32 %v781, %v270
      %v831 = vand.u32 %v782, %v270
      %v834 = vand.u32 %v783, %v270
      %v837 = vand.u32 %v784, %v270
      %839 = vmatprep.subr.bf16.mxu0 %v789
      %840 = vmatpush1.bf16.msra.mxu0 %v786
      %841 = vmatprep.subr.bf16.mxu0 0
      %842 = vmatpush1.bf16.msra.mxu0 0
      %843 = vmatprep.subr.bf16.mxu0 0
      %844 = vmatpush1.bf16.msra.mxu0 0
      %845 = vmatprep.subr.bf16.mxu0 0
      %846 = vmatpush1.bf16.msra.mxu0 0
      %847 = vmatprep.subr.bf16.mxu0 0
      %848 = vmatpush1.bf16.msra.mxu0 0
      %849 = vmatprep.subr.bf16.mxu0 0
      %850 = vmatpush1.bf16.msra.mxu0 0
      %851 = vmatprep.subr.bf16.mxu0 0
      %852 = vmatpush1.bf16.msra.mxu0 0
      %853 = vmatprep.subr.bf16.mxu0 0
      %854 = vmatpush1.bf16.msra.mxu0 0
      %855 = vmatprep.subr.bf16.mxu0 0
      %856 = vmatpush1.bf16.msra.mxu0 0
      %857 = vmatprep.subr.bf16.mxu0 0
      %858 = vmatpush1.bf16.msra.mxu0 0
      %859 = vmatprep.subr.bf16.mxu0 0
      %860 = vmatpush1.bf16.msra.mxu0 0
      %861 = vmatprep.subr.bf16.mxu0 0
      %862 = vmatpush1.bf16.msra.mxu0 0
      %863 = vmatprep.subr.bf16.mxu0 0
      %864 = vmatpush1.bf16.msra.mxu0 0
      %865 = vmatprep.subr.bf16.mxu0 0
      %866 = vmatpush1.bf16.msra.mxu0 0
      %867 = vmatprep.subr.bf16.mxu0 0
      %868 = vmatpush1.bf16.msra.mxu0 0
      %869 = vmatprep.subr.bf16.mxu0 0
      %870 = vmatpush1.bf16.msra.mxu0 0
      %871 = vmatprep.mubr.bf16.mxu0 0
      %872 = vmatmul.mubr.bf16.gmra.mrb[0].mxu0 %v265
      %v873 = vpop.f32.mrb[0].mxu0
      %v874 = vadd.f32 0.0, %v873
      %v875 = vpop.f32.mrb[0].mxu0
      %v876 = vadd.f32 0.0, %v875
      %v877 = vpop.f32.mrb[0].mxu0
      %v878 = vpop.f32.mrb[0].mxu0
      %879 = vdwg.mxu0
      %880 = vmatprep.subr.bf16.mxu0 %v795
      %881 = vmatpush1.bf16.msra.mxu0 %v792
      %882 = vmatprep.subr.bf16.mxu0 0
      %883 = vmatpush1.bf16.msra.mxu0 0
      %884 = vmatprep.subr.bf16.mxu0 0
      %885 = vmatpush1.bf16.msra.mxu0 0
      %886 = vmatprep.subr.bf16.mxu0 0
      %887 = vmatpush1.bf16.msra.mxu0 0
      %888 = vmatprep.subr.bf16.mxu0 0
      %889 = vmatpush1.bf16.msra.mxu0 0
      %890 = vmatprep.subr.bf16.mxu0 0
      %891 = vmatpush1.bf16.msra.mxu0 0
      %892 = vmatprep.subr.bf16.mxu0 0
      %893 = vmatpush1.bf16.msra.mxu0 0
      %894 = vmatprep.subr.bf16.mxu0 0
      %895 = vmatpush1.bf16.msra.mxu0 0
      %896 = vmatprep.subr.bf16.mxu0 0
      %897 = vmatpush1.bf16.msra.mxu0 0
      %898 = vmatprep.subr.bf16.mxu0 0
      %899 = vmatpush1.bf16.msra.mxu0 0
      %900 = vmatprep.subr.bf16.mxu0 0
      %901 = vmatpush1.bf16.msra.mxu0 0
      %902 = vmatprep.subr.bf16.mxu0 0
      %903 = vmatpush1.bf16.msra.mxu0 0
      %904 = vmatprep.subr.bf16.mxu0 0
      %905 = vmatpush1.bf16.msra.mxu0 0
      %906 = vmatprep.subr.bf16.mxu0 0
      %907 = vmatpush1.bf16.msra.mxu0 0
      %908 = vmatprep.subr.bf16.mxu0 0
      %909 = vmatpush1.bf16.msra.mxu0 0
      %910 = vmatprep.subr.bf16.mxu0 0
      %911 = vmatpush1.bf16.msra.mxu0 0
      %912 = vmatprep.mubr.bf16.mxu0 0
      %913 = vmatmul.mubr.bf16.gmra.mrb[0].mxu0 %v265
      %v914 = vpop.f32.mrb[0].mxu0
      %v915 = vadd.f32 0.0, %v914
      %v916 = vpop.f32.mrb[0].mxu0
      %v917 = vadd.f32 0.0, %v916
      %v918 = vpop.f32.mrb[0].mxu0
      %v919 = vpop.f32.mrb[0].mxu0
      %920 = vdwg.mxu0
      %921 = vmatprep.subr.bf16.mxu0 %v801
      %922 = vmatpush1.bf16.msra.mxu0 %v798
      %923 = vmatprep.subr.bf16.mxu0 0
      %924 = vmatpush1.bf16.msra.mxu0 0
      %925 = vmatprep.subr.bf16.mxu0 0
      %926 = vmatpush1.bf16.msra.mxu0 0
      %927 = vmatprep.subr.bf16.mxu0 0
      %928 = vmatpush1.bf16.msra.mxu0 0
      %929 = vmatprep.subr.bf16.mxu0 0
      %930 = vmatpush1.bf16.msra.mxu0 0
      %931 = vmatprep.subr.bf16.mxu0 0
      %932 = vmatpush1.bf16.msra.mxu0 0
      %933 = vmatprep.subr.bf16.mxu0 0
      %934 = vmatpush1.bf16.msra.mxu0 0
      %935 = vmatprep.subr.bf16.mxu0 0
      %936 = vmatpush1.bf16.msra.mxu0 0
      %937 = vmatprep.subr.bf16.mxu0 0
      %938 = vmatpush1.bf16.msra.mxu0 0
      %939 = vmatprep.subr.bf16.mxu0 0
      %940 = vmatpush1.bf16.msra.mxu0 0
      %941 = vmatprep.subr.bf16.mxu0 0
      %942 = vmatpush1.bf16.msra.mxu0 0
      %943 = vmatprep.subr.bf16.mxu0 0
      %944 = vmatpush1.bf16.msra.mxu0 0
      %945 = vmatprep.subr.bf16.mxu0 0
      %946 = vmatpush1.bf16.msra.mxu0 0
      %947 = vmatprep.subr.bf16.mxu0 0
      %948 = vmatpush1.bf16.msra.mxu0 0
      %949 = vmatprep.subr.bf16.mxu0 0
      %950 = vmatpush1.bf16.msra.mxu0 0
      %951 = vmatprep.subr.bf16.mxu0 0
      %952 = vmatpush1.bf16.msra.mxu0 0
      %953 = vmatprep.mubr.bf16.mxu0 0
      %954 = vmatmul.mubr.bf16.gmra.mrb[0].mxu0 %v265
      %v955 = vpop.f32.mrb[0].mxu0
      %v956 = vadd.f32 0.0, %v955
      %v957 = vpop.f32.mrb[0].mxu0
      %v958 = vadd.f32 0.0, %v957
      %v959 = vpop.f32.mrb[0].mxu0
      %v960 = vpop.f32.mrb[0].mxu0
      %961 = vdwg.mxu0
      %962 = vmatprep.subr.bf16.mxu0 %v807
      %963 = vmatpush1.bf16.msra.mxu0 %v804
      %964 = vmatprep.subr.bf16.mxu0 0
      %965 = vmatpush1.bf16.msra.mxu0 0
      %966 = vmatprep.subr.bf16.mxu0 0
      %967 = vmatpush1.bf16.msra.mxu0 0
      %968 = vmatprep.subr.bf16.mxu0 0
      %969 = vmatpush1.bf16.msra.mxu0 0
      %970 = vmatprep.subr.bf16.mxu0 0
      %971 = vmatpush1.bf16.msra.mxu0 0
      %972 = vmatprep.subr.bf16.mxu0 0
      %973 = vmatpush1.bf16.msra.mxu0 0
      %974 = vmatprep.subr.bf16.mxu0 0
      %975 = vmatpush1.bf16.msra.mxu0 0
      %976 = vmatprep.subr.bf16.mxu0 0
      %977 = vmatpush1.bf16.msra.mxu0 0
      %978 = vmatprep.subr.bf16.mxu0 0
      %979 = vmatpush1.bf16.msra.mxu0 0
      %980 = vmatprep.subr.bf16.mxu0 0
      %981 = vmatpush1.bf16.msra.mxu0 0
      %982 = vmatprep.subr.bf16.mxu0 0
      %983 = vmatpush1.bf16.msra.mxu0 0
      %984 = vmatprep.subr.bf16.mxu0 0
      %985 = vmatpush1.bf16.msra.mxu0 0
      %986 = vmatprep.subr.bf16.mxu0 0
      %987 = vmatpush1.bf16.msra.mxu0 0
      %988 = vmatprep.subr.bf16.mxu0 0
      %989 = vmatpush1.bf16.msra.mxu0 0
      %990 = vmatprep.subr.bf16.mxu0 0
      %991 = vmatpush1.bf16.msra.mxu0 0
      %992 = vmatprep.subr.bf16.mxu0 0
      %993 = vmatpush1.bf16.msra.mxu0 0
      %994 = vmatprep.mubr.bf16.mxu0 0
      %995 = vmatmul.mubr.bf16.gmra.mrb[0].mxu0 %v265
      %v996 = vpop.f32.mrb[0].mxu0
      %v997 = vadd.f32 0.0, %v996
      %v998 = vpop.f32.mrb[0].mxu0
      %v999 = vadd.f32 0.0, %v998
      %v1000 = vpop.f32.mrb[0].mxu0
      %v1001 = vpop.f32.mrb[0].mxu0
      %1002 = vdwg.mxu0
      %1003 = vmatprep.subr.bf16.mxu0 %v813
      %1004 = vmatpush1.bf16.msra.mxu0 %v810
      %1005 = vmatprep.subr.bf16.mxu0 0
      %1006 = vmatpush1.bf16.msra.mxu0 0
      %1007 = vmatprep.subr.bf16.mxu0 0
      %1008 = vmatpush1.bf16.msra.mxu0 0
      %1009 = vmatprep.subr.bf16.mxu0 0
      %1010 = vmatpush1.bf16.msra.mxu0 0
      %1011 = vmatprep.subr.bf16.mxu0 0
      %1012 = vmatpush1.bf16.msra.mxu0 0
      %1013 = vmatprep.subr.bf16.mxu0 0
      %1014 = vmatpush1.bf16.msra.mxu0 0
      %1015 = vmatprep.subr.bf16.mxu0 0
      %1016 = vmatpush1.bf16.msra.mxu0 0
      %1017 = vmatprep.subr.bf16.mxu0 0
      %1018 = vmatpush1.bf16.msra.mxu0 0
      %1019 = vmatprep.subr.bf16.mxu0 0
      %1020 = vmatpush1.bf16.msra.mxu0 0
      %1021 = vmatprep.subr.bf16.mxu0 0
      %1022 = vmatpush1.bf16.msra.mxu0 0
      %1023 = vmatprep.subr.bf16.mxu0 0
      %1024 = vmatpush1.bf16.msra.mxu0 0
      %1025 = vmatprep.subr.bf16.mxu0 0
      %1026 = vmatpush1.bf16.msra.mxu0 0
      %1027 = vmatprep.subr.bf16.mxu0 0
      %1028 = vmatpush1.bf16.msra.mxu0 0
      %1029 = vmatprep.subr.bf16.mxu0 0
      %1030 = vmatpush1.bf16.msra.mxu0 0
      %1031 = vmatprep.subr.bf16.mxu0 0
      %1032 = vmatpush1.bf16.msra.mxu0 0
      %1033 = vmatprep.subr.bf16.mxu0 0
      %1034 = vmatpush1.bf16.msra.mxu0 0
      %1035 = vmatprep.mubr.bf16.mxu0 0
      %1036 = vmatmul.mubr.bf16.gmra.mrb[0].mxu0 %v265
      %v1037 = vpop.f32.mrb[0].mxu0
      %v1038 = vadd.f32 0.0, %v1037
      %v1039 = vpop.f32.mrb[0].mxu0
      %v1040 = vadd.f32 0.0, %v1039
      %v1041 = vpop.f32.mrb[0].mxu0
      %v1042 = vpop.f32.mrb[0].mxu0
      %1043 = vdwg.mxu0
      %1044 = vmatprep.subr.bf16.mxu0 %v819
      %1045 = vmatpush1.bf16.msra.mxu0 %v816
      %1046 = vmatprep.subr.bf16.mxu0 0
      %1047 = vmatpush1.bf16.msra.mxu0 0
      %1048 = vmatprep.subr.bf16.mxu0 0
      %1049 = vmatpush1.bf16.msra.mxu0 0
      %1050 = vmatprep.subr.bf16.mxu0 0
      %1051 = vmatpush1.bf16.msra.mxu0 0
      %1052 = vmatprep.subr.bf16.mxu0 0
      %1053 = vmatpush1.bf16.msra.mxu0 0
      %1054 = vmatprep.subr.bf16.mxu0 0
      %1055 = vmatpush1.bf16.msra.mxu0 0
      %1056 = vmatprep.subr.bf16.mxu0 0
      %1057 = vmatpush1.bf16.msra.mxu0 0
      %1058 = vmatprep.subr.bf16.mxu0 0
      %1059 = vmatpush1.bf16.msra.mxu0 0
      %1060 = vmatprep.subr.bf16.mxu0 0
      %1061 = vmatpush1.bf16.msra.mxu0 0
      %1062 = vmatprep.subr.bf16.mxu0 0
      %1063 = vmatpush1.bf16.msra.mxu0 0
      %1064 = vmatprep.subr.bf16.mxu0 0
      %1065 = vmatpush1.bf16.msra.mxu0 0
      %1066 = vmatprep.subr.bf16.mxu0 0
      %1067 = vmatpush1.bf16.msra.mxu0 0
      %1068 = vmatprep.subr.bf16.mxu0 0
      %1069 = vmatpush1.bf16.msra.mxu0 0
      %1070 = vmatprep.subr.bf16.mxu0 0
      %1071 = vmatpush1.bf16.msra.mxu0 0
      %1072 = vmatprep.subr.bf16.mxu0 0
      %1073 = vmatpush1.bf16.msra.mxu0 0
      %1074 = vmatprep.subr.bf16.mxu0 0
      %1075 = vmatpush1.bf16.msra.mxu0 0
      %1076 = vmatprep.mubr.bf16.mxu0 0
      %1077 = vmatmul.mubr.bf16.gmra.mrb[0].mxu0 %v265
      %v1078 = vpop.f32.mrb[0].mxu0
      %v1079 = vadd.f32 0.0, %v1078
      %v1080 = vpop.f32.mrb[0].mxu0
      %v1081 = vadd.f32 0.0, %v1080
      %v1082 = vpop.f32.mrb[0].mxu0
      %v1083 = vpop.f32.mrb[0].mxu0
      %1084 = vdwg.mxu0
      %1085 = vmatprep.subr.bf16.mxu0 %v825
      %1086 = vmatpush1.bf16.msra.mxu0 %v822
      %1087 = vmatprep.subr.bf16.mxu0 0
      %1088 = vmatpush1.bf16.msra.mxu0 0
      %1089 = vmatprep.subr.bf16.mxu0 0
      %1090 = vmatpush1.bf16.msra.mxu0 0
      %1091 = vmatprep.subr.bf16.mxu0 0
      %1092 = vmatpush1.bf16.msra.mxu0 0
      %1093 = vmatprep.subr.bf16.mxu0 0
      %1094 = vmatpush1.bf16.msra.mxu0 0
      %1095 = vmatprep.subr.bf16.mxu0 0
      %1096 = vmatpush1.bf16.msra.mxu0 0
      %1097 = vmatprep.subr.bf16.mxu0 0
      %1098 = vmatpush1.bf16.msra.mxu0 0
      %1099 = vmatprep.subr.bf16.mxu0 0
      %1100 = vmatpush1.bf16.msra.mxu0 0
      %1101 = vmatprep.subr.bf16.mxu0 0
      %1102 = vmatpush1.bf16.msra.mxu0 0
      %1103 = vmatprep.subr.bf16.mxu0 0
      %1104 = vmatpush1.bf16.msra.mxu0 0
      %1105 = vmatprep.subr.bf16.mxu0 0
      %1106 = vmatpush1.bf16.msra.mxu0 0
      %1107 = vmatprep.subr.bf16.mxu0 0
      %1108 = vmatpush1.bf16.msra.mxu0 0
      %1109 = vmatprep.subr.bf16.mxu0 0
      %1110 = vmatpush1.bf16.msra.mxu0 0
      %1111 = vmatprep.subr.bf16.mxu0 0
      %1112 = vmatpush1.bf16.msra.mxu0 0
      %1113 = vmatprep.subr.bf16.mxu0 0
      %1114 = vmatpush1.bf16.msra.mxu0 0
      %1115 = vmatprep.subr.bf16.mxu0 0
      %1116 = vmatpush1.bf16.msra.mxu0 0
      %1117 = vmatprep.mubr.bf16.mxu0 0
      %1118 = vmatmul.mubr.bf16.gmra.mrb[0].mxu0 %v265
      %v1119 = vpop.f32.mrb[0].mxu0
      %v1120 = vadd.f32 0.0, %v1119
      %v1121 = vpop.f32.mrb[0].mxu0
      %v1122 = vadd.f32 0.0, %v1121
      %v1123 = vpop.f32.mrb[0].mxu0
      %v1124 = vpop.f32.mrb[0].mxu0
      %1125 = vdwg.mxu0
      %1126 = vmatprep.subr.bf16.mxu0 %v831
      %1127 = vmatpush1.bf16.msra.mxu0 %v828
      %1128 = vmatprep.subr.bf16.mxu0 0
      %1129 = vmatpush1.bf16.msra.mxu0 0
      %1130 = vmatprep.subr.bf16.mxu0 0
      %1131 = vmatpush1.bf16.msra.mxu0 0
      %1132 = vmatprep.subr.bf16.mxu0 0
      %1133 = vmatpush1.bf16.msra.mxu0 0
      %1134 = vmatprep.subr.bf16.mxu0 0
      %1135 = vmatpush1.bf16.msra.mxu0 0
      %1136 = vmatprep.subr.bf16.mxu0 0
      %1137 = vmatpush1.bf16.msra.mxu0 0
      %1138 = vmatprep.subr.bf16.mxu0 0
      %1139 = vmatpush1.bf16.msra.mxu0 0
      %1140 = vmatprep.subr.bf16.mxu0 0
      %1141 = vmatpush1.bf16.msra.mxu0 0
      %1142 = vmatprep.subr.bf16.mxu0 0
      %1143 = vmatpush1.bf16.msra.mxu0 0
      %1144 = vmatprep.subr.bf16.mxu0 0
      %1145 = vmatpush1.bf16.msra.mxu0 0
      %1146 = vmatprep.subr.bf16.mxu0 0
      %1147 = vmatpush1.bf16.msra.mxu0 0
      %1148 = vmatprep.subr.bf16.mxu0 0
      %1149 = vmatpush1.bf16.msra.mxu0 0
      %1150 = vmatprep.subr.bf16.mxu0 0
      %1151 = vmatpush1.bf16.msra.mxu0 0
      %1152 = vmatprep.subr.bf16.mxu0 0
      %1153 = vmatpush1.bf16.msra.mxu0 0
      %1154 = vmatprep.subr.bf16.mxu0 0
      %1155 = vmatpush1.bf16.msra.mxu0 0
      %1156 = vmatprep.subr.bf16.mxu0 0
      %1157 = vmatpush1.bf16.msra.mxu0 0
      %1158 = vmatprep.mubr.bf16.mxu0 0
      %1159 = vmatmul.mubr.bf16.gmra.mrb[0].mxu0 %v265
      %v1160 = vpop.f32.mrb[0].mxu0
      %v1161 = vadd.f32 0.0, %v1160
      %v1162 = vpop.f32.mrb[0].mxu0
      %v1163 = vadd.f32 0.0, %v1162
      %v1164 = vpop.f32.mrb[0].mxu0
      %v1165 = vpop.f32.mrb[0].mxu0
      %1166 = vdwg.mxu0
      %1167 = vmatprep.subr.bf16.mxu0 %v837
      %1168 = vmatpush1.bf16.msra.mxu0 %v834
      %1169 = vmatprep.subr.bf16.mxu0 0
      %1170 = vmatpush1.bf16.msra.mxu0 0
      %1171 = vmatprep.subr.bf16.mxu0 0
      %1172 = vmatpush1.bf16.msra.mxu0 0
      %1173 = vmatprep.subr.bf16.mxu0 0
      %1174 = vmatpush1.bf16.msra.mxu0 0
      %1175 = vmatprep.subr.bf16.mxu0 0
      %1176 = vmatpush1.bf16.msra.mxu0 0
      %1177 = vmatprep.subr.bf16.mxu0 0
      %1178 = vmatpush1.bf16.msra.mxu0 0
      %1179 = vmatprep.subr.bf16.mxu0 0
      %1180 = vmatpush1.bf16.msra.mxu0 0
      %1181 = vmatprep.subr.bf16.mxu0 0
      %1182 = vmatpush1.bf16.msra.mxu0 0
      %1183 = vmatprep.subr.bf16.mxu0 0
      %1184 = vmatpush1.bf16.msra.mxu0 0
      %1185 = vmatprep.subr.bf16.mxu0 0
      %1186 = vmatpush1.bf16.msra.mxu0 0
      %1187 = vmatprep.subr.bf16.mxu0 0
      %1188 = vmatpush1.bf16.msra.mxu0 0
      %1189 = vmatprep.subr.bf16.mxu0 0
      %1190 = vmatpush1.bf16.msra.mxu0 0
      %1191 = vmatprep.subr.bf16.mxu0 0
      %1192 = vmatpush1.bf16.msra.mxu0 0
      %1193 = vmatprep.subr.bf16.mxu0 0
      %1194 = vmatpush1.bf16.msra.mxu0 0
      %1195 = vmatprep.subr.bf16.mxu0 0
      %1196 = vmatpush1.bf16.msra.mxu0 0
      %1197 = vmatprep.subr.bf16.mxu0 0
      %1198 = vmatpush1.bf16.msra.mxu0 0
      %1199 = vmatprep.mubr.bf16.mxu0 0
      %1200 = vmatmul.mubr.bf16.gmra.mrb[0].mxu0 %v265
      %v1201 = vpop.f32.mrb[0].mxu0
      %v1202 = vadd.f32 0.0, %v1201
      %v1203 = vpop.f32.mrb[0].mxu0
      %v1204 = vadd.f32 0.0, %v1203
      %v1205 = vpop.f32.mrb[0].mxu0
      %v1206 = vpop.f32.mrb[0].mxu0
      %1207 = vdwg.mxu0
      %v1208 = vmax.f32 %v360, %v874
      %v1209 = vmax.f32 %v362, %v876
      %v1210 = vmax.f32 %v401, %v915
      %v1211 = vmax.f32 %v403, %v917
      %v1212 = vmax.f32 %v442, %v956
      %v1213 = vmax.f32 %v444, %v958
      %v1214 = vmax.f32 %v483, %v997
      %v1215 = vmax.f32 %v485, %v999
      %v1216 = vmax.f32 %v524, %v1038
      %v1217 = vmax.f32 %v526, %v1040
      %v1218 = vmax.f32 %v565, %v1079
      %v1219 = vmax.f32 %v567, %v1081
      %v1220 = vmax.f32 %v606, %v1120
      %v1221 = vmax.f32 %v608, %v1122
      %v1222 = vmax.f32 %v647, %v1161
      %v1223 = vmax.f32 %v649, %v1163
      %v1224 = vmax.f32 %v688, %v1202
      %v1225 = vmax.f32 %v690, %v1204
      %s1226 = scalar_lea.vmem %s165, 288
      %v1227 = vld [vmem:[%s1226] sm:$0xff]
      %v1228 = vld [vmem:[%s1226 + $0x8] sm:$0xff]
      %v1229 = vld [vmem:[%s1226 + $0x10] sm:$0xff]
      %v1230 = vld [vmem:[%s1226 + $0x18] sm:$0xff]
      %v1231 = vld [vmem:[%s1226 + $0x20] sm:$0xff]
      %v1232 = vld [vmem:[%s1226 + $0x28] sm:$0xff]
      %v1233 = vld [vmem:[%s1226 + $0x30] sm:$0xff]
      %v1234 = vld [vmem:[%s1226 + $0x38] sm:$0xff]
      %v1235 = vld [vmem:[%s1226 + $0x40] sm:$0xff]
      %v1236 = vld [vmem:[%s1226 + $0x48] sm:$0x11]
      %v1237 = vld [vmem:[%s1226 + $0x50] sm:$0x11]
      %v1238 = vld [vmem:[%s1226 + $0x58] sm:$0x11]
      %v1239 = vld [vmem:[%s1226 + $0x60] sm:$0x11]
      %v1240 = vld [vmem:[%s1226 + $0x68] sm:$0x11]
      %v1241 = vld [vmem:[%s1226 + $0x70] sm:$0x11]
      %v1242 = vld [vmem:[%s1226 + $0x78] sm:$0x11]
      %v1243 = vld [vmem:[%s1226 + $0x80] sm:$0x11]
      %v1244 = vld [vmem:[%s1226 + $0x88] sm:$0x11]
      %v1263 = vunpack.c.l.b16 %v1227
      %v1264 = vunpack.c.h.b16 %v1227
      %v1265 = vunpack.c.l.b16 %v1228
      %v1266 = vunpack.c.h.b16 %v1228
      %v1267 = vunpack.c.l.b16 %v1229
      %v1268 = vunpack.c.h.b16 %v1229
      %v1269 = vunpack.c.l.b16 %v1230
      %v1270 = vunpack.c.h.b16 %v1230
      %v1271 = vunpack.c.l.b16 %v1231
      %v1272 = vunpack.c.h.b16 %v1231
      %v1273 = vunpack.c.l.b16 %v1232
      %v1274 = vunpack.c.h.b16 %v1232
      %v1275 = vunpack.c.l.b16 %v1233
      %v1276 = vunpack.c.h.b16 %v1233
      %v1277 = vunpack.c.l.b16 %v1234
      %v1278 = vunpack.c.h.b16 %v1234
      %v1279 = vunpack.c.l.b16 %v1235
      %v1280 = vunpack.c.h.b16 %v1235
      %v1281 = vunpack.c.l.b16 %v1236
      %v1282 = vunpack.c.h.b16 %v1236
      %v1283 = vunpack.c.l.b16 %v1237
      %v1284 = vunpack.c.h.b16 %v1237
      %v1285 = vunpack.c.l.b16 %v1238
      %v1286 = vunpack.c.h.b16 %v1238
      %v1287 = vunpack.c.l.b16 %v1239
      %v1288 = vunpack.c.h.b16 %v1239
      %v1289 = vunpack.c.l.b16 %v1240
      %v1290 = vunpack.c.h.b16 %v1240
      %v1291 = vunpack.c.l.b16 %v1241
      %v1292 = vunpack.c.h.b16 %v1241
      %v1293 = vunpack.c.l.b16 %v1242
      %v1294 = vunpack.c.h.b16 %v1242
      %v1295 = vunpack.c.l.b16 %v1243
      %v1296 = vunpack.c.h.b16 %v1243
      %v1297 = vunpack.c.l.b16 %v1244
      %v1298 = vunpack.c.h.b16 %v1244
      %v1299 = vpack.c.b16 %v1281, %v1263
      %v1300 = vpack.c.b16 %v1282, %v1264
      %v1301 = vpack.c.b16 %v1283, %v1265
      %v1302 = vpack.c.b16 %v1284, %v1266
      %v1303 = vpack.c.b16 %v1285, %v1267
      %v1304 = vpack.c.b16 %v1286, %v1268
      %v1305 = vpack.c.b16 %v1287, %v1269
      %v1306 = vpack.c.b16 %v1288, %v1270
      %v1307 = vpack.c.b16 %v1289, %v1271
      %v1308 = vpack.c.b16 %v1290, %v1272
      %v1309 = vpack.c.b16 %v1291, %v1273
      %v1310 = vpack.c.b16 %v1292, %v1274
      %v1311 = vpack.c.b16 %v1293, %v1275
      %v1312 = vpack.c.b16 %v1294, %v1276
      %v1313 = vpack.c.b16 %v1295, %v1277
      %v1314 = vpack.c.b16 %v1296, %v1278
      %v1315 = vpack.c.b16 %v1297, %v1279
      %v1316 = vpack.c.b16 %v1298, %v1280
      %v1318 = vand.u32 %v1299, %v270
      %v1321 = vand.u32 %v1300, %v270
      %v1324 = vand.u32 %v1301, %v270
      %v1327 = vand.u32 %v1302, %v270
      %v1330 = vand.u32 %v1303, %v270
      %v1333 = vand.u32 %v1304, %v270
      %v1336 = vand.u32 %v1305, %v270
      %v1339 = vand.u32 %v1306, %v270
      %v1342 = vand.u32 %v1307, %v270
      %v1345 = vand.u32 %v1308, %v270
      %v1348 = vand.u32 %v1309, %v270
      %v1351 = vand.u32 %v1310, %v270
      %v1354 = vand.u32 %v1311, %v270
      %v1357 = vand.u32 %v1312, %v270
      %v1360 = vand.u32 %v1313, %v270
      %v1363 = vand.u32 %v1314, %v270
      %v1366 = vand.u32 %v1315, %v270
      %v1369 = vand.u32 %v1316, %v270
      %1371 = vmatprep.subr.bf16.mxu0 %v1321
      %1372 = vmatpush1.bf16.msra.mxu0 %v1318
      %1373 = vmatprep.subr.bf16.mxu0 0
      %1374 = vmatpush1.bf16.msra.mxu0 0
      %1375 = vmatprep.subr.bf16.mxu0 0
      %1376 = vmatpush1.bf16.msra.mxu0 0
      %1377 = vmatprep.subr.bf16.mxu0 0
      %1378 = vmatpush1.bf16.msra.mxu0 0
      %1379 = vmatprep.subr.bf16.mxu0 0
      %1380 = vmatpush1.bf16.msra.mxu0 0
      %1381 = vmatprep.subr.bf16.mxu0 0
      %1382 = vmatpush1.bf16.msra.mxu0 0
      %1383 = vmatprep.subr.bf16.mxu0 0
      %1384 = vmatpush1.bf16.msra.mxu0 0
      %1385 = vmatprep.subr.bf16.mxu0 0
      %1386 = vmatpush1.bf16.msra.mxu0 0
      %1387 = vmatprep.subr.bf16.mxu0 0
      %1388 = vmatpush1.bf16.msra.mxu0 0
      %1389 = vmatprep.subr.bf16.mxu0 0
      %1390 = vmatpush1.bf16.msra.mxu0 0
      %1391 = vmatprep.subr.bf16.mxu0 0
      %1392 = vmatpush1.bf16.msra.mxu0 0
      %1393 = vmatprep.subr.bf16.mxu0 0
      %1394 = vmatpush1.bf16.msra.mxu0 0
      %1395 = vmatprep.subr.bf16.mxu0 0
      %1396 = vmatpush1.bf16.msra.mxu0 0
      %1397 = vmatprep.subr.bf16.mxu0 0
      %1398 = vmatpush1.bf16.msra.mxu0 0
      %1399 = vmatprep.subr.bf16.mxu0 0
      %1400 = vmatpush1.bf16.msra.mxu0 0
      %1401 = vmatprep.subr.bf16.mxu0 0
      %1402 = vmatpush1.bf16.msra.mxu0 0
      %1403 = vmatprep.mubr.bf16.mxu0 0
      %1404 = vmatmul.mubr.bf16.gmra.mrb[0].mxu0 %v265
      %v1405 = vpop.f32.mrb[0].mxu0
      %v1406 = vadd.f32 0.0, %v1405
      %v1407 = vpop.f32.mrb[0].mxu0
      %v1408 = vadd.f32 0.0, %v1407
      %v1409 = vpop.f32.mrb[0].mxu0
      %v1410 = vpop.f32.mrb[0].mxu0
      %1411 = vdwg.mxu0
      %1412 = vmatprep.subr.bf16.mxu0 %v1327
      %1413 = vmatpush1.bf16.msra.mxu0 %v1324
      %1414 = vmatprep.subr.bf16.mxu0 0
      %1415 = vmatpush1.bf16.msra.mxu0 0
      %1416 = vmatprep.subr.bf16.mxu0 0
      %1417 = vmatpush1.bf16.msra.mxu0 0
      %1418 = vmatprep.subr.bf16.mxu0 0
      %1419 = vmatpush1.bf16.msra.mxu0 0
      %1420 = vmatprep.subr.bf16.mxu0 0
      %1421 = vmatpush1.bf16.msra.mxu0 0
      %1422 = vmatprep.subr.bf16.mxu0 0
      %1423 = vmatpush1.bf16.msra.mxu0 0
      %1424 = vmatprep.subr.bf16.mxu0 0
      %1425 = vmatpush1.bf16.msra.mxu0 0
      %1426 = vmatprep.subr.bf16.mxu0 0
      %1427 = vmatpush1.bf16.msra.mxu0 0
      %1428 = vmatprep.subr.bf16.mxu0 0
      %1429 = vmatpush1.bf16.msra.mxu0 0
      %1430 = vmatprep.subr.bf16.mxu0 0
      %1431 = vmatpush1.bf16.msra.mxu0 0
      %1432 = vmatprep.subr.bf16.mxu0 0
      %1433 = vmatpush1.bf16.msra.mxu0 0
      %1434 = vmatprep.subr.bf16.mxu0 0
      %1435 = vmatpush1.bf16.msra.mxu0 0
      %1436 = vmatprep.subr.bf16.mxu0 0
      %1437 = vmatpush1.bf16.msra.mxu0 0
      %1438 = vmatprep.subr.bf16.mxu0 0
      %1439 = vmatpush1.bf16.msra.mxu0 0
      %1440 = vmatprep.subr.bf16.mxu0 0
      %1441 = vmatpush1.bf16.msra.mxu0 0
      %1442 = vmatprep.subr.bf16.mxu0 0
      %1443 = vmatpush1.bf16.msra.mxu0 0
      %1444 = vmatprep.mubr.bf16.mxu0 0
      %1445 = vmatmul.mubr.bf16.gmra.mrb[0].mxu0 %v265
      %v1446 = vpop.f32.mrb[0].mxu0
      %v1447 = vadd.f32 0.0, %v1446
      %v1448 = vpop.f32.mrb[0].mxu0
      %v1449 = vadd.f32 0.0, %v1448
      %v1450 = vpop.f32.mrb[0].mxu0
      %v1451 = vpop.f32.mrb[0].mxu0
      %1452 = vdwg.mxu0
      %1453 = vmatprep.subr.bf16.mxu0 %v1333
      %1454 = vmatpush1.bf16.msra.mxu0 %v1330
      %1455 = vmatprep.subr.bf16.mxu0 0
      %1456 = vmatpush1.bf16.msra.mxu0 0
      %1457 = vmatprep.subr.bf16.mxu0 0
      %1458 = vmatpush1.bf16.msra.mxu0 0
      %1459 = vmatprep.subr.bf16.mxu0 0
      %1460 = vmatpush1.bf16.msra.mxu0 0
      %1461 = vmatprep.subr.bf16.mxu0 0
      %1462 = vmatpush1.bf16.msra.mxu0 0
      %1463 = vmatprep.subr.bf16.mxu0 0
      %1464 = vmatpush1.bf16.msra.mxu0 0
      %1465 = vmatprep.subr.bf16.mxu0 0
      %1466 = vmatpush1.bf16.msra.mxu0 0
      %1467 = vmatprep.subr.bf16.mxu0 0
      %1468 = vmatpush1.bf16.msra.mxu0 0
      %1469 = vmatprep.subr.bf16.mxu0 0
      %1470 = vmatpush1.bf16.msra.mxu0 0
      %1471 = vmatprep.subr.bf16.mxu0 0
      %1472 = vmatpush1.bf16.msra.mxu0 0
      %1473 = vmatprep.subr.bf16.mxu0 0
      %1474 = vmatpush1.bf16.msra.mxu0 0
      %1475 = vmatprep.subr.bf16.mxu0 0
      %1476 = vmatpush1.bf16.msra.mxu0 0
      %1477 = vmatprep.subr.bf16.mxu0 0
      %1478 = vmatpush1.bf16.msra.mxu0 0
      %1479 = vmatprep.subr.bf16.mxu0 0
      %1480 = vmatpush1.bf16.msra.mxu0 0
      %1481 = vmatprep.subr.bf16.mxu0 0
      %1482 = vmatpush1.bf16.msra.mxu0 0
      %1483 = vmatprep.subr.bf16.mxu0 0
      %1484 = vmatpush1.bf16.msra.mxu0 0
      %1485 = vmatprep.mubr.bf16.mxu0 0
      %1486 = vmatmul.mubr.bf16.gmra.mrb[0].mxu0 %v265
      %v1487 = vpop.f32.mrb[0].mxu0
      %v1488 = vadd.f32 0.0, %v1487
      %v1489 = vpop.f32.mrb[0].mxu0
      %v1490 = vadd.f32 0.0, %v1489
      %v1491 = vpop.f32.mrb[0].mxu0
      %v1492 = vpop.f32.mrb[0].mxu0
      %1493 = vdwg.mxu0
      %1494 = vmatprep.subr.bf16.mxu0 %v1339
      %1495 = vmatpush1.bf16.msra.mxu0 %v1336
      %1496 = vmatprep.subr.bf16.mxu0 0
      %1497 = vmatpush1.bf16.msra.mxu0 0
      %1498 = vmatprep.subr.bf16.mxu0 0
      %1499 = vmatpush1.bf16.msra.mxu0 0
      %1500 = vmatprep.subr.bf16.mxu0 0
      %1501 = vmatpush1.bf16.msra.mxu0 0
      %1502 = vmatprep.subr.bf16.mxu0 0
      %1503 = vmatpush1.bf16.msra.mxu0 0
      %1504 = vmatprep.subr.bf16.mxu0 0
      %1505 = vmatpush1.bf16.msra.mxu0 0
      %1506 = vmatprep.subr.bf16.mxu0 0
      %1507 = vmatpush1.bf16.msra.mxu0 0
      %1508 = vmatprep.subr.bf16.mxu0 0
      %1509 = vmatpush1.bf16.msra.mxu0 0
      %1510 = vmatprep.subr.bf16.mxu0 0
      %1511 = vmatpush1.bf16.msra.mxu0 0
      %1512 = vmatprep.subr.bf16.mxu0 0
      %1513 = vmatpush1.bf16.msra.mxu0 0
      %1514 = vmatprep.subr.bf16.mxu0 0
      %1515 = vmatpush1.bf16.msra.mxu0 0
      %1516 = vmatprep.subr.bf16.mxu0 0
      %1517 = vmatpush1.bf16.msra.mxu0 0
      %1518 = vmatprep.subr.bf16.mxu0 0
      %1519 = vmatpush1.bf16.msra.mxu0 0
      %1520 = vmatprep.subr.bf16.mxu0 0
      %1521 = vmatpush1.bf16.msra.mxu0 0
      %1522 = vmatprep.subr.bf16.mxu0 0
      %1523 = vmatpush1.bf16.msra.mxu0 0
      %1524 = vmatprep.subr.bf16.mxu0 0
      %1525 = vmatpush1.bf16.msra.mxu0 0
      %1526 = vmatprep.mubr.bf16.mxu0 0
      %1527 = vmatmul.mubr.bf16.gmra.mrb[0].mxu0 %v265
      %v1528 = vpop.f32.mrb[0].mxu0
      %v1529 = vadd.f32 0.0, %v1528
      %v1530 = vpop.f32.mrb[0].mxu0
      %v1531 = vadd.f32 0.0, %v1530
      %v1532 = vpop.f32.mrb[0].mxu0
      %v1533 = vpop.f32.mrb[0].mxu0
      %1534 = vdwg.mxu0
      %1535 = vmatprep.subr.bf16.mxu0 %v1345
      %1536 = vmatpush1.bf16.msra.mxu0 %v1342
      %1537 = vmatprep.subr.bf16.mxu0 0
      %1538 = vmatpush1.bf16.msra.mxu0 0
      %1539 = vmatprep.subr.bf16.mxu0 0
      %1540 = vmatpush1.bf16.msra.mxu0 0
      %1541 = vmatprep.subr.bf16.mxu0 0
      %1542 = vmatpush1.bf16.msra.mxu0 0
      %1543 = vmatprep.subr.bf16.mxu0 0
      %1544 = vmatpush1.bf16.msra.mxu0 0
      %1545 = vmatprep.subr.bf16.mxu0 0
      %1546 = vmatpush1.bf16.msra.mxu0 0
      %1547 = vmatprep.subr.bf16.mxu0 0
      %1548 = vmatpush1.bf16.msra.mxu0 0
      %1549 = vmatprep.subr.bf16.mxu0 0
      %1550 = vmatpush1.bf16.msra.mxu0 0
      %1551 = vmatprep.subr.bf16.mxu0 0
      %1552 = vmatpush1.bf16.msra.mxu0 0
      %1553 = vmatprep.subr.bf16.mxu0 0
      %1554 = vmatpush1.bf16.msra.mxu0 0
      %1555 = vmatprep.subr.bf16.mxu0 0
      %1556 = vmatpush1.bf16.msra.mxu0 0
      %1557 = vmatprep.subr.bf16.mxu0 0
      %1558 = vmatpush1.bf16.msra.mxu0 0
      %1559 = vmatprep.subr.bf16.mxu0 0
      %1560 = vmatpush1.bf16.msra.mxu0 0
      %1561 = vmatprep.subr.bf16.mxu0 0
      %1562 = vmatpush1.bf16.msra.mxu0 0
      %1563 = vmatprep.subr.bf16.mxu0 0
      %1564 = vmatpush1.bf16.msra.mxu0 0
      %1565 = vmatprep.subr.bf16.mxu0 0
      %1566 = vmatpush1.bf16.msra.mxu0 0
      %1567 = vmatprep.mubr.bf16.mxu0 0
      %1568 = vmatmul.mubr.bf16.gmra.mrb[0].mxu0 %v265
      %v1569 = vpop.f32.mrb[0].mxu0
      %v1570 = vadd.f32 0.0, %v1569
      %v1571 = vpop.f32.mrb[0].mxu0
      %v1572 = vadd.f32 0.0, %v1571
      %v1573 = vpop.f32.mrb[0].mxu0
      %v1574 = vpop.f32.mrb[0].mxu0
      %1575 = vdwg.mxu0
      %1576 = vmatprep.subr.bf16.mxu0 %v1351
      %1577 = vmatpush1.bf16.msra.mxu0 %v1348
      %1578 = vmatprep.subr.bf16.mxu0 0
      %1579 = vmatpush1.bf16.msra.mxu0 0
      %1580 = vmatprep.subr.bf16.mxu0 0
      %1581 = vmatpush1.bf16.msra.mxu0 0
      %1582 = vmatprep.subr.bf16.mxu0 0
      %1583 = vmatpush1.bf16.msra.mxu0 0
      %1584 = vmatprep.subr.bf16.mxu0 0
      %1585 = vmatpush1.bf16.msra.mxu0 0
      %1586 = vmatprep.subr.bf16.mxu0 0
      %1587 = vmatpush1.bf16.msra.mxu0 0
      %1588 = vmatprep.subr.bf16.mxu0 0
      %1589 = vmatpush1.bf16.msra.mxu0 0
      %1590 = vmatprep.subr.bf16.mxu0 0
      %1591 = vmatpush1.bf16.msra.mxu0 0
      %1592 = vmatprep.subr.bf16.mxu0 0
      %1593 = vmatpush1.bf16.msra.mxu0 0
      %1594 = vmatprep.subr.bf16.mxu0 0
      %1595 = vmatpush1.bf16.msra.mxu0 0
      %1596 = vmatprep.subr.bf16.mxu0 0
      %1597 = vmatpush1.bf16.msra.mxu0 0
      %1598 = vmatprep.subr.bf16.mxu0 0
      %1599 = vmatpush1.bf16.msra.mxu0 0
      %1600 = vmatprep.subr.bf16.mxu0 0
      %1601 = vmatpush1.bf16.msra.mxu0 0
      %1602 = vmatprep.subr.bf16.mxu0 0
      %1603 = vmatpush1.bf16.msra.mxu0 0
      %1604 = vmatprep.subr.bf16.mxu0 0
      %1605 = vmatpush1.bf16.msra.mxu0 0
      %1606 = vmatprep.subr.bf16.mxu0 0
      %1607 = vmatpush1.bf16.msra.mxu0 0
      %1608 = vmatprep.mubr.bf16.mxu0 0
      %1609 = vmatmul.mubr.bf16.gmra.mrb[0].mxu0 %v265
      %v1610 = vpop.f32.mrb[0].mxu0
      %v1611 = vadd.f32 0.0, %v1610
      %v1612 = vpop.f32.mrb[0].mxu0
      %v1613 = vadd.f32 0.0, %v1612
      %v1614 = vpop.f32.mrb[0].mxu0
      %v1615 = vpop.f32.mrb[0].mxu0
      %1616 = vdwg.mxu0
      %1617 = vmatprep.subr.bf16.mxu0 %v1357
      %1618 = vmatpush1.bf16.msra.mxu0 %v1354
      %1619 = vmatprep.subr.bf16.mxu0 0
      %1620 = vmatpush1.bf16.msra.mxu0 0
      %1621 = vmatprep.subr.bf16.mxu0 0
      %1622 = vmatpush1.bf16.msra.mxu0 0
      %1623 = vmatprep.subr.bf16.mxu0 0
      %1624 = vmatpush1.bf16.msra.mxu0 0
      %1625 = vmatprep.subr.bf16.mxu0 0
      %1626 = vmatpush1.bf16.msra.mxu0 0
      %1627 = vmatprep.subr.bf16.mxu0 0
      %1628 = vmatpush1.bf16.msra.mxu0 0
      %1629 = vmatprep.subr.bf16.mxu0 0
      %1630 = vmatpush1.bf16.msra.mxu0 0
      %1631 = vmatprep.subr.bf16.mxu0 0
      %1632 = vmatpush1.bf16.msra.mxu0 0
      %1633 = vmatprep.subr.bf16.mxu0 0
      %1634 = vmatpush1.bf16.msra.mxu0 0
      %1635 = vmatprep.subr.bf16.mxu0 0
      %1636 = vmatpush1.bf16.msra.mxu0 0
      %1637 = vmatprep.subr.bf16.mxu0 0
      %1638 = vmatpush1.bf16.msra.mxu0 0
      %1639 = vmatprep.subr.bf16.mxu0 0
      %1640 = vmatpush1.bf16.msra.mxu0 0
      %1641 = vmatprep.subr.bf16.mxu0 0
      %1642 = vmatpush1.bf16.msra.mxu0 0
      %1643 = vmatprep.subr.bf16.mxu0 0
      %1644 = vmatpush1.bf16.msra.mxu0 0
      %1645 = vmatprep.subr.bf16.mxu0 0
      %1646 = vmatpush1.bf16.msra.mxu0 0
      %1647 = vmatprep.subr.bf16.mxu0 0
      %1648 = vmatpush1.bf16.msra.mxu0 0
      %1649 = vmatprep.mubr.bf16.mxu0 0
      %1650 = vmatmul.mubr.bf16.gmra.mrb[0].mxu0 %v265
      %v1651 = vpop.f32.mrb[0].mxu0
      %v1652 = vadd.f32 0.0, %v1651
      %v1653 = vpop.f32.mrb[0].mxu0
      %v1654 = vadd.f32 0.0, %v1653
      %v1655 = vpop.f32.mrb[0].mxu0
      %v1656 = vpop.f32.mrb[0].mxu0
      %1657 = vdwg.mxu0
      %1658 = vmatprep.subr.bf16.mxu0 %v1363
      %1659 = vmatpush1.bf16.msra.mxu0 %v1360
      %1660 = vmatprep.subr.bf16.mxu0 0
      %1661 = vmatpush1.bf16.msra.mxu0 0
      %1662 = vmatprep.subr.bf16.mxu0 0
      %1663 = vmatpush1.bf16.msra.mxu0 0
      %1664 = vmatprep.subr.bf16.mxu0 0
      %1665 = vmatpush1.bf16.msra.mxu0 0
      %1666 = vmatprep.subr.bf16.mxu0 0
      %1667 = vmatpush1.bf16.msra.mxu0 0
      %1668 = vmatprep.subr.bf16.mxu0 0
      %1669 = vmatpush1.bf16.msra.mxu0 0
      %1670 = vmatprep.subr.bf16.mxu0 0
      %1671 = vmatpush1.bf16.msra.mxu0 0
      %1672 = vmatprep.subr.bf16.mxu0 0
      %1673 = vmatpush1.bf16.msra.mxu0 0
      %1674 = vmatprep.subr.bf16.mxu0 0
      %1675 = vmatpush1.bf16.msra.mxu0 0
      %1676 = vmatprep.subr.bf16.mxu0 0
      %1677 = vmatpush1.bf16.msra.mxu0 0
      %1678 = vmatprep.subr.bf16.mxu0 0
      %1679 = vmatpush1.bf16.msra.mxu0 0
      %1680 = vmatprep.subr.bf16.mxu0 0
      %1681 = vmatpush1.bf16.msra.mxu0 0
      %1682 = vmatprep.subr.bf16.mxu0 0
      %1683 = vmatpush1.bf16.msra.mxu0 0
      %1684 = vmatprep.subr.bf16.mxu0 0
      %1685 = vmatpush1.bf16.msra.mxu0 0
      %1686 = vmatprep.subr.bf16.mxu0 0
      %1687 = vmatpush1.bf16.msra.mxu0 0
      %1688 = vmatprep.subr.bf16.mxu0 0
      %1689 = vmatpush1.bf16.msra.mxu0 0
      %1690 = vmatprep.mubr.bf16.mxu0 0
      %1691 = vmatmul.mubr.bf16.gmra.mrb[0].mxu0 %v265
      %v1692 = vpop.f32.mrb[0].mxu0
      %v1693 = vadd.f32 0.0, %v1692
      %v1694 = vpop.f32.mrb[0].mxu0
      %v1695 = vadd.f32 0.0, %v1694
      %v1696 = vpop.f32.mrb[0].mxu0
      %v1697 = vpop.f32.mrb[0].mxu0
      %1698 = vdwg.mxu0
      %1699 = vmatprep.subr.bf16.mxu0 %v1369
      %1700 = vmatpush1.bf16.msra.mxu0 %v1366
      %1701 = vmatprep.subr.bf16.mxu0 0
      %1702 = vmatpush1.bf16.msra.mxu0 0
      %1703 = vmatprep.subr.bf16.mxu0 0
      %1704 = vmatpush1.bf16.msra.mxu0 0
      %1705 = vmatprep.subr.bf16.mxu0 0
      %1706 = vmatpush1.bf16.msra.mxu0 0
      %1707 = vmatprep.subr.bf16.mxu0 0
      %1708 = vmatpush1.bf16.msra.mxu0 0
      %1709 = vmatprep.subr.bf16.mxu0 0
      %1710 = vmatpush1.bf16.msra.mxu0 0
      %1711 = vmatprep.subr.bf16.mxu0 0
      %1712 = vmatpush1.bf16.msra.mxu0 0
      %1713 = vmatprep.subr.bf16.mxu0 0
      %1714 = vmatpush1.bf16.msra.mxu0 0
      %1715 = vmatprep.subr.bf16.mxu0 0
      %1716 = vmatpush1.bf16.msra.mxu0 0
      %1717 = vmatprep.subr.bf16.mxu0 0
      %1718 = vmatpush1.bf16.msra.mxu0 0
      %1719 = vmatprep.subr.bf16.mxu0 0
      %1720 = vmatpush1.bf16.msra.mxu0 0
      %1721 = vmatprep.subr.bf16.mxu0 0
      %1722 = vmatpush1.bf16.msra.mxu0 0
      %1723 = vmatprep.subr.bf16.mxu0 0
      %1724 = vmatpush1.bf16.msra.mxu0 0
      %1725 = vmatprep.subr.bf16.mxu0 0
      %1726 = vmatpush1.bf16.msra.mxu0 0
      %1727 = vmatprep.subr.bf16.mxu0 0
      %1728 = vmatpush1.bf16.msra.mxu0 0
      %1729 = vmatprep.subr.bf16.mxu0 0
      %1730 = vmatpush1.bf16.msra.mxu0 0
      %1731 = vmatprep.mubr.bf16.mxu0 0
      %1732 = vmatmul.mubr.bf16.gmra.mrb[0].mxu0 %v265
      %v1733 = vpop.f32.mrb[0].mxu0
      %v1734 = vadd.f32 0.0, %v1733
      %v1735 = vpop.f32.mrb[0].mxu0
      %v1736 = vadd.f32 0.0, %v1735
      %v1737 = vpop.f32.mrb[0].mxu0
      %v1738 = vpop.f32.mrb[0].mxu0
      %1739 = vdwg.mxu0
      %v1740 = vmax.f32 %v1208, %v1406
      %v1741 = vmax.f32 %v1209, %v1408
      %v1742 = vmax.f32 %v1210, %v1447
      %v1743 = vmax.f32 %v1211, %v1449
      %v1744 = vmax.f32 %v1212, %v1488
      %v1745 = vmax.f32 %v1213, %v1490
      %v1746 = vmax.f32 %v1214, %v1529
      %v1747 = vmax.f32 %v1215, %v1531
      %v1748 = vmax.f32 %v1216, %v1570
      %v1749 = vmax.f32 %v1217, %v1572
      %v1750 = vmax.f32 %v1218, %v1611
      %v1751 = vmax.f32 %v1219, %v1613
      %v1752 = vmax.f32 %v1220, %v1652
      %v1753 = vmax.f32 %v1221, %v1654
      %v1754 = vmax.f32 %v1222, %v1693
      %v1755 = vmax.f32 %v1223, %v1695
      %v1756 = vmax.f32 %v1224, %v1734
      %v1757 = vmax.f32 %v1225, %v1736
      %s1758 = scalar_lea.vmem %s165, 432
      %v1759 = vld [vmem:[%s1758] sm:$0xff]
      %v1760 = vld [vmem:[%s1758 + $0x8] sm:$0xff]
      %v1761 = vld [vmem:[%s1758 + $0x10] sm:$0xff]
      %v1762 = vld [vmem:[%s1758 + $0x18] sm:$0xff]
      %v1763 = vld [vmem:[%s1758 + $0x20] sm:$0xff]
      %v1764 = vld [vmem:[%s1758 + $0x28] sm:$0xff]
      %v1765 = vld [vmem:[%s1758 + $0x30] sm:$0xff]
      %v1766 = vld [vmem:[%s1758 + $0x38] sm:$0xff]
      %v1767 = vld [vmem:[%s1758 + $0x40] sm:$0xff]
      %v1768 = vld [vmem:[%s1758 + $0x48] sm:$0x11]
      %v1769 = vld [vmem:[%s1758 + $0x50] sm:$0x11]
      %v1770 = vld [vmem:[%s1758 + $0x58] sm:$0x11]
      %v1771 = vld [vmem:[%s1758 + $0x60] sm:$0x11]
      %v1772 = vld [vmem:[%s1758 + $0x68] sm:$0x11]
      %v1773 = vld [vmem:[%s1758 + $0x70] sm:$0x11]
      %v1774 = vld [vmem:[%s1758 + $0x78] sm:$0x11]
      %v1775 = vld [vmem:[%s1758 + $0x80] sm:$0x11]
      %v1776 = vld [vmem:[%s1758 + $0x88] sm:$0x11]
      %v1795 = vunpack.c.l.b16 %v1759
      %v1796 = vunpack.c.h.b16 %v1759
      %v1797 = vunpack.c.l.b16 %v1760
      %v1798 = vunpack.c.h.b16 %v1760
      %v1799 = vunpack.c.l.b16 %v1761
      %v1800 = vunpack.c.h.b16 %v1761
      %v1801 = vunpack.c.l.b16 %v1762
      %v1802 = vunpack.c.h.b16 %v1762
      %v1803 = vunpack.c.l.b16 %v1763
      %v1804 = vunpack.c.h.b16 %v1763
      %v1805 = vunpack.c.l.b16 %v1764
      %v1806 = vunpack.c.h.b16 %v1764
      %v1807 = vunpack.c.l.b16 %v1765
      %v1808 = vunpack.c.h.b16 %v1765
      %v1809 = vunpack.c.l.b16 %v1766
      %v1810 = vunpack.c.h.b16 %v1766
      %v1811 = vunpack.c.l.b16 %v1767
      %v1812 = vunpack.c.h.b16 %v1767
      %v1813 = vunpack.c.l.b16 %v1768
      %v1814 = vunpack.c.h.b16 %v1768
      %v1815 = vunpack.c.l.b16 %v1769
      %v1816 = vunpack.c.h.b16 %v1769
      %v1817 = vunpack.c.l.b16 %v1770
      %v1818 = vunpack.c.h.b16 %v1770
      %v1819 = vunpack.c.l.b16 %v1771
      %v1820 = vunpack.c.h.b16 %v1771
      %v1821 = vunpack.c.l.b16 %v1772
      %v1822 = vunpack.c.h.b16 %v1772
      %v1823 = vunpack.c.l.b16 %v1773
      %v1824 = vunpack.c.h.b16 %v1773
      %v1825 = vunpack.c.l.b16 %v1774
      %v1826 = vunpack.c.h.b16 %v1774
      %v1827 = vunpack.c.l.b16 %v1775
      %v1828 = vunpack.c.h.b16 %v1775
      %v1829 = vunpack.c.l.b16 %v1776
      %v1830 = vunpack.c.h.b16 %v1776
      %v1831 = vpack.c.b16 %v1813, %v1795
      %v1832 = vpack.c.b16 %v1814, %v1796
      %v1833 = vpack.c.b16 %v1815, %v1797
      %v1834 = vpack.c.b16 %v1816, %v1798
      %v1835 = vpack.c.b16 %v1817, %v1799
      %v1836 = vpack.c.b16 %v1818, %v1800
      %v1837 = vpack.c.b16 %v1819, %v1801
      %v1838 = vpack.c.b16 %v1820, %v1802
      %v1839 = vpack.c.b16 %v1821, %v1803
      %v1840 = vpack.c.b16 %v1822, %v1804
      %v1841 = vpack.c.b16 %v1823, %v1805
      %v1842 = vpack.c.b16 %v1824, %v1806
      %v1843 = vpack.c.b16 %v1825, %v1807
      %v1844 = vpack.c.b16 %v1826, %v1808
      %v1845 = vpack.c.b16 %v1827, %v1809
      %v1846 = vpack.c.b16 %v1828, %v1810
      %v1847 = vpack.c.b16 %v1829, %v1811
      %v1848 = vpack.c.b16 %v1830, %v1812
      %v1850 = vand.u32 %v1831, %v270
      %v1853 = vand.u32 %v1832, %v270
      %v1856 = vand.u32 %v1833, %v270
      %v1859 = vand.u32 %v1834, %v270
      %v1862 = vand.u32 %v1835, %v270
      %v1865 = vand.u32 %v1836, %v270
      %v1868 = vand.u32 %v1837, %v270
      %v1871 = vand.u32 %v1838, %v270
      %v1874 = vand.u32 %v1839, %v270
      %v1877 = vand.u32 %v1840, %v270
      %v1880 = vand.u32 %v1841, %v270
      %v1883 = vand.u32 %v1842, %v270
      %v1886 = vand.u32 %v1843, %v270
      %v1889 = vand.u32 %v1844, %v270
      %v1892 = vand.u32 %v1845, %v270
      %v1895 = vand.u32 %v1846, %v270
      %v1898 = vand.u32 %v1847, %v270
      %v1901 = vand.u32 %v1848, %v270
      %1903 = vmatprep.subr.bf16.mxu0 %v1853
      %1904 = vmatpush1.bf16.msra.mxu0 %v1850
      %1905 = vmatprep.subr.bf16.mxu0 0
      %1906 = vmatpush1.bf16.msra.mxu0 0
      %1907 = vmatprep.subr.bf16.mxu0 0
      %1908 = vmatpush1.bf16.msra.mxu0 0
      %1909 = vmatprep.subr.bf16.mxu0 0
      %1910 = vmatpush1.bf16.msra.mxu0 0
      %1911 = vmatprep.subr.bf16.mxu0 0
      %1912 = vmatpush1.bf16.msra.mxu0 0
      %1913 = vmatprep.subr.bf16.mxu0 0
      %1914 = vmatpush1.bf16.msra.mxu0 0
      %1915 = vmatprep.subr.bf16.mxu0 0
      %1916 = vmatpush1.bf16.msra.mxu0 0
      %1917 = vmatprep.subr.bf16.mxu0 0
      %1918 = vmatpush1.bf16.msra.mxu0 0
      %1919 = vmatprep.subr.bf16.mxu0 0
      %1920 = vmatpush1.bf16.msra.mxu0 0
      %1921 = vmatprep.subr.bf16.mxu0 0
      %1922 = vmatpush1.bf16.msra.mxu0 0
      %1923 = vmatprep.subr.bf16.mxu0 0
      %1924 = vmatpush1.bf16.msra.mxu0 0
      %1925 = vmatprep.subr.bf16.mxu0 0
      %1926 = vmatpush1.bf16.msra.mxu0 0
      %1927 = vmatprep.subr.bf16.mxu0 0
      %1928 = vmatpush1.bf16.msra.mxu0 0
      %1929 = vmatprep.subr.bf16.mxu0 0
      %1930 = vmatpush1.bf16.msra.mxu0 0
      %1931 = vmatprep.subr.bf16.mxu0 0
      %1932 = vmatpush1.bf16.msra.mxu0 0
      %1933 = vmatprep.subr.bf16.mxu0 0
      %1934 = vmatpush1.bf16.msra.mxu0 0
      %1935 = vmatprep.mubr.bf16.mxu0 0
      %1936 = vmatmul.mubr.bf16.gmra.mrb[0].mxu0 %v265
      %v1937 = vpop.f32.mrb[0].mxu0
      %v1938 = vadd.f32 0.0, %v1937
      %v1939 = vpop.f32.mrb[0].mxu0
      %v1940 = vadd.f32 0.0, %v1939
      %v1941 = vpop.f32.mrb[0].mxu0
      %v1942 = vpop.f32.mrb[0].mxu0
      %1943 = vdwg.mxu0
      %1944 = vmatprep.subr.bf16.mxu0 %v1859
      %1945 = vmatpush1.bf16.msra.mxu0 %v1856
      %1946 = vmatprep.subr.bf16.mxu0 0
      %1947 = vmatpush1.bf16.msra.mxu0 0
      %1948 = vmatprep.subr.bf16.mxu0 0
      %1949 = vmatpush1.bf16.msra.mxu0 0
      %1950 = vmatprep.subr.bf16.mxu0 0
      %1951 = vmatpush1.bf16.msra.mxu0 0
      %1952 = vmatprep.subr.bf16.mxu0 0
      %1953 = vmatpush1.bf16.msra.mxu0 0
      %1954 = vmatprep.subr.bf16.mxu0 0
      %1955 = vmatpush1.bf16.msra.mxu0 0
      %1956 = vmatprep.subr.bf16.mxu0 0
      %1957 = vmatpush1.bf16.msra.mxu0 0
      %1958 = vmatprep.subr.bf16.mxu0 0
      %1959 = vmatpush1.bf16.msra.mxu0 0
      %1960 = vmatprep.subr.bf16.mxu0 0
      %1961 = vmatpush1.bf16.msra.mxu0 0
      %1962 = vmatprep.subr.bf16.mxu0 0
      %1963 = vmatpush1.bf16.msra.mxu0 0
      %1964 = vmatprep.subr.bf16.mxu0 0
      %1965 = vmatpush1.bf16.msra.mxu0 0
      %1966 = vmatprep.subr.bf16.mxu0 0
      %1967 = vmatpush1.bf16.msra.mxu0 0
      %1968 = vmatprep.subr.bf16.mxu0 0
      %1969 = vmatpush1.bf16.msra.mxu0 0
      %1970 = vmatprep.subr.bf16.mxu0 0
      %1971 = vmatpush1.bf16.msra.mxu0 0
      %1972 = vmatprep.subr.bf16.mxu0 0
      %1973 = vmatpush1.bf16.msra.mxu0 0
      %1974 = vmatprep.subr.bf16.mxu0 0
      %1975 = vmatpush1.bf16.msra.mxu0 0
      %1976 = vmatprep.mubr.bf16.mxu0 0
      %1977 = vmatmul.mubr.bf16.gmra.mrb[0].mxu0 %v265
      %v1978 = vpop.f32.mrb[0].mxu0
      %v1979 = vadd.f32 0.0, %v1978
      %v1980 = vpop.f32.mrb[0].mxu0
      %v1981 = vadd.f32 0.0, %v1980
      %v1982 = vpop.f32.mrb[0].mxu0
      %v1983 = vpop.f32.mrb[0].mxu0
      %1984 = vdwg.mxu0
      %1985 = vmatprep.subr.bf16.mxu0 %v1865
      %1986 = vmatpush1.bf16.msra.mxu0 %v1862
      %1987 = vmatprep.subr.bf16.mxu0 0
      %1988 = vmatpush1.bf16.msra.mxu0 0
      %1989 = vmatprep.subr.bf16.mxu0 0
      %1990 = vmatpush1.bf16.msra.mxu0 0
      %1991 = vmatprep.subr.bf16.mxu0 0
      %1992 = vmatpush1.bf16.msra.mxu0 0
      %1993 = vmatprep.subr.bf16.mxu0 0
      %1994 = vmatpush1.bf16.msra.mxu0 0
      %1995 = vmatprep.subr.bf16.mxu0 0
      %1996 = vmatpush1.bf16.msra.mxu0 0
      %1997 = vmatprep.subr.bf16.mxu0 0
      %1998 = vmatpush1.bf16.msra.mxu0 0
      %1999 = vmatprep.subr.bf16.mxu0 0
      %2000 = vmatpush1.bf16.msra.mxu0 0
      %2001 = vmatprep.subr.bf16.mxu0 0
      %2002 = vmatpush1.bf16.msra.mxu0 0
      %2003 = vmatprep.subr.bf16.mxu0 0
      %2004 = vmatpush1.bf16.msra.mxu0 0
      %2005 = vmatprep.subr.bf16.mxu0 0
      %2006 = vmatpush1.bf16.msra.mxu0 0
      %2007 = vmatprep.subr.bf16.mxu0 0
      %2008 = vmatpush1.bf16.msra.mxu0 0
      %2009 = vmatprep.subr.bf16.mxu0 0
      %2010 = vmatpush1.bf16.msra.mxu0 0
      %2011 = vmatprep.subr.bf16.mxu0 0
      %2012 = vmatpush1.bf16.msra.mxu0 0
      %2013 = vmatprep.subr.bf16.mxu0 0
      %2014 = vmatpush1.bf16.msra.mxu0 0
      %2015 = vmatprep.subr.bf16.mxu0 0
      %2016 = vmatpush1.bf16.msra.mxu0 0
      %2017 = vmatprep.mubr.bf16.mxu0 0
      %2018 = vmatmul.mubr.bf16.gmra.mrb[0].mxu0 %v265
      %v2019 = vpop.f32.mrb[0].mxu0
      %v2020 = vadd.f32 0.0, %v2019
      %v2021 = vpop.f32.mrb[0].mxu0
      %v2022 = vadd.f32 0.0, %v2021
      %v2023 = vpop.f32.mrb[0].mxu0
      %v2024 = vpop.f32.mrb[0].mxu0
      %2025 = vdwg.mxu0
      %2026 = vmatprep.subr.bf16.mxu0 %v1871
      %2027 = vmatpush1.bf16.msra.mxu0 %v1868
      %2028 = vmatprep.subr.bf16.mxu0 0
      %2029 = vmatpush1.bf16.msra.mxu0 0
      %2030 = vmatprep.subr.bf16.mxu0 0
      %2031 = vmatpush1.bf16.msra.mxu0 0
      %2032 = vmatprep.subr.bf16.mxu0 0
      %2033 = vmatpush1.bf16.msra.mxu0 0
      %2034 = vmatprep.subr.bf16.mxu0 0
      %2035 = vmatpush1.bf16.msra.mxu0 0
      %2036 = vmatprep.subr.bf16.mxu0 0
      %2037 = vmatpush1.bf16.msra.mxu0 0
      %2038 = vmatprep.subr.bf16.mxu0 0
      %2039 = vmatpush1.bf16.msra.mxu0 0
      %2040 = vmatprep.subr.bf16.mxu0 0
      %2041 = vmatpush1.bf16.msra.mxu0 0
      %2042 = vmatprep.subr.bf16.mxu0 0
      %2043 = vmatpush1.bf16.msra.mxu0 0
      %2044 = vmatprep.subr.bf16.mxu0 0
      %2045 = vmatpush1.bf16.msra.mxu0 0
      %2046 = vmatprep.subr.bf16.mxu0 0
      %2047 = vmatpush1.bf16.msra.mxu0 0
      %2048 = vmatprep.subr.bf16.mxu0 0
      %2049 = vmatpush1.bf16.msra.mxu0 0
      %2050 = vmatprep.subr.bf16.mxu0 0
      %2051 = vmatpush1.bf16.msra.mxu0 0
      %2052 = vmatprep.subr.bf16.mxu0 0
      %2053 = vmatpush1.bf16.msra.mxu0 0
      %2054 = vmatprep.subr.bf16.mxu0 0
      %2055 = vmatpush1.bf16.msra.mxu0 0
      %2056 = vmatprep.subr.bf16.mxu0 0
      %2057 = vmatpush1.bf16.msra.mxu0 0
      %2058 = vmatprep.mubr.bf16.mxu0 0
      %2059 = vmatmul.mubr.bf16.gmra.mrb[0].mxu0 %v265
      %v2060 = vpop.f32.mrb[0].mxu0
      %v2061 = vadd.f32 0.0, %v2060
      %v2062 = vpop.f32.mrb[0].mxu0
      %v2063 = vadd.f32 0.0, %v2062
      %v2064 = vpop.f32.mrb[0].mxu0
      %v2065 = vpop.f32.mrb[0].mxu0
      %2066 = vdwg.mxu0
      %2067 = vmatprep.subr.bf16.mxu0 %v1877
      %2068 = vmatpush1.bf16.msra.mxu0 %v1874
      %2069 = vmatprep.subr.bf16.mxu0 0
      %2070 = vmatpush1.bf16.msra.mxu0 0
      %2071 = vmatprep.subr.bf16.mxu0 0
      %2072 = vmatpush1.bf16.msra.mxu0 0
      %2073 = vmatprep.subr.bf16.mxu0 0
      %2074 = vmatpush1.bf16.msra.mxu0 0
      %2075 = vmatprep.subr.bf16.mxu0 0
      %2076 = vmatpush1.bf16.msra.mxu0 0
      %2077 = vmatprep.subr.bf16.mxu0 0
      %2078 = vmatpush1.bf16.msra.mxu0 0
      %2079 = vmatprep.subr.bf16.mxu0 0
      %2080 = vmatpush1.bf16.msra.mxu0 0
      %2081 = vmatprep.subr.bf16.mxu0 0
      %2082 = vmatpush1.bf16.msra.mxu0 0
      %2083 = vmatprep.subr.bf16.mxu0 0
      %2084 = vmatpush1.bf16.msra.mxu0 0
      %2085 = vmatprep.subr.bf16.mxu0 0
      %2086 = vmatpush1.bf16.msra.mxu0 0
      %2087 = vmatprep.subr.bf16.mxu0 0
      %2088 = vmatpush1.bf16.msra.mxu0 0
      %2089 = vmatprep.subr.bf16.mxu0 0
      %2090 = vmatpush1.bf16.msra.mxu0 0
      %2091 = vmatprep.subr.bf16.mxu0 0
      %2092 = vmatpush1.bf16.msra.mxu0 0
      %2093 = vmatprep.subr.bf16.mxu0 0
      %2094 = vmatpush1.bf16.msra.mxu0 0
      %2095 = vmatprep.subr.bf16.mxu0 0
      %2096 = vmatpush1.bf16.msra.mxu0 0
      %2097 = vmatprep.subr.bf16.mxu0 0
      %2098 = vmatpush1.bf16.msra.mxu0 0
      %2099 = vmatprep.mubr.bf16.mxu0 0
      %2100 = vmatmul.mubr.bf16.gmra.mrb[0].mxu0 %v265
      %v2101 = vpop.f32.mrb[0].mxu0
      %v2102 = vadd.f32 0.0, %v2101
      %v2103 = vpop.f32.mrb[0].mxu0
      %v2104 = vadd.f32 0.0, %v2103
      %v2105 = vpop.f32.mrb[0].mxu0
      %v2106 = vpop.f32.mrb[0].mxu0
      %2107 = vdwg.mxu0
      %2108 = vmatprep.subr.bf16.mxu0 %v1883
      %2109 = vmatpush1.bf16.msra.mxu0 %v1880
      %2110 = vmatprep.subr.bf16.mxu0 0
      %2111 = vmatpush1.bf16.msra.mxu0 0
      %2112 = vmatprep.subr.bf16.mxu0 0
      %2113 = vmatpush1.bf16.msra.mxu0 0
      %2114 = vmatprep.subr.bf16.mxu0 0
      %2115 = vmatpush1.bf16.msra.mxu0 0
      %2116 = vmatprep.subr.bf16.mxu0 0
      %2117 = vmatpush1.bf16.msra.mxu0 0
      %2118 = vmatprep.subr.bf16.mxu0 0
      %2119 = vmatpush1.bf16.msra.mxu0 0
      %2120 = vmatprep.subr.bf16.mxu0 0
      %2121 = vmatpush1.bf16.msra.mxu0 0
      %2122 = vmatprep.subr.bf16.mxu0 0
      %2123 = vmatpush1.bf16.msra.mxu0 0
      %2124 = vmatprep.subr.bf16.mxu0 0
      %2125 = vmatpush1.bf16.msra.mxu0 0
      %2126 = vmatprep.subr.bf16.mxu0 0
      %2127 = vmatpush1.bf16.msra.mxu0 0
      %2128 = vmatprep.subr.bf16.mxu0 0
      %2129 = vmatpush1.bf16.msra.mxu0 0
      %2130 = vmatprep.subr.bf16.mxu0 0
      %2131 = vmatpush1.bf16.msra.mxu0 0
      %2132 = vmatprep.subr.bf16.mxu0 0
      %2133 = vmatpush1.bf16.msra.mxu0 0
      %2134 = vmatprep.subr.bf16.mxu0 0
      %2135 = vmatpush1.bf16.msra.mxu0 0
      %2136 = vmatprep.subr.bf16.mxu0 0
      %2137 = vmatpush1.bf16.msra.mxu0 0
      %2138 = vmatprep.subr.bf16.mxu0 0
      %2139 = vmatpush1.bf16.msra.mxu0 0
      %2140 = vmatprep.mubr.bf16.mxu0 0
      %2141 = vmatmul.mubr.bf16.gmra.mrb[0].mxu0 %v265
      %v2142 = vpop.f32.mrb[0].mxu0
      %v2143 = vadd.f32 0.0, %v2142
      %v2144 = vpop.f32.mrb[0].mxu0
      %v2145 = vadd.f32 0.0, %v2144
      %v2146 = vpop.f32.mrb[0].mxu0
      %v2147 = vpop.f32.mrb[0].mxu0
      %2148 = vdwg.mxu0
      %2149 = vmatprep.subr.bf16.mxu0 %v1889
      %2150 = vmatpush1.bf16.msra.mxu0 %v1886
      %2151 = vmatprep.subr.bf16.mxu0 0
      %2152 = vmatpush1.bf16.msra.mxu0 0
      %2153 = vmatprep.subr.bf16.mxu0 0
      %2154 = vmatpush1.bf16.msra.mxu0 0
      %2155 = vmatprep.subr.bf16.mxu0 0
      %2156 = vmatpush1.bf16.msra.mxu0 0
      %2157 = vmatprep.subr.bf16.mxu0 0
      %2158 = vmatpush1.bf16.msra.mxu0 0
      %2159 = vmatprep.subr.bf16.mxu0 0
      %2160 = vmatpush1.bf16.msra.mxu0 0
      %2161 = vmatprep.subr.bf16.mxu0 0
      %2162 = vmatpush1.bf16.msra.mxu0 0
      %2163 = vmatprep.subr.bf16.mxu0 0
      %2164 = vmatpush1.bf16.msra.mxu0 0
      %2165 = vmatprep.subr.bf16.mxu0 0
      %2166 = vmatpush1.bf16.msra.mxu0 0
      %2167 = vmatprep.subr.bf16.mxu0 0
      %2168 = vmatpush1.bf16.msra.mxu0 0
      %2169 = vmatprep.subr.bf16.mxu0 0
      %2170 = vmatpush1.bf16.msra.mxu0 0
      %2171 = vmatprep.subr.bf16.mxu0 0
      %2172 = vmatpush1.bf16.msra.mxu0 0
      %2173 = vmatprep.subr.bf16.mxu0 0
      %2174 = vmatpush1.bf16.msra.mxu0 0
      %2175 = vmatprep.subr.bf16.mxu0 0
      %2176 = vmatpush1.bf16.msra.mxu0 0
      %2177 = vmatprep.subr.bf16.mxu0 0
      %2178 = vmatpush1.bf16.msra.mxu0 0
      %2179 = vmatprep.subr.bf16.mxu0 0
      %2180 = vmatpush1.bf16.msra.mxu0 0
      %2181 = vmatprep.mubr.bf16.mxu0 0
      %2182 = vmatmul.mubr.bf16.gmra.mrb[0].mxu0 %v265
      %v2183 = vpop.f32.mrb[0].mxu0
      %v2184 = vadd.f32 0.0, %v2183
      %v2185 = vpop.f32.mrb[0].mxu0
      %v2186 = vadd.f32 0.0, %v2185
      %v2187 = vpop.f32.mrb[0].mxu0
      %v2188 = vpop.f32.mrb[0].mxu0
      %2189 = vdwg.mxu0
      %2190 = vmatprep.subr.bf16.mxu0 %v1895
      %2191 = vmatpush1.bf16.msra.mxu0 %v1892
      %2192 = vmatprep.subr.bf16.mxu0 0
      %2193 = vmatpush1.bf16.msra.mxu0 0
      %2194 = vmatprep.subr.bf16.mxu0 0
      %2195 = vmatpush1.bf16.msra.mxu0 0
      %2196 = vmatprep.subr.bf16.mxu0 0
      %2197 = vmatpush1.bf16.msra.mxu0 0
      %2198 = vmatprep.subr.bf16.mxu0 0
      %2199 = vmatpush1.bf16.msra.mxu0 0
      %2200 = vmatprep.subr.bf16.mxu0 0
      %2201 = vmatpush1.bf16.msra.mxu0 0
      %2202 = vmatprep.subr.bf16.mxu0 0
      %2203 = vmatpush1.bf16.msra.mxu0 0
      %2204 = vmatprep.subr.bf16.mxu0 0
      %2205 = vmatpush1.bf16.msra.mxu0 0
      %2206 = vmatprep.subr.bf16.mxu0 0
      %2207 = vmatpush1.bf16.msra.mxu0 0
      %2208 = vmatprep.subr.bf16.mxu0 0
      %2209 = vmatpush1.bf16.msra.mxu0 0
      %2210 = vmatprep.subr.bf16.mxu0 0
      %2211 = vmatpush1.bf16.msra.mxu0 0
      %2212 = vmatprep.subr.bf16.mxu0 0
      %2213 = vmatpush1.bf16.msra.mxu0 0
      %2214 = vmatprep.subr.bf16.mxu0 0
      %2215 = vmatpush1.bf16.msra.mxu0 0
      %2216 = vmatprep.subr.bf16.mxu0 0
      %2217 = vmatpush1.bf16.msra.mxu0 0
      %2218 = vmatprep.subr.bf16.mxu0 0
      %2219 = vmatpush1.bf16.msra.mxu0 0
      %2220 = vmatprep.subr.bf16.mxu0 0
      %2221 = vmatpush1.bf16.msra.mxu0 0
      %2222 = vmatprep.mubr.bf16.mxu0 0
      %2223 = vmatmul.mubr.bf16.gmra.mrb[0].mxu0 %v265
      %v2224 = vpop.f32.mrb[0].mxu0
      %v2225 = vadd.f32 0.0, %v2224
      %v2226 = vpop.f32.mrb[0].mxu0
      %v2227 = vadd.f32 0.0, %v2226
      %v2228 = vpop.f32.mrb[0].mxu0
      %v2229 = vpop.f32.mrb[0].mxu0
      %2230 = vdwg.mxu0
      %2231 = vmatprep.subr.bf16.mxu0 %v1901
      %2232 = vmatpush1.bf16.msra.mxu0 %v1898
      %2233 = vmatprep.subr.bf16.mxu0 0
      %2234 = vmatpush1.bf16.msra.mxu0 0
      %2235 = vmatprep.subr.bf16.mxu0 0
      %2236 = vmatpush1.bf16.msra.mxu0 0
      %2237 = vmatprep.subr.bf16.mxu0 0
      %2238 = vmatpush1.bf16.msra.mxu0 0
      %2239 = vmatprep.subr.bf16.mxu0 0
      %2240 = vmatpush1.bf16.msra.mxu0 0
      %2241 = vmatprep.subr.bf16.mxu0 0
      %2242 = vmatpush1.bf16.msra.mxu0 0
      %2243 = vmatprep.subr.bf16.mxu0 0
      %2244 = vmatpush1.bf16.msra.mxu0 0
      %2245 = vmatprep.subr.bf16.mxu0 0
      %2246 = vmatpush1.bf16.msra.mxu0 0
      %2247 = vmatprep.subr.bf16.mxu0 0
      %2248 = vmatpush1.bf16.msra.mxu0 0
      %2249 = vmatprep.subr.bf16.mxu0 0
      %2250 = vmatpush1.bf16.msra.mxu0 0
      %2251 = vmatprep.subr.bf16.mxu0 0
      %2252 = vmatpush1.bf16.msra.mxu0 0
      %2253 = vmatprep.subr.bf16.mxu0 0
      %2254 = vmatpush1.bf16.msra.mxu0 0
      %2255 = vmatprep.subr.bf16.mxu0 0
      %2256 = vmatpush1.bf16.msra.mxu0 0
      %2257 = vmatprep.subr.bf16.mxu0 0
      %2258 = vmatpush1.bf16.msra.mxu0 0
      %2259 = vmatprep.subr.bf16.mxu0 0
      %2260 = vmatpush1.bf16.msra.mxu0 0
      %2261 = vmatprep.subr.bf16.mxu0 0
      %2262 = vmatpush1.bf16.msra.mxu0 0
      %2263 = vmatprep.mubr.bf16.mxu0 0
      %2264 = vmatmul.mubr.bf16.gmra.mrb[0].mxu0 %v265
      %v2265 = vpop.f32.mrb[0].mxu0
      %v2266 = vadd.f32 0.0, %v2265
      %v2267 = vpop.f32.mrb[0].mxu0
      %v2268 = vadd.f32 0.0, %v2267
      %v2269 = vpop.f32.mrb[0].mxu0
      %v2270 = vpop.f32.mrb[0].mxu0
      %2271 = vdwg.mxu0
      %v2272 = vmax.f32 %v1740, %v1938
      %v2273 = vmax.f32 %v1741, %v1940
      %v2274 = vmax.f32 %v1742, %v1979
      %v2275 = vmax.f32 %v1743, %v1981
      %v2276 = vmax.f32 %v1744, %v2020
      %v2277 = vmax.f32 %v1745, %v2022
      %v2278 = vmax.f32 %v1746, %v2061
      %v2279 = vmax.f32 %v1747, %v2063
      %v2280 = vmax.f32 %v1748, %v2102
      %v2281 = vmax.f32 %v1749, %v2104
      %v2282 = vmax.f32 %v1750, %v2143
      %v2283 = vmax.f32 %v1751, %v2145
      %v2284 = vmax.f32 %v1752, %v2184
      %v2285 = vmax.f32 %v1753, %v2186
      %v2286 = vmax.f32 %v1754, %v2225
      %v2287 = vmax.f32 %v1755, %v2227
      %v2288 = vmax.f32 %v1756, %v2266
      %v2289 = vmax.f32 %v1757, %v2268
      %v2290 = vld [vmem:[%s2] sm:$0xff]
      %2292 = vset.pattern.permute.xlu0 0
      %2293 = vperm.xlu0 %2292, %v2290
      %v2294 = vpop.permute.xlu0 %2293
      %v2296 = vadd.f32 %v2272, %v2294
      %v2297 = vadd.f32 %v2273, %v2294
      %v2298 = vadd.f32 %v2274, %v2294
      %v2299 = vadd.f32 %v2275, %v2294
      %v2300 = vadd.f32 %v2276, %v2294
      %v2301 = vadd.f32 %v2277, %v2294
      %v2302 = vadd.f32 %v2278, %v2294
      %v2303 = vadd.f32 %v2279, %v2294
      %v2304 = vadd.f32 %v2280, %v2294
      %v2305 = vadd.f32 %v2281, %v2294
      %v2306 = vadd.f32 %v2282, %v2294
      %v2307 = vadd.f32 %v2283, %v2294
      %v2308 = vadd.f32 %v2284, %v2294
      %v2309 = vadd.f32 %v2285, %v2294
      %v2310 = vadd.f32 %v2286, %v2294
      %v2311 = vadd.f32 %v2287, %v2294
      %v2312 = vadd.f32 %v2288, %v2294
      %v2313 = vadd.f32 %v2289, %v2294
      %v2314 = vmax.f32 %v2296, 0.0
      %v2315 = vmax.f32 %v2297, 0.0
      %v2316 = vmax.f32 %v2298, 0.0
      %v2317 = vmax.f32 %v2299, 0.0
      %v2318 = vmax.f32 %v2300, 0.0
      %v2319 = vmax.f32 %v2301, 0.0
      %v2320 = vmax.f32 %v2302, 0.0
      %v2321 = vmax.f32 %v2303, 0.0
      %v2322 = vmax.f32 %v2304, 0.0
      %v2323 = vmax.f32 %v2305, 0.0
      %v2324 = vmax.f32 %v2306, 0.0
      %v2325 = vmax.f32 %v2307, 0.0
      %v2326 = vmax.f32 %v2308, 0.0
      %v2327 = vmax.f32 %v2309, 0.0
      %v2328 = vmax.f32 %v2310, 0.0
      %v2329 = vmax.f32 %v2311, 0.0
      %v2330 = vmax.f32 %v2312, 0.0
      %v2331 = vmax.f32 %v2313, 0.0
      %2332 = vst [vmem:[%s170] sm:$0xff] %v2314
      %2333 = vst [vmem:[%s170 + $0x8] sm:$0xff] %v2315
      %2334 = vst [vmem:[%s170 + $0x10] sm:$0xff] %v2316
      %2335 = vst [vmem:[%s170 + $0x18] sm:$0xff] %v2317
      %2336 = vst [vmem:[%s170 + $0x20] sm:$0xff] %v2318
      %2337 = vst [vmem:[%s170 + $0x28] sm:$0xff] %v2319
      %2338 = vst [vmem:[%s170 + $0x30] sm:$0xff] %v2320
      %2339 = vst [vmem:[%s170 + $0x38] sm:$0xff] %v2321
      %2340 = vst [vmem:[%s170 + $0x40] sm:$0xff] %v2322
      %2341 = vst [vmem:[%s170 + $0x48] sm:$0xff] %v2323
      %2342 = vst [vmem:[%s170 + $0x50] sm:$0xff] %v2324
      %2343 = vst [vmem:[%s170 + $0x58] sm:$0xff] %v2325
      %2344 = vst [vmem:[%s170 + $0x60] sm:$0xff] %v2326
      %2345 = vst [vmem:[%s170 + $0x68] sm:$0xff] %v2327
      %2346 = vst [vmem:[%s170 + $0x70] sm:$0xff] %v2328
      %2347 = vst [vmem:[%s170 + $0x78] sm:$0xff] %v2329
      %2348 = vst [vmem:[%s170 + $0x80] sm:$0xff] %v2330
      %2349 = vst [vmem:[%s170 + $0x88] sm:$0xff] %v2331
      %p2350 = scmp.lt.s32.totalorder %s14, 1
      %s2351 = scalar_select %p2350, %s14, 1
      %s2352 = smul.addr %s2351, 18
      %s2353 = smul.addr %s2352, 8
      %s2354 = scalar_lea.vmem %s3, %s2353
      // Predicated region
      $region33: #{cnn_forward.4} parent=31 // pred_check
        %p2355 = pneg %p100
      $region34: #{cnn_forward.4} parent=31 // pred_check_branch
        %2357 = sbr.rel (%p2355) target = $region36
      $region35: #{cnn_forward.4} parent=31 // pred_region
        _
      $region36: #{cnn_forward.4} parent=31 // pred_fallthru
        _
    $region32: #{cnn_forward.4} parent=5 // pred_fallthru
      _
    %p2358 = scmp.le.s32.totalorder 2, %s9
    // Predicated region
    $region37: #{cnn_forward.4} parent=5 // pred_check
      %p2359 = pneg %p2358
    $region38: #{cnn_forward.4} parent=5 // pred_check_branch
      %2361 = sbr.rel (%p2359) target = $region40
    $region39: #{cnn_forward.4} parent=5 // pred_region
      %s2362 = ssub.s32 %s9, 2
      // Predicated region
      $region41: #{cnn_forward.4} parent=39 // pred_check
        %p2363 = pneg %p106
      $region42: #{cnn_forward.4} parent=39 // pred_check_branch
        %2365 = sbr.rel (%p2363) target = $region44
      $region43: #{cnn_forward.4} parent=39 // pred_region
        %p2366 = scmp.lt.s32.totalorder %s15, 1
        %s2367 = scalar_select %p2366, %s15, 1
        %s2368 = smul.addr %s2367, 18
        %s2369 = smul.addr %s2368, 8
        %s2370 = scalar_lea.vmem %s3, %s2369
      $region44: #{cnn_forward.4} parent=39 // pred_fallthru
        _
    $region40: #{cnn_forward.4} parent=5 // pred_fallthru
      _
  $region6: #{cnn_forward.4} parent=0 // loop_footer
    %s13 = sadd.s32 1, %s9
  $region7: #{cnn_forward.4} parent=0 // loop_footer_branch
    %8 = sbr.rel target = $region3
  $region8: #{cnn_forward.4} parent=0 // loop_exit
    _

// kernel: cnn_forward.5
$region0: #{cnn_forward.5}
  #allocation0 [shape = 'u32[]', space=smem, size = 0x4, offset = 0x4, fixed_abs, tag = 'smem constant byte address 0x4 - core index']
  #allocation1 [shape = 'u32[144,128]{1,0:T(1,128)}', space=vmem, size = 0x12000, scoped, tag = 'internal scratch']
  %s0 = inlined_call_operand.vmem [shape: bf16[2,4,72,529], index: 0, kind: input, shape index: {}]
  %s1 = inlined_call_operand.vmem [shape: bf16[16,72], index: 1, kind: input, shape index: {}]
  %s2 = inlined_call_operand.vmem [shape: f32[16,1], index: 2, kind: input, shape index: {}]
  %s3 = inlined_call_operand.vmem [shape: f32[2,16,529], index: 3, kind: output, shape index: {}]
  %s4 = sld [smem:[#allocation0]]
  $region45: #{cnn_forward.5} parent=0
    _
  %s6 = ssub.s32 1, %s4
  %s7 = scalar_select 0, %s6, %s4
  loop: start=0, step=1, limit=4
  $region2: #{cnn_forward.5} parent=0 // loop_pre_header
    _
  $region3: #{cnn_forward.5} parent=0 // loop_header
    %s9 = sphi 0, %s13
    %p10 = scmp.ge.s32.totalorder %s9, 4
    %s19 = sphi 0, %s21
    %s22 = sphi 0, %s19
    %s23 = sphi 0, %s22
    %s39 = sphi 0, %s23
    %s43 = sphi 0, %s43
    %s45 = sphi 0, %s43
    %s46 = sphi 0, %s45
    %s60 = sphi 0, %s46
    %s64 = sphi 0, %s64
    %s66 = sphi 0, %s64
    %s67 = sphi 0, %s66
    %s81 = sphi 0, %s67
    %s87 = sphi 0, %s89
    %s90 = sphi 0, %s87
    %s91 = sphi 0, %s90
    %s107 = sphi 0, %s91
  $region4: #{cnn_forward.5} parent=0 // loop_header_branch
    %12 = sbr.rel (%p10) target = $region8
  $region5: #{cnn_forward.5} parent=0 // loop_body
    %s14 = ssub.s32 %s9, 1
    %s15 = ssub.s32 %s9, 2
    %s16 = sadd.s32 %s9, 1
    %s17 = ssub.s32 %s9, %s16
    %p18 = scmp.eq.s32.totalorder %s17, 0
    %s20 = sadd.s32 %s19, 1
    %s21 = scalar_select %p18, %s19, %s20
    %p24 = pneg %p18
    %p25 = scmp.eq.s32.totalorder %s9, 1
    %p26 = por %p24, %p25
    %p27 = scmp.ne.s32.totalorder %s19, %s22
    %p28 = scmp.eq.s32.totalorder %s9, 0
    %p29 = por %p27, %p28
    %p30 = scmp.ne.s32.totalorder %s19, %s22
    %p31 = scmp.eq.s32.totalorder %s14, 1
    %p32 = por %p30, %p31
    %p33 = scmp.ne.s32.totalorder %s22, %s23
    %p34 = scmp.eq.s32.totalorder %s14, 0
    %p35 = por %p33, %p34
    %p36 = scmp.ne.s32.totalorder %s22, %s23
    %p37 = scmp.eq.s32.totalorder %s15, 1
    %p38 = por %p36, %p37
    %p40 = scmp.ne.s32.totalorder %s23, %s39
    %p41 = scmp.eq.s32.totalorder %s15, 0
    %p42 = por %p40, %p41
    %s44 = sadd.s32 %s43, 1
    %p47 = scmp.eq.s32.totalorder %s9, 1
    %p48 = scmp.ne.s32.totalorder %s43, %s45
    %p49 = scmp.eq.s32.totalorder %s9, 0
    %p50 = por %p48, %p49
    %p51 = scmp.ne.s32.totalorder %s43, %s45
    %p52 = scmp.eq.s32.totalorder %s14, 1
    %p53 = por %p51, %p52
    %p54 = scmp.ne.s32.totalorder %s45, %s46
    %p55 = scmp.eq.s32.totalorder %s14, 0
    %p56 = por %p54, %p55
    %p57 = scmp.ne.s32.totalorder %s45, %s46
    %p58 = scmp.eq.s32.totalorder %s15, 1
    %p59 = por %p57, %p58
    %p61 = scmp.ne.s32.totalorder %s46, %s60
    %p62 = scmp.eq.s32.totalorder %s15, 0
    %p63 = por %p61, %p62
    %s65 = sadd.s32 %s64, 1
    %p68 = scmp.eq.s32.totalorder %s9, 1
    %p69 = scmp.ne.s32.totalorder %s64, %s66
    %p70 = scmp.eq.s32.totalorder %s9, 0
    %p71 = por %p69, %p70
    %p72 = scmp.ne.s32.totalorder %s64, %s66
    %p73 = scmp.eq.s32.totalorder %s14, 1
    %p74 = por %p72, %p73
    %p75 = scmp.ne.s32.totalorder %s66, %s67
    %p76 = scmp.eq.s32.totalorder %s14, 0
    %p77 = por %p75, %p76
    %p78 = scmp.ne.s32.totalorder %s66, %s67
    %p79 = scmp.eq.s32.totalorder %s15, 1
    %p80 = por %p78, %p79
    %p82 = scmp.ne.s32.totalorder %s67, %s81
    %p83 = scmp.eq.s32.totalorder %s15, 0
    %p84 = por %p82, %p83
    %s85 = ssub.s32 %s9, %s16
    %p86 = scmp.eq.s32.totalorder %s85, 0
    %s88 = sadd.s32 %s87, 1
    %s89 = scalar_select %p86, %s87, %s88
    %p92 = pneg %p86
    %p93 = scmp.eq.s32.totalorder %s9, 1
    %p94 = por %p92, %p93
    %p95 = scmp.ne.s32.totalorder %s87, %s90
    %p96 = scmp.eq.s32.totalorder %s9, 0
    %p97 = por %p95, %p96
    %p98 = scmp.ne.s32.totalorder %s87, %s90
    %p99 = scmp.eq.s32.totalorder %s14, 1
    %p100 = por %p98, %p99
    %p101 = scmp.ne.s32.totalorder %s90, %s91
    %p102 = scmp.eq.s32.totalorder %s14, 0
    %p103 = por %p101, %p102
    %p104 = scmp.ne.s32.totalorder %s90, %s91
    %p105 = scmp.eq.s32.totalorder %s15, 1
    %p106 = por %p104, %p105
    %p108 = scmp.ne.s32.totalorder %s91, %s107
    %p109 = scmp.eq.s32.totalorder %s15, 0
    %p110 = por %p108, %p109
    %p111 = scmp.le.s32.totalorder 1, %s9
    %p112 = scmp.lt.s32.totalorder %s9, 3
    %p113 = pnand %p111, %p112
    %p114 = pneg %p113
    // Predicated region
    $region9: #{cnn_forward.5} parent=5 // pred_check
      _
    $region10: #{cnn_forward.5} parent=5 // pred_check_branch
      %116 = sbr.rel (%p113) target = $region12
    $region11: #{cnn_forward.5} parent=5 // pred_region
      %s117 = ssub.s32 %s9, 1
      // Predicated region
      $region13: #{cnn_forward.5} parent=11 // pred_check
        %p118 = pneg %p56
      $region14: #{cnn_forward.5} parent=11 // pred_check_branch
        %120 = sbr.rel (%p118) target = $region16
      $region15: #{cnn_forward.5} parent=11 // pred_region
        _
      $region16: #{cnn_forward.5} parent=11 // pred_fallthru
        _
      // Predicated region
      $region17: #{cnn_forward.5} parent=11 // pred_check
        %p121 = pneg %p77
      $region18: #{cnn_forward.5} parent=11 // pred_check_branch
        %123 = sbr.rel (%p121) target = $region20
      $region19: #{cnn_forward.5} parent=11 // pred_region
        _
      $region20: #{cnn_forward.5} parent=11 // pred_fallthru
        _
    $region12: #{cnn_forward.5} parent=5 // pred_fallthru
      _
    %p124 = scmp.lt.s32.totalorder %s9, 2
    // Predicated region
    $region21: #{cnn_forward.5} parent=5 // pred_check
      %p125 = pneg %p124
    $region22: #{cnn_forward.5} parent=5 // pred_check_branch
      %127 = sbr.rel (%p125) target = $region24
    $region23: #{cnn_forward.5} parent=5 // pred_region
      // Predicated region
      $region25: #{cnn_forward.5} parent=23 // pred_check
        %p128 = pneg %p29
      $region26: #{cnn_forward.5} parent=23 // pred_check_branch
        %130 = sbr.rel (%p128) target = $region28
      $region27: #{cnn_forward.5} parent=23 // pred_region
        %p131 = scmp.lt.s32.totalorder %s9, 1
        %s132 = scalar_select %p131, %s9, 1
        %s133 = smul.addr %s132, 180
        %s134 = smul.addr %s133, 4
        %s135 = scalar_lea.vmem %s0, %s134
      $region28: #{cnn_forward.5} parent=23 // pred_fallthru
        _
    $region24: #{cnn_forward.5} parent=5 // pred_fallthru
      _
    %p136 = scmp.le.s32.totalorder 1, %s9
    %p137 = scmp.lt.s32.totalorder %s9, 3
    %p138 = pnand %p136, %p137
    %p139 = pneg %p138
    // Predicated region
    $region29: #{cnn_forward.5} parent=5 // pred_check
      _
    $region30: #{cnn_forward.5} parent=5 // pred_check_branch
      %141 = sbr.rel (%p138) target = $region32
    $region31: #{cnn_forward.5} parent=5 // pred_region
      %s142 = ssub.s32 %s9, 1
      %p143 = scmp.lt.s32.totalorder %s14, 1
      %s144 = scalar_select %p143, %s14, 1
      %s145 = smul.addr %s144, 180
      %s146 = smul.addr %s145, 4
      %s147 = scalar_lea.vmem %s0, %s146
      %p148 = pneg %p35
      %p149 = pneg %p32
      %p150 = pneg %p56
      %p151 = pneg %p53
      %p152 = pneg %p77
      %p153 = pneg %p74
      %p154 = pneg %p103
      %p155 = pneg %p100
      %p156 = scmp.lt.s32.totalorder %s14, 1
      %s157 = scalar_select %p156, %s14, 1
      %s158 = smul.addr %s157, 10
      %s159 = smul.addr %s158, 8
      %s160 = scalar_lea.vmem %s3, %s159
      %p161 = scmp.lt.s32.totalorder %s14, 1
      %s162 = scalar_select %p161, %s14, 1
      %s163 = smul.addr %s162, 180
      %s164 = smul.addr %s163, 4
      %s165 = scalar_lea.vmem %s0, %s164
      %p166 = scmp.lt.s32.totalorder %s14, 1
      %s167 = scalar_select %p166, %s14, 1
      %s168 = smul.addr %s167, 10
      %s169 = smul.addr %s168, 8
      %s170 = scalar_lea.vmem %s3, %s169
      %v172 = vld [vmem:[%s1] sm:$0xf]
      %v173 = vld [vmem:[%s1 + $0x4] sm:$0xf]
      %v174 = vld [vmem:[%s165] sm:$0xff]
      %v175 = vld [vmem:[%s165 + $0x8] sm:$0xff]
      %v176 = vld [vmem:[%s165 + $0x10] sm:$0xf]
      %v177 = vld [vmem:[%s165 + $0x14] sm:$0xff]
      %v178 = vld [vmem:[%s165 + $0x1c] sm:$0xff]
      %v179 = vld [vmem:[%s165 + $0x24] sm:$0xf]
      %v180 = vld [vmem:[%s165 + $0x28] sm:$0xff]
      %v181 = vld [vmem:[%s165 + $0x30] sm:$0xff]
      %v182 = vld [vmem:[%s165 + $0x38] sm:$0xf]
      %v183 = vld [vmem:[%s165 + $0x3c] sm:$0xff]
      %v184 = vld [vmem:[%s165 + $0x44] sm:$0xff]
      %v185 = vld [vmem:[%s165 + $0x4c] sm:$0xf]
      %v186 = vld [vmem:[%s165 + $0x50] sm:$0xff]
      %v187 = vld [vmem:[%s165 + $0x58] sm:$0xff]
      %v188 = vld [vmem:[%s165 + $0x60] sm:$0xf]
      %v189 = vld [vmem:[%s165 + $0x64] sm:$0xff]
      %v190 = vld [vmem:[%s165 + $0x6c] sm:$0xff]
      %v191 = vld [vmem:[%s165 + $0x74] sm:$0xf]
      %v192 = vld [vmem:[%s165 + $0x78] sm:$0xff]
      %v193 = vld [vmem:[%s165 + $0x80] sm:$0xff]
      %v194 = vld [vmem:[%s165 + $0x88] sm:$0xf]
      %v195 = vld [vmem:[%s165 + $0x8c] sm:$0xff]
      %v196 = vld [vmem:[%s165 + $0x94] sm:$0xff]
      %v197 = vld [vmem:[%s165 + $0x9c] sm:$0xf]
      %v198 = vld [vmem:[%s165 + $0xa0] sm:$0xff]
      %v199 = vld [vmem:[%s165 + $0xa8] sm:$0xff]
      %v200 = vld [vmem:[%s165 + $0xb0] sm:$0xf]
      %v203 = vunpack.c.l.b16 %v172
      %v204 = vunpack.c.l.b16 %v173
      %v205 = vpack.c.b16 %v204, %v203
      %v233 = vunpack.c.l.b16 %v174
      %v234 = vunpack.c.h.b16 %v174
      %v235 = vunpack.c.l.b16 %v175
      %v236 = vunpack.c.h.b16 %v175
      %v237 = vunpack.c.l.b16 %v176
      %v238 = vunpack.c.l.b16 %v177
      %v239 = vunpack.c.h.b16 %v177
      %v240 = vunpack.c.l.b16 %v178
      %v241 = vunpack.c.h.b16 %v178
      %v242 = vunpack.c.l.b16 %v179
      %v243 = vunpack.c.l.b16 %v180
      %v244 = vunpack.c.h.b16 %v180
      %v245 = vunpack.c.l.b16 %v181
      %v246 = vunpack.c.h.b16 %v181
      %v247 = vunpack.c.l.b16 %v182
      %v248 = vunpack.c.l.b16 %v183
      %v249 = vunpack.c.h.b16 %v183
      %v250 = vunpack.c.l.b16 %v184
      %v251 = vunpack.c.h.b16 %v184
      %v252 = vunpack.c.l.b16 %v185
      %v253 = vunpack.c.l.b16 %v186
      %v254 = vunpack.c.h.b16 %v186
      %v255 = vunpack.c.l.b16 %v187
      %v256 = vunpack.c.h.b16 %v187
      %v257 = vunpack.c.l.b16 %v188
      %v258 = vunpack.c.l.b16 %v189
      %v259 = vunpack.c.h.b16 %v189
      %v260 = vunpack.c.l.b16 %v190
      %v261 = vunpack.c.h.b16 %v190
      %v262 = vunpack.c.l.b16 %v191
      %v263 = vunpack.c.l.b16 %v192
      %v264 = vunpack.c.h.b16 %v192
      %v265 = vunpack.c.l.b16 %v193
      %v266 = vunpack.c.h.b16 %v193
      %v267 = vunpack.c.l.b16 %v194
      %v268 = vunpack.c.l.b16 %v195
      %v269 = vunpack.c.h.b16 %v195
      %v270 = vunpack.c.l.b16 %v196
      %v271 = vunpack.c.h.b16 %v196
      %v272 = vunpack.c.l.b16 %v197
      %v273 = vunpack.c.l.b16 %v198
      %v274 = vunpack.c.h.b16 %v198
      %v275 = vunpack.c.l.b16 %v199
      %v276 = vunpack.c.h.b16 %v199
      %v277 = vunpack.c.l.b16 %v200
      %v278 = vpack.c.b16 %v238, %v233
      %v279 = vpack.c.b16 %v239, %v234
      %v280 = vpack.c.b16 %v240, %v235
      %v281 = vpack.c.b16 %v241, %v236
      %v282 = vpack.c.b16 %v242, %v237
      %v283 = vpack.c.b16 %v248, %v243
      %v284 = vpack.c.b16 %v249, %v244
      %v285 = vpack.c.b16 %v250, %v245
      %v286 = vpack.c.b16 %v251, %v246
      %v287 = vpack.c.b16 %v252, %v247
      %v288 = vpack.c.b16 %v258, %v253
      %v289 = vpack.c.b16 %v259, %v254
      %v290 = vpack.c.b16 %v260, %v255
      %v291 = vpack.c.b16 %v261, %v256
      %v292 = vpack.c.b16 %v262, %v257
      %v293 = vpack.c.b16 %v268, %v263
      %v294 = vpack.c.b16 %v269, %v264
      %v295 = vpack.c.b16 %v270, %v265
      %v296 = vpack.c.b16 %v271, %v266
      %v297 = vpack.c.b16 %v272, %v267
      %v298 = vpack.c.b16 %v273, %v273
      %v299 = vpack.c.b16 %v274, %v274
      %v300 = vpack.c.b16 %v275, %v275
      %v301 = vpack.c.b16 %v276, %v276
      %v302 = vpack.c.b16 %v277, %v277
      %vm323 = vcmask 588800
      %v325 = vsel %vm323, %v205, 0
      %vm327 = vcmask 1043456
      %v329 = vsel %vm327, %v298, 0
      %v332 = vsel %vm327, %v299, 0
      %v335 = vsel %vm327, %v300, 0
      %v338 = vsel %vm327, %v301, 0
      %v341 = vsel %vm327, %v302, 0
      %343 = vmatprep.subr.bf16.mxu0 %v279
      %344 = vmatpush1.bf16.msra.mxu0 %v278
      %345 = vmatprep.subr.bf16.mxu0 %v284
      %346 = vmatpush1.bf16.msra.mxu0 %v283
      %347 = vmatprep.subr.bf16.mxu0 %v289
      %348 = vmatpush1.bf16.msra.mxu0 %v288
      %349 = vmatprep.subr.bf16.mxu0 %v294
      %350 = vmatpush1.bf16.msra.mxu0 %v293
      %351 = vmatprep.subr.bf16.mxu0 %v332
      %352 = vmatpush1.bf16.msra.mxu0 %v329
      %353 = vmatprep.subr.bf16.mxu0 0
      %354 = vmatpush1.bf16.msra.mxu0 0
      %355 = vmatprep.subr.bf16.mxu0 0
      %356 = vmatpush1.bf16.msra.mxu0 0
      %357 = vmatprep.subr.bf16.mxu0 0
      %358 = vmatpush1.bf16.msra.mxu0 0
      %359 = vmatprep.subr.bf16.mxu0 0
      %360 = vmatpush1.bf16.msra.mxu0 0
      %361 = vmatprep.subr.bf16.mxu0 0
      %362 = vmatpush1.bf16.msra.mxu0 0
      %363 = vmatprep.subr.bf16.mxu0 0
      %364 = vmatpush1.bf16.msra.mxu0 0
      %365 = vmatprep.subr.bf16.mxu0 0
      %366 = vmatpush1.bf16.msra.mxu0 0
      %367 = vmatprep.subr.bf16.mxu0 0
      %368 = vmatpush1.bf16.msra.mxu0 0
      %369 = vmatprep.subr.bf16.mxu0 0
      %370 = vmatpush1.bf16.msra.mxu0 0
      %371 = vmatprep.subr.bf16.mxu0 0
      %372 = vmatpush1.bf16.msra.mxu0 0
      %373 = vmatprep.subr.bf16.mxu0 0
      %374 = vmatpush1.bf16.msra.mxu0 0
      %375 = vmatprep.mubr.bf16.mxu0 0
      %376 = vmatmul.mubr.bf16.gmra.mrb[0].mxu0 %v325
      %v377 = vpop.f32.mrb[0].mxu0
      %v378 = vadd.f32 0.0, %v377
      %v379 = vpop.f32.mrb[0].mxu0
      %v380 = vadd.f32 0.0, %v379
      %v381 = vpop.f32.mrb[0].mxu0
      %v382 = vadd.f32 0.0, %v381
      %v383 = vpop.f32.mrb[0].mxu0
      %v384 = vadd.f32 0.0, %v383
      %385 = vdwg.mxu0
      %386 = vmatprep.subr.bf16.mxu0 %v281
      %387 = vmatpush1.bf16.msra.mxu0 %v280
      %388 = vmatprep.subr.bf16.mxu0 %v286
      %389 = vmatpush1.bf16.msra.mxu0 %v285
      %390 = vmatprep.subr.bf16.mxu0 %v291
      %391 = vmatpush1.bf16.msra.mxu0 %v290
      %392 = vmatprep.subr.bf16.mxu0 %v296
      %393 = vmatpush1.bf16.msra.mxu0 %v295
      %394 = vmatprep.subr.bf16.mxu0 %v338
      %395 = vmatpush1.bf16.msra.mxu0 %v335
      %396 = vmatprep.subr.bf16.mxu0 0
      %397 = vmatpush1.bf16.msra.mxu0 0
      %398 = vmatprep.subr.bf16.mxu0 0
      %399 = vmatpush1.bf16.msra.mxu0 0
      %400 = vmatprep.subr.bf16.mxu0 0
      %401 = vmatpush1.bf16.msra.mxu0 0
      %402 = vmatprep.subr.bf16.mxu0 0
      %403 = vmatpush1.bf16.msra.mxu0 0
      %404 = vmatprep.subr.bf16.mxu0 0
      %405 = vmatpush1.bf16.msra.mxu0 0
      %406 = vmatprep.subr.bf16.mxu0 0
      %407 = vmatpush1.bf16.msra.mxu0 0
      %408 = vmatprep.subr.bf16.mxu0 0
      %409 = vmatpush1.bf16.msra.mxu0 0
      %410 = vmatprep.subr.bf16.mxu0 0
      %411 = vmatpush1.bf16.msra.mxu0 0
      %412 = vmatprep.subr.bf16.mxu0 0
      %413 = vmatpush1.bf16.msra.mxu0 0
      %414 = vmatprep.subr.bf16.mxu0 0
      %415 = vmatpush1.bf16.msra.mxu0 0
      %416 = vmatprep.subr.bf16.mxu0 0
      %417 = vmatpush1.bf16.msra.mxu0 0
      %418 = vmatprep.mubr.bf16.mxu0 0
      %419 = vmatmul.mubr.bf16.gmra.mrb[0].mxu0 %v325
      %v420 = vpop.f32.mrb[0].mxu0
      %v421 = vadd.f32 0.0, %v420
      %v422 = vpop.f32.mrb[0].mxu0
      %v423 = vadd.f32 0.0, %v422
      %v424 = vpop.f32.mrb[0].mxu0
      %v425 = vadd.f32 0.0, %v424
      %v426 = vpop.f32.mrb[0].mxu0
      %v427 = vadd.f32 0.0, %v426
      %428 = vdwg.mxu0
      %429 = vmatprep.subr.bf16.mxu0 0
      %430 = vmatpush1.bf16.msra.mxu0 %v282
      %431 = vmatprep.subr.bf16.mxu0 0
      %432 = vmatpush1.bf16.msra.mxu0 %v287
      %433 = vmatprep.subr.bf16.mxu0 0
      %434 = vmatpush1.bf16.msra.mxu0 %v292
      %435 = vmatprep.subr.bf16.mxu0 0
      %436 = vmatpush1.bf16.msra.mxu0 %v297
      %437 = vmatprep.subr.bf16.mxu0 0
      %438 = vmatpush1.bf16.msra.mxu0 %v341
      %439 = vmatprep.subr.bf16.mxu0 0
      %440 = vmatpush1.bf16.msra.mxu0 0
      %441 = vmatprep.subr.bf16.mxu0 0
      %442 = vmatpush1.bf16.msra.mxu0 0
      %443 = vmatprep.subr.bf16.mxu0 0
      %444 = vmatpush1.bf16.msra.mxu0 0
      %445 = vmatprep.subr.bf16.mxu0 0
      %446 = vmatpush1.bf16.msra.mxu0 0
      %447 = vmatprep.subr.bf16.mxu0 0
      %448 = vmatpush1.bf16.msra.mxu0 0
      %449 = vmatprep.subr.bf16.mxu0 0
      %450 = vmatpush1.bf16.msra.mxu0 0
      %451 = vmatprep.subr.bf16.mxu0 0
      %452 = vmatpush1.bf16.msra.mxu0 0
      %453 = vmatprep.subr.bf16.mxu0 0
      %454 = vmatpush1.bf16.msra.mxu0 0
      %455 = vmatprep.subr.bf16.mxu0 0
      %456 = vmatpush1.bf16.msra.mxu0 0
      %457 = vmatprep.subr.bf16.mxu0 0
      %458 = vmatpush1.bf16.msra.mxu0 0
      %459 = vmatprep.subr.bf16.mxu0 0
      %460 = vmatpush1.bf16.msra.mxu0 0
      %461 = vmatprep.mubr.bf16.mxu0 0
      %462 = vmatmul.mubr.bf16.gmra.mrb[0].mxu0 %v325
      %v463 = vpop.f32.mrb[0].mxu0
      %v464 = vadd.f32 0.0, %v463
      %v465 = vpop.f32.mrb[0].mxu0
      %v466 = vpop.f32.mrb[0].mxu0
      %v467 = vadd.f32 0.0, %v466
      %v468 = vpop.f32.mrb[0].mxu0
      %469 = vdwg.mxu0
      %s470 = scalar_lea.vmem %s165, 180
      %v471 = vld [vmem:[%s470] sm:$0xff]
      %v472 = vld [vmem:[%s470 + $0x8] sm:$0xff]
      %v473 = vld [vmem:[%s470 + $0x10] sm:$0xf]
      %v474 = vld [vmem:[%s470 + $0x14] sm:$0xff]
      %v475 = vld [vmem:[%s470 + $0x1c] sm:$0xff]
      %v476 = vld [vmem:[%s470 + $0x24] sm:$0xf]
      %v477 = vld [vmem:[%s470 + $0x28] sm:$0xff]
      %v478 = vld [vmem:[%s470 + $0x30] sm:$0xff]
      %v479 = vld [vmem:[%s470 + $0x38] sm:$0xf]
      %v480 = vld [vmem:[%s470 + $0x3c] sm:$0xff]
      %v481 = vld [vmem:[%s470 + $0x44] sm:$0xff]
      %v482 = vld [vmem:[%s470 + $0x4c] sm:$0xf]
      %v483 = vld [vmem:[%s470 + $0x50] sm:$0xff]
      %v484 = vld [vmem:[%s470 + $0x58] sm:$0xff]
      %v485 = vld [vmem:[%s470 + $0x60] sm:$0xf]
      %v486 = vld [vmem:[%s470 + $0x64] sm:$0xff]
      %v487 = vld [vmem:[%s470 + $0x6c] sm:$0xff]
      %v488 = vld [vmem:[%s470 + $0x74] sm:$0xf]
      %v489 = vld [vmem:[%s470 + $0x78] sm:$0xff]
      %v490 = vld [vmem:[%s470 + $0x80] sm:$0xff]
      %v491 = vld [vmem:[%s470 + $0x88] sm:$0xf]
      %v492 = vld [vmem:[%s470 + $0x8c] sm:$0xff]
      %v493 = vld [vmem:[%s470 + $0x94] sm:$0xff]
      %v494 = vld [vmem:[%s470 + $0x9c] sm:$0xf]
      %v495 = vld [vmem:[%s470 + $0xa0] sm:$0xff]
      %v496 = vld [vmem:[%s470 + $0xa8] sm:$0xff]
      %v497 = vld [vmem:[%s470 + $0xb0] sm:$0xf]
      %v525 = vunpack.c.l.b16 %v471
      %v526 = vunpack.c.h.b16 %v471
      %v527 = vunpack.c.l.b16 %v472
      %v528 = vunpack.c.h.b16 %v472
      %v529 = vunpack.c.l.b16 %v473
      %v530 = vunpack.c.l.b16 %v474
      %v531 = vunpack.c.h.b16 %v474
      %v532 = vunpack.c.l.b16 %v475
      %v533 = vunpack.c.h.b16 %v475
      %v534 = vunpack.c.l.b16 %v476
      %v535 = vunpack.c.l.b16 %v477
      %v536 = vunpack.c.h.b16 %v477
      %v537 = vunpack.c.l.b16 %v478
      %v538 = vunpack.c.h.b16 %v478
      %v539 = vunpack.c.l.b16 %v479
      %v540 = vunpack.c.l.b16 %v480
      %v541 = vunpack.c.h.b16 %v480
      %v542 = vunpack.c.l.b16 %v481
      %v543 = vunpack.c.h.b16 %v481
      %v544 = vunpack.c.l.b16 %v482
      %v545 = vunpack.c.l.b16 %v483
      %v546 = vunpack.c.h.b16 %v483
      %v547 = vunpack.c.l.b16 %v484
      %v548 = vunpack.c.h.b16 %v484
      %v549 = vunpack.c.l.b16 %v485
      %v550 = vunpack.c.l.b16 %v486
      %v551 = vunpack.c.h.b16 %v486
      %v552 = vunpack.c.l.b16 %v487
      %v553 = vunpack.c.h.b16 %v487
      %v554 = vunpack.c.l.b16 %v488
      %v555 = vunpack.c.l.b16 %v489
      %v556 = vunpack.c.h.b16 %v489
      %v557 = vunpack.c.l.b16 %v490
      %v558 = vunpack.c.h.b16 %v490
      %v559 = vunpack.c.l.b16 %v491
      %v560 = vunpack.c.l.b16 %v492
      %v561 = vunpack.c.h.b16 %v492
      %v562 = vunpack.c.l.b16 %v493
      %v563 = vunpack.c.h.b16 %v493
      %v564 = vunpack.c.l.b16 %v494
      %v565 = vunpack.c.l.b16 %v495
      %v566 = vunpack.c.h.b16 %v495
      %v567 = vunpack.c.l.b16 %v496
      %v568 = vunpack.c.h.b16 %v496
      %v569 = vunpack.c.l.b16 %v497
      %v570 = vpack.c.b16 %v530, %v525
      %v571 = vpack.c.b16 %v531, %v526
      %v572 = vpack.c.b16 %v532, %v527
      %v573 = vpack.c.b16 %v533, %v528
      %v574 = vpack.c.b16 %v534, %v529
      %v575 = vpack.c.b16 %v540, %v535
      %v576 = vpack.c.b16 %v541, %v536
      %v577 = vpack.c.b16 %v542, %v537
      %v578 = vpack.c.b16 %v543, %v538
      %v579 = vpack.c.b16 %v544, %v539
      %v580 = vpack.c.b16 %v550, %v545
      %v581 = vpack.c.b16 %v551, %v546
      %v582 = vpack.c.b16 %v552, %v547
      %v583 = vpack.c.b16 %v553, %v548
      %v584 = vpack.c.b16 %v554, %v549
      %v585 = vpack.c.b16 %v560, %v555
      %v586 = vpack.c.b16 %v561, %v556
      %v587 = vpack.c.b16 %v562, %v557
      %v588 = vpack.c.b16 %v563, %v558
      %v589 = vpack.c.b16 %v564, %v559
      %v590 = vpack.c.b16 %v565, %v565
      %v591 = vpack.c.b16 %v566, %v566
      %v592 = vpack.c.b16 %v567, %v567
      %v593 = vpack.c.b16 %v568, %v568
      %v594 = vpack.c.b16 %v569, %v569
      %v616 = vsel %vm327, %v590, 0
      %v619 = vsel %vm327, %v591, 0
      %v622 = vsel %vm327, %v592, 0
      %v625 = vsel %vm327, %v593, 0
      %v628 = vsel %vm327, %v594, 0
      %630 = vmatprep.subr.bf16.mxu0 %v571
      %631 = vmatpush1.bf16.msra.mxu0 %v570
      %632 = vmatprep.subr.bf16.mxu0 %v576
      %633 = vmatpush1.bf16.msra.mxu0 %v575
      %634 = vmatprep.subr.bf16.mxu0 %v581
      %635 = vmatpush1.bf16.msra.mxu0 %v580
      %636 = vmatprep.subr.bf16.mxu0 %v586
      %637 = vmatpush1.bf16.msra.mxu0 %v585
      %638 = vmatprep.subr.bf16.mxu0 %v619
      %639 = vmatpush1.bf16.msra.mxu0 %v616
      %640 = vmatprep.subr.bf16.mxu0 0
      %641 = vmatpush1.bf16.msra.mxu0 0
      %642 = vmatprep.subr.bf16.mxu0 0
      %643 = vmatpush1.bf16.msra.mxu0 0
      %644 = vmatprep.subr.bf16.mxu0 0
      %645 = vmatpush1.bf16.msra.mxu0 0
      %646 = vmatprep.subr.bf16.mxu0 0
      %647 = vmatpush1.bf16.msra.mxu0 0
      %648 = vmatprep.subr.bf16.mxu0 0
      %649 = vmatpush1.bf16.msra.mxu0 0
      %650 = vmatprep.subr.bf16.mxu0 0
      %651 = vmatpush1.bf16.msra.mxu0 0
      %652 = vmatprep.subr.bf16.mxu0 0
      %653 = vmatpush1.bf16.msra.mxu0 0
      %654 = vmatprep.subr.bf16.mxu0 0
      %655 = vmatpush1.bf16.msra.mxu0 0
      %656 = vmatprep.subr.bf16.mxu0 0
      %657 = vmatpush1.bf16.msra.mxu0 0
      %658 = vmatprep.subr.bf16.mxu0 0
      %659 = vmatpush1.bf16.msra.mxu0 0
      %660 = vmatprep.subr.bf16.mxu0 0
      %661 = vmatpush1.bf16.msra.mxu0 0
      %662 = vmatprep.mubr.bf16.mxu0 0
      %663 = vmatmul.mubr.bf16.gmra.mrb[0].mxu0 %v325
      %v664 = vpop.f32.mrb[0].mxu0
      %v665 = vadd.f32 0.0, %v664
      %v666 = vpop.f32.mrb[0].mxu0
      %v667 = vadd.f32 0.0, %v666
      %v668 = vpop.f32.mrb[0].mxu0
      %v669 = vadd.f32 0.0, %v668
      %v670 = vpop.f32.mrb[0].mxu0
      %v671 = vadd.f32 0.0, %v670
      %672 = vdwg.mxu0
      %673 = vmatprep.subr.bf16.mxu0 %v573
      %674 = vmatpush1.bf16.msra.mxu0 %v572
      %675 = vmatprep.subr.bf16.mxu0 %v578
      %676 = vmatpush1.bf16.msra.mxu0 %v577
      %677 = vmatprep.subr.bf16.mxu0 %v583
      %678 = vmatpush1.bf16.msra.mxu0 %v582
      %679 = vmatprep.subr.bf16.mxu0 %v588
      %680 = vmatpush1.bf16.msra.mxu0 %v587
      %681 = vmatprep.subr.bf16.mxu0 %v625
      %682 = vmatpush1.bf16.msra.mxu0 %v622
      %683 = vmatprep.subr.bf16.mxu0 0
      %684 = vmatpush1.bf16.msra.mxu0 0
      %685 = vmatprep.subr.bf16.mxu0 0
      %686 = vmatpush1.bf16.msra.mxu0 0
      %687 = vmatprep.subr.bf16.mxu0 0
      %688 = vmatpush1.bf16.msra.mxu0 0
      %689 = vmatprep.subr.bf16.mxu0 0
      %690 = vmatpush1.bf16.msra.mxu0 0
      %691 = vmatprep.subr.bf16.mxu0 0
      %692 = vmatpush1.bf16.msra.mxu0 0
      %693 = vmatprep.subr.bf16.mxu0 0
      %694 = vmatpush1.bf16.msra.mxu0 0
      %695 = vmatprep.subr.bf16.mxu0 0
      %696 = vmatpush1.bf16.msra.mxu0 0
      %697 = vmatprep.subr.bf16.mxu0 0
      %698 = vmatpush1.bf16.msra.mxu0 0
      %699 = vmatprep.subr.bf16.mxu0 0
      %700 = vmatpush1.bf16.msra.mxu0 0
      %701 = vmatprep.subr.bf16.mxu0 0
      %702 = vmatpush1.bf16.msra.mxu0 0
      %703 = vmatprep.subr.bf16.mxu0 0
      %704 = vmatpush1.bf16.msra.mxu0 0
      %705 = vmatprep.mubr.bf16.mxu0 0
      %706 = vmatmul.mubr.bf16.gmra.mrb[0].mxu0 %v325
      %v707 = vpop.f32.mrb[0].mxu0
      %v708 = vadd.f32 0.0, %v707
      %v709 = vpop.f32.mrb[0].mxu0
      %v710 = vadd.f32 0.0, %v709
      %v711 = vpop.f32.mrb[0].mxu0
      %v712 = vadd.f32 0.0, %v711
      %v713 = vpop.f32.mrb[0].mxu0
      %v714 = vadd.f32 0.0, %v713
      %715 = vdwg.mxu0
      %716 = vmatprep.subr.bf16.mxu0 0
      %717 = vmatpush1.bf16.msra.mxu0 %v574
      %718 = vmatprep.subr.bf16.mxu0 0
      %719 = vmatpush1.bf16.msra.mxu0 %v579
      %720 = vmatprep.subr.bf16.mxu0 0
      %721 = vmatpush1.bf16.msra.mxu0 %v584
      %722 = vmatprep.subr.bf16.mxu0 0
      %723 = vmatpush1.bf16.msra.mxu0 %v589
      %724 = vmatprep.subr.bf16.mxu0 0
      %725 = vmatpush1.bf16.msra.mxu0 %v628
      %726 = vmatprep.subr.bf16.mxu0 0
      %727 = vmatpush1.bf16.msra.mxu0 0
      %728 = vmatprep.subr.bf16.mxu0 0
      %729 = vmatpush1.bf16.msra.mxu0 0
      %730 = vmatprep.subr.bf16.mxu0 0
      %731 = vmatpush1.bf16.msra.mxu0 0
      %732 = vmatprep.subr.bf16.mxu0 0
      %733 = vmatpush1.bf16.msra.mxu0 0
      %734 = vmatprep.subr.bf16.mxu0 0
      %735 = vmatpush1.bf16.msra.mxu0 0
      %736 = vmatprep.subr.bf16.mxu0 0
      %737 = vmatpush1.bf16.msra.mxu0 0
      %738 = vmatprep.subr.bf16.mxu0 0
      %739 = vmatpush1.bf16.msra.mxu0 0
      %740 = vmatprep.subr.bf16.mxu0 0
      %741 = vmatpush1.bf16.msra.mxu0 0
      %742 = vmatprep.subr.bf16.mxu0 0
      %743 = vmatpush1.bf16.msra.mxu0 0
      %744 = vmatprep.subr.bf16.mxu0 0
      %745 = vmatpush1.bf16.msra.mxu0 0
      %746 = vmatprep.subr.bf16.mxu0 0
      %747 = vmatpush1.bf16.msra.mxu0 0
      %748 = vmatprep.mubr.bf16.mxu0 0
      %749 = vmatmul.mubr.bf16.gmra.mrb[0].mxu0 %v325
      %v750 = vpop.f32.mrb[0].mxu0
      %v751 = vadd.f32 0.0, %v750
      %v752 = vpop.f32.mrb[0].mxu0
      %v753 = vpop.f32.mrb[0].mxu0
      %v754 = vadd.f32 0.0, %v753
      %v755 = vpop.f32.mrb[0].mxu0
      %756 = vdwg.mxu0
      %v757 = vmax.f32 %v378, %v665
      %v758 = vmax.f32 %v380, %v667
      %v759 = vmax.f32 %v421, %v708
      %v760 = vmax.f32 %v423, %v710
      %v761 = vmax.f32 %v464, %v751
      %v762 = vmax.f32 %v382, %v669
      %v763 = vmax.f32 %v384, %v671
      %v764 = vmax.f32 %v425, %v712
      %v765 = vmax.f32 %v427, %v714
      %v766 = vmax.f32 %v467, %v754
      %s767 = scalar_lea.vmem %s165, 360
      %v768 = vld [vmem:[%s767] sm:$0xff]
      %v769 = vld [vmem:[%s767 + $0x8] sm:$0xff]
      %v770 = vld [vmem:[%s767 + $0x10] sm:$0xf]
      %v771 = vld [vmem:[%s767 + $0x14] sm:$0xff]
      %v772 = vld [vmem:[%s767 + $0x1c] sm:$0xff]
      %v773 = vld [vmem:[%s767 + $0x24] sm:$0xf]
      %v774 = vld [vmem:[%s767 + $0x28] sm:$0xff]
      %v775 = vld [vmem:[%s767 + $0x30] sm:$0xff]
      %v776 = vld [vmem:[%s767 + $0x38] sm:$0xf]
      %v777 = vld [vmem:[%s767 + $0x3c] sm:$0xff]
      %v778 = vld [vmem:[%s767 + $0x44] sm:$0xff]
      %v779 = vld [vmem:[%s767 + $0x4c] sm:$0xf]
      %v780 = vld [vmem:[%s767 + $0x50] sm:$0xff]
      %v781 = vld [vmem:[%s767 + $0x58] sm:$0xff]
      %v782 = vld [vmem:[%s767 + $0x60] sm:$0xf]
      %v783 = vld [vmem:[%s767 + $0x64] sm:$0xff]
      %v784 = vld [vmem:[%s767 + $0x6c] sm:$0xff]
      %v785 = vld [vmem:[%s767 + $0x74] sm:$0xf]
      %v786 = vld [vmem:[%s767 + $0x78] sm:$0xff]
      %v787 = vld [vmem:[%s767 + $0x80] sm:$0xff]
      %v788 = vld [vmem:[%s767 + $0x88] sm:$0xf]
      %v789 = vld [vmem:[%s767 + $0x8c] sm:$0xff]
      %v790 = vld [vmem:[%s767 + $0x94] sm:$0xff]
      %v791 = vld [vmem:[%s767 + $0x9c] sm:$0xf]
      %v792 = vld [vmem:[%s767 + $0xa0] sm:$0xff]
      %v793 = vld [vmem:[%s767 + $0xa8] sm:$0xff]
      %v794 = vld [vmem:[%s767 + $0xb0] sm:$0xf]
      %v822 = vunpack.c.l.b16 %v768
      %v823 = vunpack.c.h.b16 %v768
      %v824 = vunpack.c.l.b16 %v769
      %v825 = vunpack.c.h.b16 %v769
      %v826 = vunpack.c.l.b16 %v770
      %v827 = vunpack.c.l.b16 %v771
      %v828 = vunpack.c.h.b16 %v771
      %v829 = vunpack.c.l.b16 %v772
      %v830 = vunpack.c.h.b16 %v772
      %v831 = vunpack.c.l.b16 %v773
      %v832 = vunpack.c.l.b16 %v774
      %v833 = vunpack.c.h.b16 %v774
      %v834 = vunpack.c.l.b16 %v775
      %v835 = vunpack.c.h.b16 %v775
      %v836 = vunpack.c.l.b16 %v776
      %v837 = vunpack.c.l.b16 %v777
      %v838 = vunpack.c.h.b16 %v777
      %v839 = vunpack.c.l.b16 %v778
      %v840 = vunpack.c.h.b16 %v778
      %v841 = vunpack.c.l.b16 %v779
      %v842 = vunpack.c.l.b16 %v780
      %v843 = vunpack.c.h.b16 %v780
      %v844 = vunpack.c.l.b16 %v781
      %v845 = vunpack.c.h.b16 %v781
      %v846 = vunpack.c.l.b16 %v782
      %v847 = vunpack.c.l.b16 %v783
      %v848 = vunpack.c.h.b16 %v783
      %v849 = vunpack.c.l.b16 %v784
      %v850 = vunpack.c.h.b16 %v784
      %v851 = vunpack.c.l.b16 %v785
      %v852 = vunpack.c.l.b16 %v786
      %v853 = vunpack.c.h.b16 %v786
      %v854 = vunpack.c.l.b16 %v787
      %v855 = vunpack.c.h.b16 %v787
      %v856 = vunpack.c.l.b16 %v788
      %v857 = vunpack.c.l.b16 %v789
      %v858 = vunpack.c.h.b16 %v789
      %v859 = vunpack.c.l.b16 %v790
      %v860 = vunpack.c.h.b16 %v790
      %v861 = vunpack.c.l.b16 %v791
      %v862 = vunpack.c.l.b16 %v792
      %v863 = vunpack.c.h.b16 %v792
      %v864 = vunpack.c.l.b16 %v793
      %v865 = vunpack.c.h.b16 %v793
      %v866 = vunpack.c.l.b16 %v794
      %v867 = vpack.c.b16 %v827, %v822
      %v868 = vpack.c.b16 %v828, %v823
      %v869 = vpack.c.b16 %v829, %v824
      %v870 = vpack.c.b16 %v830, %v825
      %v871 = vpack.c.b16 %v831, %v826
      %v872 = vpack.c.b16 %v837, %v832
      %v873 = vpack.c.b16 %v838, %v833
      %v874 = vpack.c.b16 %v839, %v834
      %v875 = vpack.c.b16 %v840, %v835
      %v876 = vpack.c.b16 %v841, %v836
      %v877 = vpack.c.b16 %v847, %v842
      %v878 = vpack.c.b16 %v848, %v843
      %v879 = vpack.c.b16 %v849, %v844
      %v880 = vpack.c.b16 %v850, %v845
      %v881 = vpack.c.b16 %v851, %v846
      %v882 = vpack.c.b16 %v857, %v852
      %v883 = vpack.c.b16 %v858, %v853
      %v884 = vpack.c.b16 %v859, %v854
      %v885 = vpack.c.b16 %v860, %v855
      %v886 = vpack.c.b16 %v861, %v856
      %v887 = vpack.c.b16 %v862, %v862
      %v888 = vpack.c.b16 %v863, %v863
      %v889 = vpack.c.b16 %v864, %v864
      %v890 = vpack.c.b16 %v865, %v865
      %v891 = vpack.c.b16 %v866, %v866
      %v913 = vsel %vm327, %v887, 0
      %v916 = vsel %vm327, %v888, 0
      %v919 = vsel %vm327, %v889, 0
      %v922 = vsel %vm327, %v890, 0
      %v925 = vsel %vm327, %v891, 0
      %927 = vmatprep.subr.bf16.mxu0 %v868
      %928 = vmatpush1.bf16.msra.mxu0 %v867
      %929 = vmatprep.subr.bf16.mxu0 %v873
      %930 = vmatpush1.bf16.msra.mxu0 %v872
      %931 = vmatprep.subr.bf16.mxu0 %v878
      %932 = vmatpush1.bf16.msra.mxu0 %v877
      %933 = vmatprep.subr.bf16.mxu0 %v883
      %934 = vmatpush1.bf16.msra.mxu0 %v882
      %935 = vmatprep.subr.bf16.mxu0 %v916
      %936 = vmatpush1.bf16.msra.mxu0 %v913
      %937 = vmatprep.subr.bf16.mxu0 0
      %938 = vmatpush1.bf16.msra.mxu0 0
      %939 = vmatprep.subr.bf16.mxu0 0
      %940 = vmatpush1.bf16.msra.mxu0 0
      %941 = vmatprep.subr.bf16.mxu0 0
      %942 = vmatpush1.bf16.msra.mxu0 0
      %943 = vmatprep.subr.bf16.mxu0 0
      %944 = vmatpush1.bf16.msra.mxu0 0
      %945 = vmatprep.subr.bf16.mxu0 0
      %946 = vmatpush1.bf16.msra.mxu0 0
      %947 = vmatprep.subr.bf16.mxu0 0
      %948 = vmatpush1.bf16.msra.mxu0 0
      %949 = vmatprep.subr.bf16.mxu0 0
      %950 = vmatpush1.bf16.msra.mxu0 0
      %951 = vmatprep.subr.bf16.mxu0 0
      %952 = vmatpush1.bf16.msra.mxu0 0
      %953 = vmatprep.subr.bf16.mxu0 0
      %954 = vmatpush1.bf16.msra.mxu0 0
      %955 = vmatprep.subr.bf16.mxu0 0
      %956 = vmatpush1.bf16.msra.mxu0 0
      %957 = vmatprep.subr.bf16.mxu0 0
      %958 = vmatpush1.bf16.msra.mxu0 0
      %959 = vmatprep.mubr.bf16.mxu0 0
      %960 = vmatmul.mubr.bf16.gmra.mrb[0].mxu0 %v325
      %v961 = vpop.f32.mrb[0].mxu0
      %v962 = vadd.f32 0.0, %v961
      %v963 = vpop.f32.mrb[0].mxu0
      %v964 = vadd.f32 0.0, %v963
      %v965 = vpop.f32.mrb[0].mxu0
      %v966 = vadd.f32 0.0, %v965
      %v967 = vpop.f32.mrb[0].mxu0
      %v968 = vadd.f32 0.0, %v967
      %969 = vdwg.mxu0
      %970 = vmatprep.subr.bf16.mxu0 %v870
      %971 = vmatpush1.bf16.msra.mxu0 %v869
      %972 = vmatprep.subr.bf16.mxu0 %v875
      %973 = vmatpush1.bf16.msra.mxu0 %v874
      %974 = vmatprep.subr.bf16.mxu0 %v880
      %975 = vmatpush1.bf16.msra.mxu0 %v879
      %976 = vmatprep.subr.bf16.mxu0 %v885
      %977 = vmatpush1.bf16.msra.mxu0 %v884
      %978 = vmatprep.subr.bf16.mxu0 %v922
      %979 = vmatpush1.bf16.msra.mxu0 %v919
      %980 = vmatprep.subr.bf16.mxu0 0
      %981 = vmatpush1.bf16.msra.mxu0 0
      %982 = vmatprep.subr.bf16.mxu0 0
      %983 = vmatpush1.bf16.msra.mxu0 0
      %984 = vmatprep.subr.bf16.mxu0 0
      %985 = vmatpush1.bf16.msra.mxu0 0
      %986 = vmatprep.subr.bf16.mxu0 0
      %987 = vmatpush1.bf16.msra.mxu0 0
      %988 = vmatprep.subr.bf16.mxu0 0
      %989 = vmatpush1.bf16.msra.mxu0 0
      %990 = vmatprep.subr.bf16.mxu0 0
      %991 = vmatpush1.bf16.msra.mxu0 0
      %992 = vmatprep.subr.bf16.mxu0 0
      %993 = vmatpush1.bf16.msra.mxu0 0
      %994 = vmatprep.subr.bf16.mxu0 0
      %995 = vmatpush1.bf16.msra.mxu0 0
      %996 = vmatprep.subr.bf16.mxu0 0
      %997 = vmatpush1.bf16.msra.mxu0 0
      %998 = vmatprep.subr.bf16.mxu0 0
      %999 = vmatpush1.bf16.msra.mxu0 0
      %1000 = vmatprep.subr.bf16.mxu0 0
      %1001 = vmatpush1.bf16.msra.mxu0 0
      %1002 = vmatprep.mubr.bf16.mxu0 0
      %1003 = vmatmul.mubr.bf16.gmra.mrb[0].mxu0 %v325
      %v1004 = vpop.f32.mrb[0].mxu0
      %v1005 = vadd.f32 0.0, %v1004
      %v1006 = vpop.f32.mrb[0].mxu0
      %v1007 = vadd.f32 0.0, %v1006
      %v1008 = vpop.f32.mrb[0].mxu0
      %v1009 = vadd.f32 0.0, %v1008
      %v1010 = vpop.f32.mrb[0].mxu0
      %v1011 = vadd.f32 0.0, %v1010
      %1012 = vdwg.mxu0
      %1013 = vmatprep.subr.bf16.mxu0 0
      %1014 = vmatpush1.bf16.msra.mxu0 %v871
      %1015 = vmatprep.subr.bf16.mxu0 0
      %1016 = vmatpush1.bf16.msra.mxu0 %v876
      %1017 = vmatprep.subr.bf16.mxu0 0
      %1018 = vmatpush1.bf16.msra.mxu0 %v881
      %1019 = vmatprep.subr.bf16.mxu0 0
      %1020 = vmatpush1.bf16.msra.mxu0 %v886
      %1021 = vmatprep.subr.bf16.mxu0 0
      %1022 = vmatpush1.bf16.msra.mxu0 %v925
      %1023 = vmatprep.subr.bf16.mxu0 0
      %1024 = vmatpush1.bf16.msra.mxu0 0
      %1025 = vmatprep.subr.bf16.mxu0 0
      %1026 = vmatpush1.bf16.msra.mxu0 0
      %1027 = vmatprep.subr.bf16.mxu0 0
      %1028 = vmatpush1.bf16.msra.mxu0 0
      %1029 = vmatprep.subr.bf16.mxu0 0
      %1030 = vmatpush1.bf16.msra.mxu0 0
      %1031 = vmatprep.subr.bf16.mxu0 0
      %1032 = vmatpush1.bf16.msra.mxu0 0
      %1033 = vmatprep.subr.bf16.mxu0 0
      %1034 = vmatpush1.bf16.msra.mxu0 0
      %1035 = vmatprep.subr.bf16.mxu0 0
      %1036 = vmatpush1.bf16.msra.mxu0 0
      %1037 = vmatprep.subr.bf16.mxu0 0
      %1038 = vmatpush1.bf16.msra.mxu0 0
      %1039 = vmatprep.subr.bf16.mxu0 0
      %1040 = vmatpush1.bf16.msra.mxu0 0
      %1041 = vmatprep.subr.bf16.mxu0 0
      %1042 = vmatpush1.bf16.msra.mxu0 0
      %1043 = vmatprep.subr.bf16.mxu0 0
      %1044 = vmatpush1.bf16.msra.mxu0 0
      %1045 = vmatprep.mubr.bf16.mxu0 0
      %1046 = vmatmul.mubr.bf16.gmra.mrb[0].mxu0 %v325
      %v1047 = vpop.f32.mrb[0].mxu0
      %v1048 = vadd.f32 0.0, %v1047
      %v1049 = vpop.f32.mrb[0].mxu0
      %v1050 = vpop.f32.mrb[0].mxu0
      %v1051 = vadd.f32 0.0, %v1050
      %v1052 = vpop.f32.mrb[0].mxu0
      %1053 = vdwg.mxu0
      %v1054 = vmax.f32 %v757, %v962
      %v1055 = vmax.f32 %v758, %v964
      %v1056 = vmax.f32 %v759, %v1005
      %v1057 = vmax.f32 %v760, %v1007
      %v1058 = vmax.f32 %v761, %v1048
      %v1059 = vmax.f32 %v762, %v966
      %v1060 = vmax.f32 %v763, %v968
      %v1061 = vmax.f32 %v764, %v1009
      %v1062 = vmax.f32 %v765, %v1011
      %v1063 = vmax.f32 %v766, %v1051
      %s1064 = scalar_lea.vmem %s165, 540
      %v1065 = vld [vmem:[%s1064] sm:$0xff]
      %v1066 = vld [vmem:[%s1064 + $0x8] sm:$0xff]
      %v1067 = vld [vmem:[%s1064 + $0x10] sm:$0xf]
      %v1068 = vld [vmem:[%s1064 + $0x14] sm:$0xff]
      %v1069 = vld [vmem:[%s1064 + $0x1c] sm:$0xff]
      %v1070 = vld [vmem:[%s1064 + $0x24] sm:$0xf]
      %v1071 = vld [vmem:[%s1064 + $0x28] sm:$0xff]
      %v1072 = vld [vmem:[%s1064 + $0x30] sm:$0xff]
      %v1073 = vld [vmem:[%s1064 + $0x38] sm:$0xf]
      %v1074 = vld [vmem:[%s1064 + $0x3c] sm:$0xff]
      %v1075 = vld [vmem:[%s1064 + $0x44] sm:$0xff]
      %v1076 = vld [vmem:[%s1064 + $0x4c] sm:$0xf]
      %v1077 = vld [vmem:[%s1064 + $0x50] sm:$0xff]
      %v1078 = vld [vmem:[%s1064 + $0x58] sm:$0xff]
      %v1079 = vld [vmem:[%s1064 + $0x60] sm:$0xf]
      %v1080 = vld [vmem:[%s1064 + $0x64] sm:$0xff]
      %v1081 = vld [vmem:[%s1064 + $0x6c] sm:$0xff]
      %v1082 = vld [vmem:[%s1064 + $0x74] sm:$0xf]
      %v1083 = vld [vmem:[%s1064 + $0x78] sm:$0xff]
      %v1084 = vld [vmem:[%s1064 + $0x80] sm:$0xff]
      %v1085 = vld [vmem:[%s1064 + $0x88] sm:$0xf]
      %v1086 = vld [vmem:[%s1064 + $0x8c] sm:$0xff]
      %v1087 = vld [vmem:[%s1064 + $0x94] sm:$0xff]
      %v1088 = vld [vmem:[%s1064 + $0x9c] sm:$0xf]
      %v1089 = vld [vmem:[%s1064 + $0xa0] sm:$0xff]
      %v1090 = vld [vmem:[%s1064 + $0xa8] sm:$0xff]
      %v1091 = vld [vmem:[%s1064 + $0xb0] sm:$0xf]
      %v1119 = vunpack.c.l.b16 %v1065
      %v1120 = vunpack.c.h.b16 %v1065
      %v1121 = vunpack.c.l.b16 %v1066
      %v1122 = vunpack.c.h.b16 %v1066
      %v1123 = vunpack.c.l.b16 %v1067
      %v1124 = vunpack.c.l.b16 %v1068
      %v1125 = vunpack.c.h.b16 %v1068
      %v1126 = vunpack.c.l.b16 %v1069
      %v1127 = vunpack.c.h.b16 %v1069
      %v1128 = vunpack.c.l.b16 %v1070
      %v1129 = vunpack.c.l.b16 %v1071
      %v1130 = vunpack.c.h.b16 %v1071
      %v1131 = vunpack.c.l.b16 %v1072
      %v1132 = vunpack.c.h.b16 %v1072
      %v1133 = vunpack.c.l.b16 %v1073
      %v1134 = vunpack.c.l.b16 %v1074
      %v1135 = vunpack.c.h.b16 %v1074
      %v1136 = vunpack.c.l.b16 %v1075
      %v1137 = vunpack.c.h.b16 %v1075
      %v1138 = vunpack.c.l.b16 %v1076
      %v1139 = vunpack.c.l.b16 %v1077
      %v1140 = vunpack.c.h.b16 %v1077
      %v1141 = vunpack.c.l.b16 %v1078
      %v1142 = vunpack.c.h.b16 %v1078
      %v1143 = vunpack.c.l.b16 %v1079
      %v1144 = vunpack.c.l.b16 %v1080
      %v1145 = vunpack.c.h.b16 %v1080
      %v1146 = vunpack.c.l.b16 %v1081
      %v1147 = vunpack.c.h.b16 %v1081
      %v1148 = vunpack.c.l.b16 %v1082
      %v1149 = vunpack.c.l.b16 %v1083
      %v1150 = vunpack.c.h.b16 %v1083
      %v1151 = vunpack.c.l.b16 %v1084
      %v1152 = vunpack.c.h.b16 %v1084
      %v1153 = vunpack.c.l.b16 %v1085
      %v1154 = vunpack.c.l.b16 %v1086
      %v1155 = vunpack.c.h.b16 %v1086
      %v1156 = vunpack.c.l.b16 %v1087
      %v1157 = vunpack.c.h.b16 %v1087
      %v1158 = vunpack.c.l.b16 %v1088
      %v1159 = vunpack.c.l.b16 %v1089
      %v1160 = vunpack.c.h.b16 %v1089
      %v1161 = vunpack.c.l.b16 %v1090
      %v1162 = vunpack.c.h.b16 %v1090
      %v1163 = vunpack.c.l.b16 %v1091
      %v1164 = vpack.c.b16 %v1124, %v1119
      %v1165 = vpack.c.b16 %v1125, %v1120
      %v1166 = vpack.c.b16 %v1126, %v1121
      %v1167 = vpack.c.b16 %v1127, %v1122
      %v1168 = vpack.c.b16 %v1128, %v1123
      %v1169 = vpack.c.b16 %v1134, %v1129
      %v1170 = vpack.c.b16 %v1135, %v1130
      %v1171 = vpack.c.b16 %v1136, %v1131
      %v1172 = vpack.c.b16 %v1137, %v1132
      %v1173 = vpack.c.b16 %v1138, %v1133
      %v1174 = vpack.c.b16 %v1144, %v1139
      %v1175 = vpack.c.b16 %v1145, %v1140
      %v1176 = vpack.c.b16 %v1146, %v1141
      %v1177 = vpack.c.b16 %v1147, %v1142
      %v1178 = vpack.c.b16 %v1148, %v1143
      %v1179 = vpack.c.b16 %v1154, %v1149
      %v1180 = vpack.c.b16 %v1155, %v1150
      %v1181 = vpack.c.b16 %v1156, %v1151
      %v1182 = vpack.c.b16 %v1157, %v1152
      %v1183 = vpack.c.b16 %v1158, %v1153
      %v1184 = vpack.c.b16 %v1159, %v1159
      %v1185 = vpack.c.b16 %v1160, %v1160
      %v1186 = vpack.c.b16 %v1161, %v1161
      %v1187 = vpack.c.b16 %v1162, %v1162
      %v1188 = vpack.c.b16 %v1163, %v1163
      %v1210 = vsel %vm327, %v1184, 0
      %v1213 = vsel %vm327, %v1185, 0
      %v1216 = vsel %vm327, %v1186, 0
      %v1219 = vsel %vm327, %v1187, 0
      %v1222 = vsel %vm327, %v1188, 0
      %1224 = vmatprep.subr.bf16.mxu0 %v1165
      %1225 = vmatpush1.bf16.msra.mxu0 %v1164
      %1226 = vmatprep.subr.bf16.mxu0 %v1170
      %1227 = vmatpush1.bf16.msra.mxu0 %v1169
      %1228 = vmatprep.subr.bf16.mxu0 %v1175
      %1229 = vmatpush1.bf16.msra.mxu0 %v1174
      %1230 = vmatprep.subr.bf16.mxu0 %v1180
      %1231 = vmatpush1.bf16.msra.mxu0 %v1179
      %1232 = vmatprep.subr.bf16.mxu0 %v1213
      %1233 = vmatpush1.bf16.msra.mxu0 %v1210
      %1234 = vmatprep.subr.bf16.mxu0 0
      %1235 = vmatpush1.bf16.msra.mxu0 0
      %1236 = vmatprep.subr.bf16.mxu0 0
      %1237 = vmatpush1.bf16.msra.mxu0 0
      %1238 = vmatprep.subr.bf16.mxu0 0
      %1239 = vmatpush1.bf16.msra.mxu0 0
      %1240 = vmatprep.subr.bf16.mxu0 0
      %1241 = vmatpush1.bf16.msra.mxu0 0
      %1242 = vmatprep.subr.bf16.mxu0 0
      %1243 = vmatpush1.bf16.msra.mxu0 0
      %1244 = vmatprep.subr.bf16.mxu0 0
      %1245 = vmatpush1.bf16.msra.mxu0 0
      %1246 = vmatprep.subr.bf16.mxu0 0
      %1247 = vmatpush1.bf16.msra.mxu0 0
      %1248 = vmatprep.subr.bf16.mxu0 0
      %1249 = vmatpush1.bf16.msra.mxu0 0
      %1250 = vmatprep.subr.bf16.mxu0 0
      %1251 = vmatpush1.bf16.msra.mxu0 0
      %1252 = vmatprep.subr.bf16.mxu0 0
      %1253 = vmatpush1.bf16.msra.mxu0 0
      %1254 = vmatprep.subr.bf16.mxu0 0
      %1255 = vmatpush1.bf16.msra.mxu0 0
      %1256 = vmatprep.mubr.bf16.mxu0 0
      %1257 = vmatmul.mubr.bf16.gmra.mrb[0].mxu0 %v325
      %v1258 = vpop.f32.mrb[0].mxu0
      %v1259 = vadd.f32 0.0, %v1258
      %v1260 = vpop.f32.mrb[0].mxu0
      %v1261 = vadd.f32 0.0, %v1260
      %v1262 = vpop.f32.mrb[0].mxu0
      %v1263 = vadd.f32 0.0, %v1262
      %v1264 = vpop.f32.mrb[0].mxu0
      %v1265 = vadd.f32 0.0, %v1264
      %1266 = vdwg.mxu0
      %1267 = vmatprep.subr.bf16.mxu0 %v1167
      %1268 = vmatpush1.bf16.msra.mxu0 %v1166
      %1269 = vmatprep.subr.bf16.mxu0 %v1172
      %1270 = vmatpush1.bf16.msra.mxu0 %v1171
      %1271 = vmatprep.subr.bf16.mxu0 %v1177
      %1272 = vmatpush1.bf16.msra.mxu0 %v1176
      %1273 = vmatprep.subr.bf16.mxu0 %v1182
      %1274 = vmatpush1.bf16.msra.mxu0 %v1181
      %1275 = vmatprep.subr.bf16.mxu0 %v1219
      %1276 = vmatpush1.bf16.msra.mxu0 %v1216
      %1277 = vmatprep.subr.bf16.mxu0 0
      %1278 = vmatpush1.bf16.msra.mxu0 0
      %1279 = vmatprep.subr.bf16.mxu0 0
      %1280 = vmatpush1.bf16.msra.mxu0 0
      %1281 = vmatprep.subr.bf16.mxu0 0
      %1282 = vmatpush1.bf16.msra.mxu0 0
      %1283 = vmatprep.subr.bf16.mxu0 0
      %1284 = vmatpush1.bf16.msra.mxu0 0
      %1285 = vmatprep.subr.bf16.mxu0 0
      %1286 = vmatpush1.bf16.msra.mxu0 0
      %1287 = vmatprep.subr.bf16.mxu0 0
      %1288 = vmatpush1.bf16.msra.mxu0 0
      %1289 = vmatprep.subr.bf16.mxu0 0
      %1290 = vmatpush1.bf16.msra.mxu0 0
      %1291 = vmatprep.subr.bf16.mxu0 0
      %1292 = vmatpush1.bf16.msra.mxu0 0
      %1293 = vmatprep.subr.bf16.mxu0 0
      %1294 = vmatpush1.bf16.msra.mxu0 0
      %1295 = vmatprep.subr.bf16.mxu0 0
      %1296 = vmatpush1.bf16.msra.mxu0 0
      %1297 = vmatprep.subr.bf16.mxu0 0
      %1298 = vmatpush1.bf16.msra.mxu0 0
      %1299 = vmatprep.mubr.bf16.mxu0 0
      %1300 = vmatmul.mubr.bf16.gmra.mrb[0].mxu0 %v325
      %v1301 = vpop.f32.mrb[0].mxu0
      %v1302 = vadd.f32 0.0, %v1301
      %v1303 = vpop.f32.mrb[0].mxu0
      %v1304 = vadd.f32 0.0, %v1303
      %v1305 = vpop.f32.mrb[0].mxu0
      %v1306 = vadd.f32 0.0, %v1305
      %v1307 = vpop.f32.mrb[0].mxu0
      %v1308 = vadd.f32 0.0, %v1307
      %1309 = vdwg.mxu0
      %1310 = vmatprep.subr.bf16.mxu0 0
      %1311 = vmatpush1.bf16.msra.mxu0 %v1168
      %1312 = vmatprep.subr.bf16.mxu0 0
      %1313 = vmatpush1.bf16.msra.mxu0 %v1173
      %1314 = vmatprep.subr.bf16.mxu0 0
      %1315 = vmatpush1.bf16.msra.mxu0 %v1178
      %1316 = vmatprep.subr.bf16.mxu0 0
      %1317 = vmatpush1.bf16.msra.mxu0 %v1183
      %1318 = vmatprep.subr.bf16.mxu0 0
      %1319 = vmatpush1.bf16.msra.mxu0 %v1222
      %1320 = vmatprep.subr.bf16.mxu0 0
      %1321 = vmatpush1.bf16.msra.mxu0 0
      %1322 = vmatprep.subr.bf16.mxu0 0
      %1323 = vmatpush1.bf16.msra.mxu0 0
      %1324 = vmatprep.subr.bf16.mxu0 0
      %1325 = vmatpush1.bf16.msra.mxu0 0
      %1326 = vmatprep.subr.bf16.mxu0 0
      %1327 = vmatpush1.bf16.msra.mxu0 0
      %1328 = vmatprep.subr.bf16.mxu0 0
      %1329 = vmatpush1.bf16.msra.mxu0 0
      %1330 = vmatprep.subr.bf16.mxu0 0
      %1331 = vmatpush1.bf16.msra.mxu0 0
      %1332 = vmatprep.subr.bf16.mxu0 0
      %1333 = vmatpush1.bf16.msra.mxu0 0
      %1334 = vmatprep.subr.bf16.mxu0 0
      %1335 = vmatpush1.bf16.msra.mxu0 0
      %1336 = vmatprep.subr.bf16.mxu0 0
      %1337 = vmatpush1.bf16.msra.mxu0 0
      %1338 = vmatprep.subr.bf16.mxu0 0
      %1339 = vmatpush1.bf16.msra.mxu0 0
      %1340 = vmatprep.subr.bf16.mxu0 0
      %1341 = vmatpush1.bf16.msra.mxu0 0
      %1342 = vmatprep.mubr.bf16.mxu0 0
      %1343 = vmatmul.mubr.bf16.gmra.mrb[0].mxu0 %v325
      %v1344 = vpop.f32.mrb[0].mxu0
      %v1345 = vadd.f32 0.0, %v1344
      %v1346 = vpop.f32.mrb[0].mxu0
      %v1347 = vpop.f32.mrb[0].mxu0
      %v1348 = vadd.f32 0.0, %v1347
      %v1349 = vpop.f32.mrb[0].mxu0
      %1350 = vdwg.mxu0
      %v1351 = vmax.f32 %v1054, %v1259
      %v1352 = vmax.f32 %v1055, %v1261
      %v1353 = vmax.f32 %v1056, %v1302
      %v1354 = vmax.f32 %v1057, %v1304
      %v1355 = vmax.f32 %v1058, %v1345
      %v1356 = vmax.f32 %v1059, %v1263
      %v1357 = vmax.f32 %v1060, %v1265
      %v1358 = vmax.f32 %v1061, %v1306
      %v1359 = vmax.f32 %v1062, %v1308
      %v1360 = vmax.f32 %v1063, %v1348
      %v1361 = vld [vmem:[%s2] sm:$0xff]
      %v1362 = vld [vmem:[%s2 + $0x8] sm:$0xff]
      %1364 = vset.pattern.permute.xlu0 0
      %1365 = vperm.xlu0 %1364, %v1361
      %v1366 = vpop.permute.xlu0 %1365
      %1369 = vset.pattern.permute.xlu0 0
      %1370 = vperm.xlu0 %1369, %v1362
      %v1371 = vpop.permute.xlu0 %1370
      %v1373 = vadd.f32 %v1351, %v1366
      %v1374 = vadd.f32 %v1352, %v1366
      %v1375 = vadd.f32 %v1353, %v1366
      %v1376 = vadd.f32 %v1354, %v1366
      %v1377 = vadd.f32 %v1355, %v1366
      %v1378 = vadd.f32 %v1356, %v1371
      %v1379 = vadd.f32 %v1357, %v1371
      %v1380 = vadd.f32 %v1358, %v1371
      %v1381 = vadd.f32 %v1359, %v1371
      %v1382 = vadd.f32 %v1360, %v1371
      %v1383 = vmax.f32 %v1373, 0.0
      %v1384 = vmax.f32 %v1374, 0.0
      %v1385 = vmax.f32 %v1375, 0.0
      %v1386 = vmax.f32 %v1376, 0.0
      %v1387 = vmax.f32 %v1377, 0.0
      %v1388 = vmax.f32 %v1378, 0.0
      %v1389 = vmax.f32 %v1379, 0.0
      %v1390 = vmax.f32 %v1380, 0.0
      %v1391 = vmax.f32 %v1381, 0.0
      %v1392 = vmax.f32 %v1382, 0.0
      %1393 = vst [vmem:[%s170] sm:$0xff] %v1383
      %1394 = vst [vmem:[%s170 + $0x8] sm:$0xff] %v1384
      %1395 = vst [vmem:[%s170 + $0x10] sm:$0xff] %v1385
      %1396 = vst [vmem:[%s170 + $0x18] sm:$0xff] %v1386
      %vm1397 = vcmask 138240
      %1398 = vst.msk [vmem:[%s170 + $0x20] sm:$0xff] %vm1397, %v1387
      %1399 = vst [vmem:[%s170 + $0x28] sm:$0xff] %v1388
      %1400 = vst [vmem:[%s170 + $0x30] sm:$0xff] %v1389
      %1401 = vst [vmem:[%s170 + $0x38] sm:$0xff] %v1390
      %1402 = vst [vmem:[%s170 + $0x40] sm:$0xff] %v1391
      %1403 = vst.msk [vmem:[%s170 + $0x48] sm:$0xff] %vm1397, %v1392
      %p1404 = scmp.lt.s32.totalorder %s14, 1
      %s1405 = scalar_select %p1404, %s14, 1
      %s1406 = smul.addr %s1405, 10
      %s1407 = smul.addr %s1406, 8
      %s1408 = scalar_lea.vmem %s3, %s1407
      // Predicated region
      $region33: #{cnn_forward.5} parent=31 // pred_check
        %p1409 = pneg %p100
      $region34: #{cnn_forward.5} parent=31 // pred_check_branch
        %1411 = sbr.rel (%p1409) target = $region36
      $region35: #{cnn_forward.5} parent=31 // pred_region
        _
      $region36: #{cnn_forward.5} parent=31 // pred_fallthru
        _
    $region32: #{cnn_forward.5} parent=5 // pred_fallthru
      _
    %p1412 = scmp.le.s32.totalorder 2, %s9
    // Predicated region
    $region37: #{cnn_forward.5} parent=5 // pred_check
      %p1413 = pneg %p1412
    $region38: #{cnn_forward.5} parent=5 // pred_check_branch
      %1415 = sbr.rel (%p1413) target = $region40
    $region39: #{cnn_forward.5} parent=5 // pred_region
      %s1416 = ssub.s32 %s9, 2
      // Predicated region
      $region41: #{cnn_forward.5} parent=39 // pred_check
        %p1417 = pneg %p106
      $region42: #{cnn_forward.5} parent=39 // pred_check_branch
        %1419 = sbr.rel (%p1417) target = $region44
      $region43: #{cnn_forward.5} parent=39 // pred_region
        %p1420 = scmp.lt.s32.totalorder %s15, 1
        %s1421 = scalar_select %p1420, %s15, 1
        %s1422 = smul.addr %s1421, 10
        %s1423 = smul.addr %s1422, 8
        %s1424 = scalar_lea.vmem %s3, %s1423
      $region44: #{cnn_forward.5} parent=39 // pred_fallthru
        _
    $region40: #{cnn_forward.5} parent=5 // pred_fallthru
      _
  $region6: #{cnn_forward.5} parent=0 // loop_footer
    %s13 = sadd.s32 1, %s9
  $region7: #{cnn_forward.5} parent=0 // loop_footer_branch
    %8 = sbr.rel target = $region3
  $region8: #{cnn_forward.5} parent=0 // loop_exit
    _

// kernel: cnn_forward.6
$region0: #{cnn_forward.6}
  #allocation0 [shape = 'u32[]', space=smem, size = 0x4, offset = 0x4, fixed_abs, tag = 'smem constant byte address 0x4 - core index']
  #allocation1 [shape = 'u32[144,128]{1,0:T(1,128)}', space=vmem, size = 0x12000, scoped, tag = 'internal scratch']
  %s0 = inlined_call_operand.vmem [shape: bf16[2,1,144,441], index: 0, kind: input, shape index: {}]
  %s1 = inlined_call_operand.vmem [shape: bf16[32,144], index: 1, kind: input, shape index: {}]
  %s2 = inlined_call_operand.vmem [shape: f32[32,1], index: 2, kind: input, shape index: {}]
  %s3 = inlined_call_operand.vmem [shape: f32[2,32,441], index: 3, kind: output, shape index: {}]
  %s4 = sld [smem:[#allocation0]]
  $region45: #{cnn_forward.6} parent=0
    _
  %s6 = ssub.s32 1, %s4
  %s7 = scalar_select 0, %s6, %s4
  loop: start=0, step=1, limit=4
  $region2: #{cnn_forward.6} parent=0 // loop_pre_header
    _
  $region3: #{cnn_forward.6} parent=0 // loop_header
    %s9 = sphi 0, %s13
    %p10 = scmp.ge.s32.totalorder %s9, 4
    %s19 = sphi 0, %s21
    %s22 = sphi 0, %s19
    %s23 = sphi 0, %s22
    %s39 = sphi 0, %s23
    %s43 = sphi 0, %s43
    %s45 = sphi 0, %s43
    %s46 = sphi 0, %s45
    %s60 = sphi 0, %s46
    %s64 = sphi 0, %s64
    %s66 = sphi 0, %s64
    %s67 = sphi 0, %s66
    %s81 = sphi 0, %s67
    %s87 = sphi 0, %s89
    %s90 = sphi 0, %s87
    %s91 = sphi 0, %s90
    %s107 = sphi 0, %s91
  $region4: #{cnn_forward.6} parent=0 // loop_header_branch
    %12 = sbr.rel (%p10) target = $region8
  $region5: #{cnn_forward.6} parent=0 // loop_body
    %s14 = ssub.s32 %s9, 1
    %s15 = ssub.s32 %s9, 2
    %s16 = sadd.s32 %s9, 1
    %s17 = ssub.s32 %s9, %s16
    %p18 = scmp.eq.s32.totalorder %s17, 0
    %s20 = sadd.s32 %s19, 1
    %s21 = scalar_select %p18, %s19, %s20
    %p24 = pneg %p18
    %p25 = scmp.eq.s32.totalorder %s9, 1
    %p26 = por %p24, %p25
    %p27 = scmp.ne.s32.totalorder %s19, %s22
    %p28 = scmp.eq.s32.totalorder %s9, 0
    %p29 = por %p27, %p28
    %p30 = scmp.ne.s32.totalorder %s19, %s22
    %p31 = scmp.eq.s32.totalorder %s14, 1
    %p32 = por %p30, %p31
    %p33 = scmp.ne.s32.totalorder %s22, %s23
    %p34 = scmp.eq.s32.totalorder %s14, 0
    %p35 = por %p33, %p34
    %p36 = scmp.ne.s32.totalorder %s22, %s23
    %p37 = scmp.eq.s32.totalorder %s15, 1
    %p38 = por %p36, %p37
    %p40 = scmp.ne.s32.totalorder %s23, %s39
    %p41 = scmp.eq.s32.totalorder %s15, 0
    %p42 = por %p40, %p41
    %s44 = sadd.s32 %s43, 1
    %p47 = scmp.eq.s32.totalorder %s9, 1
    %p48 = scmp.ne.s32.totalorder %s43, %s45
    %p49 = scmp.eq.s32.totalorder %s9, 0
    %p50 = por %p48, %p49
    %p51 = scmp.ne.s32.totalorder %s43, %s45
    %p52 = scmp.eq.s32.totalorder %s14, 1
    %p53 = por %p51, %p52
    %p54 = scmp.ne.s32.totalorder %s45, %s46
    %p55 = scmp.eq.s32.totalorder %s14, 0
    %p56 = por %p54, %p55
    %p57 = scmp.ne.s32.totalorder %s45, %s46
    %p58 = scmp.eq.s32.totalorder %s15, 1
    %p59 = por %p57, %p58
    %p61 = scmp.ne.s32.totalorder %s46, %s60
    %p62 = scmp.eq.s32.totalorder %s15, 0
    %p63 = por %p61, %p62
    %s65 = sadd.s32 %s64, 1
    %p68 = scmp.eq.s32.totalorder %s9, 1
    %p69 = scmp.ne.s32.totalorder %s64, %s66
    %p70 = scmp.eq.s32.totalorder %s9, 0
    %p71 = por %p69, %p70
    %p72 = scmp.ne.s32.totalorder %s64, %s66
    %p73 = scmp.eq.s32.totalorder %s14, 1
    %p74 = por %p72, %p73
    %p75 = scmp.ne.s32.totalorder %s66, %s67
    %p76 = scmp.eq.s32.totalorder %s14, 0
    %p77 = por %p75, %p76
    %p78 = scmp.ne.s32.totalorder %s66, %s67
    %p79 = scmp.eq.s32.totalorder %s15, 1
    %p80 = por %p78, %p79
    %p82 = scmp.ne.s32.totalorder %s67, %s81
    %p83 = scmp.eq.s32.totalorder %s15, 0
    %p84 = por %p82, %p83
    %s85 = ssub.s32 %s9, %s16
    %p86 = scmp.eq.s32.totalorder %s85, 0
    %s88 = sadd.s32 %s87, 1
    %s89 = scalar_select %p86, %s87, %s88
    %p92 = pneg %p86
    %p93 = scmp.eq.s32.totalorder %s9, 1
    %p94 = por %p92, %p93
    %p95 = scmp.ne.s32.totalorder %s87, %s90
    %p96 = scmp.eq.s32.totalorder %s9, 0
    %p97 = por %p95, %p96
    %p98 = scmp.ne.s32.totalorder %s87, %s90
    %p99 = scmp.eq.s32.totalorder %s14, 1
    %p100 = por %p98, %p99
    %p101 = scmp.ne.s32.totalorder %s90, %s91
    %p102 = scmp.eq.s32.totalorder %s14, 0
    %p103 = por %p101, %p102
    %p104 = scmp.ne.s32.totalorder %s90, %s91
    %p105 = scmp.eq.s32.totalorder %s15, 1
    %p106 = por %p104, %p105
    %p108 = scmp.ne.s32.totalorder %s91, %s107
    %p109 = scmp.eq.s32.totalorder %s15, 0
    %p110 = por %p108, %p109
    %p111 = scmp.le.s32.totalorder 1, %s9
    %p112 = scmp.lt.s32.totalorder %s9, 3
    %p113 = pnand %p111, %p112
    %p114 = pneg %p113
    // Predicated region
    $region9: #{cnn_forward.6} parent=5 // pred_check
      _
    $region10: #{cnn_forward.6} parent=5 // pred_check_branch
      %116 = sbr.rel (%p113) target = $region12
    $region11: #{cnn_forward.6} parent=5 // pred_region
      %s117 = ssub.s32 %s9, 1
      // Predicated region
      $region13: #{cnn_forward.6} parent=11 // pred_check
        %p118 = pneg %p56
      $region14: #{cnn_forward.6} parent=11 // pred_check_branch
        %120 = sbr.rel (%p118) target = $region16
      $region15: #{cnn_forward.6} parent=11 // pred_region
        _
      $region16: #{cnn_forward.6} parent=11 // pred_fallthru
        _
      // Predicated region
      $region17: #{cnn_forward.6} parent=11 // pred_check
        %p121 = pneg %p77
      $region18: #{cnn_forward.6} parent=11 // pred_check_branch
        %123 = sbr.rel (%p121) target = $region20
      $region19: #{cnn_forward.6} parent=11 // pred_region
        _
      $region20: #{cnn_forward.6} parent=11 // pred_fallthru
        _
    $region12: #{cnn_forward.6} parent=5 // pred_fallthru
      _
    %p124 = scmp.lt.s32.totalorder %s9, 2
    // Predicated region
    $region21: #{cnn_forward.6} parent=5 // pred_check
      %p125 = pneg %p124
    $region22: #{cnn_forward.6} parent=5 // pred_check_branch
      %127 = sbr.rel (%p125) target = $region24
    $region23: #{cnn_forward.6} parent=5 // pred_region
      // Predicated region
      $region25: #{cnn_forward.6} parent=23 // pred_check
        %p128 = pneg %p29
      $region26: #{cnn_forward.6} parent=23 // pred_check_branch
        %130 = sbr.rel (%p128) target = $region28
      $region27: #{cnn_forward.6} parent=23 // pred_region
        %p131 = scmp.lt.s32.totalorder %s9, 1
        %s132 = scalar_select %p131, %s9, 1
        %s133 = smul.addr %s132, 72
        %s134 = smul.addr %s133, 4
        %s135 = scalar_lea.vmem %s0, %s134
      $region28: #{cnn_forward.6} parent=23 // pred_fallthru
        _
    $region24: #{cnn_forward.6} parent=5 // pred_fallthru
      _
    %p136 = scmp.le.s32.totalorder 1, %s9
    %p137 = scmp.lt.s32.totalorder %s9, 3
    %p138 = pnand %p136, %p137
    %p139 = pneg %p138
    // Predicated region
    $region29: #{cnn_forward.6} parent=5 // pred_check
      _
    $region30: #{cnn_forward.6} parent=5 // pred_check_branch
      %141 = sbr.rel (%p138) target = $region32
    $region31: #{cnn_forward.6} parent=5 // pred_region
      %s142 = ssub.s32 %s9, 1
      %p143 = scmp.lt.s32.totalorder %s14, 1
      %s144 = scalar_select %p143, %s14, 1
      %s145 = smul.addr %s144, 72
      %s146 = smul.addr %s145, 4
      %s147 = scalar_lea.vmem %s0, %s146
      %p148 = pneg %p35
      %p149 = pneg %p32
      %p150 = pneg %p56
      %p151 = pneg %p53
      %p152 = pneg %p77
      %p153 = pneg %p74
      %p154 = pneg %p103
      %p155 = pneg %p100
      %p156 = scmp.lt.s32.totalorder %s14, 1
      %s157 = scalar_select %p156, %s14, 1
      %s158 = smul.addr %s157, 16
      %s159 = smul.addr %s158, 8
      %s160 = scalar_lea.vmem %s3, %s159
      %p161 = scmp.lt.s32.totalorder %s14, 1
      %s162 = scalar_select %p161, %s14, 1
      %s163 = smul.addr %s162, 72
      %s164 = smul.addr %s163, 4
      %s165 = scalar_lea.vmem %s0, %s164
      %p166 = scmp.lt.s32.totalorder %s14, 1
      %s167 = scalar_select %p166, %s14, 1
      %s168 = smul.addr %s167, 16
      %s169 = smul.addr %s168, 8
      %s170 = scalar_lea.vmem %s3, %s169
      %v172 = vld [vmem:[%s1] sm:$0xff]
      %v173 = vld [vmem:[%s1 + $0x8] sm:$0xff]
      %v174 = vld [vmem:[%s1 + $0x10] sm:$0xff]
      %v175 = vld [vmem:[%s1 + $0x18] sm:$0xff]
      %v176 = vld [vmem:[%s165] sm:$0xff]
      %v177 = vld [vmem:[%s165 + $0x8] sm:$0xff]
      %v178 = vld [vmem:[%s165 + $0x10] sm:$0xff]
      %v179 = vld [vmem:[%s165 + $0x18] sm:$0xff]
      %v180 = vld [vmem:[%s165 + $0x20] sm:$0xff]
      %v181 = vld [vmem:[%s165 + $0x28] sm:$0xff]
      %v182 = vld [vmem:[%s165 + $0x30] sm:$0xff]
      %v183 = vld [vmem:[%s165 + $0x38] sm:$0xff]
      %v184 = vld [vmem:[%s165 + $0x40] sm:$0xff]
      %v185 = vld [vmem:[%s165 + $0x48] sm:$0xff]
      %v186 = vld [vmem:[%s165 + $0x50] sm:$0xff]
      %v187 = vld [vmem:[%s165 + $0x58] sm:$0xff]
      %v188 = vld [vmem:[%s165 + $0x60] sm:$0xff]
      %v189 = vld [vmem:[%s165 + $0x68] sm:$0xff]
      %v190 = vld [vmem:[%s165 + $0x70] sm:$0xff]
      %v191 = vld [vmem:[%s165 + $0x78] sm:$0xff]
      %v192 = vld [vmem:[%s165 + $0x80] sm:$0xff]
      %v193 = vld [vmem:[%s165 + $0x88] sm:$0xff]
      %v194 = vld [vmem:[%s165 + $0x90] sm:$0xff]
      %v195 = vld [vmem:[%s165 + $0x98] sm:$0xff]
      %v196 = vld [vmem:[%s165 + $0xa0] sm:$0xff]
      %v197 = vld [vmem:[%s165 + $0xa8] sm:$0xff]
      %v198 = vld [vmem:[%s165 + $0xb0] sm:$0xff]
      %v199 = vld [vmem:[%s165 + $0xb8] sm:$0xff]
      %v200 = vld [vmem:[%s165 + $0xc0] sm:$0xff]
      %v201 = vld [vmem:[%s165 + $0xc8] sm:$0xff]
      %v202 = vld [vmem:[%s165 + $0xd0] sm:$0xff]
      %v203 = vld [vmem:[%s165 + $0xd8] sm:$0xff]
      %v204 = vld [vmem:[%s165 + $0xe0] sm:$0xff]
      %v205 = vld [vmem:[%s165 + $0xe8] sm:$0xff]
      %v206 = vld [vmem:[%s165 + $0xf0] sm:$0xff]
      %v207 = vld [vmem:[%s165 + $0xf8] sm:$0xff]
      %v208 = vld [vmem:[%s165 + $0x100] sm:$0xff]
      %v209 = vld [vmem:[%s165 + $0x108] sm:$0xff]
      %v210 = vld [vmem:[%s165 + $0x110] sm:$0xff]
      %v211 = vld [vmem:[%s165 + $0x118] sm:$0xff]
      %v212 = vld [vmem:[%s2] sm:$0xff]
      %v213 = vld [vmem:[%s2 + $0x8] sm:$0xff]
      %v214 = vld [vmem:[%s2 + $0x10] sm:$0xff]
      %v215 = vld [vmem:[%s2 + $0x18] sm:$0xff]
      %217 = vset.pattern.permute.xlu0 0
      %218 = vperm.xlu0 %217, %v212
      %v219 = vpop.permute.xlu0 %218
      %222 = vset.pattern.permute.xlu0 0
      %223 = vperm.xlu0 %222, %v213
      %v224 = vpop.permute.xlu0 %223
      %227 = vset.pattern.permute.xlu0 0
      %228 = vperm.xlu0 %227, %v214
      %v229 = vpop.permute.xlu0 %228
      %232 = vset.pattern.permute.xlu0 0
      %233 = vperm.xlu0 %232, %v215
      %v234 = vpop.permute.xlu0 %233
      %v240 = vunpack.c.l.b16 %v172
      %v241 = vunpack.c.h.b16 %v172
      %v242 = vunpack.c.l.b16 %v173
      %v243 = vunpack.c.h.b16 %v173
      %v244 = vunpack.c.l.b16 %v174
      %v245 = vunpack.c.h.b16 %v174
      %v246 = vunpack.c.l.b16 %v175
      %v247 = vunpack.c.h.b16 %v175
      %v248 = vpack.c.b16 %v242, %v240
      %v249 = vpack.c.b16 %v243, %v241
      %v250 = vpack.c.b16 %v246, %v244
      %v251 = vpack.c.b16 %v247, %v245
      %v290 = vunpack.c.l.b16 %v176
      %v291 = vunpack.c.h.b16 %v176
      %v292 = vunpack.c.l.b16 %v177
      %v293 = vunpack.c.h.b16 %v177
      %v294 = vunpack.c.l.b16 %v178
      %v295 = vunpack.c.h.b16 %v178
      %v296 = vunpack.c.l.b16 %v179
      %v297 = vunpack.c.h.b16 %v179
      %v298 = vunpack.c.l.b16 %v180
      %v299 = vunpack.c.h.b16 %v180
      %v300 = vunpack.c.l.b16 %v181
      %v301 = vunpack.c.h.b16 %v181
      %v302 = vunpack.c.l.b16 %v182
      %v303 = vunpack.c.h.b16 %v182
      %v304 = vunpack.c.l.b16 %v183
      %v305 = vunpack.c.h.b16 %v183
      %v306 = vunpack.c.l.b16 %v184
      %v307 = vunpack.c.h.b16 %v184
      %v308 = vunpack.c.l.b16 %v185
      %v309 = vunpack.c.h.b16 %v185
      %v310 = vunpack.c.l.b16 %v186
      %v311 = vunpack.c.h.b16 %v186
      %v312 = vunpack.c.l.b16 %v187
      %v313 = vunpack.c.h.b16 %v187
      %v314 = vunpack.c.l.b16 %v188
      %v315 = vunpack.c.h.b16 %v188
      %v316 = vunpack.c.l.b16 %v189
      %v317 = vunpack.c.h.b16 %v189
      %v318 = vunpack.c.l.b16 %v190
      %v319 = vunpack.c.h.b16 %v190
      %v320 = vunpack.c.l.b16 %v191
      %v321 = vunpack.c.h.b16 %v191
      %v322 = vunpack.c.l.b16 %v192
      %v323 = vunpack.c.h.b16 %v192
      %v324 = vunpack.c.l.b16 %v193
      %v325 = vunpack.c.h.b16 %v193
      %v326 = vunpack.c.l.b16 %v194
      %v327 = vunpack.c.h.b16 %v194
      %v328 = vunpack.c.l.b16 %v195
      %v329 = vunpack.c.h.b16 %v195
      %v330 = vunpack.c.l.b16 %v196
      %v331 = vunpack.c.h.b16 %v196
      %v332 = vunpack.c.l.b16 %v197
      %v333 = vunpack.c.h.b16 %v197
      %v334 = vunpack.c.l.b16 %v198
      %v335 = vunpack.c.h.b16 %v198
      %v336 = vunpack.c.l.b16 %v199
      %v337 = vunpack.c.h.b16 %v199
      %v338 = vunpack.c.l.b16 %v200
      %v339 = vunpack.c.h.b16 %v200
      %v340 = vunpack.c.l.b16 %v201
      %v341 = vunpack.c.h.b16 %v201
      %v342 = vunpack.c.l.b16 %v202
      %v343 = vunpack.c.h.b16 %v202
      %v344 = vunpack.c.l.b16 %v203
      %v345 = vunpack.c.h.b16 %v203
      %v346 = vunpack.c.l.b16 %v204
      %v347 = vunpack.c.h.b16 %v204
      %v348 = vunpack.c.l.b16 %v205
      %v349 = vunpack.c.h.b16 %v205
      %v350 = vunpack.c.l.b16 %v206
      %v351 = vunpack.c.h.b16 %v206
      %v352 = vunpack.c.l.b16 %v207
      %v353 = vunpack.c.h.b16 %v207
      %v354 = vunpack.c.l.b16 %v208
      %v355 = vunpack.c.h.b16 %v208
      %v356 = vunpack.c.l.b16 %v209
      %v357 = vunpack.c.h.b16 %v209
      %v358 = vunpack.c.l.b16 %v210
      %v359 = vunpack.c.h.b16 %v210
      %v360 = vunpack.c.l.b16 %v211
      %v361 = vunpack.c.h.b16 %v211
      %v362 = vpack.c.b16 %v294, %v290
      %v363 = vpack.c.b16 %v295, %v291
      %v364 = vpack.c.b16 %v296, %v292
      %v365 = vpack.c.b16 %v297, %v293
      %v366 = vpack.c.b16 %v302, %v298
      %v367 = vpack.c.b16 %v303, %v299
      %v368 = vpack.c.b16 %v304, %v300
      %v369 = vpack.c.b16 %v305, %v301
      %v370 = vpack.c.b16 %v310, %v306
      %v371 = vpack.c.b16 %v311, %v307
      %v372 = vpack.c.b16 %v312, %v308
      %v373 = vpack.c.b16 %v313, %v309
      %v374 = vpack.c.b16 %v318, %v314
      %v375 = vpack.c.b16 %v319, %v315
      %v376 = vpack.c.b16 %v320, %v316
      %v377 = vpack.c.b16 %v321, %v317
      %v378 = vpack.c.b16 %v326, %v322
      %v379 = vpack.c.b16 %v327, %v323
      %v380 = vpack.c.b16 %v328, %v324
      %v381 = vpack.c.b16 %v329, %v325
      %v382 = vpack.c.b16 %v334, %v330
      %v383 = vpack.c.b16 %v335, %v331
      %v384 = vpack.c.b16 %v336, %v332
      %v385 = vpack.c.b16 %v337, %v333
      %v386 = vpack.c.b16 %v342, %v338
      %v387 = vpack.c.b16 %v343, %v339
      %v388 = vpack.c.b16 %v344, %v340
      %v389 = vpack.c.b16 %v345, %v341
      %v390 = vpack.c.b16 %v350, %v346
      %v391 = vpack.c.b16 %v351, %v347
      %v392 = vpack.c.b16 %v352, %v348
      %v393 = vpack.c.b16 %v353, %v349
      %v394 = vpack.c.b16 %v358, %v354
      %v395 = vpack.c.b16 %v359, %v355
      %v396 = vpack.c.b16 %v360, %v356
      %v397 = vpack.c.b16 %v361, %v357
      %vm434 = vcmask 130048
      %v436 = vsel %vm434, %v249, 0
      %v439 = vsel %vm434, %v251, 0
      %441 = vmatprep.subr.bf16.mxu0 %v363
      %442 = vmatpush1.bf16.msra.mxu0 %v362
      %443 = vmatprep.subr.bf16.mxu0 %v367
      %444 = vmatpush1.bf16.msra.mxu0 %v366
      %445 = vmatprep.subr.bf16.mxu0 %v371
      %446 = vmatpush1.bf16.msra.mxu0 %v370
      %447 = vmatprep.subr.bf16.mxu0 %v375
      %448 = vmatpush1.bf16.msra.mxu0 %v374
      %449 = vmatprep.subr.bf16.mxu0 %v379
      %450 = vmatpush1.bf16.msra.mxu0 %v378
      %451 = vmatprep.subr.bf16.mxu0 %v383
      %452 = vmatpush1.bf16.msra.mxu0 %v382
      %453 = vmatprep.subr.bf16.mxu0 %v387
      %454 = vmatpush1.bf16.msra.mxu0 %v386
      %455 = vmatprep.subr.bf16.mxu0 %v391
      %456 = vmatpush1.bf16.msra.mxu0 %v390
      %457 = vmatprep.subr.bf16.mxu0 %v395
      %458 = vmatpush1.bf16.msra.mxu0 %v394
      %459 = vmatprep.subr.bf16.mxu0 0
      %460 = vmatpush1.bf16.msra.mxu0 0
      %461 = vmatprep.subr.bf16.mxu0 0
      %462 = vmatpush1.bf16.msra.mxu0 0
      %463 = vmatprep.subr.bf16.mxu0 0
      %464 = vmatpush1.bf16.msra.mxu0 0
      %465 = vmatprep.subr.bf16.mxu0 0
      %466 = vmatpush1.bf16.msra.mxu0 0
      %467 = vmatprep.subr.bf16.mxu0 0
      %468 = vmatpush1.bf16.msra.mxu0 0
      %469 = vmatprep.subr.bf16.mxu0 0
      %470 = vmatpush1.bf16.msra.mxu0 0
      %471 = vmatprep.subr.bf16.mxu0 0
      %472 = vmatpush1.bf16.msra.mxu0 0
      %473 = vmatprep.mubr.bf16.mxu0 %v436
      %474 = vmatmul.mubr.bf16.gmra.mrb[0].mxu0 %v248
      %v475 = vpop.f32.mrb[0].mxu0
      %v476 = vadd.f32 %v219, %v475
      %v477 = vpop.f32.mrb[0].mxu0
      %v478 = vadd.f32 %v219, %v477
      %v479 = vpop.f32.mrb[0].mxu0
      %v480 = vadd.f32 %v224, %v479
      %v481 = vpop.f32.mrb[0].mxu0
      %v482 = vadd.f32 %v224, %v481
      %483 = vmatprep.mubr.bf16.mxu0 %v439
      %484 = vmatmul.mubr.bf16.gmra.mrb[0].mxu0 %v250
      %v485 = vpop.f32.mrb[0].mxu0
      %v486 = vadd.f32 %v229, %v485
      %v487 = vpop.f32.mrb[0].mxu0
      %v488 = vadd.f32 %v229, %v487
      %v489 = vpop.f32.mrb[0].mxu0
      %v490 = vadd.f32 %v234, %v489
      %v491 = vpop.f32.mrb[0].mxu0
      %v492 = vadd.f32 %v234, %v491
      %493 = vdwg.mxu0
      %494 = vmatprep.subr.bf16.mxu0 %v365
      %495 = vmatpush1.bf16.msra.mxu0 %v364
      %496 = vmatprep.subr.bf16.mxu0 %v369
      %497 = vmatpush1.bf16.msra.mxu0 %v368
      %498 = vmatprep.subr.bf16.mxu0 %v373
      %499 = vmatpush1.bf16.msra.mxu0 %v372
      %500 = vmatprep.subr.bf16.mxu0 %v377
      %501 = vmatpush1.bf16.msra.mxu0 %v376
      %502 = vmatprep.subr.bf16.mxu0 %v381
      %503 = vmatpush1.bf16.msra.mxu0 %v380
      %504 = vmatprep.subr.bf16.mxu0 %v385
      %505 = vmatpush1.bf16.msra.mxu0 %v384
      %506 = vmatprep.subr.bf16.mxu0 %v389
      %507 = vmatpush1.bf16.msra.mxu0 %v388
      %508 = vmatprep.subr.bf16.mxu0 %v393
      %509 = vmatpush1.bf16.msra.mxu0 %v392
      %510 = vmatprep.subr.bf16.mxu0 %v397
      %511 = vmatpush1.bf16.msra.mxu0 %v396
      %512 = vmatprep.subr.bf16.mxu0 0
      %513 = vmatpush1.bf16.msra.mxu0 0
      %514 = vmatprep.subr.bf16.mxu0 0
      %515 = vmatpush1.bf16.msra.mxu0 0
      %516 = vmatprep.subr.bf16.mxu0 0
      %517 = vmatpush1.bf16.msra.mxu0 0
      %518 = vmatprep.subr.bf16.mxu0 0
      %519 = vmatpush1.bf16.msra.mxu0 0
      %520 = vmatprep.subr.bf16.mxu0 0
      %521 = vmatpush1.bf16.msra.mxu0 0
      %522 = vmatprep.subr.bf16.mxu0 0
      %523 = vmatpush1.bf16.msra.mxu0 0
      %524 = vmatprep.subr.bf16.mxu0 0
      %525 = vmatpush1.bf16.msra.mxu0 0
      %526 = vmatprep.mubr.bf16.mxu0 %v436
      %527 = vmatmul.mubr.bf16.gmra.mrb[0].mxu0 %v248
      %v528 = vpop.f32.mrb[0].mxu0
      %v529 = vadd.f32 %v219, %v528
      %v530 = vpop.f32.mrb[0].mxu0
      %v531 = vadd.f32 %v219, %v530
      %v532 = vpop.f32.mrb[0].mxu0
      %v533 = vadd.f32 %v224, %v532
      %v534 = vpop.f32.mrb[0].mxu0
      %v535 = vadd.f32 %v224, %v534
      %536 = vmatprep.mubr.bf16.mxu0 %v439
      %537 = vmatmul.mubr.bf16.gmra.mrb[0].mxu0 %v250
      %v538 = vpop.f32.mrb[0].mxu0
      %v539 = vadd.f32 %v229, %v538
      %v540 = vpop.f32.mrb[0].mxu0
      %v541 = vadd.f32 %v229, %v540
      %v542 = vpop.f32.mrb[0].mxu0
      %v543 = vadd.f32 %v234, %v542
      %v544 = vpop.f32.mrb[0].mxu0
      %v545 = vadd.f32 %v234, %v544
      %546 = vdwg.mxu0
      %v547 = vmax.f32 %v476, 0.0
      %v548 = vmax.f32 %v478, 0.0
      %v549 = vmax.f32 %v529, 0.0
      %v550 = vmax.f32 %v531, 0.0
      %v551 = vmax.f32 %v480, 0.0
      %v552 = vmax.f32 %v482, 0.0
      %v553 = vmax.f32 %v533, 0.0
      %v554 = vmax.f32 %v535, 0.0
      %v555 = vmax.f32 %v486, 0.0
      %v556 = vmax.f32 %v488, 0.0
      %v557 = vmax.f32 %v539, 0.0
      %v558 = vmax.f32 %v541, 0.0
      %v559 = vmax.f32 %v490, 0.0
      %v560 = vmax.f32 %v492, 0.0
      %v561 = vmax.f32 %v543, 0.0
      %v562 = vmax.f32 %v545, 0.0
      %563 = vst [vmem:[%s170] sm:$0xff] %v547
      %564 = vst [vmem:[%s170 + $0x8] sm:$0xff] %v548
      %565 = vst [vmem:[%s170 + $0x10] sm:$0xff] %v549
      %vm566 = vcmask 465920
      %567 = vst.msk [vmem:[%s170 + $0x18] sm:$0xff] %vm566, %v550
      %568 = vst [vmem:[%s170 + $0x20] sm:$0xff] %v551
      %569 = vst [vmem:[%s170 + $0x28] sm:$0xff] %v552
      %570 = vst [vmem:[%s170 + $0x30] sm:$0xff] %v553
      %571 = vst.msk [vmem:[%s170 + $0x38] sm:$0xff] %vm566, %v554
      %572 = vst [vmem:[%s170 + $0x40] sm:$0xff] %v555
      %573 = vst [vmem:[%s170 + $0x48] sm:$0xff] %v556
      %574 = vst [vmem:[%s170 + $0x50] sm:$0xff] %v557
      %575 = vst.msk [vmem:[%s170 + $0x58] sm:$0xff] %vm566, %v558
      %576 = vst [vmem:[%s170 + $0x60] sm:$0xff] %v559
      %577 = vst [vmem:[%s170 + $0x68] sm:$0xff] %v560
      %578 = vst [vmem:[%s170 + $0x70] sm:$0xff] %v561
      %579 = vst.msk [vmem:[%s170 + $0x78] sm:$0xff] %vm566, %v562
      %p580 = scmp.lt.s32.totalorder %s14, 1
      %s581 = scalar_select %p580, %s14, 1
      %s582 = smul.addr %s581, 16
      %s583 = smul.addr %s582, 8
      %s584 = scalar_lea.vmem %s3, %s583
      // Predicated region
      $region33: #{cnn_forward.6} parent=31 // pred_check
        %p585 = pneg %p100
      $region34: #{cnn_forward.6} parent=31 // pred_check_branch
        %587 = sbr.rel (%p585) target = $region36
      $region35: #{cnn_forward.6} parent=31 // pred_region
        _
      $region36: #{cnn_forward.6} parent=31 // pred_fallthru
        _
    $region32: #{cnn_forward.6} parent=5 // pred_fallthru
      _
    %p588 = scmp.le.s32.totalorder 2, %s9
    // Predicated region
    $region37: #{cnn_forward.6} parent=5 // pred_check
      %p589 = pneg %p588
    $region38: #{cnn_forward.6} parent=5 // pred_check_branch
      %591 = sbr.rel (%p589) target = $region40
    $region39: #{cnn_forward.6} parent=5 // pred_region
      %s592 = ssub.s32 %s9, 2
      // Predicated region
      $region41: #{cnn_forward.6} parent=39 // pred_check
        %p593 = pneg %p106
      $region42: #{cnn_forward.6} parent=39 // pred_check_branch
        %595 = sbr.rel (%p593) target = $region44
      $region43: #{cnn_forward.6} parent=39 // pred_region
        %p596 = scmp.lt.s32.totalorder %s15, 1
        %s597 = scalar_select %p596, %s15, 1
        %s598 = smul.addr %s597, 16
        %s599 = smul.addr %s598, 8
        %s600 = scalar_lea.vmem %s3, %s599
      $region44: #{cnn_forward.6} parent=39 // pred_fallthru
        _
    $region40: #{cnn_forward.6} parent=5 // pred_fallthru
      _
  $region6: #{cnn_forward.6} parent=0 // loop_footer
    %s13 = sadd.s32 1, %s9
  $region7: #{cnn_forward.6} parent=0 // loop_footer_branch
    %8 = sbr.rel target = $region3
  $region8: #{cnn_forward.6} parent=0 // loop_exit
    _

// kernel: cnn_forward.7
$region0: #{cnn_forward.7}
  #allocation0 [shape = 'u32[]', space=smem, size = 0x4, offset = 0x4, fixed_abs, tag = 'smem constant byte address 0x4 - core index']
  #allocation1 [shape = 'u32[144,128]{1,0:T(1,128)}', space=vmem, size = 0x12000, scoped, tag = 'internal scratch']
  %s0 = inlined_call_operand.vmem [shape: bf16[2,14112], index: 0, kind: input, shape index: {}]
  %s1 = inlined_call_operand.vmem [shape: bf16[2,14112], index: 1, kind: input, shape index: {}]
  %s2 = inlined_call_operand.vmem [shape: f32[1,2], index: 2, kind: input, shape index: {}]
  %s3 = inlined_call_operand.hbm [shape: f32[2,2], index: 3, kind: output, shape index: {}]
  %s4 = sld [smem:[#allocation0]]
  $region22: #{cnn_forward.7} parent=0
    _
  %s6 = ssub.s32 1, %s4
  %s7 = scalar_select 0, %s6, %s4
  $region1: #{cnn_forward.7} parent=0
    #allocation2 [shape = 'u8[1024]{0}', space=vmem, size = 0x400, scoped, tag = 'output window, operand 0, single buffered']
    #allocation3 [shape = 's32[1]{0}', space=sflag, size = 0x4, scoped, tag = 'scoped memory for cnn_forward.7']
    %8 = vsyncpa [#allocation3], 0
    // Predicated region
    $region2: #{cnn_forward.7} parent=1 // pred_check
      _
    $region3: #{cnn_forward.7} parent=1 // pred_check_branch
      %10 = sbr.rel (0) target = $region5
    $region4: #{cnn_forward.7} parent=1 // pred_region
      _
    $region5: #{cnn_forward.7} parent=1 // pred_fallthru
      _
    // Predicated region
    $region6: #{cnn_forward.7} parent=1 // pred_check
      _
    $region7: #{cnn_forward.7} parent=1 // pred_check_branch
      %12 = sbr.rel (0) target = $region9
    $region8: #{cnn_forward.7} parent=1 // pred_region
      _
    $region9: #{cnn_forward.7} parent=1 // pred_fallthru
      _
    // Predicated region
    $region10: #{cnn_forward.7} parent=1 // pred_check
      _
    $region11: #{cnn_forward.7} parent=1 // pred_check_branch
      %14 = sbr.rel (0) target = $region13
    $region12: #{cnn_forward.7} parent=1 // pred_region
      _
    $region13: #{cnn_forward.7} parent=1 // pred_fallthru
      _
    %v16 = vld [vmem:[%s0] sm:$0xff]
    %v17 = vld [vmem:[%s0 + $0x8] sm:$0xff]
    %v18 = vld [vmem:[%s0 + $0x10] sm:$0xff]
    %v19 = vld [vmem:[%s0 + $0x18] sm:$0xff]
    %v20 = vld [vmem:[%s0 + $0x20] sm:$0xff]
    %v21 = vld [vmem:[%s0 + $0x28] sm:$0xff]
    %v22 = vld [vmem:[%s0 + $0x30] sm:$0xff]
    %v23 = vld [vmem:[%s0 + $0x38] sm:$0xff]
    %v24 = vld [vmem:[%s0 + $0x40] sm:$0xff]
    %v25 = vld [vmem:[%s0 + $0x48] sm:$0xff]
    %v26 = vld [vmem:[%s0 + $0x50] sm:$0xff]
    %v27 = vld [vmem:[%s0 + $0x58] sm:$0xff]
    %v28 = vld [vmem:[%s0 + $0x60] sm:$0xff]
    %v29 = vld [vmem:[%s0 + $0x68] sm:$0x7f]
    %v30 = vld [vmem:[%s1] sm:$0xff]
    %v31 = vld [vmem:[%s1 + $0x8] sm:$0xff]
    %v32 = vld [vmem:[%s1 + $0x10] sm:$0xff]
    %v33 = vld [vmem:[%s1 + $0x18] sm:$0xff]
    %v34 = vld [vmem:[%s1 + $0x20] sm:$0xff]
    %v35 = vld [vmem:[%s1 + $0x28] sm:$0xff]
    %v36 = vld [vmem:[%s1 + $0x30] sm:$0xff]
    %v37 = vld [vmem:[%s1 + $0x38] sm:$0xff]
    %v38 = vld [vmem:[%s1 + $0x40] sm:$0xff]
    %v39 = vld [vmem:[%s1 + $0x48] sm:$0xff]
    %v40 = vld [vmem:[%s1 + $0x50] sm:$0xff]
    %v41 = vld [vmem:[%s1 + $0x58] sm:$0xff]
    %v42 = vld [vmem:[%s1 + $0x60] sm:$0xff]
    %v43 = vld [vmem:[%s1 + $0x68] sm:$0x7f]
    %v44 = vld [vmem:[%s2] sm:$0x1]
    %v46 = vlaneseq
    %v47 = vshrl.u32 %v46, 7
    %v48 = vsub.s32 0, %v47
    %v49 = vrot.slane %v44, %v48
    %v65 = vcombine.high %v16, %v16
    %v67 = vunpack.c.l.s4 1966171168
    %v68 = vunpack.c.0.s8 %v67
    %v69 = vlaneseq
    %v70 = vshrl.u32 %v69, 7
    %v71 = vsub.s32 %v68, %v70
    %v72 = vrot.slane %v16, %v71
    %v74 = vunpack.c.l.s4 1966171168
    %v75 = vunpack.c.0.s8 %v74
    %v76 = vlaneseq
    %v77 = vshrl.u32 %v76, 7
    %v78 = vsub.s32 %v75, %v77
    %v79 = vrot.slane %v65, %v78
    %v80 = vcombine.high %v72, %v72
    %v81 = vcombine.high %v79, %v79
    %v83 = vunpack.c.l.s4 1966171168
    %v84 = vunpack.c.0.s8 %v83
    %v85 = vlaneseq
    %v86 = vshrl.u32 %v85, 7
    %v87 = vsub.s32 %v84, %v86
    %v88 = vrot.slane %v72, %v87
    %v90 = vunpack.c.l.s4 1966171168
    %v91 = vunpack.c.0.s8 %v90
    %v92 = vlaneseq
    %v93 = vshrl.u32 %v92, 7
    %v94 = vsub.s32 %v91, %v93
    %v95 = vrot.slane %v79, %v94
    %v97 = vunpack.c.l.s4 1966171168
    %v98 = vunpack.c.0.s8 %v97
    %v99 = vlaneseq
    %v100 = vshrl.u32 %v99, 7
    %v101 = vsub.s32 %v98, %v100
    %v102 = vrot.slane %v80, %v101
    %v104 = vunpack.c.l.s4 1966171168
    %v105 = vunpack.c.0.s8 %v104
    %v106 = vlaneseq
    %v107 = vshrl.u32 %v106, 7
    %v108 = vsub.s32 %v105, %v107
    %v109 = vrot.slane %v81, %v108
    %v110 = vcombine.high %v88, %v88
    %v111 = vcombine.high %v95, %v95
    %v112 = vcombine.high %v102, %v102
    %v113 = vcombine.high %v109, %v109
    %v114 = vcombine.high %v17, %v17
    %v116 = vunpack.c.l.s4 1966171168
    %v117 = vunpack.c.0.s8 %v116
    %v118 = vlaneseq
    %v119 = vshrl.u32 %v118, 7
    %v120 = vsub.s32 %v117, %v119
    %v121 = vrot.slane %v17, %v120
    %v123 = vunpack.c.l.s4 1966171168
    %v124 = vunpack.c.0.s8 %v123
    %v125 = vlaneseq
    %v126 = vshrl.u32 %v125, 7
    %v127 = vsub.s32 %v124, %v126
    %v128 = vrot.slane %v114, %v127
    %v129 = vcombine.high %v121, %v121
    %v130 = vcombine.high %v128, %v128
    %v132 = vunpack.c.l.s4 1966171168
    %v133 = vunpack.c.0.s8 %v132
    %v134 = vlaneseq
    %v135 = vshrl.u32 %v134, 7
    %v136 = vsub.s32 %v133, %v135
    %v137 = vrot.slane %v121, %v136
    %v139 = vunpack.c.l.s4 1966171168
    %v140 = vunpack.c.0.s8 %v139
    %v141 = vlaneseq
    %v142 = vshrl.u32 %v141, 7
    %v143 = vsub.s32 %v140, %v142
    %v144 = vrot.slane %v128, %v143
    %v146 = vunpack.c.l.s4 1966171168
    %v147 = vunpack.c.0.s8 %v146
    %v148 = vlaneseq
    %v149 = vshrl.u32 %v148, 7
    %v150 = vsub.s32 %v147, %v149
    %v151 = vrot.slane %v129, %v150
    %v153 = vunpack.c.l.s4 1966171168
    %v154 = vunpack.c.0.s8 %v153
    %v155 = vlaneseq
    %v156 = vshrl.u32 %v155, 7
    %v157 = vsub.s32 %v154, %v156
    %v158 = vrot.slane %v130, %v157
    %v159 = vcombine.high %v137, %v137
    %v160 = vcombine.high %v144, %v144
    %v161 = vcombine.high %v151, %v151
    %v162 = vcombine.high %v158, %v158
    %v163 = vcombine.high %v18, %v18
    %v165 = vunpack.c.l.s4 1966171168
    %v166 = vunpack.c.0.s8 %v165
    %v167 = vlaneseq
    %v168 = vshrl.u32 %v167, 7
    %v169 = vsub.s32 %v166, %v168
    %v170 = vrot.slane %v18, %v169
    %v172 = vunpack.c.l.s4 1966171168
    %v173 = vunpack.c.0.s8 %v172
    %v174 = vlaneseq
    %v175 = vshrl.u32 %v174, 7
    %v176 = vsub.s32 %v173, %v175
    %v177 = vrot.slane %v163, %v176
    %v178 = vcombine.high %v170, %v170
    %v179 = vcombine.high %v177, %v177
    %v181 = vunpack.c.l.s4 1966171168
    %v182 = vunpack.c.0.s8 %v181
    %v183 = vlaneseq
    %v184 = vshrl.u32 %v183, 7
    %v185 = vsub.s32 %v182, %v184
    %v186 = vrot.slane %v170, %v185
    %v188 = vunpack.c.l.s4 1966171168
    %v189 = vunpack.c.0.s8 %v188
    %v190 = vlaneseq
    %v191 = vshrl.u32 %v190, 7
    %v192 = vsub.s32 %v189, %v191
    %v193 = vrot.slane %v177, %v192
    %v195 = vunpack.c.l.s4 1966171168
    %v196 = vunpack.c.0.s8 %v195
    %v197 = vlaneseq
    %v198 = vshrl.u32 %v197, 7
    %v199 = vsub.s32 %v196, %v198
    %v200 = vrot.slane %v178, %v199
    %v202 = vunpack.c.l.s4 1966171168
    %v203 = vunpack.c.0.s8 %v202
    %v204 = vlaneseq
    %v205 = vshrl.u32 %v204, 7
    %v206 = vsub.s32 %v203, %v205
    %v207 = vrot.slane %v179, %v206
    %v208 = vcombine.high %v186, %v186
    %v209 = vcombine.high %v193, %v193
    %v210 = vcombine.high %v200, %v200
    %v211 = vcombine.high %v207, %v207
    %v212 = vcombine.high %v19, %v19
    %v214 = vunpack.c.l.s4 1966171168
    %v215 = vunpack.c.0.s8 %v214
    %v216 = vlaneseq
    %v217 = vshrl.u32 %v216, 7
    %v218 = vsub.s32 %v215, %v217
    %v219 = vrot.slane %v19, %v218
    %v221 = vunpack.c.l.s4 1966171168
    %v222 = vunpack.c.0.s8 %v221
    %v223 = vlaneseq
    %v224 = vshrl.u32 %v223, 7
    %v225 = vsub.s32 %v222, %v224
    %v226 = vrot.slane %v212, %v225
    %v227 = vcombine.high %v219, %v219
    %v228 = vcombine.high %v226, %v226
    %v230 = vunpack.c.l.s4 1966171168
    %v231 = vunpack.c.0.s8 %v230
    %v232 = vlaneseq
    %v233 = vshrl.u32 %v232, 7
    %v234 = vsub.s32 %v231, %v233
    %v235 = vrot.slane %v219, %v234
    %v237 = vunpack.c.l.s4 1966171168
    %v238 = vunpack.c.0.s8 %v237
    %v239 = vlaneseq
    %v240 = vshrl.u32 %v239, 7
    %v241 = vsub.s32 %v238, %v240
    %v242 = vrot.slane %v226, %v241
    %v244 = vunpack.c.l.s4 1966171168
    %v245 = vunpack.c.0.s8 %v244
    %v246 = vlaneseq
    %v247 = vshrl.u32 %v246, 7
    %v248 = vsub.s32 %v245, %v247
    %v249 = vrot.slane %v227, %v248
    %v251 = vunpack.c.l.s4 1966171168
    %v252 = vunpack.c.0.s8 %v251
    %v253 = vlaneseq
    %v254 = vshrl.u32 %v253, 7
    %v255 = vsub.s32 %v252, %v254
    %v256 = vrot.slane %v228, %v255
    %v257 = vcombine.high %v235, %v235
    %v258 = vcombine.high %v242, %v242
    %v259 = vcombine.high %v249, %v249
    %v260 = vcombine.high %v256, %v256
    %v261 = vcombine.high %v20, %v20
    %v263 = vunpack.c.l.s4 1966171168
    %v264 = vunpack.c.0.s8 %v263
    %v265 = vlaneseq
    %v266 = vshrl.u32 %v265, 7
    %v267 = vsub.s32 %v264, %v266
    %v268 = vrot.slane %v20, %v267
    %v270 = vunpack.c.l.s4 1966171168
    %v271 = vunpack.c.0.s8 %v270
    %v272 = vlaneseq
    %v273 = vshrl.u32 %v272, 7
    %v274 = vsub.s32 %v271, %v273
    %v275 = vrot.slane %v261, %v274
    %v276 = vcombine.high %v268, %v268
    %v277 = vcombine.high %v275, %v275
    %v279 = vunpack.c.l.s4 1966171168
    %v280 = vunpack.c.0.s8 %v279
    %v281 = vlaneseq
    %v282 = vshrl.u32 %v281, 7
    %v283 = vsub.s32 %v280, %v282
    %v284 = vrot.slane %v268, %v283
    %v286 = vunpack.c.l.s4 1966171168
    %v287 = vunpack.c.0.s8 %v286
    %v288 = vlaneseq
    %v289 = vshrl.u32 %v288, 7
    %v290 = vsub.s32 %v287, %v289
    %v291 = vrot.slane %v275, %v290
    %v293 = vunpack.c.l.s4 1966171168
    %v294 = vunpack.c.0.s8 %v293
    %v295 = vlaneseq
    %v296 = vshrl.u32 %v295, 7
    %v297 = vsub.s32 %v294, %v296
    %v298 = vrot.slane %v276, %v297
    %v300 = vunpack.c.l.s4 1966171168
    %v301 = vunpack.c.0.s8 %v300
    %v302 = vlaneseq
    %v303 = vshrl.u32 %v302, 7
    %v304 = vsub.s32 %v301, %v303
    %v305 = vrot.slane %v277, %v304
    %v306 = vcombine.high %v284, %v284
    %v307 = vcombine.high %v291, %v291
    %v308 = vcombine.high %v298, %v298
    %v309 = vcombine.high %v305, %v305
    %v310 = vcombine.high %v21, %v21
    %v312 = vunpack.c.l.s4 1966171168
    %v313 = vunpack.c.0.s8 %v312
    %v314 = vlaneseq
    %v315 = vshrl.u32 %v314, 7
    %v316 = vsub.s32 %v313, %v315
    %v317 = vrot.slane %v21, %v316
    %v319 = vunpack.c.l.s4 1966171168
    %v320 = vunpack.c.0.s8 %v319
    %v321 = vlaneseq
    %v322 = vshrl.u32 %v321, 7
    %v323 = vsub.s32 %v320, %v322
    %v324 = vrot.slane %v310, %v323
    %v325 = vcombine.high %v317, %v317
    %v326 = vcombine.high %v324, %v324
    %v328 = vunpack.c.l.s4 1966171168
    %v329 = vunpack.c.0.s8 %v328
    %v330 = vlaneseq
    %v331 = vshrl.u32 %v330, 7
    %v332 = vsub.s32 %v329, %v331
    %v333 = vrot.slane %v317, %v332
    %v335 = vunpack.c.l.s4 1966171168
    %v336 = vunpack.c.0.s8 %v335
    %v337 = vlaneseq
    %v338 = vshrl.u32 %v337, 7
    %v339 = vsub.s32 %v336, %v338
    %v340 = vrot.slane %v324, %v339
    %v342 = vunpack.c.l.s4 1966171168
    %v343 = vunpack.c.0.s8 %v342
    %v344 = vlaneseq
    %v345 = vshrl.u32 %v344, 7
    %v346 = vsub.s32 %v343, %v345
    %v347 = vrot.slane %v325, %v346
    %v349 = vunpack.c.l.s4 1966171168
    %v350 = vunpack.c.0.s8 %v349
    %v351 = vlaneseq
    %v352 = vshrl.u32 %v351, 7
    %v353 = vsub.s32 %v350, %v352
    %v354 = vrot.slane %v326, %v353
    %v355 = vcombine.high %v333, %v333
    %v356 = vcombine.high %v340, %v340
    %v357 = vcombine.high %v347, %v347
    %v358 = vcombine.high %v354, %v354
    %v359 = vcombine.high %v22, %v22
    %v361 = vunpack.c.l.s4 1966171168
    %v362 = vunpack.c.0.s8 %v361
    %v363 = vlaneseq
    %v364 = vshrl.u32 %v363, 7
    %v365 = vsub.s32 %v362, %v364
    %v366 = vrot.slane %v22, %v365
    %v368 = vunpack.c.l.s4 1966171168
    %v369 = vunpack.c.0.s8 %v368
    %v370 = vlaneseq
    %v371 = vshrl.u32 %v370, 7
    %v372 = vsub.s32 %v369, %v371
    %v373 = vrot.slane %v359, %v372
    %v374 = vcombine.high %v366, %v366
    %v375 = vcombine.high %v373, %v373
    %v377 = vunpack.c.l.s4 1966171168
    %v378 = vunpack.c.0.s8 %v377
    %v379 = vlaneseq
    %v380 = vshrl.u32 %v379, 7
    %v381 = vsub.s32 %v378, %v380
    %v382 = vrot.slane %v366, %v381
    %v384 = vunpack.c.l.s4 1966171168
    %v385 = vunpack.c.0.s8 %v384
    %v386 = vlaneseq
    %v387 = vshrl.u32 %v386, 7
    %v388 = vsub.s32 %v385, %v387
    %v389 = vrot.slane %v373, %v388
    %v391 = vunpack.c.l.s4 1966171168
    %v392 = vunpack.c.0.s8 %v391
    %v393 = vlaneseq
    %v394 = vshrl.u32 %v393, 7
    %v395 = vsub.s32 %v392, %v394
    %v396 = vrot.slane %v374, %v395
    %v398 = vunpack.c.l.s4 1966171168
    %v399 = vunpack.c.0.s8 %v398
    %v400 = vlaneseq
    %v401 = vshrl.u32 %v400, 7
    %v402 = vsub.s32 %v399, %v401
    %v403 = vrot.slane %v375, %v402
    %v404 = vcombine.high %v382, %v382
    %v405 = vcombine.high %v389, %v389
    %v406 = vcombine.high %v396, %v396
    %v407 = vcombine.high %v403, %v403
    %v408 = vcombine.high %v23, %v23
    %v410 = vunpack.c.l.s4 1966171168
    %v411 = vunpack.c.0.s8 %v410
    %v412 = vlaneseq
    %v413 = vshrl.u32 %v412, 7
    %v414 = vsub.s32 %v411, %v413
    %v415 = vrot.slane %v23, %v414
    %v417 = vunpack.c.l.s4 1966171168
    %v418 = vunpack.c.0.s8 %v417
    %v419 = vlaneseq
    %v420 = vshrl.u32 %v419, 7
    %v421 = vsub.s32 %v418, %v420
    %v422 = vrot.slane %v408, %v421
    %v423 = vcombine.high %v415, %v415
    %v424 = vcombine.high %v422, %v422
    %v426 = vunpack.c.l.s4 1966171168
    %v427 = vunpack.c.0.s8 %v426
    %v428 = vlaneseq
    %v429 = vshrl.u32 %v428, 7
    %v430 = vsub.s32 %v427, %v429
    %v431 = vrot.slane %v415, %v430
    %v433 = vunpack.c.l.s4 1966171168
    %v434 = vunpack.c.0.s8 %v433
    %v435 = vlaneseq
    %v436 = vshrl.u32 %v435, 7
    %v437 = vsub.s32 %v434, %v436
    %v438 = vrot.slane %v422, %v437
    %v440 = vunpack.c.l.s4 1966171168
    %v441 = vunpack.c.0.s8 %v440
    %v442 = vlaneseq
    %v443 = vshrl.u32 %v442, 7
    %v444 = vsub.s32 %v441, %v443
    %v445 = vrot.slane %v423, %v444
    %v447 = vunpack.c.l.s4 1966171168
    %v448 = vunpack.c.0.s8 %v447
    %v449 = vlaneseq
    %v450 = vshrl.u32 %v449, 7
    %v451 = vsub.s32 %v448, %v450
    %v452 = vrot.slane %v424, %v451
    %v453 = vcombine.high %v431, %v431
    %v454 = vcombine.high %v438, %v438
    %v455 = vcombine.high %v445, %v445
    %v456 = vcombine.high %v452, %v452
    %v457 = vcombine.high %v24, %v24
    %v459 = vunpack.c.l.s4 1966171168
    %v460 = vunpack.c.0.s8 %v459
    %v461 = vlaneseq
    %v462 = vshrl.u32 %v461, 7
    %v463 = vsub.s32 %v460, %v462
    %v464 = vrot.slane %v24, %v463
    %v466 = vunpack.c.l.s4 1966171168
    %v467 = vunpack.c.0.s8 %v466
    %v468 = vlaneseq
    %v469 = vshrl.u32 %v468, 7
    %v470 = vsub.s32 %v467, %v469
    %v471 = vrot.slane %v457, %v470
    %v472 = vcombine.high %v464, %v464
    %v473 = vcombine.high %v471, %v471
    %v475 = vunpack.c.l.s4 1966171168
    %v476 = vunpack.c.0.s8 %v475
    %v477 = vlaneseq
    %v478 = vshrl.u32 %v477, 7
    %v479 = vsub.s32 %v476, %v478
    %v480 = vrot.slane %v464, %v479
    %v482 = vunpack.c.l.s4 1966171168
    %v483 = vunpack.c.0.s8 %v482
    %v484 = vlaneseq
    %v485 = vshrl.u32 %v484, 7
    %v486 = vsub.s32 %v483, %v485
    %v487 = vrot.slane %v471, %v486
    %v489 = vunpack.c.l.s4 1966171168
    %v490 = vunpack.c.0.s8 %v489
    %v491 = vlaneseq
    %v492 = vshrl.u32 %v491, 7
    %v493 = vsub.s32 %v490, %v492
    %v494 = vrot.slane %v472, %v493
    %v496 = vunpack.c.l.s4 1966171168
    %v497 = vunpack.c.0.s8 %v496
    %v498 = vlaneseq
    %v499 = vshrl.u32 %v498, 7
    %v500 = vsub.s32 %v497, %v499
    %v501 = vrot.slane %v473, %v500
    %v502 = vcombine.high %v480, %v480
    %v503 = vcombine.high %v487, %v487
    %v504 = vcombine.high %v494, %v494
    %v505 = vcombine.high %v501, %v501
    %v506 = vcombine.high %v25, %v25
    %v508 = vunpack.c.l.s4 1966171168
    %v509 = vunpack.c.0.s8 %v508
    %v510 = vlaneseq
    %v511 = vshrl.u32 %v510, 7
    %v512 = vsub.s32 %v509, %v511
    %v513 = vrot.slane %v25, %v512
    %v515 = vunpack.c.l.s4 1966171168
    %v516 = vunpack.c.0.s8 %v515
    %v517 = vlaneseq
    %v518 = vshrl.u32 %v517, 7
    %v519 = vsub.s32 %v516, %v518
    %v520 = vrot.slane %v506, %v519
    %v521 = vcombine.high %v513, %v513
    %v522 = vcombine.high %v520, %v520
    %v524 = vunpack.c.l.s4 1966171168
    %v525 = vunpack.c.0.s8 %v524
    %v526 = vlaneseq
    %v527 = vshrl.u32 %v526, 7
    %v528 = vsub.s32 %v525, %v527
    %v529 = vrot.slane %v513, %v528
    %v531 = vunpack.c.l.s4 1966171168
    %v532 = vunpack.c.0.s8 %v531
    %v533 = vlaneseq
    %v534 = vshrl.u32 %v533, 7
    %v535 = vsub.s32 %v532, %v534
    %v536 = vrot.slane %v520, %v535
    %v538 = vunpack.c.l.s4 1966171168
    %v539 = vunpack.c.0.s8 %v538
    %v540 = vlaneseq
    %v541 = vshrl.u32 %v540, 7
    %v542 = vsub.s32 %v539, %v541
    %v543 = vrot.slane %v521, %v542
    %v545 = vunpack.c.l.s4 1966171168
    %v546 = vunpack.c.0.s8 %v545
    %v547 = vlaneseq
    %v548 = vshrl.u32 %v547, 7
    %v549 = vsub.s32 %v546, %v548
    %v550 = vrot.slane %v522, %v549
    %v551 = vcombine.high %v529, %v529
    %v552 = vcombine.high %v536, %v536
    %v553 = vcombine.high %v543, %v543
    %v554 = vcombine.high %v550, %v550
    %v555 = vcombine.high %v26, %v26
    %v557 = vunpack.c.l.s4 1966171168
    %v558 = vunpack.c.0.s8 %v557
    %v559 = vlaneseq
    %v560 = vshrl.u32 %v559, 7
    %v561 = vsub.s32 %v558, %v560
    %v562 = vrot.slane %v26, %v561
    %v564 = vunpack.c.l.s4 1966171168
    %v565 = vunpack.c.0.s8 %v564
    %v566 = vlaneseq
    %v567 = vshrl.u32 %v566, 7
    %v568 = vsub.s32 %v565, %v567
    %v569 = vrot.slane %v555, %v568
    %v570 = vcombine.high %v562, %v562
    %v571 = vcombine.high %v569, %v569
    %v573 = vunpack.c.l.s4 1966171168
    %v574 = vunpack.c.0.s8 %v573
    %v575 = vlaneseq
    %v576 = vshrl.u32 %v575, 7
    %v577 = vsub.s32 %v574, %v576
    %v578 = vrot.slane %v562, %v577
    %v580 = vunpack.c.l.s4 1966171168
    %v581 = vunpack.c.0.s8 %v580
    %v582 = vlaneseq
    %v583 = vshrl.u32 %v582, 7
    %v584 = vsub.s32 %v581, %v583
    %v585 = vrot.slane %v569, %v584
    %v587 = vunpack.c.l.s4 1966171168
    %v588 = vunpack.c.0.s8 %v587
    %v589 = vlaneseq
    %v590 = vshrl.u32 %v589, 7
    %v591 = vsub.s32 %v588, %v590
    %v592 = vrot.slane %v570, %v591
    %v594 = vunpack.c.l.s4 1966171168
    %v595 = vunpack.c.0.s8 %v594
    %v596 = vlaneseq
    %v597 = vshrl.u32 %v596, 7
    %v598 = vsub.s32 %v595, %v597
    %v599 = vrot.slane %v571, %v598
    %v600 = vcombine.high %v578, %v578
    %v601 = vcombine.high %v585, %v585
    %v602 = vcombine.high %v592, %v592
    %v603 = vcombine.high %v599, %v599
    %v604 = vcombine.high %v27, %v27
    %v606 = vunpack.c.l.s4 1966171168
    %v607 = vunpack.c.0.s8 %v606
    %v608 = vlaneseq
    %v609 = vshrl.u32 %v608, 7
    %v610 = vsub.s32 %v607, %v609
    %v611 = vrot.slane %v27, %v610
    %v613 = vunpack.c.l.s4 1966171168
    %v614 = vunpack.c.0.s8 %v613
    %v615 = vlaneseq
    %v616 = vshrl.u32 %v615, 7
    %v617 = vsub.s32 %v614, %v616
    %v618 = vrot.slane %v604, %v617
    %v619 = vcombine.high %v611, %v611
    %v620 = vcombine.high %v618, %v618
    %v622 = vunpack.c.l.s4 1966171168
    %v623 = vunpack.c.0.s8 %v622
    %v624 = vlaneseq
    %v625 = vshrl.u32 %v624, 7
    %v626 = vsub.s32 %v623, %v625
    %v627 = vrot.slane %v611, %v626
    %v629 = vunpack.c.l.s4 1966171168
    %v630 = vunpack.c.0.s8 %v629
    %v631 = vlaneseq
    %v632 = vshrl.u32 %v631, 7
    %v633 = vsub.s32 %v630, %v632
    %v634 = vrot.slane %v618, %v633
    %v636 = vunpack.c.l.s4 1966171168
    %v637 = vunpack.c.0.s8 %v636
    %v638 = vlaneseq
    %v639 = vshrl.u32 %v638, 7
    %v640 = vsub.s32 %v637, %v639
    %v641 = vrot.slane %v619, %v640
    %v643 = vunpack.c.l.s4 1966171168
    %v644 = vunpack.c.0.s8 %v643
    %v645 = vlaneseq
    %v646 = vshrl.u32 %v645, 7
    %v647 = vsub.s32 %v644, %v646
    %v648 = vrot.slane %v620, %v647
    %v649 = vcombine.high %v627, %v627
    %v650 = vcombine.high %v634, %v634
    %v651 = vcombine.high %v641, %v641
    %v652 = vcombine.high %v648, %v648
    %v653 = vcombine.high %v28, %v28
    %v655 = vunpack.c.l.s4 1966171168
    %v656 = vunpack.c.0.s8 %v655
    %v657 = vlaneseq
    %v658 = vshrl.u32 %v657, 7
    %v659 = vsub.s32 %v656, %v658
    %v660 = vrot.slane %v28, %v659
    %v662 = vunpack.c.l.s4 1966171168
    %v663 = vunpack.c.0.s8 %v662
    %v664 = vlaneseq
    %v665 = vshrl.u32 %v664, 7
    %v666 = vsub.s32 %v663, %v665
    %v667 = vrot.slane %v653, %v666
    %v668 = vcombine.high %v660, %v660
    %v669 = vcombine.high %v667, %v667
    %v671 = vunpack.c.l.s4 1966171168
    %v672 = vunpack.c.0.s8 %v671
    %v673 = vlaneseq
    %v674 = vshrl.u32 %v673, 7
    %v675 = vsub.s32 %v672, %v674
    %v676 = vrot.slane %v660, %v675
    %v678 = vunpack.c.l.s4 1966171168
    %v679 = vunpack.c.0.s8 %v678
    %v680 = vlaneseq
    %v681 = vshrl.u32 %v680, 7
    %v682 = vsub.s32 %v679, %v681
    %v683 = vrot.slane %v667, %v682
    %v685 = vunpack.c.l.s4 1966171168
    %v686 = vunpack.c.0.s8 %v685
    %v687 = vlaneseq
    %v688 = vshrl.u32 %v687, 7
    %v689 = vsub.s32 %v686, %v688
    %v690 = vrot.slane %v668, %v689
    %v692 = vunpack.c.l.s4 1966171168
    %v693 = vunpack.c.0.s8 %v692
    %v694 = vlaneseq
    %v695 = vshrl.u32 %v694, 7
    %v696 = vsub.s32 %v693, %v695
    %v697 = vrot.slane %v669, %v696
    %v698 = vcombine.high %v676, %v676
    %v699 = vcombine.high %v683, %v683
    %v700 = vcombine.high %v690, %v690
    %v701 = vcombine.high %v697, %v697
    %v702 = vcombine.high %v29, %v29
    %v704 = vunpack.c.l.s4 1966171168
    %v705 = vunpack.c.0.s8 %v704
    %v706 = vlaneseq
    %v707 = vshrl.u32 %v706, 7
    %v708 = vsub.s32 %v705, %v707
    %v709 = vrot.slane %v29, %v708
    %v711 = vunpack.c.l.s4 1966171168
    %v712 = vunpack.c.0.s8 %v711
    %v713 = vlaneseq
    %v714 = vshrl.u32 %v713, 7
    %v715 = vsub.s32 %v712, %v714
    %v716 = vrot.slane %v702, %v715
    %v717 = vcombine.high %v709, %v709
    %v718 = vcombine.high %v716, %v716
    %v720 = vunpack.c.l.s4 1966171168
    %v721 = vunpack.c.0.s8 %v720
    %v722 = vlaneseq
    %v723 = vshrl.u32 %v722, 7
    %v724 = vsub.s32 %v721, %v723
    %v725 = vrot.slane %v709, %v724
    %v727 = vunpack.c.l.s4 1966171168
    %v728 = vunpack.c.0.s8 %v727
    %v729 = vlaneseq
    %v730 = vshrl.u32 %v729, 7
    %v731 = vsub.s32 %v728, %v730
    %v732 = vrot.slane %v716, %v731
    %v734 = vunpack.c.l.s4 1966171168
    %v735 = vunpack.c.0.s8 %v734
    %v736 = vlaneseq
    %v737 = vshrl.u32 %v736, 7
    %v738 = vsub.s32 %v735, %v737
    %v739 = vrot.slane %v717, %v738
    %v741 = vunpack.c.l.s4 1966171168
    %v742 = vunpack.c.0.s8 %v741
    %v743 = vlaneseq
    %v744 = vshrl.u32 %v743, 7
    %v745 = vsub.s32 %v742, %v744
    %v746 = vrot.slane %v718, %v745
    %v747 = vcombine.high %v725, %v725
    %v748 = vcombine.high %v732, %v732
    %v749 = vcombine.high %v739, %v739
    %v874 = vcombine.high %v30, %v30
    %v876 = vunpack.c.l.s4 1966171168
    %v877 = vunpack.c.0.s8 %v876
    %v878 = vlaneseq
    %v879 = vshrl.u32 %v878, 7
    %v880 = vsub.s32 %v877, %v879
    %v881 = vrot.slane %v30, %v880
    %v883 = vunpack.c.l.s4 1966171168
    %v884 = vunpack.c.0.s8 %v883
    %v885 = vlaneseq
    %v886 = vshrl.u32 %v885, 7
    %v887 = vsub.s32 %v884, %v886
    %v888 = vrot.slane %v874, %v887
    %v889 = vcombine.high %v881, %v881
    %v890 = vcombine.high %v888, %v888
    %v892 = vunpack.c.l.s4 1966171168
    %v893 = vunpack.c.0.s8 %v892
    %v894 = vlaneseq
    %v895 = vshrl.u32 %v894, 7
    %v896 = vsub.s32 %v893, %v895
    %v897 = vrot.slane %v881, %v896
    %v899 = vunpack.c.l.s4 1966171168
    %v900 = vunpack.c.0.s8 %v899
    %v901 = vlaneseq
    %v902 = vshrl.u32 %v901, 7
    %v903 = vsub.s32 %v900, %v902
    %v904 = vrot.slane %v888, %v903
    %v906 = vunpack.c.l.s4 1966171168
    %v907 = vunpack.c.0.s8 %v906
    %v908 = vlaneseq
    %v909 = vshrl.u32 %v908, 7
    %v910 = vsub.s32 %v907, %v909
    %v911 = vrot.slane %v889, %v910
    %v913 = vunpack.c.l.s4 1966171168
    %v914 = vunpack.c.0.s8 %v913
    %v915 = vlaneseq
    %v916 = vshrl.u32 %v915, 7
    %v917 = vsub.s32 %v914, %v916
    %v918 = vrot.slane %v890, %v917
    %v919 = vcombine.high %v897, %v897
    %v920 = vcombine.high %v904, %v904
    %v921 = vcombine.high %v911, %v911
    %v922 = vcombine.high %v918, %v918
    %v923 = vcombine.high %v31, %v31
    %v925 = vunpack.c.l.s4 1966171168
    %v926 = vunpack.c.0.s8 %v925
    %v927 = vlaneseq
    %v928 = vshrl.u32 %v927, 7
    %v929 = vsub.s32 %v926, %v928
    %v930 = vrot.slane %v31, %v929
    %v932 = vunpack.c.l.s4 1966171168
    %v933 = vunpack.c.0.s8 %v932
    %v934 = vlaneseq
    %v935 = vshrl.u32 %v934, 7
    %v936 = vsub.s32 %v933, %v935
    %v937 = vrot.slane %v923, %v936
    %v938 = vcombine.high %v930, %v930
    %v939 = vcombine.high %v937, %v937
    %v941 = vunpack.c.l.s4 1966171168
    %v942 = vunpack.c.0.s8 %v941
    %v943 = vlaneseq
    %v944 = vshrl.u32 %v943, 7
    %v945 = vsub.s32 %v942, %v944
    %v946 = vrot.slane %v930, %v945
    %v948 = vunpack.c.l.s4 1966171168
    %v949 = vunpack.c.0.s8 %v948
    %v950 = vlaneseq
    %v951 = vshrl.u32 %v950, 7
    %v952 = vsub.s32 %v949, %v951
    %v953 = vrot.slane %v937, %v952
    %v955 = vunpack.c.l.s4 1966171168
    %v956 = vunpack.c.0.s8 %v955
    %v957 = vlaneseq
    %v958 = vshrl.u32 %v957, 7
    %v959 = vsub.s32 %v956, %v958
    %v960 = vrot.slane %v938, %v959
    %v962 = vunpack.c.l.s4 1966171168
    %v963 = vunpack.c.0.s8 %v962
    %v964 = vlaneseq
    %v965 = vshrl.u32 %v964, 7
    %v966 = vsub.s32 %v963, %v965
    %v967 = vrot.slane %v939, %v966
    %v968 = vcombine.high %v946, %v946
    %v969 = vcombine.high %v953, %v953
    %v970 = vcombine.high %v960, %v960
    %v971 = vcombine.high %v967, %v967
    %v972 = vcombine.high %v32, %v32
    %v974 = vunpack.c.l.s4 1966171168
    %v975 = vunpack.c.0.s8 %v974
    %v976 = vlaneseq
    %v977 = vshrl.u32 %v976, 7
    %v978 = vsub.s32 %v975, %v977
    %v979 = vrot.slane %v32, %v978
    %v981 = vunpack.c.l.s4 1966171168
    %v982 = vunpack.c.0.s8 %v981
    %v983 = vlaneseq
    %v984 = vshrl.u32 %v983, 7
    %v985 = vsub.s32 %v982, %v984
    %v986 = vrot.slane %v972, %v985
    %v987 = vcombine.high %v979, %v979
    %v988 = vcombine.high %v986, %v986
    %v990 = vunpack.c.l.s4 1966171168
    %v991 = vunpack.c.0.s8 %v990
    %v992 = vlaneseq
    %v993 = vshrl.u32 %v992, 7
    %v994 = vsub.s32 %v991, %v993
    %v995 = vrot.slane %v979, %v994
    %v997 = vunpack.c.l.s4 1966171168
    %v998 = vunpack.c.0.s8 %v997
    %v999 = vlaneseq
    %v1000 = vshrl.u32 %v999, 7
    %v1001 = vsub.s32 %v998, %v1000
    %v1002 = vrot.slane %v986, %v1001
    %v1004 = vunpack.c.l.s4 1966171168
    %v1005 = vunpack.c.0.s8 %v1004
    %v1006 = vlaneseq
    %v1007 = vshrl.u32 %v1006, 7
    %v1008 = vsub.s32 %v1005, %v1007
    %v1009 = vrot.slane %v987, %v1008
    %v1011 = vunpack.c.l.s4 1966171168
    %v1012 = vunpack.c.0.s8 %v1011
    %v1013 = vlaneseq
    %v1014 = vshrl.u32 %v1013, 7
    %v1015 = vsub.s32 %v1012, %v1014
    %v1016 = vrot.slane %v988, %v1015
    %v1017 = vcombine.high %v995, %v995
    %v1018 = vcombine.high %v1002, %v1002
    %v1019 = vcombine.high %v1009, %v1009
    %v1020 = vcombine.high %v1016, %v1016
    %v1021 = vcombine.high %v33, %v33
    %v1023 = vunpack.c.l.s4 1966171168
    %v1024 = vunpack.c.0.s8 %v1023
    %v1025 = vlaneseq
    %v1026 = vshrl.u32 %v1025, 7
    %v1027 = vsub.s32 %v1024, %v1026
    %v1028 = vrot.slane %v33, %v1027
    %v1030 = vunpack.c.l.s4 1966171168
    %v1031 = vunpack.c.0.s8 %v1030
    %v1032 = vlaneseq
    %v1033 = vshrl.u32 %v1032, 7
    %v1034 = vsub.s32 %v1031, %v1033
    %v1035 = vrot.slane %v1021, %v1034
    %v1036 = vcombine.high %v1028, %v1028
    %v1037 = vcombine.high %v1035, %v1035
    %v1039 = vunpack.c.l.s4 1966171168
    %v1040 = vunpack.c.0.s8 %v1039
    %v1041 = vlaneseq
    %v1042 = vshrl.u32 %v1041, 7
    %v1043 = vsub.s32 %v1040, %v1042
    %v1044 = vrot.slane %v1028, %v1043
    %v1046 = vunpack.c.l.s4 1966171168
    %v1047 = vunpack.c.0.s8 %v1046
    %v1048 = vlaneseq
    %v1049 = vshrl.u32 %v1048, 7
    %v1050 = vsub.s32 %v1047, %v1049
    %v1051 = vrot.slane %v1035, %v1050
    %v1053 = vunpack.c.l.s4 1966171168
    %v1054 = vunpack.c.0.s8 %v1053
    %v1055 = vlaneseq
    %v1056 = vshrl.u32 %v1055, 7
    %v1057 = vsub.s32 %v1054, %v1056
    %v1058 = vrot.slane %v1036, %v1057
    %v1060 = vunpack.c.l.s4 1966171168
    %v1061 = vunpack.c.0.s8 %v1060
    %v1062 = vlaneseq
    %v1063 = vshrl.u32 %v1062, 7
    %v1064 = vsub.s32 %v1061, %v1063
    %v1065 = vrot.slane %v1037, %v1064
    %v1066 = vcombine.high %v1044, %v1044
    %v1067 = vcombine.high %v1051, %v1051
    %v1068 = vcombine.high %v1058, %v1058
    %v1069 = vcombine.high %v1065, %v1065
    %v1070 = vcombine.high %v34, %v34
    %v1072 = vunpack.c.l.s4 1966171168
    %v1073 = vunpack.c.0.s8 %v1072
    %v1074 = vlaneseq
    %v1075 = vshrl.u32 %v1074, 7
    %v1076 = vsub.s32 %v1073, %v1075
    %v1077 = vrot.slane %v34, %v1076
    %v1079 = vunpack.c.l.s4 1966171168
    %v1080 = vunpack.c.0.s8 %v1079
    %v1081 = vlaneseq
    %v1082 = vshrl.u32 %v1081, 7
    %v1083 = vsub.s32 %v1080, %v1082
    %v1084 = vrot.slane %v1070, %v1083
    %v1085 = vcombine.high %v1077, %v1077
    %v1086 = vcombine.high %v1084, %v1084
    %v1088 = vunpack.c.l.s4 1966171168
    %v1089 = vunpack.c.0.s8 %v1088
    %v1090 = vlaneseq
    %v1091 = vshrl.u32 %v1090, 7
    %v1092 = vsub.s32 %v1089, %v1091
    %v1093 = vrot.slane %v1077, %v1092
    %v1095 = vunpack.c.l.s4 1966171168
    %v1096 = vunpack.c.0.s8 %v1095
    %v1097 = vlaneseq
    %v1098 = vshrl.u32 %v1097, 7
    %v1099 = vsub.s32 %v1096, %v1098
    %v1100 = vrot.slane %v1084, %v1099
    %v1102 = vunpack.c.l.s4 1966171168
    %v1103 = vunpack.c.0.s8 %v1102
    %v1104 = vlaneseq
    %v1105 = vshrl.u32 %v1104, 7
    %v1106 = vsub.s32 %v1103, %v1105
    %v1107 = vrot.slane %v1085, %v1106
    %v1109 = vunpack.c.l.s4 1966171168
    %v1110 = vunpack.c.0.s8 %v1109
    %v1111 = vlaneseq
    %v1112 = vshrl.u32 %v1111, 7
    %v1113 = vsub.s32 %v1110, %v1112
    %v1114 = vrot.slane %v1086, %v1113
    %v1115 = vcombine.high %v1093, %v1093
    %v1116 = vcombine.high %v1100, %v1100
    %v1117 = vcombine.high %v1107, %v1107
    %v1118 = vcombine.high %v1114, %v1114
    %v1119 = vcombine.high %v35, %v35
    %v1121 = vunpack.c.l.s4 1966171168
    %v1122 = vunpack.c.0.s8 %v1121
    %v1123 = vlaneseq
    %v1124 = vshrl.u32 %v1123, 7
    %v1125 = vsub.s32 %v1122, %v1124
    %v1126 = vrot.slane %v35, %v1125
    %v1128 = vunpack.c.l.s4 1966171168
    %v1129 = vunpack.c.0.s8 %v1128
    %v1130 = vlaneseq
    %v1131 = vshrl.u32 %v1130, 7
    %v1132 = vsub.s32 %v1129, %v1131
    %v1133 = vrot.slane %v1119, %v1132
    %v1134 = vcombine.high %v1126, %v1126
    %v1135 = vcombine.high %v1133, %v1133
    %v1137 = vunpack.c.l.s4 1966171168
    %v1138 = vunpack.c.0.s8 %v1137
    %v1139 = vlaneseq
    %v1140 = vshrl.u32 %v1139, 7
    %v1141 = vsub.s32 %v1138, %v1140
    %v1142 = vrot.slane %v1126, %v1141
    %v1144 = vunpack.c.l.s4 1966171168
    %v1145 = vunpack.c.0.s8 %v1144
    %v1146 = vlaneseq
    %v1147 = vshrl.u32 %v1146, 7
    %v1148 = vsub.s32 %v1145, %v1147
    %v1149 = vrot.slane %v1133, %v1148
    %v1151 = vunpack.c.l.s4 1966171168
    %v1152 = vunpack.c.0.s8 %v1151
    %v1153 = vlaneseq
    %v1154 = vshrl.u32 %v1153, 7
    %v1155 = vsub.s32 %v1152, %v1154
    %v1156 = vrot.slane %v1134, %v1155
    %v1158 = vunpack.c.l.s4 1966171168
    %v1159 = vunpack.c.0.s8 %v1158
    %v1160 = vlaneseq
    %v1161 = vshrl.u32 %v1160, 7
    %v1162 = vsub.s32 %v1159, %v1161
    %v1163 = vrot.slane %v1135, %v1162
    %v1164 = vcombine.high %v1142, %v1142
    %v1165 = vcombine.high %v1149, %v1149
    %v1166 = vcombine.high %v1156, %v1156
    %v1167 = vcombine.high %v1163, %v1163
    %v1168 = vcombine.high %v36, %v36
    %v1170 = vunpack.c.l.s4 1966171168
    %v1171 = vunpack.c.0.s8 %v1170
    %v1172 = vlaneseq
    %v1173 = vshrl.u32 %v1172, 7
    %v1174 = vsub.s32 %v1171, %v1173
    %v1175 = vrot.slane %v36, %v1174
    %v1177 = vunpack.c.l.s4 1966171168
    %v1178 = vunpack.c.0.s8 %v1177
    %v1179 = vlaneseq
    %v1180 = vshrl.u32 %v1179, 7
    %v1181 = vsub.s32 %v1178, %v1180
    %v1182 = vrot.slane %v1168, %v1181
    %v1183 = vcombine.high %v1175, %v1175
    %v1184 = vcombine.high %v1182, %v1182
    %v1186 = vunpack.c.l.s4 1966171168
    %v1187 = vunpack.c.0.s8 %v1186
    %v1188 = vlaneseq
    %v1189 = vshrl.u32 %v1188, 7
    %v1190 = vsub.s32 %v1187, %v1189
    %v1191 = vrot.slane %v1175, %v1190
    %v1193 = vunpack.c.l.s4 1966171168
    %v1194 = vunpack.c.0.s8 %v1193
    %v1195 = vlaneseq
    %v1196 = vshrl.u32 %v1195, 7
    %v1197 = vsub.s32 %v1194, %v1196
    %v1198 = vrot.slane %v1182, %v1197
    %v1200 = vunpack.c.l.s4 1966171168
    %v1201 = vunpack.c.0.s8 %v1200
    %v1202 = vlaneseq
    %v1203 = vshrl.u32 %v1202, 7
    %v1204 = vsub.s32 %v1201, %v1203
    %v1205 = vrot.slane %v1183, %v1204
    %v1207 = vunpack.c.l.s4 1966171168
    %v1208 = vunpack.c.0.s8 %v1207
    %v1209 = vlaneseq
    %v1210 = vshrl.u32 %v1209, 7
    %v1211 = vsub.s32 %v1208, %v1210
    %v1212 = vrot.slane %v1184, %v1211
    %v1213 = vcombine.high %v1191, %v1191
    %v1214 = vcombine.high %v1198, %v1198
    %v1215 = vcombine.high %v1205, %v1205
    %v1216 = vcombine.high %v1212, %v1212
    %v1217 = vcombine.high %v37, %v37
    %v1219 = vunpack.c.l.s4 1966171168
    %v1220 = vunpack.c.0.s8 %v1219
    %v1221 = vlaneseq
    %v1222 = vshrl.u32 %v1221, 7
    %v1223 = vsub.s32 %v1220, %v1222
    %v1224 = vrot.slane %v37, %v1223
    %v1226 = vunpack.c.l.s4 1966171168
    %v1227 = vunpack.c.0.s8 %v1226
    %v1228 = vlaneseq
    %v1229 = vshrl.u32 %v1228, 7
    %v1230 = vsub.s32 %v1227, %v1229
    %v1231 = vrot.slane %v1217, %v1230
    %v1232 = vcombine.high %v1224, %v1224
    %v1233 = vcombine.high %v1231, %v1231
    %v1235 = vunpack.c.l.s4 1966171168
    %v1236 = vunpack.c.0.s8 %v1235
    %v1237 = vlaneseq
    %v1238 = vshrl.u32 %v1237, 7
    %v1239 = vsub.s32 %v1236, %v1238
    %v1240 = vrot.slane %v1224, %v1239
    %v1242 = vunpack.c.l.s4 1966171168
    %v1243 = vunpack.c.0.s8 %v1242
    %v1244 = vlaneseq
    %v1245 = vshrl.u32 %v1244, 7
    %v1246 = vsub.s32 %v1243, %v1245
    %v1247 = vrot.slane %v1231, %v1246
    %v1249 = vunpack.c.l.s4 1966171168
    %v1250 = vunpack.c.0.s8 %v1249
    %v1251 = vlaneseq
    %v1252 = vshrl.u32 %v1251, 7
    %v1253 = vsub.s32 %v1250, %v1252
    %v1254 = vrot.slane %v1232, %v1253
    %v1256 = vunpack.c.l.s4 1966171168
    %v1257 = vunpack.c.0.s8 %v1256
    %v1258 = vlaneseq
    %v1259 = vshrl.u32 %v1258, 7
    %v1260 = vsub.s32 %v1257, %v1259
    %v1261 = vrot.slane %v1233, %v1260
    %v1262 = vcombine.high %v1240, %v1240
    %v1263 = vcombine.high %v1247, %v1247
    %v1264 = vcombine.high %v1254, %v1254
    %v1265 = vcombine.high %v1261, %v1261
    %v1266 = vcombine.high %v38, %v38
    %v1268 = vunpack.c.l.s4 1966171168
    %v1269 = vunpack.c.0.s8 %v1268
    %v1270 = vlaneseq
    %v1271 = vshrl.u32 %v1270, 7
    %v1272 = vsub.s32 %v1269, %v1271
    %v1273 = vrot.slane %v38, %v1272
    %v1275 = vunpack.c.l.s4 1966171168
    %v1276 = vunpack.c.0.s8 %v1275
    %v1277 = vlaneseq
    %v1278 = vshrl.u32 %v1277, 7
    %v1279 = vsub.s32 %v1276, %v1278
    %v1280 = vrot.slane %v1266, %v1279
    %v1281 = vcombine.high %v1273, %v1273
    %v1282 = vcombine.high %v1280, %v1280
    %v1284 = vunpack.c.l.s4 1966171168
    %v1285 = vunpack.c.0.s8 %v1284
    %v1286 = vlaneseq
    %v1287 = vshrl.u32 %v1286, 7
    %v1288 = vsub.s32 %v1285, %v1287
    %v1289 = vrot.slane %v1273, %v1288
    %v1291 = vunpack.c.l.s4 1966171168
    %v1292 = vunpack.c.0.s8 %v1291
    %v1293 = vlaneseq
    %v1294 = vshrl.u32 %v1293, 7
    %v1295 = vsub.s32 %v1292, %v1294
    %v1296 = vrot.slane %v1280, %v1295
    %v1298 = vunpack.c.l.s4 1966171168
    %v1299 = vunpack.c.0.s8 %v1298
    %v1300 = vlaneseq
    %v1301 = vshrl.u32 %v1300, 7
    %v1302 = vsub.s32 %v1299, %v1301
    %v1303 = vrot.slane %v1281, %v1302
    %v1305 = vunpack.c.l.s4 1966171168
    %v1306 = vunpack.c.0.s8 %v1305
    %v1307 = vlaneseq
    %v1308 = vshrl.u32 %v1307, 7
    %v1309 = vsub.s32 %v1306, %v1308
    %v1310 = vrot.slane %v1282, %v1309
    %v1311 = vcombine.high %v1289, %v1289
    %v1312 = vcombine.high %v1296, %v1296
    %v1313 = vcombine.high %v1303, %v1303
    %v1314 = vcombine.high %v1310, %v1310
    %v1315 = vcombine.high %v39, %v39
    %v1317 = vunpack.c.l.s4 1966171168
    %v1318 = vunpack.c.0.s8 %v1317
    %v1319 = vlaneseq
    %v1320 = vshrl.u32 %v1319, 7
    %v1321 = vsub.s32 %v1318, %v1320
    %v1322 = vrot.slane %v39, %v1321
    %v1324 = vunpack.c.l.s4 1966171168
    %v1325 = vunpack.c.0.s8 %v1324
    %v1326 = vlaneseq
    %v1327 = vshrl.u32 %v1326, 7
    %v1328 = vsub.s32 %v1325, %v1327
    %v1329 = vrot.slane %v1315, %v1328
    %v1330 = vcombine.high %v1322, %v1322
    %v1331 = vcombine.high %v1329, %v1329
    %v1333 = vunpack.c.l.s4 1966171168
    %v1334 = vunpack.c.0.s8 %v1333
    %v1335 = vlaneseq
    %v1336 = vshrl.u32 %v1335, 7
    %v1337 = vsub.s32 %v1334, %v1336
    %v1338 = vrot.slane %v1322, %v1337
    %v1340 = vunpack.c.l.s4 1966171168
    %v1341 = vunpack.c.0.s8 %v1340
    %v1342 = vlaneseq
    %v1343 = vshrl.u32 %v1342, 7
    %v1344 = vsub.s32 %v1341, %v1343
    %v1345 = vrot.slane %v1329, %v1344
    %v1347 = vunpack.c.l.s4 1966171168
    %v1348 = vunpack.c.0.s8 %v1347
    %v1349 = vlaneseq
    %v1350 = vshrl.u32 %v1349, 7
    %v1351 = vsub.s32 %v1348, %v1350
    %v1352 = vrot.slane %v1330, %v1351
    %v1354 = vunpack.c.l.s4 1966171168
    %v1355 = vunpack.c.0.s8 %v1354
    %v1356 = vlaneseq
    %v1357 = vshrl.u32 %v1356, 7
    %v1358 = vsub.s32 %v1355, %v1357
    %v1359 = vrot.slane %v1331, %v1358
    %v1360 = vcombine.high %v1338, %v1338
    %v1361 = vcombine.high %v1345, %v1345
    %v1362 = vcombine.high %v1352, %v1352
    %v1363 = vcombine.high %v1359, %v1359
    %v1364 = vcombine.high %v40, %v40
    %v1366 = vunpack.c.l.s4 1966171168
    %v1367 = vunpack.c.0.s8 %v1366
    %v1368 = vlaneseq
    %v1369 = vshrl.u32 %v1368, 7
    %v1370 = vsub.s32 %v1367, %v1369
    %v1371 = vrot.slane %v40, %v1370
    %v1373 = vunpack.c.l.s4 1966171168
    %v1374 = vunpack.c.0.s8 %v1373
    %v1375 = vlaneseq
    %v1376 = vshrl.u32 %v1375, 7
    %v1377 = vsub.s32 %v1374, %v1376
    %v1378 = vrot.slane %v1364, %v1377
    %v1379 = vcombine.high %v1371, %v1371
    %v1380 = vcombine.high %v1378, %v1378
    %v1382 = vunpack.c.l.s4 1966171168
    %v1383 = vunpack.c.0.s8 %v1382
    %v1384 = vlaneseq
    %v1385 = vshrl.u32 %v1384, 7
    %v1386 = vsub.s32 %v1383, %v1385
    %v1387 = vrot.slane %v1371, %v1386
    %v1389 = vunpack.c.l.s4 1966171168
    %v1390 = vunpack.c.0.s8 %v1389
    %v1391 = vlaneseq
    %v1392 = vshrl.u32 %v1391, 7
    %v1393 = vsub.s32 %v1390, %v1392
    %v1394 = vrot.slane %v1378, %v1393
    %v1396 = vunpack.c.l.s4 1966171168
    %v1397 = vunpack.c.0.s8 %v1396
    %v1398 = vlaneseq
    %v1399 = vshrl.u32 %v1398, 7
    %v1400 = vsub.s32 %v1397, %v1399
    %v1401 = vrot.slane %v1379, %v1400
    %v1403 = vunpack.c.l.s4 1966171168
    %v1404 = vunpack.c.0.s8 %v1403
    %v1405 = vlaneseq
    %v1406 = vshrl.u32 %v1405, 7
    %v1407 = vsub.s32 %v1404, %v1406
    %v1408 = vrot.slane %v1380, %v1407
    %v1409 = vcombine.high %v1387, %v1387
    %v1410 = vcombine.high %v1394, %v1394
    %v1411 = vcombine.high %v1401, %v1401
    %v1412 = vcombine.high %v1408, %v1408
    %v1413 = vcombine.high %v41, %v41
    %v1415 = vunpack.c.l.s4 1966171168
    %v1416 = vunpack.c.0.s8 %v1415
    %v1417 = vlaneseq
    %v1418 = vshrl.u32 %v1417, 7
    %v1419 = vsub.s32 %v1416, %v1418
    %v1420 = vrot.slane %v41, %v1419
    %v1422 = vunpack.c.l.s4 1966171168
    %v1423 = vunpack.c.0.s8 %v1422
    %v1424 = vlaneseq
    %v1425 = vshrl.u32 %v1424, 7
    %v1426 = vsub.s32 %v1423, %v1425
    %v1427 = vrot.slane %v1413, %v1426
    %v1428 = vcombine.high %v1420, %v1420
    %v1429 = vcombine.high %v1427, %v1427
    %v1431 = vunpack.c.l.s4 1966171168
    %v1432 = vunpack.c.0.s8 %v1431
    %v1433 = vlaneseq
    %v1434 = vshrl.u32 %v1433, 7
    %v1435 = vsub.s32 %v1432, %v1434
    %v1436 = vrot.slane %v1420, %v1435
    %v1438 = vunpack.c.l.s4 1966171168
    %v1439 = vunpack.c.0.s8 %v1438
    %v1440 = vlaneseq
    %v1441 = vshrl.u32 %v1440, 7
    %v1442 = vsub.s32 %v1439, %v1441
    %v1443 = vrot.slane %v1427, %v1442
    %v1445 = vunpack.c.l.s4 1966171168
    %v1446 = vunpack.c.0.s8 %v1445
    %v1447 = vlaneseq
    %v1448 = vshrl.u32 %v1447, 7
    %v1449 = vsub.s32 %v1446, %v1448
    %v1450 = vrot.slane %v1428, %v1449
    %v1452 = vunpack.c.l.s4 1966171168
    %v1453 = vunpack.c.0.s8 %v1452
    %v1454 = vlaneseq
    %v1455 = vshrl.u32 %v1454, 7
    %v1456 = vsub.s32 %v1453, %v1455
    %v1457 = vrot.slane %v1429, %v1456
    %v1458 = vcombine.high %v1436, %v1436
    %v1459 = vcombine.high %v1443, %v1443
    %v1460 = vcombine.high %v1450, %v1450
    %v1461 = vcombine.high %v1457, %v1457
    %v1462 = vcombine.high %v42, %v42
    %v1464 = vunpack.c.l.s4 1966171168
    %v1465 = vunpack.c.0.s8 %v1464
    %v1466 = vlaneseq
    %v1467 = vshrl.u32 %v1466, 7
    %v1468 = vsub.s32 %v1465, %v1467
    %v1469 = vrot.slane %v42, %v1468
    %v1471 = vunpack.c.l.s4 1966171168
    %v1472 = vunpack.c.0.s8 %v1471
    %v1473 = vlaneseq
    %v1474 = vshrl.u32 %v1473, 7
    %v1475 = vsub.s32 %v1472, %v1474
    %v1476 = vrot.slane %v1462, %v1475
    %v1477 = vcombine.high %v1469, %v1469
    %v1478 = vcombine.high %v1476, %v1476
    %v1480 = vunpack.c.l.s4 1966171168
    %v1481 = vunpack.c.0.s8 %v1480
    %v1482 = vlaneseq
    %v1483 = vshrl.u32 %v1482, 7
    %v1484 = vsub.s32 %v1481, %v1483
    %v1485 = vrot.slane %v1469, %v1484
    %v1487 = vunpack.c.l.s4 1966171168
    %v1488 = vunpack.c.0.s8 %v1487
    %v1489 = vlaneseq
    %v1490 = vshrl.u32 %v1489, 7
    %v1491 = vsub.s32 %v1488, %v1490
    %v1492 = vrot.slane %v1476, %v1491
    %v1494 = vunpack.c.l.s4 1966171168
    %v1495 = vunpack.c.0.s8 %v1494
    %v1496 = vlaneseq
    %v1497 = vshrl.u32 %v1496, 7
    %v1498 = vsub.s32 %v1495, %v1497
    %v1499 = vrot.slane %v1477, %v1498
    %v1501 = vunpack.c.l.s4 1966171168
    %v1502 = vunpack.c.0.s8 %v1501
    %v1503 = vlaneseq
    %v1504 = vshrl.u32 %v1503, 7
    %v1505 = vsub.s32 %v1502, %v1504
    %v1506 = vrot.slane %v1478, %v1505
    %v1507 = vcombine.high %v1485, %v1485
    %v1508 = vcombine.high %v1492, %v1492
    %v1509 = vcombine.high %v1499, %v1499
    %v1510 = vcombine.high %v1506, %v1506
    %v1511 = vcombine.high %v43, %v43
    %v1513 = vunpack.c.l.s4 1966171168
    %v1514 = vunpack.c.0.s8 %v1513
    %v1515 = vlaneseq
    %v1516 = vshrl.u32 %v1515, 7
    %v1517 = vsub.s32 %v1514, %v1516
    %v1518 = vrot.slane %v43, %v1517
    %v1520 = vunpack.c.l.s4 1966171168
    %v1521 = vunpack.c.0.s8 %v1520
    %v1522 = vlaneseq
    %v1523 = vshrl.u32 %v1522, 7
    %v1524 = vsub.s32 %v1521, %v1523
    %v1525 = vrot.slane %v1511, %v1524
    %v1526 = vcombine.high %v1518, %v1518
    %v1527 = vcombine.high %v1525, %v1525
    %v1529 = vunpack.c.l.s4 1966171168
    %v1530 = vunpack.c.0.s8 %v1529
    %v1531 = vlaneseq
    %v1532 = vshrl.u32 %v1531, 7
    %v1533 = vsub.s32 %v1530, %v1532
    %v1534 = vrot.slane %v1518, %v1533
    %v1536 = vunpack.c.l.s4 1966171168
    %v1537 = vunpack.c.0.s8 %v1536
    %v1538 = vlaneseq
    %v1539 = vshrl.u32 %v1538, 7
    %v1540 = vsub.s32 %v1537, %v1539
    %v1541 = vrot.slane %v1525, %v1540
    %v1543 = vunpack.c.l.s4 1966171168
    %v1544 = vunpack.c.0.s8 %v1543
    %v1545 = vlaneseq
    %v1546 = vshrl.u32 %v1545, 7
    %v1547 = vsub.s32 %v1544, %v1546
    %v1548 = vrot.slane %v1526, %v1547
    %v1550 = vunpack.c.l.s4 1966171168
    %v1551 = vunpack.c.0.s8 %v1550
    %v1552 = vlaneseq
    %v1553 = vshrl.u32 %v1552, 7
    %v1554 = vsub.s32 %v1551, %v1553
    %v1555 = vrot.slane %v1527, %v1554
    %v1556 = vcombine.high %v1534, %v1534
    %v1557 = vcombine.high %v1541, %v1541
    %v1558 = vcombine.high %v1548, %v1548
    %vm1669 = vcmask 261120
    %v1671 = vsel %vm1669, %v748, 0
    %v1674 = vsel %vm1669, %v1557, 0
    %1676 = vmatprep.subr.bf16.mxu0 %v911
    %1677 = vmatpush1.bf16.xpose.msra.mxu0 %v897
    %1678 = vmatprep.subr.bf16.mxu0 0
    %1679 = vmatpush1.bf16.xpose.msra.mxu0 0
    %1680 = vmatprep.subr.bf16.mxu0 0
    %1681 = vmatpush1.bf16.xpose.msra.mxu0 0
    %1682 = vmatprep.subr.bf16.mxu0 0
    %1683 = vmatpush1.bf16.xpose.msra.mxu0 0
    %1684 = vmatprep.subr.bf16.mxu0 0
    %1685 = vmatpush1.bf16.xpose.msra.mxu0 0
    %1686 = vmatprep.subr.bf16.mxu0 0
    %1687 = vmatpush1.bf16.xpose.msra.mxu0 0
    %1688 = vmatprep.subr.bf16.mxu0 0
    %1689 = vmatpush1.bf16.xpose.msra.mxu0 0
    %1690 = vmatprep.subr.bf16.mxu0 0
    %1691 = vmatpush1.bf16.xpose.msra.mxu0 0
    %1692 = vmatprep.subr.bf16.mxu0 0
    %1693 = vmatpush1.bf16.xpose.msra.mxu0 0
    %1694 = vmatprep.subr.bf16.mxu0 0
    %1695 = vmatpush1.bf16.xpose.msra.mxu0 0
    %1696 = vmatprep.subr.bf16.mxu0 0
    %1697 = vmatpush1.bf16.xpose.msra.mxu0 0
    %1698 = vmatprep.subr.bf16.mxu0 0
    %1699 = vmatpush1.bf16.xpose.msra.mxu0 0
    %1700 = vmatprep.subr.bf16.mxu0 0
    %1701 = vmatpush1.bf16.xpose.msra.mxu0 0
    %1702 = vmatprep.subr.bf16.mxu0 0
    %1703 = vmatpush1.bf16.xpose.msra.mxu0 0
    %1704 = vmatprep.subr.bf16.mxu0 0
    %1705 = vmatpush1.bf16.xpose.msra.mxu0 0
    %1706 = vmatprep.subr.bf16.mxu0 0
    %1707 = vmatpush1.bf16.xpose.msra.mxu0 0
    %1708 = vmatprep.mubr.bf16.mxu0 %v102
    %1709 = vmatmul.mubr.bf16.gmra.mrb[0].mxu0 %v88
    %v1710 = vpop.f32.mrb[0].mxu0
    %v1711 = vadd.f32 %v49, %v1710
    %v1712 = vpop.f32.mrb[0].mxu0
    %v1713 = vpop.f32.mrb[0].mxu0
    %v1714 = vpop.f32.mrb[0].mxu0
    %1715 = vdwg.mxu0
    %1716 = vmatprep.subr.bf16.mxu0 %v921
    %1717 = vmatpush1.bf16.xpose.msra.mxu0 %v919
    %1718 = vmatprep.subr.bf16.mxu0 0
    %1719 = vmatpush1.bf16.xpose.msra.mxu0 0
    %1720 = vmatprep.subr.bf16.mxu0 0
    %1721 = vmatpush1.bf16.xpose.msra.mxu0 0
    %1722 = vmatprep.subr.bf16.mxu0 0
    %1723 = vmatpush1.bf16.xpose.msra.mxu0 0
    %1724 = vmatprep.subr.bf16.mxu0 0
    %1725 = vmatpush1.bf16.xpose.msra.mxu0 0
    %1726 = vmatprep.subr.bf16.mxu0 0
    %1727 = vmatpush1.bf16.xpose.msra.mxu0 0
    %1728 = vmatprep.subr.bf16.mxu0 0
    %1729 = vmatpush1.bf16.xpose.msra.mxu0 0
    %1730 = vmatprep.subr.bf16.mxu0 0
    %1731 = vmatpush1.bf16.xpose.msra.mxu0 0
    %1732 = vmatprep.subr.bf16.mxu0 0
    %1733 = vmatpush1.bf16.xpose.msra.mxu0 0
    %1734 = vmatprep.subr.bf16.mxu0 0
    %1735 = vmatpush1.bf16.xpose.msra.mxu0 0
    %1736 = vmatprep.subr.bf16.mxu0 0
    %1737 = vmatpush1.bf16.xpose.msra.mxu0 0
    %1738 = vmatprep.subr.bf16.mxu0 0
    %1739 = vmatpush1.bf16.xpose.msra.mxu0 0
    %1740 = vmatprep.subr.bf16.mxu0 0
    %1741 = vmatpush1.bf16.xpose.msra.mxu0 0
    %1742 = vmatprep.subr.bf16.mxu0 0
    %1743 = vmatpush1.bf16.xpose.msra.mxu0 0
    %1744 = vmatprep.subr.bf16.mxu0 0
    %1745 = vmatpush1.bf16.xpose.msra.mxu0 0
    %1746 = vmatprep.subr.bf16.mxu0 0
    %1747 = vmatpush1.bf16.xpose.msra.mxu0 0
    %1748 = vmatprep.mubr.bf16.mxu0 %v112
    %1749 = vmatmul.mubr.bf16.gmra.mrb[0].mxu0 %v110
    %v1750 = vpop.f32.mrb[0].mxu0
    %v1751 = vadd.f32 %v1711, %v1750
    %v1752 = vpop.f32.mrb[0].mxu0
    %v1753 = vpop.f32.mrb[0].mxu0
    %v1754 = vpop.f32.mrb[0].mxu0
    %1755 = vdwg.mxu0
    %1756 = vmatprep.subr.bf16.mxu0 %v918
    %1757 = vmatpush1.bf16.xpose.msra.mxu0 %v904
    %1758 = vmatprep.subr.bf16.mxu0 0
    %1759 = vmatpush1.bf16.xpose.msra.mxu0 0
    %1760 = vmatprep.subr.bf16.mxu0 0
    %1761 = vmatpush1.bf16.xpose.msra.mxu0 0
    %1762 = vmatprep.subr.bf16.mxu0 0
    %1763 = vmatpush1.bf16.xpose.msra.mxu0 0
    %1764 = vmatprep.subr.bf16.mxu0 0
    %1765 = vmatpush1.bf16.xpose.msra.mxu0 0
    %1766 = vmatprep.subr.bf16.mxu0 0
    %1767 = vmatpush1.bf16.xpose.msra.mxu0 0
    %1768 = vmatprep.subr.bf16.mxu0 0
    %1769 = vmatpush1.bf16.xpose.msra.mxu0 0
    %1770 = vmatprep.subr.bf16.mxu0 0
    %1771 = vmatpush1.bf16.xpose.msra.mxu0 0
    %1772 = vmatprep.subr.bf16.mxu0 0
    %1773 = vmatpush1.bf16.xpose.msra.mxu0 0
    %1774 = vmatprep.subr.bf16.mxu0 0
    %1775 = vmatpush1.bf16.xpose.msra.mxu0 0
    %1776 = vmatprep.subr.bf16.mxu0 0
    %1777 = vmatpush1.bf16.xpose.msra.mxu0 0
    %1778 = vmatprep.subr.bf16.mxu0 0
    %1779 = vmatpush1.bf16.xpose.msra.mxu0 0
    %1780 = vmatprep.subr.bf16.mxu0 0
    %1781 = vmatpush1.bf16.xpose.msra.mxu0 0
    %1782 = vmatprep.subr.bf16.mxu0 0
    %1783 = vmatpush1.bf16.xpose.msra.mxu0 0
    %1784 = vmatprep.subr.bf16.mxu0 0
    %1785 = vmatpush1.bf16.xpose.msra.mxu0 0
    %1786 = vmatprep.subr.bf16.mxu0 0
    %1787 = vmatpush1.bf16.xpose.msra.mxu0 0
    %1788 = vmatprep.mubr.bf16.mxu0 %v109
    %1789 = vmatmul.mubr.bf16.gmra.mrb[0].mxu0 %v95
    %v1790 = vpop.f32.mrb[0].mxu0
    %v1791 = vadd.f32 %v1751, %v1790
    %v1792 = vpop.f32.mrb[0].mxu0
    %v1793 = vpop.f32.mrb[0].mxu0
    %v1794 = vpop.f32.mrb[0].mxu0
    %1795 = vdwg.mxu0
    %1796 = vmatprep.subr.bf16.mxu0 %v922
    %1797 = vmatpush1.bf16.xpose.msra.mxu0 %v920
    %1798 = vmatprep.subr.bf16.mxu0 0
    %1799 = vmatpush1.bf16.xpose.msra.mxu0 0
    %1800 = vmatprep.subr.bf16.mxu0 0
    %1801 = vmatpush1.bf16.xpose.msra.mxu0 0
    %1802 = vmatprep.subr.bf16.mxu0 0
    %1803 = vmatpush1.bf16.xpose.msra.mxu0 0
    %1804 = vmatprep.subr.bf16.mxu0 0
    %1805 = vmatpush1.bf16.xpose.msra.mxu0 0
    %1806 = vmatprep.subr.bf16.mxu0 0
    %1807 = vmatpush1.bf16.xpose.msra.mxu0 0
    %1808 = vmatprep.subr.bf16.mxu0 0
    %1809 = vmatpush1.bf16.xpose.msra.mxu0 0
    %1810 = vmatprep.subr.bf16.mxu0 0
    %1811 = vmatpush1.bf16.xpose.msra.mxu0 0
    %1812 = vmatprep.subr.bf16.mxu0 0
    %1813 = vmatpush1.bf16.xpose.msra.mxu0 0
    %1814 = vmatprep.subr.bf16.mxu0 0
    %1815 = vmatpush1.bf16.xpose.msra.mxu0 0
    %1816 = vmatprep.subr.bf16.mxu0 0
    %1817 = vmatpush1.bf16.xpose.msra.mxu0 0
    %1818 = vmatprep.subr.bf16.mxu0 0
    %1819 = vmatpush1.bf16.xpose.msra.mxu0 0
    %1820 = vmatprep.subr.bf16.mxu0 0
    %1821 = vmatpush1.bf16.xpose.msra.mxu0 0
    %1822 = vmatprep.subr.bf16.mxu0 0
    %1823 = vmatpush1.bf16.xpose.msra.mxu0 0
    %1824 = vmatprep.subr.bf16.mxu0 0
    %1825 = vmatpush1.bf16.xpose.msra.mxu0 0
    %1826 = vmatprep.subr.bf16.mxu0 0
    %1827 = vmatpush1.bf16.xpose.msra.mxu0 0
    %1828 = vmatprep.mubr.bf16.mxu0 %v113
    %1829 = vmatmul.mubr.bf16.gmra.mrb[0].mxu0 %v111
    %v1830 = vpop.f32.mrb[0].mxu0
    %v1831 = vadd.f32 %v1791, %v1830
    %v1832 = vpop.f32.mrb[0].mxu0
    %v1833 = vpop.f32.mrb[0].mxu0
    %v1834 = vpop.f32.mrb[0].mxu0
    %1835 = vdwg.mxu0
    %1836 = vmatprep.subr.bf16.mxu0 %v960
    %1837 = vmatpush1.bf16.xpose.msra.mxu0 %v946
    %1838 = vmatprep.subr.bf16.mxu0 0
    %1839 = vmatpush1.bf16.xpose.msra.mxu0 0
    %1840 = vmatprep.subr.bf16.mxu0 0
    %1841 = vmatpush1.bf16.xpose.msra.mxu0 0
    %1842 = vmatprep.subr.bf16.mxu0 0
    %1843 = vmatpush1.bf16.xpose.msra.mxu0 0
    %1844 = vmatprep.subr.bf16.mxu0 0
    %1845 = vmatpush1.bf16.xpose.msra.mxu0 0
    %1846 = vmatprep.subr.bf16.mxu0 0
    %1847 = vmatpush1.bf16.xpose.msra.mxu0 0
    %1848 = vmatprep.subr.bf16.mxu0 0
    %1849 = vmatpush1.bf16.xpose.msra.mxu0 0
    %1850 = vmatprep.subr.bf16.mxu0 0
    %1851 = vmatpush1.bf16.xpose.msra.mxu0 0
    %1852 = vmatprep.subr.bf16.mxu0 0
    %1853 = vmatpush1.bf16.xpose.msra.mxu0 0
    %1854 = vmatprep.subr.bf16.mxu0 0
    %1855 = vmatpush1.bf16.xpose.msra.mxu0 0
    %1856 = vmatprep.subr.bf16.mxu0 0
    %1857 = vmatpush1.bf16.xpose.msra.mxu0 0
    %1858 = vmatprep.subr.bf16.mxu0 0
    %1859 = vmatpush1.bf16.xpose.msra.mxu0 0
    %1860 = vmatprep.subr.bf16.mxu0 0
    %1861 = vmatpush1.bf16.xpose.msra.mxu0 0
    %1862 = vmatprep.subr.bf16.mxu0 0
    %1863 = vmatpush1.bf16.xpose.msra.mxu0 0
    %1864 = vmatprep.subr.bf16.mxu0 0
    %1865 = vmatpush1.bf16.xpose.msra.mxu0 0
    %1866 = vmatprep.subr.bf16.mxu0 0
    %1867 = vmatpush1.bf16.xpose.msra.mxu0 0
    %1868 = vmatprep.mubr.bf16.mxu0 %v151
    %1869 = vmatmul.mubr.bf16.gmra.mrb[0].mxu0 %v137
    %v1870 = vpop.f32.mrb[0].mxu0
    %v1871 = vadd.f32 %v1831, %v1870
    %v1872 = vpop.f32.mrb[0].mxu0
    %v1873 = vpop.f32.mrb[0].mxu0
    %v1874 = vpop.f32.mrb[0].mxu0
    %1875 = vdwg.mxu0
    %1876 = vmatprep.subr.bf16.mxu0 %v970
    %1877 = vmatpush1.bf16.xpose.msra.mxu0 %v968
    %1878 = vmatprep.subr.bf16.mxu0 0
    %1879 = vmatpush1.bf16.xpose.msra.mxu0 0
    %1880 = vmatprep.subr.bf16.mxu0 0
    %1881 = vmatpush1.bf16.xpose.msra.mxu0 0
    %1882 = vmatprep.subr.bf16.mxu0 0
    %1883 = vmatpush1.bf16.xpose.msra.mxu0 0
    %1884 = vmatprep.subr.bf16.mxu0 0
    %1885 = vmatpush1.bf16.xpose.msra.mxu0 0
    %1886 = vmatprep.subr.bf16.mxu0 0
    %1887 = vmatpush1.bf16.xpose.msra.mxu0 0
    %1888 = vmatprep.subr.bf16.mxu0 0
    %1889 = vmatpush1.bf16.xpose.msra.mxu0 0
    %1890 = vmatprep.subr.bf16.mxu0 0
    %1891 = vmatpush1.bf16.xpose.msra.mxu0 0
    %1892 = vmatprep.subr.bf16.mxu0 0
    %1893 = vmatpush1.bf16.xpose.msra.mxu0 0
    %1894 = vmatprep.subr.bf16.mxu0 0
    %1895 = vmatpush1.bf16.xpose.msra.mxu0 0
    %1896 = vmatprep.subr.bf16.mxu0 0
    %1897 = vmatpush1.bf16.xpose.msra.mxu0 0
    %1898 = vmatprep.subr.bf16.mxu0 0
    %1899 = vmatpush1.bf16.xpose.msra.mxu0 0
    %1900 = vmatprep.subr.bf16.mxu0 0
    %1901 = vmatpush1.bf16.xpose.msra.mxu0 0
    %1902 = vmatprep.subr.bf16.mxu0 0
    %1903 = vmatpush1.bf16.xpose.msra.mxu0 0
    %1904 = vmatprep.subr.bf16.mxu0 0
    %1905 = vmatpush1.bf16.xpose.msra.mxu0 0
    %1906 = vmatprep.subr.bf16.mxu0 0
    %1907 = vmatpush1.bf16.xpose.msra.mxu0 0
    %1908 = vmatprep.mubr.bf16.mxu0 %v161
    %1909 = vmatmul.mubr.bf16.gmra.mrb[0].mxu0 %v159
    %v1910 = vpop.f32.mrb[0].mxu0
    %v1911 = vadd.f32 %v1871, %v1910
    %v1912 = vpop.f32.mrb[0].mxu0
    %v1913 = vpop.f32.mrb[0].mxu0
    %v1914 = vpop.f32.mrb[0].mxu0
    %1915 = vdwg.mxu0
    %1916 = vmatprep.subr.bf16.mxu0 %v967
    %1917 = vmatpush1.bf16.xpose.msra.mxu0 %v953
    %1918 = vmatprep.subr.bf16.mxu0 0
    %1919 = vmatpush1.bf16.xpose.msra.mxu0 0
    %1920 = vmatprep.subr.bf16.mxu0 0
    %1921 = vmatpush1.bf16.xpose.msra.mxu0 0
    %1922 = vmatprep.subr.bf16.mxu0 0
    %1923 = vmatpush1.bf16.xpose.msra.mxu0 0
    %1924 = vmatprep.subr.bf16.mxu0 0
    %1925 = vmatpush1.bf16.xpose.msra.mxu0 0
    %1926 = vmatprep.subr.bf16.mxu0 0
    %1927 = vmatpush1.bf16.xpose.msra.mxu0 0
    %1928 = vmatprep.subr.bf16.mxu0 0
    %1929 = vmatpush1.bf16.xpose.msra.mxu0 0
    %1930 = vmatprep.subr.bf16.mxu0 0
    %1931 = vmatpush1.bf16.xpose.msra.mxu0 0
    %1932 = vmatprep.subr.bf16.mxu0 0
    %1933 = vmatpush1.bf16.xpose.msra.mxu0 0
    %1934 = vmatprep.subr.bf16.mxu0 0
    %1935 = vmatpush1.bf16.xpose.msra.mxu0 0
    %1936 = vmatprep.subr.bf16.mxu0 0
    %1937 = vmatpush1.bf16.xpose.msra.mxu0 0
    %1938 = vmatprep.subr.bf16.mxu0 0
    %1939 = vmatpush1.bf16.xpose.msra.mxu0 0
    %1940 = vmatprep.subr.bf16.mxu0 0
    %1941 = vmatpush1.bf16.xpose.msra.mxu0 0
    %1942 = vmatprep.subr.bf16.mxu0 0
    %1943 = vmatpush1.bf16.xpose.msra.mxu0 0
    %1944 = vmatprep.subr.bf16.mxu0 0
    %1945 = vmatpush1.bf16.xpose.msra.mxu0 0
    %1946 = vmatprep.subr.bf16.mxu0 0
    %1947 = vmatpush1.bf16.xpose.msra.mxu0 0
    %1948 = vmatprep.mubr.bf16.mxu0 %v158
    %1949 = vmatmul.mubr.bf16.gmra.mrb[0].mxu0 %v144
    %v1950 = vpop.f32.mrb[0].mxu0
    %v1951 = vadd.f32 %v1911, %v1950
    %v1952 = vpop.f32.mrb[0].mxu0
    %v1953 = vpop.f32.mrb[0].mxu0
    %v1954 = vpop.f32.mrb[0].mxu0
    %1955 = vdwg.mxu0
    %1956 = vmatprep.subr.bf16.mxu0 %v971
    %1957 = vmatpush1.bf16.xpose.msra.mxu0 %v969
    %1958 = vmatprep.subr.bf16.mxu0 0
    %1959 = vmatpush1.bf16.xpose.msra.mxu0 0
    %1960 = vmatprep.subr.bf16.mxu0 0
    %1961 = vmatpush1.bf16.xpose.msra.mxu0 0
    %1962 = vmatprep.subr.bf16.mxu0 0
    %1963 = vmatpush1.bf16.xpose.msra.mxu0 0
    %1964 = vmatprep.subr.bf16.mxu0 0
    %1965 = vmatpush1.bf16.xpose.msra.mxu0 0
    %1966 = vmatprep.subr.bf16.mxu0 0
    %1967 = vmatpush1.bf16.xpose.msra.mxu0 0
    %1968 = vmatprep.subr.bf16.mxu0 0
    %1969 = vmatpush1.bf16.xpose.msra.mxu0 0
    %1970 = vmatprep.subr.bf16.mxu0 0
    %1971 = vmatpush1.bf16.xpose.msra.mxu0 0
    %1972 = vmatprep.subr.bf16.mxu0 0
    %1973 = vmatpush1.bf16.xpose.msra.mxu0 0
    %1974 = vmatprep.subr.bf16.mxu0 0
    %1975 = vmatpush1.bf16.xpose.msra.mxu0 0
    %1976 = vmatprep.subr.bf16.mxu0 0
    %1977 = vmatpush1.bf16.xpose.msra.mxu0 0
    %1978 = vmatprep.subr.bf16.mxu0 0
    %1979 = vmatpush1.bf16.xpose.msra.mxu0 0
    %1980 = vmatprep.subr.bf16.mxu0 0
    %1981 = vmatpush1.bf16.xpose.msra.mxu0 0
    %1982 = vmatprep.subr.bf16.mxu0 0
    %1983 = vmatpush1.bf16.xpose.msra.mxu0 0
    %1984 = vmatprep.subr.bf16.mxu0 0
    %1985 = vmatpush1.bf16.xpose.msra.mxu0 0
    %1986 = vmatprep.subr.bf16.mxu0 0
    %1987 = vmatpush1.bf16.xpose.msra.mxu0 0
    %1988 = vmatprep.mubr.bf16.mxu0 %v162
    %1989 = vmatmul.mubr.bf16.gmra.mrb[0].mxu0 %v160
    %v1990 = vpop.f32.mrb[0].mxu0
    %v1991 = vadd.f32 %v1951, %v1990
    %v1992 = vpop.f32.mrb[0].mxu0
    %v1993 = vpop.f32.mrb[0].mxu0
    %v1994 = vpop.f32.mrb[0].mxu0
    %1995 = vdwg.mxu0
    %1996 = vmatprep.subr.bf16.mxu0 %v1009
    %1997 = vmatpush1.bf16.xpose.msra.mxu0 %v995
    %1998 = vmatprep.subr.bf16.mxu0 0
    %1999 = vmatpush1.bf16.xpose.msra.mxu0 0
    %2000 = vmatprep.subr.bf16.mxu0 0
    %2001 = vmatpush1.bf16.xpose.msra.mxu0 0
    %2002 = vmatprep.subr.bf16.mxu0 0
    %2003 = vmatpush1.bf16.xpose.msra.mxu0 0
    %2004 = vmatprep.subr.bf16.mxu0 0
    %2005 = vmatpush1.bf16.xpose.msra.mxu0 0
    %2006 = vmatprep.subr.bf16.mxu0 0
    %2007 = vmatpush1.bf16.xpose.msra.mxu0 0
    %2008 = vmatprep.subr.bf16.mxu0 0
    %2009 = vmatpush1.bf16.xpose.msra.mxu0 0
    %2010 = vmatprep.subr.bf16.mxu0 0
    %2011 = vmatpush1.bf16.xpose.msra.mxu0 0
    %2012 = vmatprep.subr.bf16.mxu0 0
    %2013 = vmatpush1.bf16.xpose.msra.mxu0 0
    %2014 = vmatprep.subr.bf16.mxu0 0
    %2015 = vmatpush1.bf16.xpose.msra.mxu0 0
    %2016 = vmatprep.subr.bf16.mxu0 0
    %2017 = vmatpush1.bf16.xpose.msra.mxu0 0
    %2018 = vmatprep.subr.bf16.mxu0 0
    %2019 = vmatpush1.bf16.xpose.msra.mxu0 0
    %2020 = vmatprep.subr.bf16.mxu0 0
    %2021 = vmatpush1.bf16.xpose.msra.mxu0 0
    %2022 = vmatprep.subr.bf16.mxu0 0
    %2023 = vmatpush1.bf16.xpose.msra.mxu0 0
    %2024 = vmatprep.subr.bf16.mxu0 0
    %2025 = vmatpush1.bf16.xpose.msra.mxu0 0
    %2026 = vmatprep.subr.bf16.mxu0 0
    %2027 = vmatpush1.bf16.xpose.msra.mxu0 0
    %2028 = vmatprep.mubr.bf16.mxu0 %v200
    %2029 = vmatmul.mubr.bf16.gmra.mrb[0].mxu0 %v186
    %v2030 = vpop.f32.mrb[0].mxu0
    %v2031 = vadd.f32 %v1991, %v2030
    %v2032 = vpop.f32.mrb[0].mxu0
    %v2033 = vpop.f32.mrb[0].mxu0
    %v2034 = vpop.f32.mrb[0].mxu0
    %2035 = vdwg.mxu0
    %2036 = vmatprep.subr.bf16.mxu0 %v1019
    %2037 = vmatpush1.bf16.xpose.msra.mxu0 %v1017
    %2038 = vmatprep.subr.bf16.mxu0 0
    %2039 = vmatpush1.bf16.xpose.msra.mxu0 0
    %2040 = vmatprep.subr.bf16.mxu0 0
    %2041 = vmatpush1.bf16.xpose.msra.mxu0 0
    %2042 = vmatprep.subr.bf16.mxu0 0
    %2043 = vmatpush1.bf16.xpose.msra.mxu0 0
    %2044 = vmatprep.subr.bf16.mxu0 0
    %2045 = vmatpush1.bf16.xpose.msra.mxu0 0
    %2046 = vmatprep.subr.bf16.mxu0 0
    %2047 = vmatpush1.bf16.xpose.msra.mxu0 0
    %2048 = vmatprep.subr.bf16.mxu0 0
    %2049 = vmatpush1.bf16.xpose.msra.mxu0 0
    %2050 = vmatprep.subr.bf16.mxu0 0
    %2051 = vmatpush1.bf16.xpose.msra.mxu0 0
    %2052 = vmatprep.subr.bf16.mxu0 0
    %2053 = vmatpush1.bf16.xpose.msra.mxu0 0
    %2054 = vmatprep.subr.bf16.mxu0 0
    %2055 = vmatpush1.bf16.xpose.msra.mxu0 0
    %2056 = vmatprep.subr.bf16.mxu0 0
    %2057 = vmatpush1.bf16.xpose.msra.mxu0 0
    %2058 = vmatprep.subr.bf16.mxu0 0
    %2059 = vmatpush1.bf16.xpose.msra.mxu0 0
    %2060 = vmatprep.subr.bf16.mxu0 0
    %2061 = vmatpush1.bf16.xpose.msra.mxu0 0
    %2062 = vmatprep.subr.bf16.mxu0 0
    %2063 = vmatpush1.bf16.xpose.msra.mxu0 0
    %2064 = vmatprep.subr.bf16.mxu0 0
    %2065 = vmatpush1.bf16.xpose.msra.mxu0 0
    %2066 = vmatprep.subr.bf16.mxu0 0
    %2067 = vmatpush1.bf16.xpose.msra.mxu0 0
    %2068 = vmatprep.mubr.bf16.mxu0 %v210
    %2069 = vmatmul.mubr.bf16.gmra.mrb[0].mxu0 %v208
    %v2070 = vpop.f32.mrb[0].mxu0
    %v2071 = vadd.f32 %v2031, %v2070
    %v2072 = vpop.f32.mrb[0].mxu0
    %v2073 = vpop.f32.mrb[0].mxu0
    %v2074 = vpop.f32.mrb[0].mxu0
    %2075 = vdwg.mxu0
    %2076 = vmatprep.subr.bf16.mxu0 %v1016
    %2077 = vmatpush1.bf16.xpose.msra.mxu0 %v1002
    %2078 = vmatprep.subr.bf16.mxu0 0
    %2079 = vmatpush1.bf16.xpose.msra.mxu0 0
    %2080 = vmatprep.subr.bf16.mxu0 0
    %2081 = vmatpush1.bf16.xpose.msra.mxu0 0
    %2082 = vmatprep.subr.bf16.mxu0 0
    %2083 = vmatpush1.bf16.xpose.msra.mxu0 0
    %2084 = vmatprep.subr.bf16.mxu0 0
    %2085 = vmatpush1.bf16.xpose.msra.mxu0 0
    %2086 = vmatprep.subr.bf16.mxu0 0
    %2087 = vmatpush1.bf16.xpose.msra.mxu0 0
    %2088 = vmatprep.subr.bf16.mxu0 0
    %2089 = vmatpush1.bf16.xpose.msra.mxu0 0
    %2090 = vmatprep.subr.bf16.mxu0 0
    %2091 = vmatpush1.bf16.xpose.msra.mxu0 0
    %2092 = vmatprep.subr.bf16.mxu0 0
    %2093 = vmatpush1.bf16.xpose.msra.mxu0 0
    %2094 = vmatprep.subr.bf16.mxu0 0
    %2095 = vmatpush1.bf16.xpose.msra.mxu0 0
    %2096 = vmatprep.subr.bf16.mxu0 0
    %2097 = vmatpush1.bf16.xpose.msra.mxu0 0
    %2098 = vmatprep.subr.bf16.mxu0 0
    %2099 = vmatpush1.bf16.xpose.msra.mxu0 0
    %2100 = vmatprep.subr.bf16.mxu0 0
    %2101 = vmatpush1.bf16.xpose.msra.mxu0 0
    %2102 = vmatprep.subr.bf16.mxu0 0
    %2103 = vmatpush1.bf16.xpose.msra.mxu0 0
    %2104 = vmatprep.subr.bf16.mxu0 0
    %2105 = vmatpush1.bf16.xpose.msra.mxu0 0
    %2106 = vmatprep.subr.bf16.mxu0 0
    %2107 = vmatpush1.bf16.xpose.msra.mxu0 0
    %2108 = vmatprep.mubr.bf16.mxu0 %v207
    %2109 = vmatmul.mubr.bf16.gmra.mrb[0].mxu0 %v193
    %v2110 = vpop.f32.mrb[0].mxu0
    %v2111 = vadd.f32 %v2071, %v2110
    %v2112 = vpop.f32.mrb[0].mxu0
    %v2113 = vpop.f32.mrb[0].mxu0
    %v2114 = vpop.f32.mrb[0].mxu0
    %2115 = vdwg.mxu0
    %2116 = vmatprep.subr.bf16.mxu0 %v1020
    %2117 = vmatpush1.bf16.xpose.msra.mxu0 %v1018
    %2118 = vmatprep.subr.bf16.mxu0 0
    %2119 = vmatpush1.bf16.xpose.msra.mxu0 0
    %2120 = vmatprep.subr.bf16.mxu0 0
    %2121 = vmatpush1.bf16.xpose.msra.mxu0 0
    %2122 = vmatprep.subr.bf16.mxu0 0
    %2123 = vmatpush1.bf16.xpose.msra.mxu0 0
    %2124 = vmatprep.subr.bf16.mxu0 0
    %2125 = vmatpush1.bf16.xpose.msra.mxu0 0
    %2126 = vmatprep.subr.bf16.mxu0 0
    %2127 = vmatpush1.bf16.xpose.msra.mxu0 0
    %2128 = vmatprep.subr.bf16.mxu0 0
    %2129 = vmatpush1.bf16.xpose.msra.mxu0 0
    %2130 = vmatprep.subr.bf16.mxu0 0
    %2131 = vmatpush1.bf16.xpose.msra.mxu0 0
    %2132 = vmatprep.subr.bf16.mxu0 0
    %2133 = vmatpush1.bf16.xpose.msra.mxu0 0
    %2134 = vmatprep.subr.bf16.mxu0 0
    %2135 = vmatpush1.bf16.xpose.msra.mxu0 0
    %2136 = vmatprep.subr.bf16.mxu0 0
    %2137 = vmatpush1.bf16.xpose.msra.mxu0 0
    %2138 = vmatprep.subr.bf16.mxu0 0
    %2139 = vmatpush1.bf16.xpose.msra.mxu0 0
    %2140 = vmatprep.subr.bf16.mxu0 0
    %2141 = vmatpush1.bf16.xpose.msra.mxu0 0
    %2142 = vmatprep.subr.bf16.mxu0 0
    %2143 = vmatpush1.bf16.xpose.msra.mxu0 0
    %2144 = vmatprep.subr.bf16.mxu0 0
    %2145 = vmatpush1.bf16.xpose.msra.mxu0 0
    %2146 = vmatprep.subr.bf16.mxu0 0
    %2147 = vmatpush1.bf16.xpose.msra.mxu0 0
    %2148 = vmatprep.mubr.bf16.mxu0 %v211
    %2149 = vmatmul.mubr.bf16.gmra.mrb[0].mxu0 %v209
    %v2150 = vpop.f32.mrb[0].mxu0
    %v2151 = vadd.f32 %v2111, %v2150
    %v2152 = vpop.f32.mrb[0].mxu0
    %v2153 = vpop.f32.mrb[0].mxu0
    %v2154 = vpop.f32.mrb[0].mxu0
    %2155 = vdwg.mxu0
    %2156 = vmatprep.subr.bf16.mxu0 %v1058
    %2157 = vmatpush1.bf16.xpose.msra.mxu0 %v1044
    %2158 = vmatprep.subr.bf16.mxu0 0
    %2159 = vmatpush1.bf16.xpose.msra.mxu0 0
    %2160 = vmatprep.subr.bf16.mxu0 0
    %2161 = vmatpush1.bf16.xpose.msra.mxu0 0
    %2162 = vmatprep.subr.bf16.mxu0 0
    %2163 = vmatpush1.bf16.xpose.msra.mxu0 0
    %2164 = vmatprep.subr.bf16.mxu0 0
    %2165 = vmatpush1.bf16.xpose.msra.mxu0 0
    %2166 = vmatprep.subr.bf16.mxu0 0
    %2167 = vmatpush1.bf16.xpose.msra.mxu0 0
    %2168 = vmatprep.subr.bf16.mxu0 0
    %2169 = vmatpush1.bf16.xpose.msra.mxu0 0
    %2170 = vmatprep.subr.bf16.mxu0 0
    %2171 = vmatpush1.bf16.xpose.msra.mxu0 0
    %2172 = vmatprep.subr.bf16.mxu0 0
    %2173 = vmatpush1.bf16.xpose.msra.mxu0 0
    %2174 = vmatprep.subr.bf16.mxu0 0
    %2175 = vmatpush1.bf16.xpose.msra.mxu0 0
    %2176 = vmatprep.subr.bf16.mxu0 0
    %2177 = vmatpush1.bf16.xpose.msra.mxu0 0
    %2178 = vmatprep.subr.bf16.mxu0 0
    %2179 = vmatpush1.bf16.xpose.msra.mxu0 0
    %2180 = vmatprep.subr.bf16.mxu0 0
    %2181 = vmatpush1.bf16.xpose.msra.mxu0 0
    %2182 = vmatprep.subr.bf16.mxu0 0
    %2183 = vmatpush1.bf16.xpose.msra.mxu0 0
    %2184 = vmatprep.subr.bf16.mxu0 0
    %2185 = vmatpush1.bf16.xpose.msra.mxu0 0
    %2186 = vmatprep.subr.bf16.mxu0 0
    %2187 = vmatpush1.bf16.xpose.msra.mxu0 0
    %2188 = vmatprep.mubr.bf16.mxu0 %v249
    %2189 = vmatmul.mubr.bf16.gmra.mrb[0].mxu0 %v235
    %v2190 = vpop.f32.mrb[0].mxu0
    %v2191 = vadd.f32 %v2151, %v2190
    %v2192 = vpop.f32.mrb[0].mxu0
    %v2193 = vpop.f32.mrb[0].mxu0
    %v2194 = vpop.f32.mrb[0].mxu0
    %2195 = vdwg.mxu0
    %2196 = vmatprep.subr.bf16.mxu0 %v1068
    %2197 = vmatpush1.bf16.xpose.msra.mxu0 %v1066
    %2198 = vmatprep.subr.bf16.mxu0 0
    %2199 = vmatpush1.bf16.xpose.msra.mxu0 0
    %2200 = vmatprep.subr.bf16.mxu0 0
    %2201 = vmatpush1.bf16.xpose.msra.mxu0 0
    %2202 = vmatprep.subr.bf16.mxu0 0
    %2203 = vmatpush1.bf16.xpose.msra.mxu0 0
    %2204 = vmatprep.subr.bf16.mxu0 0
    %2205 = vmatpush1.bf16.xpose.msra.mxu0 0
    %2206 = vmatprep.subr.bf16.mxu0 0
    %2207 = vmatpush1.bf16.xpose.msra.mxu0 0
    %2208 = vmatprep.subr.bf16.mxu0 0
    %2209 = vmatpush1.bf16.xpose.msra.mxu0 0
    %2210 = vmatprep.subr.bf16.mxu0 0
    %2211 = vmatpush1.bf16.xpose.msra.mxu0 0
    %2212 = vmatprep.subr.bf16.mxu0 0
    %2213 = vmatpush1.bf16.xpose.msra.mxu0 0
    %2214 = vmatprep.subr.bf16.mxu0 0
    %2215 = vmatpush1.bf16.xpose.msra.mxu0 0
    %2216 = vmatprep.subr.bf16.mxu0 0
    %2217 = vmatpush1.bf16.xpose.msra.mxu0 0
    %2218 = vmatprep.subr.bf16.mxu0 0
    %2219 = vmatpush1.bf16.xpose.msra.mxu0 0
    %2220 = vmatprep.subr.bf16.mxu0 0
    %2221 = vmatpush1.bf16.xpose.msra.mxu0 0
    %2222 = vmatprep.subr.bf16.mxu0 0
    %2223 = vmatpush1.bf16.xpose.msra.mxu0 0
    %2224 = vmatprep.subr.bf16.mxu0 0
    %2225 = vmatpush1.bf16.xpose.msra.mxu0 0
    %2226 = vmatprep.subr.bf16.mxu0 0
    %2227 = vmatpush1.bf16.xpose.msra.mxu0 0
    %2228 = vmatprep.mubr.bf16.mxu0 %v259
    %2229 = vmatmul.mubr.bf16.gmra.mrb[0].mxu0 %v257
    %v2230 = vpop.f32.mrb[0].mxu0
    %v2231 = vadd.f32 %v2191, %v2230
    %v2232 = vpop.f32.mrb[0].mxu0
    %v2233 = vpop.f32.mrb[0].mxu0
    %v2234 = vpop.f32.mrb[0].mxu0
    %2235 = vdwg.mxu0
    %2236 = vmatprep.subr.bf16.mxu0 %v1065
    %2237 = vmatpush1.bf16.xpose.msra.mxu0 %v1051
    %2238 = vmatprep.subr.bf16.mxu0 0
    %2239 = vmatpush1.bf16.xpose.msra.mxu0 0
    %2240 = vmatprep.subr.bf16.mxu0 0
    %2241 = vmatpush1.bf16.xpose.msra.mxu0 0
    %2242 = vmatprep.subr.bf16.mxu0 0
    %2243 = vmatpush1.bf16.xpose.msra.mxu0 0
    %2244 = vmatprep.subr.bf16.mxu0 0
    %2245 = vmatpush1.bf16.xpose.msra.mxu0 0
    %2246 = vmatprep.subr.bf16.mxu0 0
    %2247 = vmatpush1.bf16.xpose.msra.mxu0 0
    %2248 = vmatprep.subr.bf16.mxu0 0
    %2249 = vmatpush1.bf16.xpose.msra.mxu0 0
    %2250 = vmatprep.subr.bf16.mxu0 0
    %2251 = vmatpush1.bf16.xpose.msra.mxu0 0
    %2252 = vmatprep.subr.bf16.mxu0 0
    %2253 = vmatpush1.bf16.xpose.msra.mxu0 0
    %2254 = vmatprep.subr.bf16.mxu0 0
    %2255 = vmatpush1.bf16.xpose.msra.mxu0 0
    %2256 = vmatprep.subr.bf16.mxu0 0
    %2257 = vmatpush1.bf16.xpose.msra.mxu0 0
    %2258 = vmatprep.subr.bf16.mxu0 0
    %2259 = vmatpush1.bf16.xpose.msra.mxu0 0
    %2260 = vmatprep.subr.bf16.mxu0 0
    %2261 = vmatpush1.bf16.xpose.msra.mxu0 0
    %2262 = vmatprep.subr.bf16.mxu0 0
    %2263 = vmatpush1.bf16.xpose.msra.mxu0 0
    %2264 = vmatprep.subr.bf16.mxu0 0
    %2265 = vmatpush1.bf16.xpose.msra.mxu0 0
    %2266 = vmatprep.subr.bf16.mxu0 0
    %2267 = vmatpush1.bf16.xpose.msra.mxu0 0
    %2268 = vmatprep.mubr.bf16.mxu0 %v256
    %2269 = vmatmul.mubr.bf16.gmra.mrb[0].mxu0 %v242
    %v2270 = vpop.f32.mrb[0].mxu0
    %v2271 = vadd.f32 %v2231, %v2270
    %v2272 = vpop.f32.mrb[0].mxu0
    %v2273 = vpop.f32.mrb[0].mxu0
    %v2274 = vpop.f32.mrb[0].mxu0
    %2275 = vdwg.mxu0
    %2276 = vmatprep.subr.bf16.mxu0 %v1069
    %2277 = vmatpush1.bf16.xpose.msra.mxu0 %v1067
    %2278 = vmatprep.subr.bf16.mxu0 0
    %2279 = vmatpush1.bf16.xpose.msra.mxu0 0
    %2280 = vmatprep.subr.bf16.mxu0 0
    %2281 = vmatpush1.bf16.xpose.msra.mxu0 0
    %2282 = vmatprep.subr.bf16.mxu0 0
    %2283 = vmatpush1.bf16.xpose.msra.mxu0 0
    %2284 = vmatprep.subr.bf16.mxu0 0
    %2285 = vmatpush1.bf16.xpose.msra.mxu0 0
    %2286 = vmatprep.subr.bf16.mxu0 0
    %2287 = vmatpush1.bf16.xpose.msra.mxu0 0
    %2288 = vmatprep.subr.bf16.mxu0 0
    %2289 = vmatpush1.bf16.xpose.msra.mxu0 0
    %2290 = vmatprep.subr.bf16.mxu0 0
    %2291 = vmatpush1.bf16.xpose.msra.mxu0 0
    %2292 = vmatprep.subr.bf16.mxu0 0
    %2293 = vmatpush1.bf16.xpose.msra.mxu0 0
    %2294 = vmatprep.subr.bf16.mxu0 0
    %2295 = vmatpush1.bf16.xpose.msra.mxu0 0
    %2296 = vmatprep.subr.bf16.mxu0 0
    %2297 = vmatpush1.bf16.xpose.msra.mxu0 0
    %2298 = vmatprep.subr.bf16.mxu0 0
    %2299 = vmatpush1.bf16.xpose.msra.mxu0 0
    %2300 = vmatprep.subr.bf16.mxu0 0
    %2301 = vmatpush1.bf16.xpose.msra.mxu0 0
    %2302 = vmatprep.subr.bf16.mxu0 0
    %2303 = vmatpush1.bf16.xpose.msra.mxu0 0
    %2304 = vmatprep.subr.bf16.mxu0 0
    %2305 = vmatpush1.bf16.xpose.msra.mxu0 0
    %2306 = vmatprep.subr.bf16.mxu0 0
    %2307 = vmatpush1.bf16.xpose.msra.mxu0 0
    %2308 = vmatprep.mubr.bf16.mxu0 %v260
    %2309 = vmatmul.mubr.bf16.gmra.mrb[0].mxu0 %v258
    %v2310 = vpop.f32.mrb[0].mxu0
    %v2311 = vadd.f32 %v2271, %v2310
    %v2312 = vpop.f32.mrb[0].mxu0
    %v2313 = vpop.f32.mrb[0].mxu0
    %v2314 = vpop.f32.mrb[0].mxu0
    %2315 = vdwg.mxu0
    %2316 = vmatprep.subr.bf16.mxu0 %v1107
    %2317 = vmatpush1.bf16.xpose.msra.mxu0 %v1093
    %2318 = vmatprep.subr.bf16.mxu0 0
    %2319 = vmatpush1.bf16.xpose.msra.mxu0 0
    %2320 = vmatprep.subr.bf16.mxu0 0
    %2321 = vmatpush1.bf16.xpose.msra.mxu0 0
    %2322 = vmatprep.subr.bf16.mxu0 0
    %2323 = vmatpush1.bf16.xpose.msra.mxu0 0
    %2324 = vmatprep.subr.bf16.mxu0 0
    %2325 = vmatpush1.bf16.xpose.msra.mxu0 0
    %2326 = vmatprep.subr.bf16.mxu0 0
    %2327 = vmatpush1.bf16.xpose.msra.mxu0 0
    %2328 = vmatprep.subr.bf16.mxu0 0
    %2329 = vmatpush1.bf16.xpose.msra.mxu0 0
    %2330 = vmatprep.subr.bf16.mxu0 0
    %2331 = vmatpush1.bf16.xpose.msra.mxu0 0
    %2332 = vmatprep.subr.bf16.mxu0 0
    %2333 = vmatpush1.bf16.xpose.msra.mxu0 0
    %2334 = vmatprep.subr.bf16.mxu0 0
    %2335 = vmatpush1.bf16.xpose.msra.mxu0 0
    %2336 = vmatprep.subr.bf16.mxu0 0
    %2337 = vmatpush1.bf16.xpose.msra.mxu0 0
    %2338 = vmatprep.subr.bf16.mxu0 0
    %2339 = vmatpush1.bf16.xpose.msra.mxu0 0
    %2340 = vmatprep.subr.bf16.mxu0 0
    %2341 = vmatpush1.bf16.xpose.msra.mxu0 0
    %2342 = vmatprep.subr.bf16.mxu0 0
    %2343 = vmatpush1.bf16.xpose.msra.mxu0 0
    %2344 = vmatprep.subr.bf16.mxu0 0
    %2345 = vmatpush1.bf16.xpose.msra.mxu0 0
    %2346 = vmatprep.subr.bf16.mxu0 0
    %2347 = vmatpush1.bf16.xpose.msra.mxu0 0
    %2348 = vmatprep.mubr.bf16.mxu0 %v298
    %2349 = vmatmul.mubr.bf16.gmra.mrb[0].mxu0 %v284
    %v2350 = vpop.f32.mrb[0].mxu0
    %v2351 = vadd.f32 %v2311, %v2350
    %v2352 = vpop.f32.mrb[0].mxu0
    %v2353 = vpop.f32.mrb[0].mxu0
    %v2354 = vpop.f32.mrb[0].mxu0
    %2355 = vdwg.mxu0
    %2356 = vmatprep.subr.bf16.mxu0 %v1117
    %2357 = vmatpush1.bf16.xpose.msra.mxu0 %v1115
    %2358 = vmatprep.subr.bf16.mxu0 0
    %2359 = vmatpush1.bf16.xpose.msra.mxu0 0
    %2360 = vmatprep.subr.bf16.mxu0 0
    %2361 = vmatpush1.bf16.xpose.msra.mxu0 0
    %2362 = vmatprep.subr.bf16.mxu0 0
    %2363 = vmatpush1.bf16.xpose.msra.mxu0 0
    %2364 = vmatprep.subr.bf16.mxu0 0
    %2365 = vmatpush1.bf16.xpose.msra.mxu0 0
    %2366 = vmatprep.subr.bf16.mxu0 0
    %2367 = vmatpush1.bf16.xpose.msra.mxu0 0
    %2368 = vmatprep.subr.bf16.mxu0 0
    %2369 = vmatpush1.bf16.xpose.msra.mxu0 0
    %2370 = vmatprep.subr.bf16.mxu0 0
    %2371 = vmatpush1.bf16.xpose.msra.mxu0 0
    %2372 = vmatprep.subr.bf16.mxu0 0
    %2373 = vmatpush1.bf16.xpose.msra.mxu0 0
    %2374 = vmatprep.subr.bf16.mxu0 0
    %2375 = vmatpush1.bf16.xpose.msra.mxu0 0
    %2376 = vmatprep.subr.bf16.mxu0 0
    %2377 = vmatpush1.bf16.xpose.msra.mxu0 0
    %2378 = vmatprep.subr.bf16.mxu0 0
    %2379 = vmatpush1.bf16.xpose.msra.mxu0 0
    %2380 = vmatprep.subr.bf16.mxu0 0
    %2381 = vmatpush1.bf16.xpose.msra.mxu0 0
    %2382 = vmatprep.subr.bf16.mxu0 0
    %2383 = vmatpush1.bf16.xpose.msra.mxu0 0
    %2384 = vmatprep.subr.bf16.mxu0 0
    %2385 = vmatpush1.bf16.xpose.msra.mxu0 0
    %2386 = vmatprep.subr.bf16.mxu0 0
    %2387 = vmatpush1.bf16.xpose.msra.mxu0 0
    %2388 = vmatprep.mubr.bf16.mxu0 %v308
    %2389 = vmatmul.mubr.bf16.gmra.mrb[0].mxu0 %v306
    %v2390 = vpop.f32.mrb[0].mxu0
    %v2391 = vadd.f32 %v2351, %v2390
    %v2392 = vpop.f32.mrb[0].mxu0
    %v2393 = vpop.f32.mrb[0].mxu0
    %v2394 = vpop.f32.mrb[0].mxu0
    %2395 = vdwg.mxu0
    %2396 = vmatprep.subr.bf16.mxu0 %v1114
    %2397 = vmatpush1.bf16.xpose.msra.mxu0 %v1100
    %2398 = vmatprep.subr.bf16.mxu0 0
    %2399 = vmatpush1.bf16.xpose.msra.mxu0 0
    %2400 = vmatprep.subr.bf16.mxu0 0
    %2401 = vmatpush1.bf16.xpose.msra.mxu0 0
    %2402 = vmatprep.subr.bf16.mxu0 0
    %2403 = vmatpush1.bf16.xpose.msra.mxu0 0
    %2404 = vmatprep.subr.bf16.mxu0 0
    %2405 = vmatpush1.bf16.xpose.msra.mxu0 0
    %2406 = vmatprep.subr.bf16.mxu0 0
    %2407 = vmatpush1.bf16.xpose.msra.mxu0 0
    %2408 = vmatprep.subr.bf16.mxu0 0
    %2409 = vmatpush1.bf16.xpose.msra.mxu0 0
    %2410 = vmatprep.subr.bf16.mxu0 0
    %2411 = vmatpush1.bf16.xpose.msra.mxu0 0
    %2412 = vmatprep.subr.bf16.mxu0 0
    %2413 = vmatpush1.bf16.xpose.msra.mxu0 0
    %2414 = vmatprep.subr.bf16.mxu0 0
    %2415 = vmatpush1.bf16.xpose.msra.mxu0 0
    %2416 = vmatprep.subr.bf16.mxu0 0
    %2417 = vmatpush1.bf16.xpose.msra.mxu0 0
    %2418 = vmatprep.subr.bf16.mxu0 0
    %2419 = vmatpush1.bf16.xpose.msra.mxu0 0
    %2420 = vmatprep.subr.bf16.mxu0 0
    %2421 = vmatpush1.bf16.xpose.msra.mxu0 0
    %2422 = vmatprep.subr.bf16.mxu0 0
    %2423 = vmatpush1.bf16.xpose.msra.mxu0 0
    %2424 = vmatprep.subr.bf16.mxu0 0
    %2425 = vmatpush1.bf16.xpose.msra.mxu0 0
    %2426 = vmatprep.subr.bf16.mxu0 0
    %2427 = vmatpush1.bf16.xpose.msra.mxu0 0
    %2428 = vmatprep.mubr.bf16.mxu0 %v305
    %2429 = vmatmul.mubr.bf16.gmra.mrb[0].mxu0 %v291
    %v2430 = vpop.f32.mrb[0].mxu0
    %v2431 = vadd.f32 %v2391, %v2430
    %v2432 = vpop.f32.mrb[0].mxu0
    %v2433 = vpop.f32.mrb[0].mxu0
    %v2434 = vpop.f32.mrb[0].mxu0
    %2435 = vdwg.mxu0
    %2436 = vmatprep.subr.bf16.mxu0 %v1118
    %2437 = vmatpush1.bf16.xpose.msra.mxu0 %v1116
    %2438 = vmatprep.subr.bf16.mxu0 0
    %2439 = vmatpush1.bf16.xpose.msra.mxu0 0
    %2440 = vmatprep.subr.bf16.mxu0 0
    %2441 = vmatpush1.bf16.xpose.msra.mxu0 0
    %2442 = vmatprep.subr.bf16.mxu0 0
    %2443 = vmatpush1.bf16.xpose.msra.mxu0 0
    %2444 = vmatprep.subr.bf16.mxu0 0
    %2445 = vmatpush1.bf16.xpose.msra.mxu0 0
    %2446 = vmatprep.subr.bf16.mxu0 0
    %2447 = vmatpush1.bf16.xpose.msra.mxu0 0
    %2448 = vmatprep.subr.bf16.mxu0 0
    %2449 = vmatpush1.bf16.xpose.msra.mxu0 0
    %2450 = vmatprep.subr.bf16.mxu0 0
    %2451 = vmatpush1.bf16.xpose.msra.mxu0 0
    %2452 = vmatprep.subr.bf16.mxu0 0
    %2453 = vmatpush1.bf16.xpose.msra.mxu0 0
    %2454 = vmatprep.subr.bf16.mxu0 0
    %2455 = vmatpush1.bf16.xpose.msra.mxu0 0
    %2456 = vmatprep.subr.bf16.mxu0 0
    %2457 = vmatpush1.bf16.xpose.msra.mxu0 0
    %2458 = vmatprep.subr.bf16.mxu0 0
    %2459 = vmatpush1.bf16.xpose.msra.mxu0 0
    %2460 = vmatprep.subr.bf16.mxu0 0
    %2461 = vmatpush1.bf16.xpose.msra.mxu0 0
    %2462 = vmatprep.subr.bf16.mxu0 0
    %2463 = vmatpush1.bf16.xpose.msra.mxu0 0
    %2464 = vmatprep.subr.bf16.mxu0 0
    %2465 = vmatpush1.bf16.xpose.msra.mxu0 0
    %2466 = vmatprep.subr.bf16.mxu0 0
    %2467 = vmatpush1.bf16.xpose.msra.mxu0 0
    %2468 = vmatprep.mubr.bf16.mxu0 %v309
    %2469 = vmatmul.mubr.bf16.gmra.mrb[0].mxu0 %v307
    %v2470 = vpop.f32.mrb[0].mxu0
    %v2471 = vadd.f32 %v2431, %v2470
    %v2472 = vpop.f32.mrb[0].mxu0
    %v2473 = vpop.f32.mrb[0].mxu0
    %v2474 = vpop.f32.mrb[0].mxu0
    %2475 = vdwg.mxu0
    %2476 = vmatprep.subr.bf16.mxu0 %v1156
    %2477 = vmatpush1.bf16.xpose.msra.mxu0 %v1142
    %2478 = vmatprep.subr.bf16.mxu0 0
    %2479 = vmatpush1.bf16.xpose.msra.mxu0 0
    %2480 = vmatprep.subr.bf16.mxu0 0
    %2481 = vmatpush1.bf16.xpose.msra.mxu0 0
    %2482 = vmatprep.subr.bf16.mxu0 0
    %2483 = vmatpush1.bf16.xpose.msra.mxu0 0
    %2484 = vmatprep.subr.bf16.mxu0 0
    %2485 = vmatpush1.bf16.xpose.msra.mxu0 0
    %2486 = vmatprep.subr.bf16.mxu0 0
    %2487 = vmatpush1.bf16.xpose.msra.mxu0 0
    %2488 = vmatprep.subr.bf16.mxu0 0
    %2489 = vmatpush1.bf16.xpose.msra.mxu0 0
    %2490 = vmatprep.subr.bf16.mxu0 0
    %2491 = vmatpush1.bf16.xpose.msra.mxu0 0
    %2492 = vmatprep.subr.bf16.mxu0 0
    %2493 = vmatpush1.bf16.xpose.msra.mxu0 0
    %2494 = vmatprep.subr.bf16.mxu0 0
    %2495 = vmatpush1.bf16.xpose.msra.mxu0 0
    %2496 = vmatprep.subr.bf16.mxu0 0
    %2497 = vmatpush1.bf16.xpose.msra.mxu0 0
    %2498 = vmatprep.subr.bf16.mxu0 0
    %2499 = vmatpush1.bf16.xpose.msra.mxu0 0
    %2500 = vmatprep.subr.bf16.mxu0 0
    %2501 = vmatpush1.bf16.xpose.msra.mxu0 0
    %2502 = vmatprep.subr.bf16.mxu0 0
    %2503 = vmatpush1.bf16.xpose.msra.mxu0 0
    %2504 = vmatprep.subr.bf16.mxu0 0
    %2505 = vmatpush1.bf16.xpose.msra.mxu0 0
    %2506 = vmatprep.subr.bf16.mxu0 0
    %2507 = vmatpush1.bf16.xpose.msra.mxu0 0
    %2508 = vmatprep.mubr.bf16.mxu0 %v347
    %2509 = vmatmul.mubr.bf16.gmra.mrb[0].mxu0 %v333
    %v2510 = vpop.f32.mrb[0].mxu0
    %v2511 = vadd.f32 %v2471, %v2510
    %v2512 = vpop.f32.mrb[0].mxu0
    %v2513 = vpop.f32.mrb[0].mxu0
    %v2514 = vpop.f32.mrb[0].mxu0
    %2515 = vdwg.mxu0
    %2516 = vmatprep.subr.bf16.mxu0 %v1166
    %2517 = vmatpush1.bf16.xpose.msra.mxu0 %v1164
    %2518 = vmatprep.subr.bf16.mxu0 0
    %2519 = vmatpush1.bf16.xpose.msra.mxu0 0
    %2520 = vmatprep.subr.bf16.mxu0 0
    %2521 = vmatpush1.bf16.xpose.msra.mxu0 0
    %2522 = vmatprep.subr.bf16.mxu0 0
    %2523 = vmatpush1.bf16.xpose.msra.mxu0 0
    %2524 = vmatprep.subr.bf16.mxu0 0
    %2525 = vmatpush1.bf16.xpose.msra.mxu0 0
    %2526 = vmatprep.subr.bf16.mxu0 0
    %2527 = vmatpush1.bf16.xpose.msra.mxu0 0
    %2528 = vmatprep.subr.bf16.mxu0 0
    %2529 = vmatpush1.bf16.xpose.msra.mxu0 0
    %2530 = vmatprep.subr.bf16.mxu0 0
    %2531 = vmatpush1.bf16.xpose.msra.mxu0 0
    %2532 = vmatprep.subr.bf16.mxu0 0
    %2533 = vmatpush1.bf16.xpose.msra.mxu0 0
    %2534 = vmatprep.subr.bf16.mxu0 0
    %2535 = vmatpush1.bf16.xpose.msra.mxu0 0
    %2536 = vmatprep.subr.bf16.mxu0 0
    %2537 = vmatpush1.bf16.xpose.msra.mxu0 0
    %2538 = vmatprep.subr.bf16.mxu0 0
    %2539 = vmatpush1.bf16.xpose.msra.mxu0 0
    %2540 = vmatprep.subr.bf16.mxu0 0
    %2541 = vmatpush1.bf16.xpose.msra.mxu0 0
    %2542 = vmatprep.subr.bf16.mxu0 0
    %2543 = vmatpush1.bf16.xpose.msra.mxu0 0
    %2544 = vmatprep.subr.bf16.mxu0 0
    %2545 = vmatpush1.bf16.xpose.msra.mxu0 0
    %2546 = vmatprep.subr.bf16.mxu0 0
    %2547 = vmatpush1.bf16.xpose.msra.mxu0 0
    %2548 = vmatprep.mubr.bf16.mxu0 %v357
    %2549 = vmatmul.mubr.bf16.gmra.mrb[0].mxu0 %v355
    %v2550 = vpop.f32.mrb[0].mxu0
    %v2551 = vadd.f32 %v2511, %v2550
    %v2552 = vpop.f32.mrb[0].mxu0
    %v2553 = vpop.f32.mrb[0].mxu0
    %v2554 = vpop.f32.mrb[0].mxu0
    %2555 = vdwg.mxu0
    %2556 = vmatprep.subr.bf16.mxu0 %v1163
    %2557 = vmatpush1.bf16.xpose.msra.mxu0 %v1149
    %2558 = vmatprep.subr.bf16.mxu0 0
    %2559 = vmatpush1.bf16.xpose.msra.mxu0 0
    %2560 = vmatprep.subr.bf16.mxu0 0
    %2561 = vmatpush1.bf16.xpose.msra.mxu0 0
    %2562 = vmatprep.subr.bf16.mxu0 0
    %2563 = vmatpush1.bf16.xpose.msra.mxu0 0
    %2564 = vmatprep.subr.bf16.mxu0 0
    %2565 = vmatpush1.bf16.xpose.msra.mxu0 0
    %2566 = vmatprep.subr.bf16.mxu0 0
    %2567 = vmatpush1.bf16.xpose.msra.mxu0 0
    %2568 = vmatprep.subr.bf16.mxu0 0
    %2569 = vmatpush1.bf16.xpose.msra.mxu0 0
    %2570 = vmatprep.subr.bf16.mxu0 0
    %2571 = vmatpush1.bf16.xpose.msra.mxu0 0
    %2572 = vmatprep.subr.bf16.mxu0 0
    %2573 = vmatpush1.bf16.xpose.msra.mxu0 0
    %2574 = vmatprep.subr.bf16.mxu0 0
    %2575 = vmatpush1.bf16.xpose.msra.mxu0 0
    %2576 = vmatprep.subr.bf16.mxu0 0
    %2577 = vmatpush1.bf16.xpose.msra.mxu0 0
    %2578 = vmatprep.subr.bf16.mxu0 0
    %2579 = vmatpush1.bf16.xpose.msra.mxu0 0
    %2580 = vmatprep.subr.bf16.mxu0 0
    %2581 = vmatpush1.bf16.xpose.msra.mxu0 0
    %2582 = vmatprep.subr.bf16.mxu0 0
    %2583 = vmatpush1.bf16.xpose.msra.mxu0 0
    %2584 = vmatprep.subr.bf16.mxu0 0
    %2585 = vmatpush1.bf16.xpose.msra.mxu0 0
    %2586 = vmatprep.subr.bf16.mxu0 0
    %2587 = vmatpush1.bf16.xpose.msra.mxu0 0
    %2588 = vmatprep.mubr.bf16.mxu0 %v354
    %2589 = vmatmul.mubr.bf16.gmra.mrb[0].mxu0 %v340
    %v2590 = vpop.f32.mrb[0].mxu0
    %v2591 = vadd.f32 %v2551, %v2590
    %v2592 = vpop.f32.mrb[0].mxu0
    %v2593 = vpop.f32.mrb[0].mxu0
    %v2594 = vpop.f32.mrb[0].mxu0
    %2595 = vdwg.mxu0
    %2596 = vmatprep.subr.bf16.mxu0 %v1167
    %2597 = vmatpush1.bf16.xpose.msra.mxu0 %v1165
    %2598 = vmatprep.subr.bf16.mxu0 0
    %2599 = vmatpush1.bf16.xpose.msra.mxu0 0
    %2600 = vmatprep.subr.bf16.mxu0 0
    %2601 = vmatpush1.bf16.xpose.msra.mxu0 0
    %2602 = vmatprep.subr.bf16.mxu0 0
    %2603 = vmatpush1.bf16.xpose.msra.mxu0 0
    %2604 = vmatprep.subr.bf16.mxu0 0
    %2605 = vmatpush1.bf16.xpose.msra.mxu0 0
    %2606 = vmatprep.subr.bf16.mxu0 0
    %2607 = vmatpush1.bf16.xpose.msra.mxu0 0
    %2608 = vmatprep.subr.bf16.mxu0 0
    %2609 = vmatpush1.bf16.xpose.msra.mxu0 0
    %2610 = vmatprep.subr.bf16.mxu0 0
    %2611 = vmatpush1.bf16.xpose.msra.mxu0 0
    %2612 = vmatprep.subr.bf16.mxu0 0
    %2613 = vmatpush1.bf16.xpose.msra.mxu0 0
    %2614 = vmatprep.subr.bf16.mxu0 0
    %2615 = vmatpush1.bf16.xpose.msra.mxu0 0
    %2616 = vmatprep.subr.bf16.mxu0 0
    %2617 = vmatpush1.bf16.xpose.msra.mxu0 0
    %2618 = vmatprep.subr.bf16.mxu0 0
    %2619 = vmatpush1.bf16.xpose.msra.mxu0 0
    %2620 = vmatprep.subr.bf16.mxu0 0
    %2621 = vmatpush1.bf16.xpose.msra.mxu0 0
    %2622 = vmatprep.subr.bf16.mxu0 0
    %2623 = vmatpush1.bf16.xpose.msra.mxu0 0
    %2624 = vmatprep.subr.bf16.mxu0 0
    %2625 = vmatpush1.bf16.xpose.msra.mxu0 0
    %2626 = vmatprep.subr.bf16.mxu0 0
    %2627 = vmatpush1.bf16.xpose.msra.mxu0 0
    %2628 = vmatprep.mubr.bf16.mxu0 %v358
    %2629 = vmatmul.mubr.bf16.gmra.mrb[0].mxu0 %v356
    %v2630 = vpop.f32.mrb[0].mxu0
    %v2631 = vadd.f32 %v2591, %v2630
    %v2632 = vpop.f32.mrb[0].mxu0
    %v2633 = vpop.f32.mrb[0].mxu0
    %v2634 = vpop.f32.mrb[0].mxu0
    %2635 = vdwg.mxu0
    %2636 = vmatprep.subr.bf16.mxu0 %v1205
    %2637 = vmatpush1.bf16.xpose.msra.mxu0 %v1191
    %2638 = vmatprep.subr.bf16.mxu0 0
    %2639 = vmatpush1.bf16.xpose.msra.mxu0 0
    %2640 = vmatprep.subr.bf16.mxu0 0
    %2641 = vmatpush1.bf16.xpose.msra.mxu0 0
    %2642 = vmatprep.subr.bf16.mxu0 0
    %2643 = vmatpush1.bf16.xpose.msra.mxu0 0
    %2644 = vmatprep.subr.bf16.mxu0 0
    %2645 = vmatpush1.bf16.xpose.msra.mxu0 0
    %2646 = vmatprep.subr.bf16.mxu0 0
    %2647 = vmatpush1.bf16.xpose.msra.mxu0 0
    %2648 = vmatprep.subr.bf16.mxu0 0
    %2649 = vmatpush1.bf16.xpose.msra.mxu0 0
    %2650 = vmatprep.subr.bf16.mxu0 0
    %2651 = vmatpush1.bf16.xpose.msra.mxu0 0
    %2652 = vmatprep.subr.bf16.mxu0 0
    %2653 = vmatpush1.bf16.xpose.msra.mxu0 0
    %2654 = vmatprep.subr.bf16.mxu0 0
    %2655 = vmatpush1.bf16.xpose.msra.mxu0 0
    %2656 = vmatprep.subr.bf16.mxu0 0
    %2657 = vmatpush1.bf16.xpose.msra.mxu0 0
    %2658 = vmatprep.subr.bf16.mxu0 0
    %2659 = vmatpush1.bf16.xpose.msra.mxu0 0
    %2660 = vmatprep.subr.bf16.mxu0 0
    %2661 = vmatpush1.bf16.xpose.msra.mxu0 0
    %2662 = vmatprep.subr.bf16.mxu0 0
    %2663 = vmatpush1.bf16.xpose.msra.mxu0 0
    %2664 = vmatprep.subr.bf16.mxu0 0
    %2665 = vmatpush1.bf16.xpose.msra.mxu0 0
    %2666 = vmatprep.subr.bf16.mxu0 0
    %2667 = vmatpush1.bf16.xpose.msra.mxu0 0
    %2668 = vmatprep.mubr.bf16.mxu0 %v396
    %2669 = vmatmul.mubr.bf16.gmra.mrb[0].mxu0 %v382
    %v2670 = vpop.f32.mrb[0].mxu0
    %v2671 = vadd.f32 %v2631, %v2670
    %v2672 = vpop.f32.mrb[0].mxu0
    %v2673 = vpop.f32.mrb[0].mxu0
    %v2674 = vpop.f32.mrb[0].mxu0
    %2675 = vdwg.mxu0
    %2676 = vmatprep.subr.bf16.mxu0 %v1215
    %2677 = vmatpush1.bf16.xpose.msra.mxu0 %v1213
    %2678 = vmatprep.subr.bf16.mxu0 0
    %2679 = vmatpush1.bf16.xpose.msra.mxu0 0
    %2680 = vmatprep.subr.bf16.mxu0 0
    %2681 = vmatpush1.bf16.xpose.msra.mxu0 0
    %2682 = vmatprep.subr.bf16.mxu0 0
    %2683 = vmatpush1.bf16.xpose.msra.mxu0 0
    %2684 = vmatprep.subr.bf16.mxu0 0
    %2685 = vmatpush1.bf16.xpose.msra.mxu0 0
    %2686 = vmatprep.subr.bf16.mxu0 0
    %2687 = vmatpush1.bf16.xpose.msra.mxu0 0
    %2688 = vmatprep.subr.bf16.mxu0 0
    %2689 = vmatpush1.bf16.xpose.msra.mxu0 0
    %2690 = vmatprep.subr.bf16.mxu0 0
    %2691 = vmatpush1.bf16.xpose.msra.mxu0 0
    %2692 = vmatprep.subr.bf16.mxu0 0
    %2693 = vmatpush1.bf16.xpose.msra.mxu0 0
    %2694 = vmatprep.subr.bf16.mxu0 0
    %2695 = vmatpush1.bf16.xpose.msra.mxu0 0
    %2696 = vmatprep.subr.bf16.mxu0 0
    %2697 = vmatpush1.bf16.xpose.msra.mxu0 0
    %2698 = vmatprep.subr.bf16.mxu0 0
    %2699 = vmatpush1.bf16.xpose.msra.mxu0 0
    %2700 = vmatprep.subr.bf16.mxu0 0
    %2701 = vmatpush1.bf16.xpose.msra.mxu0 0
    %2702 = vmatprep.subr.bf16.mxu0 0
    %2703 = vmatpush1.bf16.xpose.msra.mxu0 0
    %2704 = vmatprep.subr.bf16.mxu0 0
    %2705 = vmatpush1.bf16.xpose.msra.mxu0 0
    %2706 = vmatprep.subr.bf16.mxu0 0
    %2707 = vmatpush1.bf16.xpose.msra.mxu0 0
    %2708 = vmatprep.mubr.bf16.mxu0 %v406
    %2709 = vmatmul.mubr.bf16.gmra.mrb[0].mxu0 %v404
    %v2710 = vpop.f32.mrb[0].mxu0
    %v2711 = vadd.f32 %v2671, %v2710
    %v2712 = vpop.f32.mrb[0].mxu0
    %v2713 = vpop.f32.mrb[0].mxu0
    %v2714 = vpop.f32.mrb[0].mxu0
    %2715 = vdwg.mxu0
    %2716 = vmatprep.subr.bf16.mxu0 %v1212
    %2717 = vmatpush1.bf16.xpose.msra.mxu0 %v1198
    %2718 = vmatprep.subr.bf16.mxu0 0
    %2719 = vmatpush1.bf16.xpose.msra.mxu0 0
    %2720 = vmatprep.subr.bf16.mxu0 0
    %2721 = vmatpush1.bf16.xpose.msra.mxu0 0
    %2722 = vmatprep.subr.bf16.mxu0 0
    %2723 = vmatpush1.bf16.xpose.msra.mxu0 0
    %2724 = vmatprep.subr.bf16.mxu0 0
    %2725 = vmatpush1.bf16.xpose.msra.mxu0 0
    %2726 = vmatprep.subr.bf16.mxu0 0
    %2727 = vmatpush1.bf16.xpose.msra.mxu0 0
    %2728 = vmatprep.subr.bf16.mxu0 0
    %2729 = vmatpush1.bf16.xpose.msra.mxu0 0
    %2730 = vmatprep.subr.bf16.mxu0 0
    %2731 = vmatpush1.bf16.xpose.msra.mxu0 0
    %2732 = vmatprep.subr.bf16.mxu0 0
    %2733 = vmatpush1.bf16.xpose.msra.mxu0 0
    %2734 = vmatprep.subr.bf16.mxu0 0
    %2735 = vmatpush1.bf16.xpose.msra.mxu0 0
    %2736 = vmatprep.subr.bf16.mxu0 0
    %2737 = vmatpush1.bf16.xpose.msra.mxu0 0
    %2738 = vmatprep.subr.bf16.mxu0 0
    %2739 = vmatpush1.bf16.xpose.msra.mxu0 0
    %2740 = vmatprep.subr.bf16.mxu0 0
    %2741 = vmatpush1.bf16.xpose.msra.mxu0 0
    %2742 = vmatprep.subr.bf16.mxu0 0
    %2743 = vmatpush1.bf16.xpose.msra.mxu0 0
    %2744 = vmatprep.subr.bf16.mxu0 0
    %2745 = vmatpush1.bf16.xpose.msra.mxu0 0
    %2746 = vmatprep.subr.bf16.mxu0 0
    %2747 = vmatpush1.bf16.xpose.msra.mxu0 0
    %2748 = vmatprep.mubr.bf16.mxu0 %v403
    %2749 = vmatmul.mubr.bf16.gmra.mrb[0].mxu0 %v389
    %v2750 = vpop.f32.mrb[0].mxu0
    %v2751 = vadd.f32 %v2711, %v2750
    %v2752 = vpop.f32.mrb[0].mxu0
    %v2753 = vpop.f32.mrb[0].mxu0
    %v2754 = vpop.f32.mrb[0].mxu0
    %2755 = vdwg.mxu0
    %2756 = vmatprep.subr.bf16.mxu0 %v1216
    %2757 = vmatpush1.bf16.xpose.msra.mxu0 %v1214
    %2758 = vmatprep.subr.bf16.mxu0 0
    %2759 = vmatpush1.bf16.xpose.msra.mxu0 0
    %2760 = vmatprep.subr.bf16.mxu0 0
    %2761 = vmatpush1.bf16.xpose.msra.mxu0 0
    %2762 = vmatprep.subr.bf16.mxu0 0
    %2763 = vmatpush1.bf16.xpose.msra.mxu0 0
    %2764 = vmatprep.subr.bf16.mxu0 0
    %2765 = vmatpush1.bf16.xpose.msra.mxu0 0
    %2766 = vmatprep.subr.bf16.mxu0 0
    %2767 = vmatpush1.bf16.xpose.msra.mxu0 0
    %2768 = vmatprep.subr.bf16.mxu0 0
    %2769 = vmatpush1.bf16.xpose.msra.mxu0 0
    %2770 = vmatprep.subr.bf16.mxu0 0
    %2771 = vmatpush1.bf16.xpose.msra.mxu0 0
    %2772 = vmatprep.subr.bf16.mxu0 0
    %2773 = vmatpush1.bf16.xpose.msra.mxu0 0
    %2774 = vmatprep.subr.bf16.mxu0 0
    %2775 = vmatpush1.bf16.xpose.msra.mxu0 0
    %2776 = vmatprep.subr.bf16.mxu0 0
    %2777 = vmatpush1.bf16.xpose.msra.mxu0 0
    %2778 = vmatprep.subr.bf16.mxu0 0
    %2779 = vmatpush1.bf16.xpose.msra.mxu0 0
    %2780 = vmatprep.subr.bf16.mxu0 0
    %2781 = vmatpush1.bf16.xpose.msra.mxu0 0
    %2782 = vmatprep.subr.bf16.mxu0 0
    %2783 = vmatpush1.bf16.xpose.msra.mxu0 0
    %2784 = vmatprep.subr.bf16.mxu0 0
    %2785 = vmatpush1.bf16.xpose.msra.mxu0 0
    %2786 = vmatprep.subr.bf16.mxu0 0
    %2787 = vmatpush1.bf16.xpose.msra.mxu0 0
    %2788 = vmatprep.mubr.bf16.mxu0 %v407
    %2789 = vmatmul.mubr.bf16.gmra.mrb[0].mxu0 %v405
    %v2790 = vpop.f32.mrb[0].mxu0
    %v2791 = vadd.f32 %v2751, %v2790
    %v2792 = vpop.f32.mrb[0].mxu0
    %v2793 = vpop.f32.mrb[0].mxu0
    %v2794 = vpop.f32.mrb[0].mxu0
    %2795 = vdwg.mxu0
    %2796 = vmatprep.subr.bf16.mxu0 %v1254
    %2797 = vmatpush1.bf16.xpose.msra.mxu0 %v1240
    %2798 = vmatprep.subr.bf16.mxu0 0
    %2799 = vmatpush1.bf16.xpose.msra.mxu0 0
    %2800 = vmatprep.subr.bf16.mxu0 0
    %2801 = vmatpush1.bf16.xpose.msra.mxu0 0
    %2802 = vmatprep.subr.bf16.mxu0 0
    %2803 = vmatpush1.bf16.xpose.msra.mxu0 0
    %2804 = vmatprep.subr.bf16.mxu0 0
    %2805 = vmatpush1.bf16.xpose.msra.mxu0 0
    %2806 = vmatprep.subr.bf16.mxu0 0
    %2807 = vmatpush1.bf16.xpose.msra.mxu0 0
    %2808 = vmatprep.subr.bf16.mxu0 0
    %2809 = vmatpush1.bf16.xpose.msra.mxu0 0
    %2810 = vmatprep.subr.bf16.mxu0 0
    %2811 = vmatpush1.bf16.xpose.msra.mxu0 0
    %2812 = vmatprep.subr.bf16.mxu0 0
    %2813 = vmatpush1.bf16.xpose.msra.mxu0 0
    %2814 = vmatprep.subr.bf16.mxu0 0
    %2815 = vmatpush1.bf16.xpose.msra.mxu0 0
    %2816 = vmatprep.subr.bf16.mxu0 0
    %2817 = vmatpush1.bf16.xpose.msra.mxu0 0
    %2818 = vmatprep.subr.bf16.mxu0 0
    %2819 = vmatpush1.bf16.xpose.msra.mxu0 0
    %2820 = vmatprep.subr.bf16.mxu0 0
    %2821 = vmatpush1.bf16.xpose.msra.mxu0 0
    %2822 = vmatprep.subr.bf16.mxu0 0
    %2823 = vmatpush1.bf16.xpose.msra.mxu0 0
    %2824 = vmatprep.subr.bf16.mxu0 0
    %2825 = vmatpush1.bf16.xpose.msra.mxu0 0
    %2826 = vmatprep.subr.bf16.mxu0 0
    %2827 = vmatpush1.bf16.xpose.msra.mxu0 0
    %2828 = vmatprep.mubr.bf16.mxu0 %v445
    %2829 = vmatmul.mubr.bf16.gmra.mrb[0].mxu0 %v431
    %v2830 = vpop.f32.mrb[0].mxu0
    %v2831 = vadd.f32 %v2791, %v2830
    %v2832 = vpop.f32.mrb[0].mxu0
    %v2833 = vpop.f32.mrb[0].mxu0
    %v2834 = vpop.f32.mrb[0].mxu0
    %2835 = vdwg.mxu0
    %2836 = vmatprep.subr.bf16.mxu0 %v1264
    %2837 = vmatpush1.bf16.xpose.msra.mxu0 %v1262
    %2838 = vmatprep.subr.bf16.mxu0 0
    %2839 = vmatpush1.bf16.xpose.msra.mxu0 0
    %2840 = vmatprep.subr.bf16.mxu0 0
    %2841 = vmatpush1.bf16.xpose.msra.mxu0 0
    %2842 = vmatprep.subr.bf16.mxu0 0
    %2843 = vmatpush1.bf16.xpose.msra.mxu0 0
    %2844 = vmatprep.subr.bf16.mxu0 0
    %2845 = vmatpush1.bf16.xpose.msra.mxu0 0
    %2846 = vmatprep.subr.bf16.mxu0 0
    %2847 = vmatpush1.bf16.xpose.msra.mxu0 0
    %2848 = vmatprep.subr.bf16.mxu0 0
    %2849 = vmatpush1.bf16.xpose.msra.mxu0 0
    %2850 = vmatprep.subr.bf16.mxu0 0
    %2851 = vmatpush1.bf16.xpose.msra.mxu0 0
    %2852 = vmatprep.subr.bf16.mxu0 0
    %2853 = vmatpush1.bf16.xpose.msra.mxu0 0
    %2854 = vmatprep.subr.bf16.mxu0 0
    %2855 = vmatpush1.bf16.xpose.msra.mxu0 0
    %2856 = vmatprep.subr.bf16.mxu0 0
    %2857 = vmatpush1.bf16.xpose.msra.mxu0 0
    %2858 = vmatprep.subr.bf16.mxu0 0
    %2859 = vmatpush1.bf16.xpose.msra.mxu0 0
    %2860 = vmatprep.subr.bf16.mxu0 0
    %2861 = vmatpush1.bf16.xpose.msra.mxu0 0
    %2862 = vmatprep.subr.bf16.mxu0 0
    %2863 = vmatpush1.bf16.xpose.msra.mxu0 0
    %2864 = vmatprep.subr.bf16.mxu0 0
    %2865 = vmatpush1.bf16.xpose.msra.mxu0 0
    %2866 = vmatprep.subr.bf16.mxu0 0
    %2867 = vmatpush1.bf16.xpose.msra.mxu0 0
    %2868 = vmatprep.mubr.bf16.mxu0 %v455
    %2869 = vmatmul.mubr.bf16.gmra.mrb[0].mxu0 %v453
    %v2870 = vpop.f32.mrb[0].mxu0
    %v2871 = vadd.f32 %v2831, %v2870
    %v2872 = vpop.f32.mrb[0].mxu0
    %v2873 = vpop.f32.mrb[0].mxu0
    %v2874 = vpop.f32.mrb[0].mxu0
    %2875 = vdwg.mxu0
    %2876 = vmatprep.subr.bf16.mxu0 %v1261
    %2877 = vmatpush1.bf16.xpose.msra.mxu0 %v1247
    %2878 = vmatprep.subr.bf16.mxu0 0
    %2879 = vmatpush1.bf16.xpose.msra.mxu0 0
    %2880 = vmatprep.subr.bf16.mxu0 0
    %2881 = vmatpush1.bf16.xpose.msra.mxu0 0
    %2882 = vmatprep.subr.bf16.mxu0 0
    %2883 = vmatpush1.bf16.xpose.msra.mxu0 0
    %2884 = vmatprep.subr.bf16.mxu0 0
    %2885 = vmatpush1.bf16.xpose.msra.mxu0 0
    %2886 = vmatprep.subr.bf16.mxu0 0
    %2887 = vmatpush1.bf16.xpose.msra.mxu0 0
    %2888 = vmatprep.subr.bf16.mxu0 0
    %2889 = vmatpush1.bf16.xpose.msra.mxu0 0
    %2890 = vmatprep.subr.bf16.mxu0 0
    %2891 = vmatpush1.bf16.xpose.msra.mxu0 0
    %2892 = vmatprep.subr.bf16.mxu0 0
    %2893 = vmatpush1.bf16.xpose.msra.mxu0 0
    %2894 = vmatprep.subr.bf16.mxu0 0
    %2895 = vmatpush1.bf16.xpose.msra.mxu0 0
    %2896 = vmatprep.subr.bf16.mxu0 0
    %2897 = vmatpush1.bf16.xpose.msra.mxu0 0
    %2898 = vmatprep.subr.bf16.mxu0 0
    %2899 = vmatpush1.bf16.xpose.msra.mxu0 0
    %2900 = vmatprep.subr.bf16.mxu0 0
    %2901 = vmatpush1.bf16.xpose.msra.mxu0 0
    %2902 = vmatprep.subr.bf16.mxu0 0
    %2903 = vmatpush1.bf16.xpose.msra.mxu0 0
    %2904 = vmatprep.subr.bf16.mxu0 0
    %2905 = vmatpush1.bf16.xpose.msra.mxu0 0
    %2906 = vmatprep.subr.bf16.mxu0 0
    %2907 = vmatpush1.bf16.xpose.msra.mxu0 0
    %2908 = vmatprep.mubr.bf16.mxu0 %v452
    %2909 = vmatmul.mubr.bf16.gmra.mrb[0].mxu0 %v438
    %v2910 = vpop.f32.mrb[0].mxu0
    %v2911 = vadd.f32 %v2871, %v2910
    %v2912 = vpop.f32.mrb[0].mxu0
    %v2913 = vpop.f32.mrb[0].mxu0
    %v2914 = vpop.f32.mrb[0].mxu0
    %2915 = vdwg.mxu0
    %2916 = vmatprep.subr.bf16.mxu0 %v1265
    %2917 = vmatpush1.bf16.xpose.msra.mxu0 %v1263
    %2918 = vmatprep.subr.bf16.mxu0 0
    %2919 = vmatpush1.bf16.xpose.msra.mxu0 0
    %2920 = vmatprep.subr.bf16.mxu0 0
    %2921 = vmatpush1.bf16.xpose.msra.mxu0 0
    %2922 = vmatprep.subr.bf16.mxu0 0
    %2923 = vmatpush1.bf16.xpose.msra.mxu0 0
    %2924 = vmatprep.subr.bf16.mxu0 0
    %2925 = vmatpush1.bf16.xpose.msra.mxu0 0
    %2926 = vmatprep.subr.bf16.mxu0 0
    %2927 = vmatpush1.bf16.xpose.msra.mxu0 0
    %2928 = vmatprep.subr.bf16.mxu0 0
    %2929 = vmatpush1.bf16.xpose.msra.mxu0 0
    %2930 = vmatprep.subr.bf16.mxu0 0
    %2931 = vmatpush1.bf16.xpose.msra.mxu0 0
    %2932 = vmatprep.subr.bf16.mxu0 0
    %2933 = vmatpush1.bf16.xpose.msra.mxu0 0
    %2934 = vmatprep.subr.bf16.mxu0 0
    %2935 = vmatpush1.bf16.xpose.msra.mxu0 0
    %2936 = vmatprep.subr.bf16.mxu0 0
    %2937 = vmatpush1.bf16.xpose.msra.mxu0 0
    %2938 = vmatprep.subr.bf16.mxu0 0
    %2939 = vmatpush1.bf16.xpose.msra.mxu0 0
    %2940 = vmatprep.subr.bf16.mxu0 0
    %2941 = vmatpush1.bf16.xpose.msra.mxu0 0
    %2942 = vmatprep.subr.bf16.mxu0 0
    %2943 = vmatpush1.bf16.xpose.msra.mxu0 0
    %2944 = vmatprep.subr.bf16.mxu0 0
    %2945 = vmatpush1.bf16.xpose.msra.mxu0 0
    %2946 = vmatprep.subr.bf16.mxu0 0
    %2947 = vmatpush1.bf16.xpose.msra.mxu0 0
    %2948 = vmatprep.mubr.bf16.mxu0 %v456
    %2949 = vmatmul.mubr.bf16.gmra.mrb[0].mxu0 %v454
    %v2950 = vpop.f32.mrb[0].mxu0
    %v2951 = vadd.f32 %v2911, %v2950
    %v2952 = vpop.f32.mrb[0].mxu0
    %v2953 = vpop.f32.mrb[0].mxu0
    %v2954 = vpop.f32.mrb[0].mxu0
    %2955 = vdwg.mxu0
    %2956 = vmatprep.subr.bf16.mxu0 %v1303
    %2957 = vmatpush1.bf16.xpose.msra.mxu0 %v1289
    %2958 = vmatprep.subr.bf16.mxu0 0
    %2959 = vmatpush1.bf16.xpose.msra.mxu0 0
    %2960 = vmatprep.subr.bf16.mxu0 0
    %2961 = vmatpush1.bf16.xpose.msra.mxu0 0
    %2962 = vmatprep.subr.bf16.mxu0 0
    %2963 = vmatpush1.bf16.xpose.msra.mxu0 0
    %2964 = vmatprep.subr.bf16.mxu0 0
    %2965 = vmatpush1.bf16.xpose.msra.mxu0 0
    %2966 = vmatprep.subr.bf16.mxu0 0
    %2967 = vmatpush1.bf16.xpose.msra.mxu0 0
    %2968 = vmatprep.subr.bf16.mxu0 0
    %2969 = vmatpush1.bf16.xpose.msra.mxu0 0
    %2970 = vmatprep.subr.bf16.mxu0 0
    %2971 = vmatpush1.bf16.xpose.msra.mxu0 0
    %2972 = vmatprep.subr.bf16.mxu0 0
    %2973 = vmatpush1.bf16.xpose.msra.mxu0 0
    %2974 = vmatprep.subr.bf16.mxu0 0
    %2975 = vmatpush1.bf16.xpose.msra.mxu0 0
    %2976 = vmatprep.subr.bf16.mxu0 0
    %2977 = vmatpush1.bf16.xpose.msra.mxu0 0
    %2978 = vmatprep.subr.bf16.mxu0 0
    %2979 = vmatpush1.bf16.xpose.msra.mxu0 0
    %2980 = vmatprep.subr.bf16.mxu0 0
    %2981 = vmatpush1.bf16.xpose.msra.mxu0 0
    %2982 = vmatprep.subr.bf16.mxu0 0
    %2983 = vmatpush1.bf16.xpose.msra.mxu0 0
    %2984 = vmatprep.subr.bf16.mxu0 0
    %2985 = vmatpush1.bf16.xpose.msra.mxu0 0
    %2986 = vmatprep.subr.bf16.mxu0 0
    %2987 = vmatpush1.bf16.xpose.msra.mxu0 0
    %2988 = vmatprep.mubr.bf16.mxu0 %v494
    %2989 = vmatmul.mubr.bf16.gmra.mrb[0].mxu0 %v480
    %v2990 = vpop.f32.mrb[0].mxu0
    %v2991 = vadd.f32 %v2951, %v2990
    %v2992 = vpop.f32.mrb[0].mxu0
    %v2993 = vpop.f32.mrb[0].mxu0
    %v2994 = vpop.f32.mrb[0].mxu0
    %2995 = vdwg.mxu0
    %2996 = vmatprep.subr.bf16.mxu0 %v1313
    %2997 = vmatpush1.bf16.xpose.msra.mxu0 %v1311
    %2998 = vmatprep.subr.bf16.mxu0 0
    %2999 = vmatpush1.bf16.xpose.msra.mxu0 0
    %3000 = vmatprep.subr.bf16.mxu0 0
    %3001 = vmatpush1.bf16.xpose.msra.mxu0 0
    %3002 = vmatprep.subr.bf16.mxu0 0
    %3003 = vmatpush1.bf16.xpose.msra.mxu0 0
    %3004 = vmatprep.subr.bf16.mxu0 0
    %3005 = vmatpush1.bf16.xpose.msra.mxu0 0
    %3006 = vmatprep.subr.bf16.mxu0 0
    %3007 = vmatpush1.bf16.xpose.msra.mxu0 0
    %3008 = vmatprep.subr.bf16.mxu0 0
    %3009 = vmatpush1.bf16.xpose.msra.mxu0 0
    %3010 = vmatprep.subr.bf16.mxu0 0
    %3011 = vmatpush1.bf16.xpose.msra.mxu0 0
    %3012 = vmatprep.subr.bf16.mxu0 0
    %3013 = vmatpush1.bf16.xpose.msra.mxu0 0
    %3014 = vmatprep.subr.bf16.mxu0 0
    %3015 = vmatpush1.bf16.xpose.msra.mxu0 0
    %3016 = vmatprep.subr.bf16.mxu0 0
    %3017 = vmatpush1.bf16.xpose.msra.mxu0 0
    %3018 = vmatprep.subr.bf16.mxu0 0
    %3019 = vmatpush1.bf16.xpose.msra.mxu0 0
    %3020 = vmatprep.subr.bf16.mxu0 0
    %3021 = vmatpush1.bf16.xpose.msra.mxu0 0
    %3022 = vmatprep.subr.bf16.mxu0 0
    %3023 = vmatpush1.bf16.xpose.msra.mxu0 0
    %3024 = vmatprep.subr.bf16.mxu0 0
    %3025 = vmatpush1.bf16.xpose.msra.mxu0 0
    %3026 = vmatprep.subr.bf16.mxu0 0
    %3027 = vmatpush1.bf16.xpose.msra.mxu0 0
    %3028 = vmatprep.mubr.bf16.mxu0 %v504
    %3029 = vmatmul.mubr.bf16.gmra.mrb[0].mxu0 %v502
    %v3030 = vpop.f32.mrb[0].mxu0
    %v3031 = vadd.f32 %v2991, %v3030
    %v3032 = vpop.f32.mrb[0].mxu0
    %v3033 = vpop.f32.mrb[0].mxu0
    %v3034 = vpop.f32.mrb[0].mxu0
    %3035 = vdwg.mxu0
    %3036 = vmatprep.subr.bf16.mxu0 %v1310
    %3037 = vmatpush1.bf16.xpose.msra.mxu0 %v1296
    %3038 = vmatprep.subr.bf16.mxu0 0
    %3039 = vmatpush1.bf16.xpose.msra.mxu0 0
    %3040 = vmatprep.subr.bf16.mxu0 0
    %3041 = vmatpush1.bf16.xpose.msra.mxu0 0
    %3042 = vmatprep.subr.bf16.mxu0 0
    %3043 = vmatpush1.bf16.xpose.msra.mxu0 0
    %3044 = vmatprep.subr.bf16.mxu0 0
    %3045 = vmatpush1.bf16.xpose.msra.mxu0 0
    %3046 = vmatprep.subr.bf16.mxu0 0
    %3047 = vmatpush1.bf16.xpose.msra.mxu0 0
    %3048 = vmatprep.subr.bf16.mxu0 0
    %3049 = vmatpush1.bf16.xpose.msra.mxu0 0
    %3050 = vmatprep.subr.bf16.mxu0 0
    %3051 = vmatpush1.bf16.xpose.msra.mxu0 0
    %3052 = vmatprep.subr.bf16.mxu0 0
    %3053 = vmatpush1.bf16.xpose.msra.mxu0 0
    %3054 = vmatprep.subr.bf16.mxu0 0
    %3055 = vmatpush1.bf16.xpose.msra.mxu0 0
    %3056 = vmatprep.subr.bf16.mxu0 0
    %3057 = vmatpush1.bf16.xpose.msra.mxu0 0
    %3058 = vmatprep.subr.bf16.mxu0 0
    %3059 = vmatpush1.bf16.xpose.msra.mxu0 0
    %3060 = vmatprep.subr.bf16.mxu0 0
    %3061 = vmatpush1.bf16.xpose.msra.mxu0 0
    %3062 = vmatprep.subr.bf16.mxu0 0
    %3063 = vmatpush1.bf16.xpose.msra.mxu0 0
    %3064 = vmatprep.subr.bf16.mxu0 0
    %3065 = vmatpush1.bf16.xpose.msra.mxu0 0
    %3066 = vmatprep.subr.bf16.mxu0 0
    %3067 = vmatpush1.bf16.xpose.msra.mxu0 0
    %3068 = vmatprep.mubr.bf16.mxu0 %v501
    %3069 = vmatmul.mubr.bf16.gmra.mrb[0].mxu0 %v487
    %v3070 = vpop.f32.mrb[0].mxu0
    %v3071 = vadd.f32 %v3031, %v3070
    %v3072 = vpop.f32.mrb[0].mxu0
    %v3073 = vpop.f32.mrb[0].mxu0
    %v3074 = vpop.f32.mrb[0].mxu0
    %3075 = vdwg.mxu0
    %3076 = vmatprep.subr.bf16.mxu0 %v1314
    %3077 = vmatpush1.bf16.xpose.msra.mxu0 %v1312
    %3078 = vmatprep.subr.bf16.mxu0 0
    %3079 = vmatpush1.bf16.xpose.msra.mxu0 0
    %3080 = vmatprep.subr.bf16.mxu0 0
    %3081 = vmatpush1.bf16.xpose.msra.mxu0 0
    %3082 = vmatprep.subr.bf16.mxu0 0
    %3083 = vmatpush1.bf16.xpose.msra.mxu0 0
    %3084 = vmatprep.subr.bf16.mxu0 0
    %3085 = vmatpush1.bf16.xpose.msra.mxu0 0
    %3086 = vmatprep.subr.bf16.mxu0 0
    %3087 = vmatpush1.bf16.xpose.msra.mxu0 0
    %3088 = vmatprep.subr.bf16.mxu0 0
    %3089 = vmatpush1.bf16.xpose.msra.mxu0 0
    %3090 = vmatprep.subr.bf16.mxu0 0
    %3091 = vmatpush1.bf16.xpose.msra.mxu0 0
    %3092 = vmatprep.subr.bf16.mxu0 0
    %3093 = vmatpush1.bf16.xpose.msra.mxu0 0
    %3094 = vmatprep.subr.bf16.mxu0 0
    %3095 = vmatpush1.bf16.xpose.msra.mxu0 0
    %3096 = vmatprep.subr.bf16.mxu0 0
    %3097 = vmatpush1.bf16.xpose.msra.mxu0 0
    %3098 = vmatprep.subr.bf16.mxu0 0
    %3099 = vmatpush1.bf16.xpose.msra.mxu0 0
    %3100 = vmatprep.subr.bf16.mxu0 0
    %3101 = vmatpush1.bf16.xpose.msra.mxu0 0
    %3102 = vmatprep.subr.bf16.mxu0 0
    %3103 = vmatpush1.bf16.xpose.msra.mxu0 0
    %3104 = vmatprep.subr.bf16.mxu0 0
    %3105 = vmatpush1.bf16.xpose.msra.mxu0 0
    %3106 = vmatprep.subr.bf16.mxu0 0
    %3107 = vmatpush1.bf16.xpose.msra.mxu0 0
    %3108 = vmatprep.mubr.bf16.mxu0 %v505
    %3109 = vmatmul.mubr.bf16.gmra.mrb[0].mxu0 %v503
    %v3110 = vpop.f32.mrb[0].mxu0
    %v3111 = vadd.f32 %v3071, %v3110
    %v3112 = vpop.f32.mrb[0].mxu0
    %v3113 = vpop.f32.mrb[0].mxu0
    %v3114 = vpop.f32.mrb[0].mxu0
    %3115 = vdwg.mxu0
    %3116 = vmatprep.subr.bf16.mxu0 %v1352
    %3117 = vmatpush1.bf16.xpose.msra.mxu0 %v1338
    %3118 = vmatprep.subr.bf16.mxu0 0
    %3119 = vmatpush1.bf16.xpose.msra.mxu0 0
    %3120 = vmatprep.subr.bf16.mxu0 0
    %3121 = vmatpush1.bf16.xpose.msra.mxu0 0
    %3122 = vmatprep.subr.bf16.mxu0 0
    %3123 = vmatpush1.bf16.xpose.msra.mxu0 0
    %3124 = vmatprep.subr.bf16.mxu0 0
    %3125 = vmatpush1.bf16.xpose.msra.mxu0 0
    %3126 = vmatprep.subr.bf16.mxu0 0
    %3127 = vmatpush1.bf16.xpose.msra.mxu0 0
    %3128 = vmatprep.subr.bf16.mxu0 0
    %3129 = vmatpush1.bf16.xpose.msra.mxu0 0
    %3130 = vmatprep.subr.bf16.mxu0 0
    %3131 = vmatpush1.bf16.xpose.msra.mxu0 0
    %3132 = vmatprep.subr.bf16.mxu0 0
    %3133 = vmatpush1.bf16.xpose.msra.mxu0 0
    %3134 = vmatprep.subr.bf16.mxu0 0
    %3135 = vmatpush1.bf16.xpose.msra.mxu0 0
    %3136 = vmatprep.subr.bf16.mxu0 0
    %3137 = vmatpush1.bf16.xpose.msra.mxu0 0
    %3138 = vmatprep.subr.bf16.mxu0 0
    %3139 = vmatpush1.bf16.xpose.msra.mxu0 0
    %3140 = vmatprep.subr.bf16.mxu0 0
    %3141 = vmatpush1.bf16.xpose.msra.mxu0 0
    %3142 = vmatprep.subr.bf16.mxu0 0
    %3143 = vmatpush1.bf16.xpose.msra.mxu0 0
    %3144 = vmatprep.subr.bf16.mxu0 0
    %3145 = vmatpush1.bf16.xpose.msra.mxu0 0
    %3146 = vmatprep.subr.bf16.mxu0 0
    %3147 = vmatpush1.bf16.xpose.msra.mxu0 0
    %3148 = vmatprep.mubr.bf16.mxu0 %v543
    %3149 = vmatmul.mubr.bf16.gmra.mrb[0].mxu0 %v529
    %v3150 = vpop.f32.mrb[0].mxu0
    %v3151 = vadd.f32 %v3111, %v3150
    %v3152 = vpop.f32.mrb[0].mxu0
    %v3153 = vpop.f32.mrb[0].mxu0
    %v3154 = vpop.f32.mrb[0].mxu0
    %3155 = vdwg.mxu0
    %3156 = vmatprep.subr.bf16.mxu0 %v1362
    %3157 = vmatpush1.bf16.xpose.msra.mxu0 %v1360
    %3158 = vmatprep.subr.bf16.mxu0 0
    %3159 = vmatpush1.bf16.xpose.msra.mxu0 0
    %3160 = vmatprep.subr.bf16.mxu0 0
    %3161 = vmatpush1.bf16.xpose.msra.mxu0 0
    %3162 = vmatprep.subr.bf16.mxu0 0
    %3163 = vmatpush1.bf16.xpose.msra.mxu0 0
    %3164 = vmatprep.subr.bf16.mxu0 0
    %3165 = vmatpush1.bf16.xpose.msra.mxu0 0
    %3166 = vmatprep.subr.bf16.mxu0 0
    %3167 = vmatpush1.bf16.xpose.msra.mxu0 0
    %3168 = vmatprep.subr.bf16.mxu0 0
    %3169 = vmatpush1.bf16.xpose.msra.mxu0 0
    %3170 = vmatprep.subr.bf16.mxu0 0
    %3171 = vmatpush1.bf16.xpose.msra.mxu0 0
    %3172 = vmatprep.subr.bf16.mxu0 0
    %3173 = vmatpush1.bf16.xpose.msra.mxu0 0
    %3174 = vmatprep.subr.bf16.mxu0 0
    %3175 = vmatpush1.bf16.xpose.msra.mxu0 0
    %3176 = vmatprep.subr.bf16.mxu0 0
    %3177 = vmatpush1.bf16.xpose.msra.mxu0 0
    %3178 = vmatprep.subr.bf16.mxu0 0
    %3179 = vmatpush1.bf16.xpose.msra.mxu0 0
    %3180 = vmatprep.subr.bf16.mxu0 0
    %3181 = vmatpush1.bf16.xpose.msra.mxu0 0
    %3182 = vmatprep.subr.bf16.mxu0 0
    %3183 = vmatpush1.bf16.xpose.msra.mxu0 0
    %3184 = vmatprep.subr.bf16.mxu0 0
    %3185 = vmatpush1.bf16.xpose.msra.mxu0 0
    %3186 = vmatprep.subr.bf16.mxu0 0
    %3187 = vmatpush1.bf16.xpose.msra.mxu0 0
    %3188 = vmatprep.mubr.bf16.mxu0 %v553
    %3189 = vmatmul.mubr.bf16.gmra.mrb[0].mxu0 %v551
    %v3190 = vpop.f32.mrb[0].mxu0
    %v3191 = vadd.f32 %v3151, %v3190
    %v3192 = vpop.f32.mrb[0].mxu0
    %v3193 = vpop.f32.mrb[0].mxu0
    %v3194 = vpop.f32.mrb[0].mxu0
    %3195 = vdwg.mxu0
    %3196 = vmatprep.subr.bf16.mxu0 %v1359
    %3197 = vmatpush1.bf16.xpose.msra.mxu0 %v1345
    %3198 = vmatprep.subr.bf16.mxu0 0
    %3199 = vmatpush1.bf16.xpose.msra.mxu0 0
    %3200 = vmatprep.subr.bf16.mxu0 0
    %3201 = vmatpush1.bf16.xpose.msra.mxu0 0
    %3202 = vmatprep.subr.bf16.mxu0 0
    %3203 = vmatpush1.bf16.xpose.msra.mxu0 0
    %3204 = vmatprep.subr.bf16.mxu0 0
    %3205 = vmatpush1.bf16.xpose.msra.mxu0 0
    %3206 = vmatprep.subr.bf16.mxu0 0
    %3207 = vmatpush1.bf16.xpose.msra.mxu0 0
    %3208 = vmatprep.subr.bf16.mxu0 0
    %3209 = vmatpush1.bf16.xpose.msra.mxu0 0
    %3210 = vmatprep.subr.bf16.mxu0 0
    %3211 = vmatpush1.bf16.xpose.msra.mxu0 0
    %3212 = vmatprep.subr.bf16.mxu0 0
    %3213 = vmatpush1.bf16.xpose.msra.mxu0 0
    %3214 = vmatprep.subr.bf16.mxu0 0
    %3215 = vmatpush1.bf16.xpose.msra.mxu0 0
    %3216 = vmatprep.subr.bf16.mxu0 0
    %3217 = vmatpush1.bf16.xpose.msra.mxu0 0
    %3218 = vmatprep.subr.bf16.mxu0 0
    %3219 = vmatpush1.bf16.xpose.msra.mxu0 0
    %3220 = vmatprep.subr.bf16.mxu0 0
    %3221 = vmatpush1.bf16.xpose.msra.mxu0 0
    %3222 = vmatprep.subr.bf16.mxu0 0
    %3223 = vmatpush1.bf16.xpose.msra.mxu0 0
    %3224 = vmatprep.subr.bf16.mxu0 0
    %3225 = vmatpush1.bf16.xpose.msra.mxu0 0
    %3226 = vmatprep.subr.bf16.mxu0 0
    %3227 = vmatpush1.bf16.xpose.msra.mxu0 0
    %3228 = vmatprep.mubr.bf16.mxu0 %v550
    %3229 = vmatmul.mubr.bf16.gmra.mrb[0].mxu0 %v536
    %v3230 = vpop.f32.mrb[0].mxu0
    %v3231 = vadd.f32 %v3191, %v3230
    %v3232 = vpop.f32.mrb[0].mxu0
    %v3233 = vpop.f32.mrb[0].mxu0
    %v3234 = vpop.f32.mrb[0].mxu0
    %3235 = vdwg.mxu0
    %3236 = vmatprep.subr.bf16.mxu0 %v1363
    %3237 = vmatpush1.bf16.xpose.msra.mxu0 %v1361
    %3238 = vmatprep.subr.bf16.mxu0 0
    %3239 = vmatpush1.bf16.xpose.msra.mxu0 0
    %3240 = vmatprep.subr.bf16.mxu0 0
    %3241 = vmatpush1.bf16.xpose.msra.mxu0 0
    %3242 = vmatprep.subr.bf16.mxu0 0
    %3243 = vmatpush1.bf16.xpose.msra.mxu0 0
    %3244 = vmatprep.subr.bf16.mxu0 0
    %3245 = vmatpush1.bf16.xpose.msra.mxu0 0
    %3246 = vmatprep.subr.bf16.mxu0 0
    %3247 = vmatpush1.bf16.xpose.msra.mxu0 0
    %3248 = vmatprep.subr.bf16.mxu0 0
    %3249 = vmatpush1.bf16.xpose.msra.mxu0 0
    %3250 = vmatprep.subr.bf16.mxu0 0
    %3251 = vmatpush1.bf16.xpose.msra.mxu0 0
    %3252 = vmatprep.subr.bf16.mxu0 0
    %3253 = vmatpush1.bf16.xpose.msra.mxu0 0
    %3254 = vmatprep.subr.bf16.mxu0 0
    %3255 = vmatpush1.bf16.xpose.msra.mxu0 0
    %3256 = vmatprep.subr.bf16.mxu0 0
    %3257 = vmatpush1.bf16.xpose.msra.mxu0 0
    %3258 = vmatprep.subr.bf16.mxu0 0
    %3259 = vmatpush1.bf16.xpose.msra.mxu0 0
    %3260 = vmatprep.subr.bf16.mxu0 0
    %3261 = vmatpush1.bf16.xpose.msra.mxu0 0
    %3262 = vmatprep.subr.bf16.mxu0 0
    %3263 = vmatpush1.bf16.xpose.msra.mxu0 0
    %3264 = vmatprep.subr.bf16.mxu0 0
    %3265 = vmatpush1.bf16.xpose.msra.mxu0 0
    %3266 = vmatprep.subr.bf16.mxu0 0
    %3267 = vmatpush1.bf16.xpose.msra.mxu0 0
    %3268 = vmatprep.mubr.bf16.mxu0 %v554
    %3269 = vmatmul.mubr.bf16.gmra.mrb[0].mxu0 %v552
    %v3270 = vpop.f32.mrb[0].mxu0
    %v3271 = vadd.f32 %v3231, %v3270
    %v3272 = vpop.f32.mrb[0].mxu0
    %v3273 = vpop.f32.mrb[0].mxu0
    %v3274 = vpop.f32.mrb[0].mxu0
    %3275 = vdwg.mxu0
    %3276 = vmatprep.subr.bf16.mxu0 %v1401
    %3277 = vmatpush1.bf16.xpose.msra.mxu0 %v1387
    %3278 = vmatprep.subr.bf16.mxu0 0
    %3279 = vmatpush1.bf16.xpose.msra.mxu0 0
    %3280 = vmatprep.subr.bf16.mxu0 0
    %3281 = vmatpush1.bf16.xpose.msra.mxu0 0
    %3282 = vmatprep.subr.bf16.mxu0 0
    %3283 = vmatpush1.bf16.xpose.msra.mxu0 0
    %3284 = vmatprep.subr.bf16.mxu0 0
    %3285 = vmatpush1.bf16.xpose.msra.mxu0 0
    %3286 = vmatprep.subr.bf16.mxu0 0
    %3287 = vmatpush1.bf16.xpose.msra.mxu0 0
    %3288 = vmatprep.subr.bf16.mxu0 0
    %3289 = vmatpush1.bf16.xpose.msra.mxu0 0
    %3290 = vmatprep.subr.bf16.mxu0 0
    %3291 = vmatpush1.bf16.xpose.msra.mxu0 0
    %3292 = vmatprep.subr.bf16.mxu0 0
    %3293 = vmatpush1.bf16.xpose.msra.mxu0 0
    %3294 = vmatprep.subr.bf16.mxu0 0
    %3295 = vmatpush1.bf16.xpose.msra.mxu0 0
    %3296 = vmatprep.subr.bf16.mxu0 0
    %3297 = vmatpush1.bf16.xpose.msra.mxu0 0
    %3298 = vmatprep.subr.bf16.mxu0 0
    %3299 = vmatpush1.bf16.xpose.msra.mxu0 0
    %3300 = vmatprep.subr.bf16.mxu0 0
    %3301 = vmatpush1.bf16.xpose.msra.mxu0 0
    %3302 = vmatprep.subr.bf16.mxu0 0
    %3303 = vmatpush1.bf16.xpose.msra.mxu0 0
    %3304 = vmatprep.subr.bf16.mxu0 0
    %3305 = vmatpush1.bf16.xpose.msra.mxu0 0
    %3306 = vmatprep.subr.bf16.mxu0 0
    %3307 = vmatpush1.bf16.xpose.msra.mxu0 0
    %3308 = vmatprep.mubr.bf16.mxu0 %v592
    %3309 = vmatmul.mubr.bf16.gmra.mrb[0].mxu0 %v578
    %v3310 = vpop.f32.mrb[0].mxu0
    %v3311 = vadd.f32 %v3271, %v3310
    %v3312 = vpop.f32.mrb[0].mxu0
    %v3313 = vpop.f32.mrb[0].mxu0
    %v3314 = vpop.f32.mrb[0].mxu0
    %3315 = vdwg.mxu0
    %3316 = vmatprep.subr.bf16.mxu0 %v1411
    %3317 = vmatpush1.bf16.xpose.msra.mxu0 %v1409
    %3318 = vmatprep.subr.bf16.mxu0 0
    %3319 = vmatpush1.bf16.xpose.msra.mxu0 0
    %3320 = vmatprep.subr.bf16.mxu0 0
    %3321 = vmatpush1.bf16.xpose.msra.mxu0 0
    %3322 = vmatprep.subr.bf16.mxu0 0
    %3323 = vmatpush1.bf16.xpose.msra.mxu0 0
    %3324 = vmatprep.subr.bf16.mxu0 0
    %3325 = vmatpush1.bf16.xpose.msra.mxu0 0
    %3326 = vmatprep.subr.bf16.mxu0 0
    %3327 = vmatpush1.bf16.xpose.msra.mxu0 0
    %3328 = vmatprep.subr.bf16.mxu0 0
    %3329 = vmatpush1.bf16.xpose.msra.mxu0 0
    %3330 = vmatprep.subr.bf16.mxu0 0
    %3331 = vmatpush1.bf16.xpose.msra.mxu0 0
    %3332 = vmatprep.subr.bf16.mxu0 0
    %3333 = vmatpush1.bf16.xpose.msra.mxu0 0
    %3334 = vmatprep.subr.bf16.mxu0 0
    %3335 = vmatpush1.bf16.xpose.msra.mxu0 0
    %3336 = vmatprep.subr.bf16.mxu0 0
    %3337 = vmatpush1.bf16.xpose.msra.mxu0 0
    %3338 = vmatprep.subr.bf16.mxu0 0
    %3339 = vmatpush1.bf16.xpose.msra.mxu0 0
    %3340 = vmatprep.subr.bf16.mxu0 0
    %3341 = vmatpush1.bf16.xpose.msra.mxu0 0
    %3342 = vmatprep.subr.bf16.mxu0 0
    %3343 = vmatpush1.bf16.xpose.msra.mxu0 0
    %3344 = vmatprep.subr.bf16.mxu0 0
    %3345 = vmatpush1.bf16.xpose.msra.mxu0 0
    %3346 = vmatprep.subr.bf16.mxu0 0
    %3347 = vmatpush1.bf16.xpose.msra.mxu0 0
    %3348 = vmatprep.mubr.bf16.mxu0 %v602
    %3349 = vmatmul.mubr.bf16.gmra.mrb[0].mxu0 %v600
    %v3350 = vpop.f32.mrb[0].mxu0
    %v3351 = vadd.f32 %v3311, %v3350
    %v3352 = vpop.f32.mrb[0].mxu0
    %v3353 = vpop.f32.mrb[0].mxu0
    %v3354 = vpop.f32.mrb[0].mxu0
    %3355 = vdwg.mxu0
    %3356 = vmatprep.subr.bf16.mxu0 %v1408
    %3357 = vmatpush1.bf16.xpose.msra.mxu0 %v1394
    %3358 = vmatprep.subr.bf16.mxu0 0
    %3359 = vmatpush1.bf16.xpose.msra.mxu0 0
    %3360 = vmatprep.subr.bf16.mxu0 0
    %3361 = vmatpush1.bf16.xpose.msra.mxu0 0
    %3362 = vmatprep.subr.bf16.mxu0 0
    %3363 = vmatpush1.bf16.xpose.msra.mxu0 0
    %3364 = vmatprep.subr.bf16.mxu0 0
    %3365 = vmatpush1.bf16.xpose.msra.mxu0 0
    %3366 = vmatprep.subr.bf16.mxu0 0
    %3367 = vmatpush1.bf16.xpose.msra.mxu0 0
    %3368 = vmatprep.subr.bf16.mxu0 0
    %3369 = vmatpush1.bf16.xpose.msra.mxu0 0
    %3370 = vmatprep.subr.bf16.mxu0 0
    %3371 = vmatpush1.bf16.xpose.msra.mxu0 0
    %3372 = vmatprep.subr.bf16.mxu0 0
    %3373 = vmatpush1.bf16.xpose.msra.mxu0 0
    %3374 = vmatprep.subr.bf16.mxu0 0
    %3375 = vmatpush1.bf16.xpose.msra.mxu0 0
    %3376 = vmatprep.subr.bf16.mxu0 0
    %3377 = vmatpush1.bf16.xpose.msra.mxu0 0
    %3378 = vmatprep.subr.bf16.mxu0 0
    %3379 = vmatpush1.bf16.xpose.msra.mxu0 0
    %3380 = vmatprep.subr.bf16.mxu0 0
    %3381 = vmatpush1.bf16.xpose.msra.mxu0 0
    %3382 = vmatprep.subr.bf16.mxu0 0
    %3383 = vmatpush1.bf16.xpose.msra.mxu0 0
    %3384 = vmatprep.subr.bf16.mxu0 0
    %3385 = vmatpush1.bf16.xpose.msra.mxu0 0
    %3386 = vmatprep.subr.bf16.mxu0 0
    %3387 = vmatpush1.bf16.xpose.msra.mxu0 0
    %3388 = vmatprep.mubr.bf16.mxu0 %v599
    %3389 = vmatmul.mubr.bf16.gmra.mrb[0].mxu0 %v585
    %v3390 = vpop.f32.mrb[0].mxu0
    %v3391 = vadd.f32 %v3351, %v3390
    %v3392 = vpop.f32.mrb[0].mxu0
    %v3393 = vpop.f32.mrb[0].mxu0
    %v3394 = vpop.f32.mrb[0].mxu0
    %3395 = vdwg.mxu0
    %3396 = vmatprep.subr.bf16.mxu0 %v1412
    %3397 = vmatpush1.bf16.xpose.msra.mxu0 %v1410
    %3398 = vmatprep.subr.bf16.mxu0 0
    %3399 = vmatpush1.bf16.xpose.msra.mxu0 0
    %3400 = vmatprep.subr.bf16.mxu0 0
    %3401 = vmatpush1.bf16.xpose.msra.mxu0 0
    %3402 = vmatprep.subr.bf16.mxu0 0
    %3403 = vmatpush1.bf16.xpose.msra.mxu0 0
    %3404 = vmatprep.subr.bf16.mxu0 0
    %3405 = vmatpush1.bf16.xpose.msra.mxu0 0
    %3406 = vmatprep.subr.bf16.mxu0 0
    %3407 = vmatpush1.bf16.xpose.msra.mxu0 0
    %3408 = vmatprep.subr.bf16.mxu0 0
    %3409 = vmatpush1.bf16.xpose.msra.mxu0 0
    %3410 = vmatprep.subr.bf16.mxu0 0
    %3411 = vmatpush1.bf16.xpose.msra.mxu0 0
    %3412 = vmatprep.subr.bf16.mxu0 0
    %3413 = vmatpush1.bf16.xpose.msra.mxu0 0
    %3414 = vmatprep.subr.bf16.mxu0 0
    %3415 = vmatpush1.bf16.xpose.msra.mxu0 0
    %3416 = vmatprep.subr.bf16.mxu0 0
    %3417 = vmatpush1.bf16.xpose.msra.mxu0 0
    %3418 = vmatprep.subr.bf16.mxu0 0
    %3419 = vmatpush1.bf16.xpose.msra.mxu0 0
    %3420 = vmatprep.subr.bf16.mxu0 0
    %3421 = vmatpush1.bf16.xpose.msra.mxu0 0
    %3422 = vmatprep.subr.bf16.mxu0 0
    %3423 = vmatpush1.bf16.xpose.msra.mxu0 0
    %3424 = vmatprep.subr.bf16.mxu0 0
    %3425 = vmatpush1.bf16.xpose.msra.mxu0 0
    %3426 = vmatprep.subr.bf16.mxu0 0
    %3427 = vmatpush1.bf16.xpose.msra.mxu0 0
    %3428 = vmatprep.mubr.bf16.mxu0 %v603
    %3429 = vmatmul.mubr.bf16.gmra.mrb[0].mxu0 %v601
    %v3430 = vpop.f32.mrb[0].mxu0
    %v3431 = vadd.f32 %v3391, %v3430
    %v3432 = vpop.f32.mrb[0].mxu0
    %v3433 = vpop.f32.mrb[0].mxu0
    %v3434 = vpop.f32.mrb[0].mxu0
    %3435 = vdwg.mxu0
    %3436 = vmatprep.subr.bf16.mxu0 %v1450
    %3437 = vmatpush1.bf16.xpose.msra.mxu0 %v1436
    %3438 = vmatprep.subr.bf16.mxu0 0
    %3439 = vmatpush1.bf16.xpose.msra.mxu0 0
    %3440 = vmatprep.subr.bf16.mxu0 0
    %3441 = vmatpush1.bf16.xpose.msra.mxu0 0
    %3442 = vmatprep.subr.bf16.mxu0 0
    %3443 = vmatpush1.bf16.xpose.msra.mxu0 0
    %3444 = vmatprep.subr.bf16.mxu0 0
    %3445 = vmatpush1.bf16.xpose.msra.mxu0 0
    %3446 = vmatprep.subr.bf16.mxu0 0
    %3447 = vmatpush1.bf16.xpose.msra.mxu0 0
    %3448 = vmatprep.subr.bf16.mxu0 0
    %3449 = vmatpush1.bf16.xpose.msra.mxu0 0
    %3450 = vmatprep.subr.bf16.mxu0 0
    %3451 = vmatpush1.bf16.xpose.msra.mxu0 0
    %3452 = vmatprep.subr.bf16.mxu0 0
    %3453 = vmatpush1.bf16.xpose.msra.mxu0 0
    %3454 = vmatprep.subr.bf16.mxu0 0
    %3455 = vmatpush1.bf16.xpose.msra.mxu0 0
    %3456 = vmatprep.subr.bf16.mxu0 0
    %3457 = vmatpush1.bf16.xpose.msra.mxu0 0
    %3458 = vmatprep.subr.bf16.mxu0 0
    %3459 = vmatpush1.bf16.xpose.msra.mxu0 0
    %3460 = vmatprep.subr.bf16.mxu0 0
    %3461 = vmatpush1.bf16.xpose.msra.mxu0 0
    %3462 = vmatprep.subr.bf16.mxu0 0
    %3463 = vmatpush1.bf16.xpose.msra.mxu0 0
    %3464 = vmatprep.subr.bf16.mxu0 0
    %3465 = vmatpush1.bf16.xpose.msra.mxu0 0
    %3466 = vmatprep.subr.bf16.mxu0 0
    %3467 = vmatpush1.bf16.xpose.msra.mxu0 0
    %3468 = vmatprep.mubr.bf16.mxu0 %v641
    %3469 = vmatmul.mubr.bf16.gmra.mrb[0].mxu0 %v627
    %v3470 = vpop.f32.mrb[0].mxu0
    %v3471 = vadd.f32 %v3431, %v3470
    %v3472 = vpop.f32.mrb[0].mxu0
    %v3473 = vpop.f32.mrb[0].mxu0
    %v3474 = vpop.f32.mrb[0].mxu0
    %3475 = vdwg.mxu0
    %3476 = vmatprep.subr.bf16.mxu0 %v1460
    %3477 = vmatpush1.bf16.xpose.msra.mxu0 %v1458
    %3478 = vmatprep.subr.bf16.mxu0 0
    %3479 = vmatpush1.bf16.xpose.msra.mxu0 0
    %3480 = vmatprep.subr.bf16.mxu0 0
    %3481 = vmatpush1.bf16.xpose.msra.mxu0 0
    %3482 = vmatprep.subr.bf16.mxu0 0
    %3483 = vmatpush1.bf16.xpose.msra.mxu0 0
    %3484 = vmatprep.subr.bf16.mxu0 0
    %3485 = vmatpush1.bf16.xpose.msra.mxu0 0
    %3486 = vmatprep.subr.bf16.mxu0 0
    %3487 = vmatpush1.bf16.xpose.msra.mxu0 0
    %3488 = vmatprep.subr.bf16.mxu0 0
    %3489 = vmatpush1.bf16.xpose.msra.mxu0 0
    %3490 = vmatprep.subr.bf16.mxu0 0
    %3491 = vmatpush1.bf16.xpose.msra.mxu0 0
    %3492 = vmatprep.subr.bf16.mxu0 0
    %3493 = vmatpush1.bf16.xpose.msra.mxu0 0
    %3494 = vmatprep.subr.bf16.mxu0 0
    %3495 = vmatpush1.bf16.xpose.msra.mxu0 0
    %3496 = vmatprep.subr.bf16.mxu0 0
    %3497 = vmatpush1.bf16.xpose.msra.mxu0 0
    %3498 = vmatprep.subr.bf16.mxu0 0
    %3499 = vmatpush1.bf16.xpose.msra.mxu0 0
    %3500 = vmatprep.subr.bf16.mxu0 0
    %3501 = vmatpush1.bf16.xpose.msra.mxu0 0
    %3502 = vmatprep.subr.bf16.mxu0 0
    %3503 = vmatpush1.bf16.xpose.msra.mxu0 0
    %3504 = vmatprep.subr.bf16.mxu0 0
    %3505 = vmatpush1.bf16.xpose.msra.mxu0 0
    %3506 = vmatprep.subr.bf16.mxu0 0
    %3507 = vmatpush1.bf16.xpose.msra.mxu0 0
    %3508 = vmatprep.mubr.bf16.mxu0 %v651
    %3509 = vmatmul.mubr.bf16.gmra.mrb[0].mxu0 %v649
    %v3510 = vpop.f32.mrb[0].mxu0
    %v3511 = vadd.f32 %v3471, %v3510
    %v3512 = vpop.f32.mrb[0].mxu0
    %v3513 = vpop.f32.mrb[0].mxu0
    %v3514 = vpop.f32.mrb[0].mxu0
    %3515 = vdwg.mxu0
    %3516 = vmatprep.subr.bf16.mxu0 %v1457
    %3517 = vmatpush1.bf16.xpose.msra.mxu0 %v1443
    %3518 = vmatprep.subr.bf16.mxu0 0
    %3519 = vmatpush1.bf16.xpose.msra.mxu0 0
    %3520 = vmatprep.subr.bf16.mxu0 0
    %3521 = vmatpush1.bf16.xpose.msra.mxu0 0
    %3522 = vmatprep.subr.bf16.mxu0 0
    %3523 = vmatpush1.bf16.xpose.msra.mxu0 0
    %3524 = vmatprep.subr.bf16.mxu0 0
    %3525 = vmatpush1.bf16.xpose.msra.mxu0 0
    %3526 = vmatprep.subr.bf16.mxu0 0
    %3527 = vmatpush1.bf16.xpose.msra.mxu0 0
    %3528 = vmatprep.subr.bf16.mxu0 0
    %3529 = vmatpush1.bf16.xpose.msra.mxu0 0
    %3530 = vmatprep.subr.bf16.mxu0 0
    %3531 = vmatpush1.bf16.xpose.msra.mxu0 0
    %3532 = vmatprep.subr.bf16.mxu0 0
    %3533 = vmatpush1.bf16.xpose.msra.mxu0 0
    %3534 = vmatprep.subr.bf16.mxu0 0
    %3535 = vmatpush1.bf16.xpose.msra.mxu0 0
    %3536 = vmatprep.subr.bf16.mxu0 0
    %3537 = vmatpush1.bf16.xpose.msra.mxu0 0
    %3538 = vmatprep.subr.bf16.mxu0 0
    %3539 = vmatpush1.bf16.xpose.msra.mxu0 0
    %3540 = vmatprep.subr.bf16.mxu0 0
    %3541 = vmatpush1.bf16.xpose.msra.mxu0 0
    %3542 = vmatprep.subr.bf16.mxu0 0
    %3543 = vmatpush1.bf16.xpose.msra.mxu0 0
    %3544 = vmatprep.subr.bf16.mxu0 0
    %3545 = vmatpush1.bf16.xpose.msra.mxu0 0
    %3546 = vmatprep.subr.bf16.mxu0 0
    %3547 = vmatpush1.bf16.xpose.msra.mxu0 0
    %3548 = vmatprep.mubr.bf16.mxu0 %v648
    %3549 = vmatmul.mubr.bf16.gmra.mrb[0].mxu0 %v634
    %v3550 = vpop.f32.mrb[0].mxu0
    %v3551 = vadd.f32 %v3511, %v3550
    %v3552 = vpop.f32.mrb[0].mxu0
    %v3553 = vpop.f32.mrb[0].mxu0
    %v3554 = vpop.f32.mrb[0].mxu0
    %3555 = vdwg.mxu0
    %3556 = vmatprep.subr.bf16.mxu0 %v1461
    %3557 = vmatpush1.bf16.xpose.msra.mxu0 %v1459
    %3558 = vmatprep.subr.bf16.mxu0 0
    %3559 = vmatpush1.bf16.xpose.msra.mxu0 0
    %3560 = vmatprep.subr.bf16.mxu0 0
    %3561 = vmatpush1.bf16.xpose.msra.mxu0 0
    %3562 = vmatprep.subr.bf16.mxu0 0
    %3563 = vmatpush1.bf16.xpose.msra.mxu0 0
    %3564 = vmatprep.subr.bf16.mxu0 0
    %3565 = vmatpush1.bf16.xpose.msra.mxu0 0
    %3566 = vmatprep.subr.bf16.mxu0 0
    %3567 = vmatpush1.bf16.xpose.msra.mxu0 0
    %3568 = vmatprep.subr.bf16.mxu0 0
    %3569 = vmatpush1.bf16.xpose.msra.mxu0 0
    %3570 = vmatprep.subr.bf16.mxu0 0
    %3571 = vmatpush1.bf16.xpose.msra.mxu0 0
    %3572 = vmatprep.subr.bf16.mxu0 0
    %3573 = vmatpush1.bf16.xpose.msra.mxu0 0
    %3574 = vmatprep.subr.bf16.mxu0 0
    %3575 = vmatpush1.bf16.xpose.msra.mxu0 0
    %3576 = vmatprep.subr.bf16.mxu0 0
    %3577 = vmatpush1.bf16.xpose.msra.mxu0 0
    %3578 = vmatprep.subr.bf16.mxu0 0
    %3579 = vmatpush1.bf16.xpose.msra.mxu0 0
    %3580 = vmatprep.subr.bf16.mxu0 0
    %3581 = vmatpush1.bf16.xpose.msra.mxu0 0
    %3582 = vmatprep.subr.bf16.mxu0 0
    %3583 = vmatpush1.bf16.xpose.msra.mxu0 0
    %3584 = vmatprep.subr.bf16.mxu0 0
    %3585 = vmatpush1.bf16.xpose.msra.mxu0 0
    %3586 = vmatprep.subr.bf16.mxu0 0
    %3587 = vmatpush1.bf16.xpose.msra.mxu0 0
    %3588 = vmatprep.mubr.bf16.mxu0 %v652
    %3589 = vmatmul.mubr.bf16.gmra.mrb[0].mxu0 %v650
    %v3590 = vpop.f32.mrb[0].mxu0
    %v3591 = vadd.f32 %v3551, %v3590
    %v3592 = vpop.f32.mrb[0].mxu0
    %v3593 = vpop.f32.mrb[0].mxu0
    %v3594 = vpop.f32.mrb[0].mxu0
    %3595 = vdwg.mxu0
    %3596 = vmatprep.subr.bf16.mxu0 %v1499
    %3597 = vmatpush1.bf16.xpose.msra.mxu0 %v1485
    %3598 = vmatprep.subr.bf16.mxu0 0
    %3599 = vmatpush1.bf16.xpose.msra.mxu0 0
    %3600 = vmatprep.subr.bf16.mxu0 0
    %3601 = vmatpush1.bf16.xpose.msra.mxu0 0
    %3602 = vmatprep.subr.bf16.mxu0 0
    %3603 = vmatpush1.bf16.xpose.msra.mxu0 0
    %3604 = vmatprep.subr.bf16.mxu0 0
    %3605 = vmatpush1.bf16.xpose.msra.mxu0 0
    %3606 = vmatprep.subr.bf16.mxu0 0
    %3607 = vmatpush1.bf16.xpose.msra.mxu0 0
    %3608 = vmatprep.subr.bf16.mxu0 0
    %3609 = vmatpush1.bf16.xpose.msra.mxu0 0
    %3610 = vmatprep.subr.bf16.mxu0 0
    %3611 = vmatpush1.bf16.xpose.msra.mxu0 0
    %3612 = vmatprep.subr.bf16.mxu0 0
    %3613 = vmatpush1.bf16.xpose.msra.mxu0 0
    %3614 = vmatprep.subr.bf16.mxu0 0
    %3615 = vmatpush1.bf16.xpose.msra.mxu0 0
    %3616 = vmatprep.subr.bf16.mxu0 0
    %3617 = vmatpush1.bf16.xpose.msra.mxu0 0
    %3618 = vmatprep.subr.bf16.mxu0 0
    %3619 = vmatpush1.bf16.xpose.msra.mxu0 0
    %3620 = vmatprep.subr.bf16.mxu0 0
    %3621 = vmatpush1.bf16.xpose.msra.mxu0 0
    %3622 = vmatprep.subr.bf16.mxu0 0
    %3623 = vmatpush1.bf16.xpose.msra.mxu0 0
    %3624 = vmatprep.subr.bf16.mxu0 0
    %3625 = vmatpush1.bf16.xpose.msra.mxu0 0
    %3626 = vmatprep.subr.bf16.mxu0 0
    %3627 = vmatpush1.bf16.xpose.msra.mxu0 0
    %3628 = vmatprep.mubr.bf16.mxu0 %v690
    %3629 = vmatmul.mubr.bf16.gmra.mrb[0].mxu0 %v676
    %v3630 = vpop.f32.mrb[0].mxu0
    %v3631 = vadd.f32 %v3591, %v3630
    %v3632 = vpop.f32.mrb[0].mxu0
    %v3633 = vpop.f32.mrb[0].mxu0
    %v3634 = vpop.f32.mrb[0].mxu0
    %3635 = vdwg.mxu0
    %3636 = vmatprep.subr.bf16.mxu0 %v1509
    %3637 = vmatpush1.bf16.xpose.msra.mxu0 %v1507
    %3638 = vmatprep.subr.bf16.mxu0 0
    %3639 = vmatpush1.bf16.xpose.msra.mxu0 0
    %3640 = vmatprep.subr.bf16.mxu0 0
    %3641 = vmatpush1.bf16.xpose.msra.mxu0 0
    %3642 = vmatprep.subr.bf16.mxu0 0
    %3643 = vmatpush1.bf16.xpose.msra.mxu0 0
    %3644 = vmatprep.subr.bf16.mxu0 0
    %3645 = vmatpush1.bf16.xpose.msra.mxu0 0
    %3646 = vmatprep.subr.bf16.mxu0 0
    %3647 = vmatpush1.bf16.xpose.msra.mxu0 0
    %3648 = vmatprep.subr.bf16.mxu0 0
    %3649 = vmatpush1.bf16.xpose.msra.mxu0 0
    %3650 = vmatprep.subr.bf16.mxu0 0
    %3651 = vmatpush1.bf16.xpose.msra.mxu0 0
    %3652 = vmatprep.subr.bf16.mxu0 0
    %3653 = vmatpush1.bf16.xpose.msra.mxu0 0
    %3654 = vmatprep.subr.bf16.mxu0 0
    %3655 = vmatpush1.bf16.xpose.msra.mxu0 0
    %3656 = vmatprep.subr.bf16.mxu0 0
    %3657 = vmatpush1.bf16.xpose.msra.mxu0 0
    %3658 = vmatprep.subr.bf16.mxu0 0
    %3659 = vmatpush1.bf16.xpose.msra.mxu0 0
    %3660 = vmatprep.subr.bf16.mxu0 0
    %3661 = vmatpush1.bf16.xpose.msra.mxu0 0
    %3662 = vmatprep.subr.bf16.mxu0 0
    %3663 = vmatpush1.bf16.xpose.msra.mxu0 0
    %3664 = vmatprep.subr.bf16.mxu0 0
    %3665 = vmatpush1.bf16.xpose.msra.mxu0 0
    %3666 = vmatprep.subr.bf16.mxu0 0
    %3667 = vmatpush1.bf16.xpose.msra.mxu0 0
    %3668 = vmatprep.mubr.bf16.mxu0 %v700
    %3669 = vmatmul.mubr.bf16.gmra.mrb[0].mxu0 %v698
    %v3670 = vpop.f32.mrb[0].mxu0
    %v3671 = vadd.f32 %v3631, %v3670
    %v3672 = vpop.f32.mrb[0].mxu0
    %v3673 = vpop.f32.mrb[0].mxu0
    %v3674 = vpop.f32.mrb[0].mxu0
    %3675 = vdwg.mxu0
    %3676 = vmatprep.subr.bf16.mxu0 %v1506
    %3677 = vmatpush1.bf16.xpose.msra.mxu0 %v1492
    %3678 = vmatprep.subr.bf16.mxu0 0
    %3679 = vmatpush1.bf16.xpose.msra.mxu0 0
    %3680 = vmatprep.subr.bf16.mxu0 0
    %3681 = vmatpush1.bf16.xpose.msra.mxu0 0
    %3682 = vmatprep.subr.bf16.mxu0 0
    %3683 = vmatpush1.bf16.xpose.msra.mxu0 0
    %3684 = vmatprep.subr.bf16.mxu0 0
    %3685 = vmatpush1.bf16.xpose.msra.mxu0 0
    %3686 = vmatprep.subr.bf16.mxu0 0
    %3687 = vmatpush1.bf16.xpose.msra.mxu0 0
    %3688 = vmatprep.subr.bf16.mxu0 0
    %3689 = vmatpush1.bf16.xpose.msra.mxu0 0
    %3690 = vmatprep.subr.bf16.mxu0 0
    %3691 = vmatpush1.bf16.xpose.msra.mxu0 0
    %3692 = vmatprep.subr.bf16.mxu0 0
    %3693 = vmatpush1.bf16.xpose.msra.mxu0 0
    %3694 = vmatprep.subr.bf16.mxu0 0
    %3695 = vmatpush1.bf16.xpose.msra.mxu0 0
    %3696 = vmatprep.subr.bf16.mxu0 0
    %3697 = vmatpush1.bf16.xpose.msra.mxu0 0
    %3698 = vmatprep.subr.bf16.mxu0 0
    %3699 = vmatpush1.bf16.xpose.msra.mxu0 0
    %3700 = vmatprep.subr.bf16.mxu0 0
    %3701 = vmatpush1.bf16.xpose.msra.mxu0 0
    %3702 = vmatprep.subr.bf16.mxu0 0
    %3703 = vmatpush1.bf16.xpose.msra.mxu0 0
    %3704 = vmatprep.subr.bf16.mxu0 0
    %3705 = vmatpush1.bf16.xpose.msra.mxu0 0
    %3706 = vmatprep.subr.bf16.mxu0 0
    %3707 = vmatpush1.bf16.xpose.msra.mxu0 0
    %3708 = vmatprep.mubr.bf16.mxu0 %v697
    %3709 = vmatmul.mubr.bf16.gmra.mrb[0].mxu0 %v683
    %v3710 = vpop.f32.mrb[0].mxu0
    %v3711 = vadd.f32 %v3671, %v3710
    %v3712 = vpop.f32.mrb[0].mxu0
    %v3713 = vpop.f32.mrb[0].mxu0
    %v3714 = vpop.f32.mrb[0].mxu0
    %3715 = vdwg.mxu0
    %3716 = vmatprep.subr.bf16.mxu0 %v1510
    %3717 = vmatpush1.bf16.xpose.msra.mxu0 %v1508
    %3718 = vmatprep.subr.bf16.mxu0 0
    %3719 = vmatpush1.bf16.xpose.msra.mxu0 0
    %3720 = vmatprep.subr.bf16.mxu0 0
    %3721 = vmatpush1.bf16.xpose.msra.mxu0 0
    %3722 = vmatprep.subr.bf16.mxu0 0
    %3723 = vmatpush1.bf16.xpose.msra.mxu0 0
    %3724 = vmatprep.subr.bf16.mxu0 0
    %3725 = vmatpush1.bf16.xpose.msra.mxu0 0
    %3726 = vmatprep.subr.bf16.mxu0 0
    %3727 = vmatpush1.bf16.xpose.msra.mxu0 0
    %3728 = vmatprep.subr.bf16.mxu0 0
    %3729 = vmatpush1.bf16.xpose.msra.mxu0 0
    %3730 = vmatprep.subr.bf16.mxu0 0
    %3731 = vmatpush1.bf16.xpose.msra.mxu0 0
    %3732 = vmatprep.subr.bf16.mxu0 0
    %3733 = vmatpush1.bf16.xpose.msra.mxu0 0
    %3734 = vmatprep.subr.bf16.mxu0 0
    %3735 = vmatpush1.bf16.xpose.msra.mxu0 0
    %3736 = vmatprep.subr.bf16.mxu0 0
    %3737 = vmatpush1.bf16.xpose.msra.mxu0 0
    %3738 = vmatprep.subr.bf16.mxu0 0
    %3739 = vmatpush1.bf16.xpose.msra.mxu0 0
    %3740 = vmatprep.subr.bf16.mxu0 0
    %3741 = vmatpush1.bf16.xpose.msra.mxu0 0
    %3742 = vmatprep.subr.bf16.mxu0 0
    %3743 = vmatpush1.bf16.xpose.msra.mxu0 0
    %3744 = vmatprep.subr.bf16.mxu0 0
    %3745 = vmatpush1.bf16.xpose.msra.mxu0 0
    %3746 = vmatprep.subr.bf16.mxu0 0
    %3747 = vmatpush1.bf16.xpose.msra.mxu0 0
    %3748 = vmatprep.mubr.bf16.mxu0 %v701
    %3749 = vmatmul.mubr.bf16.gmra.mrb[0].mxu0 %v699
    %v3750 = vpop.f32.mrb[0].mxu0
    %v3751 = vadd.f32 %v3711, %v3750
    %v3752 = vpop.f32.mrb[0].mxu0
    %v3753 = vpop.f32.mrb[0].mxu0
    %v3754 = vpop.f32.mrb[0].mxu0
    %3755 = vdwg.mxu0
    %3756 = vmatprep.subr.bf16.mxu0 %v1548
    %3757 = vmatpush1.bf16.xpose.msra.mxu0 %v1534
    %3758 = vmatprep.subr.bf16.mxu0 0
    %3759 = vmatpush1.bf16.xpose.msra.mxu0 0
    %3760 = vmatprep.subr.bf16.mxu0 0
    %3761 = vmatpush1.bf16.xpose.msra.mxu0 0
    %3762 = vmatprep.subr.bf16.mxu0 0
    %3763 = vmatpush1.bf16.xpose.msra.mxu0 0
    %3764 = vmatprep.subr.bf16.mxu0 0
    %3765 = vmatpush1.bf16.xpose.msra.mxu0 0
    %3766 = vmatprep.subr.bf16.mxu0 0
    %3767 = vmatpush1.bf16.xpose.msra.mxu0 0
    %3768 = vmatprep.subr.bf16.mxu0 0
    %3769 = vmatpush1.bf16.xpose.msra.mxu0 0
    %3770 = vmatprep.subr.bf16.mxu0 0
    %3771 = vmatpush1.bf16.xpose.msra.mxu0 0
    %3772 = vmatprep.subr.bf16.mxu0 0
    %3773 = vmatpush1.bf16.xpose.msra.mxu0 0
    %3774 = vmatprep.subr.bf16.mxu0 0
    %3775 = vmatpush1.bf16.xpose.msra.mxu0 0
    %3776 = vmatprep.subr.bf16.mxu0 0
    %3777 = vmatpush1.bf16.xpose.msra.mxu0 0
    %3778 = vmatprep.subr.bf16.mxu0 0
    %3779 = vmatpush1.bf16.xpose.msra.mxu0 0
    %3780 = vmatprep.subr.bf16.mxu0 0
    %3781 = vmatpush1.bf16.xpose.msra.mxu0 0
    %3782 = vmatprep.subr.bf16.mxu0 0
    %3783 = vmatpush1.bf16.xpose.msra.mxu0 0
    %3784 = vmatprep.subr.bf16.mxu0 0
    %3785 = vmatpush1.bf16.xpose.msra.mxu0 0
    %3786 = vmatprep.subr.bf16.mxu0 0
    %3787 = vmatpush1.bf16.xpose.msra.mxu0 0
    %3788 = vmatprep.mubr.bf16.mxu0 %v739
    %3789 = vmatmul.mubr.bf16.gmra.mrb[0].mxu0 %v725
    %v3790 = vpop.f32.mrb[0].mxu0
    %v3791 = vadd.f32 %v3751, %v3790
    %v3792 = vpop.f32.mrb[0].mxu0
    %v3793 = vpop.f32.mrb[0].mxu0
    %v3794 = vpop.f32.mrb[0].mxu0
    %3795 = vdwg.mxu0
    %3796 = vmatprep.subr.bf16.mxu0 %v1558
    %3797 = vmatpush1.bf16.xpose.msra.mxu0 %v1556
    %3798 = vmatprep.subr.bf16.mxu0 0
    %3799 = vmatpush1.bf16.xpose.msra.mxu0 0
    %3800 = vmatprep.subr.bf16.mxu0 0
    %3801 = vmatpush1.bf16.xpose.msra.mxu0 0
    %3802 = vmatprep.subr.bf16.mxu0 0
    %3803 = vmatpush1.bf16.xpose.msra.mxu0 0
    %3804 = vmatprep.subr.bf16.mxu0 0
    %3805 = vmatpush1.bf16.xpose.msra.mxu0 0
    %3806 = vmatprep.subr.bf16.mxu0 0
    %3807 = vmatpush1.bf16.xpose.msra.mxu0 0
    %3808 = vmatprep.subr.bf16.mxu0 0
    %3809 = vmatpush1.bf16.xpose.msra.mxu0 0
    %3810 = vmatprep.subr.bf16.mxu0 0
    %3811 = vmatpush1.bf16.xpose.msra.mxu0 0
    %3812 = vmatprep.subr.bf16.mxu0 0
    %3813 = vmatpush1.bf16.xpose.msra.mxu0 0
    %3814 = vmatprep.subr.bf16.mxu0 0
    %3815 = vmatpush1.bf16.xpose.msra.mxu0 0
    %3816 = vmatprep.subr.bf16.mxu0 0
    %3817 = vmatpush1.bf16.xpose.msra.mxu0 0
    %3818 = vmatprep.subr.bf16.mxu0 0
    %3819 = vmatpush1.bf16.xpose.msra.mxu0 0
    %3820 = vmatprep.subr.bf16.mxu0 0
    %3821 = vmatpush1.bf16.xpose.msra.mxu0 0
    %3822 = vmatprep.subr.bf16.mxu0 0
    %3823 = vmatpush1.bf16.xpose.msra.mxu0 0
    %3824 = vmatprep.subr.bf16.mxu0 0
    %3825 = vmatpush1.bf16.xpose.msra.mxu0 0
    %3826 = vmatprep.subr.bf16.mxu0 0
    %3827 = vmatpush1.bf16.xpose.msra.mxu0 0
    %3828 = vmatprep.mubr.bf16.mxu0 %v749
    %3829 = vmatmul.mubr.bf16.gmra.mrb[0].mxu0 %v747
    %v3830 = vpop.f32.mrb[0].mxu0
    %v3831 = vadd.f32 %v3791, %v3830
    %v3832 = vpop.f32.mrb[0].mxu0
    %v3833 = vpop.f32.mrb[0].mxu0
    %v3834 = vpop.f32.mrb[0].mxu0
    %3835 = vdwg.mxu0
    %3836 = vmatprep.subr.bf16.mxu0 %v1555
    %3837 = vmatpush1.bf16.xpose.msra.mxu0 %v1541
    %3838 = vmatprep.subr.bf16.mxu0 0
    %3839 = vmatpush1.bf16.xpose.msra.mxu0 0
    %3840 = vmatprep.subr.bf16.mxu0 0
    %3841 = vmatpush1.bf16.xpose.msra.mxu0 0
    %3842 = vmatprep.subr.bf16.mxu0 0
    %3843 = vmatpush1.bf16.xpose.msra.mxu0 0
    %3844 = vmatprep.subr.bf16.mxu0 0
    %3845 = vmatpush1.bf16.xpose.msra.mxu0 0
    %3846 = vmatprep.subr.bf16.mxu0 0
    %3847 = vmatpush1.bf16.xpose.msra.mxu0 0
    %3848 = vmatprep.subr.bf16.mxu0 0
    %3849 = vmatpush1.bf16.xpose.msra.mxu0 0
    %3850 = vmatprep.subr.bf16.mxu0 0
    %3851 = vmatpush1.bf16.xpose.msra.mxu0 0
    %3852 = vmatprep.subr.bf16.mxu0 0
    %3853 = vmatpush1.bf16.xpose.msra.mxu0 0
    %3854 = vmatprep.subr.bf16.mxu0 0
    %3855 = vmatpush1.bf16.xpose.msra.mxu0 0
    %3856 = vmatprep.subr.bf16.mxu0 0
    %3857 = vmatpush1.bf16.xpose.msra.mxu0 0
    %3858 = vmatprep.subr.bf16.mxu0 0
    %3859 = vmatpush1.bf16.xpose.msra.mxu0 0
    %3860 = vmatprep.subr.bf16.mxu0 0
    %3861 = vmatpush1.bf16.xpose.msra.mxu0 0
    %3862 = vmatprep.subr.bf16.mxu0 0
    %3863 = vmatpush1.bf16.xpose.msra.mxu0 0
    %3864 = vmatprep.subr.bf16.mxu0 0
    %3865 = vmatpush1.bf16.xpose.msra.mxu0 0
    %3866 = vmatprep.subr.bf16.mxu0 0
    %3867 = vmatpush1.bf16.xpose.msra.mxu0 0
    %3868 = vmatprep.mubr.bf16.mxu0 %v746
    %3869 = vmatmul.mubr.bf16.gmra.mrb[0].mxu0 %v732
    %v3870 = vpop.f32.mrb[0].mxu0
    %v3871 = vadd.f32 %v3831, %v3870
    %v3872 = vpop.f32.mrb[0].mxu0
    %v3873 = vpop.f32.mrb[0].mxu0
    %v3874 = vpop.f32.mrb[0].mxu0
    %3875 = vdwg.mxu0
    %3876 = vmatprep.subr.bf16.mxu0 0
    %3877 = vmatpush1.bf16.xpose.msra.mxu0 %v1674
    %3878 = vmatprep.subr.bf16.mxu0 0
    %3879 = vmatpush1.bf16.xpose.msra.mxu0 0
    %3880 = vmatprep.subr.bf16.mxu0 0
    %3881 = vmatpush1.bf16.xpose.msra.mxu0 0
    %3882 = vmatprep.subr.bf16.mxu0 0
    %3883 = vmatpush1.bf16.xpose.msra.mxu0 0
    %3884 = vmatprep.subr.bf16.mxu0 0
    %3885 = vmatpush1.bf16.xpose.msra.mxu0 0
    %3886 = vmatprep.subr.bf16.mxu0 0
    %3887 = vmatpush1.bf16.xpose.msra.mxu0 0
    %3888 = vmatprep.subr.bf16.mxu0 0
    %3889 = vmatpush1.bf16.xpose.msra.mxu0 0
    %3890 = vmatprep.subr.bf16.mxu0 0
    %3891 = vmatpush1.bf16.xpose.msra.mxu0 0
    %3892 = vmatprep.subr.bf16.mxu0 0
    %3893 = vmatpush1.bf16.xpose.msra.mxu0 0
    %3894 = vmatprep.subr.bf16.mxu0 0
    %3895 = vmatpush1.bf16.xpose.msra.mxu0 0
    %3896 = vmatprep.subr.bf16.mxu0 0
    %3897 = vmatpush1.bf16.xpose.msra.mxu0 0
    %3898 = vmatprep.subr.bf16.mxu0 0
    %3899 = vmatpush1.bf16.xpose.msra.mxu0 0
    %3900 = vmatprep.subr.bf16.mxu0 0
    %3901 = vmatpush1.bf16.xpose.msra.mxu0 0
    %3902 = vmatprep.subr.bf16.mxu0 0
    %3903 = vmatpush1.bf16.xpose.msra.mxu0 0
    %3904 = vmatprep.subr.bf16.mxu0 0
    %3905 = vmatpush1.bf16.xpose.msra.mxu0 0
    %3906 = vmatprep.subr.bf16.mxu0 0
    %3907 = vmatpush1.bf16.xpose.msra.mxu0 0
    %3908 = vmatprep.mubr.bf16.mxu0 0
    %3909 = vmatmul.mubr.bf16.gmra.mrb[0].mxu0 %v1671
    %v3910 = vpop.f32.mrb[0].mxu0
    %v3911 = vadd.f32 %v3871, %v3910
    %v3912 = vpop.f32.mrb[0].mxu0
    %v3913 = vpop.f32.mrb[0].mxu0
    %v3914 = vpop.f32.mrb[0].mxu0
    %3915 = vdwg.mxu0
    %vm3916 = vcmask 9216
    %3917 = vst.msk [vmem:[#allocation2] sm:$0x3] %vm3916, %v3911
    // Predicated region
    $region14: #{cnn_forward.7} parent=1 // pred_check
      _
    $region15: #{cnn_forward.7} parent=1 // pred_check_branch
      %3919 = sbr.rel (0) target = $region17
    $region16: #{cnn_forward.7} parent=1 // pred_region
      %s3921 = ssub.s32 32, 32
      %3922 = vsyncadd [#allocation3], %s3921
      %s3924 = sshll.u32 [#allocation2], 4
      %s3925 = int_to_ptr.vmem [resolvable:$true] %s3924
      %3927 = dma.vmem_to_hbm [thread:$0]  %s3925, 32, %s3, [#allocation3]
    $region17: #{cnn_forward.7} parent=1 // pred_fallthru
      _
    // Predicated region
    $region18: #{cnn_forward.7} parent=1 // pred_check
      _
    $region19: #{cnn_forward.7} parent=1 // pred_check_branch
      %3929 = sbr.rel (0) target = $region21
    $region20: #{cnn_forward.7} parent=1 // pred_region
      %3930 = dma.done [#allocation3], 32
    $region21: #{cnn_forward.7} parent=1 // pred_fallthru
      _
    %3931 = vsyncpa [#allocation3], 1

</llo_original>
